<compile_context>
chip_gen: v7x
topology: tpu7x:2x2x1
jax: 0.10.0
libtpu: 0.0.40
codegen_flags: <defaults>
</compile_context>

<pallas_src>
import functools

import jax
import jax.numpy as jnp
from jax.experimental import pallas as pl
from jax.experimental.pallas import tpu as pltpu  # noqa: F401  (not needed at this toy scale)


def _round_up(x, m):
    return (x + m - 1) // m * m


# ------------------------------ Pallas kernels ------------------------------

def _matmul_bias_kernel(a_ref, w_ref, b_ref, o_ref, *, relu):
    """One-shot (M,K)@(K,N): bf16 MXU inputs, f32 accumulate, f32 epilogue,
    result written directly to the output block (no scratch accumulator)."""
    out = jnp.dot(a_ref[...], w_ref[...], preferred_element_type=jnp.float32)
    out = out + b_ref[...]
    if relu:
        out = jnp.maximum(out, 0.0)
    o_ref[...] = out


def pallas_matmul_bias(a, w, b, relu=False):
    """(M,K) @ (K,N) + b with optional ReLU.

    No grid / no scratch: at these sizes (M<=256, K<=800, N<=54) all operands
    fit comfortably in VMEM, so the kernel is a single MXU pass.
    # TODO(synk): at real model scale (C=512, K up to 12800) add an M grid axis
    # marked "parallel" (2 TensorCores on v7x, 64 MiB VMEM) and 256-wide tiles
    # for the 2x256^2 MXU on v6e/v7x.
    """
    M, K = a.shape
    K2, N = w.shape
    assert K == K2
    a = a.astype(jnp.bfloat16)
    w = w.astype(jnp.bfloat16)
    b = b.reshape(1, N).astype(jnp.float32)
    # Minimal zero padding: M up to a sublane tile, K to a multiple of 8 so the
    # contraction never touches layout padding.  Only the tiny target-branch
    # matmuls (M=1 / K=27) actually get padded; the big M=256 calls do not.
    Mp = _round_up(max(M, 8), 8)
    Kp = _round_up(K, 8)
    if Mp != M or Kp != K:
        a = jnp.pad(a, ((0, Mp - M), (0, Kp - K)))
    if Kp != K:
        w = jnp.pad(w, ((0, Kp - K), (0, 0)))
    out = pl.pallas_call(
        functools.partial(_matmul_bias_kernel, relu=relu),
        out_shape=jax.ShapeDtypeStruct((Mp, N), jnp.float32),
    )(a, w, b)
    return out[:M] if Mp != M else out


def _div_diffs_kernel(xpad_ref, tgt_ref, o_ref, *, kh, kw, oh, ow, inv_denom):
    """Fuses: ones-kernel conv over image feats (ts x ts box-sum of the channel
    sum), ones-kernel conv over target feats (full sum), their difference,
    sqrt(pow(2)) (== abs) and the divide — all VPU/XLU work, no MXU."""
    tsum = jnp.sum(tgt_ref[...])
    acc = jnp.zeros((oh, ow), jnp.float32)
    for di in range(kh):
        for dj in range(kw):
            acc = acc + jnp.sum(xpad_ref[di:di + oh, dj:dj + ow, :], axis=-1)
    o_ref[...] = jnp.abs(acc - tsum) * inv_denom


def pallas_div_diffs(features, target_features):
    """features (1,H,W,C), target_features (1,ts,ts,C) -> (H,W) div_diffs."""
    _, H, W, C = features.shape
    ts = target_features.shape[1]
    p = ts // 2
    xpad = jnp.pad(features[0], ((p, p), (p, p), (0, 0)))   # (H+2p, W+2p, C)
    return pl.pallas_call(
        functools.partial(_div_diffs_kernel, kh=ts, kw=ts, oh=H, ow=W,
                          inv_denom=1.0 / float(ts * C)),
        out_shape=jax.ShapeDtypeStruct((H, W), jnp.float32),
    )(xpad, target_features[0])


# -------------------------------- conv glue ---------------------------------

def _wmat(w_oikk):
    """(Cout, Cin, kh, kw) torch weight -> (kh*kw*Cin, Cout) matmul weight."""
    cout, cin, kh, kw = w_oikk.shape
    return jnp.transpose(w_oikk, (2, 3, 1, 0)).reshape(kh * kw * cin, cout)


def im2col(x, kh, kw, pad):
    """x: NHWC -> ((N*oh*ow, kh*kw*C), (N, oh, ow)); column order (i, j, c)."""
    if pad:
        x = jnp.pad(x, ((0, 0), (pad, pad), (pad, pad), (0, 0)))
    n, h, w, c = x.shape
    oh, ow = h - kh + 1, w - kw + 1
    if kh == 1 and kw == 1:            # 1x1 conv: pure reshape, no duplication
        return x.reshape(n * oh * ow, c), (n, oh, ow)
    if oh == 1 and ow == 1:            # valid conv covering the whole map
        return x.reshape(n, kh * kw * c), (n, 1, 1)
    cols = [x[:, i:i + oh, j:j + ow, :] for i in range(kh) for j in range(kw)]
    cols = jnp.concatenate(cols, axis=-1)
    # TODO(synk): for large feature maps form the im2col columns inside the
    # kernel via ref window loads instead of materializing them in HBM.
    return cols.reshape(n * oh * ow, kh * kw * c), (n, oh, ow)


def conv2d_pallas(x_nhwc, w_oikk, bias, same_padding=False, relu=True):
    cout, cin, kh, kw = w_oikk.shape
    pad = kh // 2 if same_padding else 0
    cols, (n, oh, ow) = im2col(x_nhwc, kh, kw, pad)
    out = pallas_matmul_bias(cols, _wmat(w_oikk), bias, relu=relu)
    return out.reshape(n, oh, ow, cout)


def conv2d_ref(x_nhwc, w_oikk, bias, same_padding=False, relu=True):
    cout, cin, kh, kw = w_oikk.shape
    pad = kh // 2 if same_padding else 0
    cols, (n, oh, ow) = im2col(x_nhwc, kh, kw, pad)
    out = cols @ _wmat(w_oikk) + bias
    if relu:
        out = jnp.maximum(out, 0.0)
    return out.reshape(n, oh, ow, cout)


# --------------------------------- RPN model --------------------------------

ANCHOR_SCALES = 3                    # len([8, 16, 32])
NUM_SCORE = ANCHOR_SCALES * 3 * 2    # 18
NUM_BBOX = ANCHOR_SCALES * 3 * 4     # 36


def init_params(key, C):
    def conv_param(k, cout, cin, ks):
        kw_, kb_ = jax.random.split(k)
        w = jax.random.normal(kw_, (cout, cin, ks, ks), jnp.float32) * 0.01
        b = jax.random.normal(kb_, (cout,), jnp.float32) * 0.01
        return w, b

    ks = jax.random.split(key, 6)
    return {
        "backbone": conv_param(ks[0], C, 3, 3),
        "target_conv": conv_param(ks[1], C, C, 5),
        "target_embedding": conv_param(ks[2], C, 2 * C, 1),
        "conv1": conv_param(ks[3], C, C, 5),
        "score_conv": conv_param(ks[4], NUM_SCORE, C, 1),
        "bbox_conv": conv_param(ks[5], NUM_BBOX, C, 1),
    }


def _softmax_reshape(rpn_cls_score_nhwc):
    """reshape_layer(d=2) + softmax(dim=1) + reshape_layer(d=18), NCHW semantics."""
    _, H, W, _ = rpn_cls_score_nhwc.shape
    cls_nchw = jnp.transpose(rpn_cls_score_nhwc, (0, 3, 1, 2))        # (1,18,H,W)
    cls_reshape = cls_nchw.reshape(1, 2, (NUM_SCORE * H) // 2, W)
    prob = jax.nn.softmax(cls_reshape, axis=1)
    return prob.reshape(1, NUM_SCORE, H, W)


@jax.jit
def rpn_forward(params, target_data, im_data):
    C = params["backbone"][0].shape[0]
    # TODO(synk): VGG16 backbone definition is not in the reference source;
    # replaced by a single conv3x3+ReLU stand-in at feature-map resolution.
    features = conv2d_pallas(im_data, *params["backbone"],
                             same_padding=True, relu=True)                 # (1,H,W,C)
    target_features = conv2d_pallas(target_data, *params["backbone"],
                                    same_padding=True, relu=True)          # (1,ts,ts,C)
    _, H, W, _ = features.shape

    # ones-kernel convs + diff + sqrt(pow2) + div, fused into one VPU kernel
    div_diffs = pallas_div_diffs(features, target_features)                # (H,W)

    # target_conv: 5x5 valid conv on the ts x ts map -> a single-row matmul
    target_red = conv2d_pallas(target_features, *params["target_conv"],
                               relu=True)                                  # (1,1,1,C)

    # target_embedding folded (broadcast term is spatially constant)
    w_emb, b_emb = params["target_embedding"]
    w_full = _wmat(w_emb)                                                  # (2C, C)
    w_f, w_t = w_full[:C], w_full[C:]
    bias_emb = target_red.reshape(1, C) @ w_t + b_emb                      # (1, C)
    x = pallas_matmul_bias(features.reshape(H * W, C), w_f, bias_emb, relu=True)
    x = x.reshape(1, H, W, C)

    rpn_conv1 = conv2d_pallas(x, *params["conv1"],
                              same_padding=True, relu=True)                # (1,H,W,C)

    # fused score+bbox 1x1 heads: one matmul with N = 18 + 36 = 54
    (w_s, b_s), (w_b, b_b) = params["score_conv"], params["bbox_conv"]
    w_head = jnp.concatenate([_wmat(w_s), _wmat(w_b)], axis=1)             # (C, 54)
    b_head = jnp.concatenate([b_s, b_b])
    head = pallas_matmul_bias(rpn_conv1.reshape(H * W, C), w_head, b_head, relu=False)
    rpn_cls_score = head[:, :NUM_SCORE].reshape(1, H, W, NUM_SCORE)
    rpn_bbox_pred = head[:, NUM_SCORE:].reshape(1, H, W, NUM_BBOX)

    rpn_cls_prob_reshape = _softmax_reshape(rpn_cls_score)
    rpn_bbox_pred_nchw = jnp.transpose(rpn_bbox_pred, (0, 3, 1, 2))

    # TODO(synk): proposal_layer (anchor generation + NMS), anchor_target_layer
    # and the training losses are host-side numpy routines with data-dependent
    # shapes; not implemented as kernels.
    return (jnp.transpose(target_features, (0, 3, 1, 2)),
            jnp.transpose(features, (0, 3, 1, 2)),
            rpn_cls_prob_reshape,
            rpn_bbox_pred_nchw,
            div_diffs)


@jax.jit
def rpn_forward_ref(params, target_data, im_data):
    """Plain-jnp reference following the original (unfused) module structure."""
    C = params["backbone"][0].shape[0]
    features = conv2d_ref(im_data, *params["backbone"], same_padding=True, relu=True)
    target_features = conv2d_ref(target_data, *params["backbone"], same_padding=True, relu=True)
    _, H, W, _ = features.shape
    ts = target_features.shape[1]

    ones_w = jnp.ones((1, C, ts, ts), jnp.float32)
    zero_b = jnp.zeros((1,), jnp.float32)
    summed_image = conv2d_ref(features, ones_w, zero_b, same_padding=True, relu=False)
    summed_target = conv2d_ref(target_features, ones_w, zero_b, same_padding=False, relu=False)
    d = summed_image[0, :, :, 0] - summed_target[0, 0, 0, 0]
    div_diffs = jnp.sqrt(d * d) / (ts * C)

    target_red = conv2d_ref(target_features, *params["target_conv"], relu=True)
    target_expand = jnp.broadcast_to(target_red, (1, H, W, C))
    x = jnp.concatenate([features, target_expand], axis=-1)
    x = conv2d_ref(x, *params["target_embedding"], relu=True)
    rpn_conv1 = conv2d_ref(x, *params["conv1"], same_padding=True, relu=True)
    rpn_cls_score = conv2d_ref(rpn_conv1, *params["score_conv"], relu=False)
    rpn_bbox_pred = conv2d_ref(rpn_conv1, *params["bbox_conv"], relu=False)

    rpn_cls_prob_reshape = _softmax_reshape(rpn_cls_score)
    return (jnp.transpose(target_features, (0, 3, 1, 2)),
            jnp.transpose(features, (0, 3, 1, 2)),
            rpn_cls_prob_reshape,
            jnp.transpose(rpn_bbox_pred, (0, 3, 1, 2)),
            div_diffs)


# ----------------------------------- main ------------------------------------

if __name__ == "__main__":
    C = 32           # stand-in for 512 feature channels
    H = W = 16       # image feature-map size
    TS = 5           # target feature-map size (target_conv 5x5 valid -> 1x1)

    key = jax.random.PRNGKey(0)
    kp, ki, kt = jax.random.split(key, 3)
    params = init_params(kp, C)
    im_data = jax.random.normal(ki, (1, H, W, 3), jnp.float32)        # NHWC
    target_data = jax.random.normal(kt, (1, TS, TS, 3), jnp.float32)  # NHWC

    outs = jax.block_until_ready(rpn_forward(params, target_data, im_data))
    refs = jax.block_until_ready(rpn_forward_ref(params, target_data, im_data))

    names = ["target_features", "features", "rpn_cls_prob_reshape",
             "rpn_bbox_pred", "div_diffs"]
    for name, o, r in zip(names, outs, refs):
        assert o.shape == r.shape, f"shape mismatch in {name}: {o.shape} vs {r.shape}"
        assert bool(jnp.all(jnp.isfinite(o))), f"non-finite output in {name}"
        assert jnp.allclose(o, r, atol=2e-2, rtol=2e-2), f"mismatch in {name}"

    print("KERNEL_OK")
</pallas_src>

<mosaic_0001>
module attributes {stable_mosaic.version = 11 : i64} {
  func.func @_matmul_bias_kernel(%arg0: memref<256x32xbf16, #tpu.memory_space<vmem>>, %arg1: memref<32x32xbf16, #tpu.memory_space<vmem>>, %arg2: memref<1x32xf32, #tpu.memory_space<vmem>>, %arg3: memref<256x32xf32, #tpu.memory_space<vmem>>) attributes {dimension_semantics = [], scalar_prefetch = 0 : i64, scratch_operands = 0 : i64, tpu.core_type = #tpu.core_type<tc>} {
    %c0 = arith.constant 0 : index
    %c0_0 = arith.constant 0 : index
    %0 = vector.load %arg0[%c0, %c0_0] : memref<256x32xbf16, #tpu.memory_space<vmem>>, vector<256x32xbf16>
    %c0_1 = arith.constant 0 : index
    %c0_2 = arith.constant 0 : index
    %1 = vector.load %arg1[%c0_1, %c0_2] : memref<32x32xbf16, #tpu.memory_space<vmem>>, vector<32x32xbf16>
    %cst = arith.constant dense<0.000000e+00> : vector<256x32xf32>
    %2 = tpu.matmul %0, %1, %cst {dimension_numbers = #tpu.dot_dimension_numbers<[1], [0], [0], [1], [0, 0, 1, 1], [], []>} : vector<256x32xbf16>, vector<32x32xbf16>, vector<256x32xf32> -> vector<256x32xf32>
    %c0_3 = arith.constant 0 : index
    %c0_4 = arith.constant 0 : index
    %3 = vector.load %arg2[%c0_3, %c0_4] : memref<1x32xf32, #tpu.memory_space<vmem>>, vector<1x32xf32>
    %4 = vector.broadcast %3 : vector<1x32xf32> to vector<256x32xf32>
    %5 = arith.addf %2, %4 : vector<256x32xf32>
    %cst_5 = arith.constant 0.000000e+00 : f32
    %6 = vector.broadcast %cst_5 : f32 to vector<256x32xf32>
    %7 = arith.maximumf %5, %6 : vector<256x32xf32>
    %c0_6 = arith.constant 0 : index
    %c0_7 = arith.constant 0 : index
    %8 = vector.load %arg3[%c0_6, %c0_7] : memref<256x32xf32, #tpu.memory_space<vmem>>, vector<256x32xf32>
    tpu.vector_store %arg3[%c0_6, %c0_7], %7 {strides = array<i32>} : memref<256x32xf32, #tpu.memory_space<vmem>>, vector<256x32xf32>,
    return
  }
}

module attributes {stable_mosaic.version = 11 : i64} {
  func.func @_matmul_bias_kernel(%arg0: memref<32x32xbf16, #tpu.memory_space<vmem>>, %arg1: memref<32x32xbf16, #tpu.memory_space<vmem>>, %arg2: memref<1x32xf32, #tpu.memory_space<vmem>>, %arg3: memref<32x32xf32, #tpu.memory_space<vmem>>) attributes {dimension_semantics = [], scalar_prefetch = 0 : i64, scratch_operands = 0 : i64, tpu.core_type = #tpu.core_type<tc>} {
    %c0 = arith.constant 0 : index
    %c0_0 = arith.constant 0 : index
    %0 = vector.load %arg0[%c0, %c0_0] : memref<32x32xbf16, #tpu.memory_space<vmem>>, vector<32x32xbf16>
    %c0_1 = arith.constant 0 : index
    %c0_2 = arith.constant 0 : index
    %1 = vector.load %arg1[%c0_1, %c0_2] : memref<32x32xbf16, #tpu.memory_space<vmem>>, vector<32x32xbf16>
    %cst = arith.constant dense<0.000000e+00> : vector<32x32xf32>
    %2 = tpu.matmul %0, %1, %cst {dimension_numbers = #tpu.dot_dimension_numbers<[1], [0], [0], [1], [0, 0, 1, 1], [], []>} : vector<32x32xbf16>, vector<32x32xbf16>, vector<32x32xf32> -> vector<32x32xf32>
    %c0_3 = arith.constant 0 : index
    %c0_4 = arith.constant 0 : index
    %3 = vector.load %arg2[%c0_3, %c0_4] : memref<1x32xf32, #tpu.memory_space<vmem>>, vector<1x32xf32>
    %4 = vector.broadcast %3 : vector<1x32xf32> to vector<32x32xf32>
    %5 = arith.addf %2, %4 : vector<32x32xf32>
    %cst_5 = arith.constant 0.000000e+00 : f32
    %6 = vector.broadcast %cst_5 : f32 to vector<32x32xf32>
    %7 = arith.maximumf %5, %6 : vector<32x32xf32>
    %c0_6 = arith.constant 0 : index
    %c0_7 = arith.constant 0 : index
    %8 = vector.load %arg3[%c0_6, %c0_7] : memref<32x32xf32, #tpu.memory_space<vmem>>, vector<32x32xf32>
    tpu.vector_store %arg3[%c0_6, %c0_7], %7 {strides = array<i32>} : memref<32x32xf32, #tpu.memory_space<vmem>>, vector<32x32xf32>,
    return
  }
}

module attributes {stable_mosaic.version = 11 : i64} {
  func.func @_matmul_bias_kernel(%arg0: memref<8x800xbf16, #tpu.memory_space<vmem>>, %arg1: memref<800x32xbf16, #tpu.memory_space<vmem>>, %arg2: memref<1x32xf32, #tpu.memory_space<vmem>>, %arg3: memref<8x32xf32, #tpu.memory_space<vmem>>) attributes {dimension_semantics = [], scalar_prefetch = 0 : i64, scratch_operands = 0 : i64, tpu.core_type = #tpu.core_type<tc>} {
    %c0 = arith.constant 0 : index
    %c0_0 = arith.constant 0 : index
    %0 = vector.load %arg0[%c0, %c0_0] : memref<8x800xbf16, #tpu.memory_space<vmem>>, vector<8x800xbf16>
    %c0_1 = arith.constant 0 : index
    %c0_2 = arith.constant 0 : index
    %1 = vector.load %arg1[%c0_1, %c0_2] : memref<800x32xbf16, #tpu.memory_space<vmem>>, vector<800x32xbf16>
    %cst = arith.constant dense<0.000000e+00> : vector<8x32xf32>
    %2 = tpu.matmul %0, %1, %cst {dimension_numbers = #tpu.dot_dimension_numbers<[1], [0], [0], [1], [0, 0, 1, 1], [], []>} : vector<8x800xbf16>, vector<800x32xbf16>, vector<8x32xf32> -> vector<8x32xf32>
    %c0_3 = arith.constant 0 : index
    %c0_4 = arith.constant 0 : index
    %3 = vector.load %arg2[%c0_3, %c0_4] : memref<1x32xf32, #tpu.memory_space<vmem>>, vector<1x32xf32>
    %4 = vector.broadcast %3 : vector<1x32xf32> to vector<8x32xf32>
    %5 = arith.addf %2, %4 : vector<8x32xf32>
    %cst_5 = arith.constant 0.000000e+00 : f32
    %6 = vector.broadcast %cst_5 : f32 to vector<8x32xf32>
    %7 = arith.maximumf %5, %6 : vector<8x32xf32>
    %c0_6 = arith.constant 0 : index
    %c0_7 = arith.constant 0 : index
    %8 = vector.load %arg3[%c0_6, %c0_7] : memref<8x32xf32, #tpu.memory_space<vmem>>, vector<8x32xf32>
    tpu.vector_store %arg3[%c0_6, %c0_7], %7 {strides = array<i32>} : memref<8x32xf32, #tpu.memory_space<vmem>>, vector<8x32xf32>,
    return
  }
}

module attributes {stable_mosaic.version = 11 : i64} {
  func.func @_matmul_bias_kernel(%arg0: memref<256x800xbf16, #tpu.memory_space<vmem>>, %arg1: memref<800x32xbf16, #tpu.memory_space<vmem>>, %arg2: memref<1x32xf32, #tpu.memory_space<vmem>>, %arg3: memref<256x32xf32, #tpu.memory_space<vmem>>) attributes {dimension_semantics = [], scalar_prefetch = 0 : i64, scratch_operands = 0 : i64, tpu.core_type = #tpu.core_type<tc>} {
    %c0 = arith.constant 0 : index
    %c0_0 = arith.constant 0 : index
    %0 = vector.load %arg0[%c0, %c0_0] : memref<256x800xbf16, #tpu.memory_space<vmem>>, vector<256x800xbf16>
    %c0_1 = arith.constant 0 : index
    %c0_2 = arith.constant 0 : index
    %1 = vector.load %arg1[%c0_1, %c0_2] : memref<800x32xbf16, #tpu.memory_space<vmem>>, vector<800x32xbf16>
    %cst = arith.constant dense<0.000000e+00> : vector<256x32xf32>
    %2 = tpu.matmul %0, %1, %cst {dimension_numbers = #tpu.dot_dimension_numbers<[1], [0], [0], [1], [0, 0, 1, 1], [], []>} : vector<256x800xbf16>, vector<800x32xbf16>, vector<256x32xf32> -> vector<256x32xf32>
    %c0_3 = arith.constant 0 : index
    %c0_4 = arith.constant 0 : index
    %3 = vector.load %arg2[%c0_3, %c0_4] : memref<1x32xf32, #tpu.memory_space<vmem>>, vector<1x32xf32>
    %4 = vector.broadcast %3 : vector<1x32xf32> to vector<256x32xf32>
    %5 = arith.addf %2, %4 : vector<256x32xf32>
    %cst_5 = arith.constant 0.000000e+00 : f32
    %6 = vector.broadcast %cst_5 : f32 to vector<256x32xf32>
    %7 = arith.maximumf %5, %6 : vector<256x32xf32>
    %c0_6 = arith.constant 0 : index
    %c0_7 = arith.constant 0 : index
    %8 = vector.load %arg3[%c0_6, %c0_7] : memref<256x32xf32, #tpu.memory_space<vmem>>, vector<256x32xf32>
    tpu.vector_store %arg3[%c0_6, %c0_7], %7 {strides = array<i32>} : memref<256x32xf32, #tpu.memory_space<vmem>>, vector<256x32xf32>,
    return
  }
}

module attributes {stable_mosaic.version = 11 : i64} {
  func.func @_matmul_bias_kernel(%arg0: memref<256x32xbf16, #tpu.memory_space<vmem>>, %arg1: memref<32x54xbf16, #tpu.memory_space<vmem>>, %arg2: memref<1x54xf32, #tpu.memory_space<vmem>>, %arg3: memref<256x54xf32, #tpu.memory_space<vmem>>) attributes {dimension_semantics = [], scalar_prefetch = 0 : i64, scratch_operands = 0 : i64, tpu.core_type = #tpu.core_type<tc>} {
    %c0 = arith.constant 0 : index
    %c0_0 = arith.constant 0 : index
    %0 = vector.load %arg0[%c0, %c0_0] : memref<256x32xbf16, #tpu.memory_space<vmem>>, vector<256x32xbf16>
    %c0_1 = arith.constant 0 : index
    %c0_2 = arith.constant 0 : index
    %1 = vector.load %arg1[%c0_1, %c0_2] : memref<32x54xbf16, #tpu.memory_space<vmem>>, vector<32x54xbf16>
    %cst = arith.constant dense<0.000000e+00> : vector<256x54xf32>
    %2 = tpu.matmul %0, %1, %cst {dimension_numbers = #tpu.dot_dimension_numbers<[1], [0], [0], [1], [0, 0, 1, 1], [], []>} : vector<256x32xbf16>, vector<32x54xbf16>, vector<256x54xf32> -> vector<256x54xf32>
    %c0_3 = arith.constant 0 : index
    %c0_4 = arith.constant 0 : index
    %3 = vector.load %arg2[%c0_3, %c0_4] : memref<1x54xf32, #tpu.memory_space<vmem>>, vector<1x54xf32>
    %4 = vector.broadcast %3 : vector<1x54xf32> to vector<256x54xf32>
    %5 = arith.addf %2, %4 : vector<256x54xf32>
    %c0_5 = arith.constant 0 : index
    %c0_6 = arith.constant 0 : index
    %6 = vector.load %arg3[%c0_5, %c0_6] : memref<256x54xf32, #tpu.memory_space<vmem>>, vector<256x54xf32>
    tpu.vector_store %arg3[%c0_5, %c0_6], %5 {strides = array<i32>} : memref<256x54xf32, #tpu.memory_space<vmem>>, vector<256x54xf32>,
    return
  }
}

module attributes {stable_mosaic.version = 11 : i64} {
  func.func @_div_diffs_kernel(%arg0: memref<20x20x32xf32, #tpu.memory_space<vmem>>, %arg1: memref<5x5x32xf32, #tpu.memory_space<vmem>>, %arg2: memref<16x16xf32, #tpu.memory_space<vmem>>) attributes {dimension_semantics = [], scalar_prefetch = 0 : i64, scratch_operands = 0 : i64, tpu.core_type = #tpu.core_type<tc>} {
    %c0 = arith.constant 0 : index
    %c0_0 = arith.constant 0 : index
    %c0_1 = arith.constant 0 : index
    %0 = vector.load %arg1[%c0, %c0_0, %c0_1] : memref<5x5x32xf32, #tpu.memory_space<vmem>>, vector<5x5x32xf32>
    %1 = vector.shape_cast %0 : vector<5x5x32xf32> to vector<1x5x5x32xf32>
    %cst = arith.constant dense<0.000000e+00> : vector<1xf32>
    %2 = vector.multi_reduction <add>, %1, %cst [1, 2, 3] : vector<1x5x5x32xf32> to vector<1xf32>
    %3 = vector.shape_cast %2 : vector<1xf32> to vector<1x1x1x1xf32>
    %4 = vector.extract %3[0, 0, 0, 0] : f32 from vector<1x1x1x1xf32>
    %cst_2 = arith.constant 0.000000e+00 : f32
    %5 = vector.broadcast %cst_2 : f32 to vector<16x16xf32>
    %c0_3 = arith.constant 0 : index
    %c0_4 = arith.constant 0 : index
    %c0_5 = arith.constant 0 : index
    %6 = vector.load %arg0[%c0_3, %c0_4, %c0_5] : memref<20x20x32xf32, #tpu.memory_space<vmem>>, vector<16x16x32xf32>
    %cst_6 = arith.constant dense<0.000000e+00> : vector<16x16xf32>
    %7 = vector.multi_reduction <add>, %6, %cst_6 [2] : vector<16x16x32xf32> to vector<16x16xf32>
    %8 = arith.addf %5, %7 : vector<16x16xf32>
    %c0_7 = arith.constant 0 : index
    %c1 = arith.constant 1 : index
    %c0_8 = arith.constant 0 : index
    %9 = vector.load %arg0[%c0_7, %c1, %c0_8] : memref<20x20x32xf32, #tpu.memory_space<vmem>>, vector<16x16x32xf32>
    %cst_9 = arith.constant dense<0.000000e+00> : vector<16x16xf32>
    %10 = vector.multi_reduction <add>, %9, %cst_9 [2] : vector<16x16x32xf32> to vector<16x16xf32>
    %11 = arith.addf %8, %10 : vector<16x16xf32>
    %c0_10 = arith.constant 0 : index
    %c2 = arith.constant 2 : index
    %c0_11 = arith.constant 0 : index
    %12 = vector.load %arg0[%c0_10, %c2, %c0_11] : memref<20x20x32xf32, #tpu.memory_space<vmem>>, vector<16x16x32xf32>
    %cst_12 = arith.constant dense<0.000000e+00> : vector<16x16xf32>
    %13 = vector.multi_reduction <add>, %12, %cst_12 [2] : vector<16x16x32xf32> to vector<16x16xf32>
    %14 = arith.addf %11, %13 : vector<16x16xf32>
    %c0_13 = arith.constant 0 : index
    %c3 = arith.constant 3 : index
    %c0_14 = arith.constant 0 : index
    %15 = vector.load %arg0[%c0_13, %c3, %c0_14] : memref<20x20x32xf32, #tpu.memory_space<vmem>>, vector<16x16x32xf32>
    %cst_15 = arith.constant dense<0.000000e+00> : vector<16x16xf32>
    %16 = vector.multi_reduction <add>, %15, %cst_15 [2] : vector<16x16x32xf32> to vector<16x16xf32>
    %17 = arith.addf %14, %16 : vector<16x16xf32>
    %c0_16 = arith.constant 0 : index
    %c4 = arith.constant 4 : index
    %c0_17 = arith.constant 0 : index
    %18 = vector.load %arg0[%c0_16, %c4, %c0_17] : memref<20x20x32xf32, #tpu.memory_space<vmem>>, vector<16x16x32xf32>
    %cst_18 = arith.constant dense<0.000000e+00> : vector<16x16xf32>
    %19 = vector.multi_reduction <add>, %18, %cst_18 [2] : vector<16x16x32xf32> to vector<16x16xf32>
    %20 = arith.addf %17, %19 : vector<16x16xf32>
    %c1_19 = arith.constant 1 : index
    %c0_20 = arith.constant 0 : index
    %c0_21 = arith.constant 0 : index
    %21 = vector.load %arg0[%c1_19, %c0_20, %c0_21] : memref<20x20x32xf32, #tpu.memory_space<vmem>>, vector<16x16x32xf32>
    %cst_22 = arith.constant dense<0.000000e+00> : vector<16x16xf32>
    %22 = vector.multi_reduction <add>, %21, %cst_22 [2] : vector<16x16x32xf32> to vector<16x16xf32>
    %23 = arith.addf %20, %22 : vector<16x16xf32>
    %c1_23 = arith.constant 1 : index
    %c1_24 = arith.constant 1 : index
    %c0_25 = arith.constant 0 : index
    %24 = vector.load %arg0[%c1_23, %c1_24, %c0_25] : memref<20x20x32xf32, #tpu.memory_space<vmem>>, vector<16x16x32xf32>
    %cst_26 = arith.constant dense<0.000000e+00> : vector<16x16xf32>
    %25 = vector.multi_reduction <add>, %24, %cst_26 [2] : vector<16x16x32xf32> to vector<16x16xf32>
    %26 = arith.addf %23, %25 : vector<16x16xf32>
    %c1_27 = arith.constant 1 : index
    %c2_28 = arith.constant 2 : index
    %c0_29 = arith.constant 0 : index
    %27 = vector.load %arg0[%c1_27, %c2_28, %c0_29] : memref<20x20x32xf32, #tpu.memory_space<vmem>>, vector<16x16x32xf32>
    %cst_30 = arith.constant dense<0.000000e+00> : vector<16x16xf32>
    %28 = vector.multi_reduction <add>, %27, %cst_30 [2] : vector<16x16x32xf32> to vector<16x16xf32>
    %29 = arith.addf %26, %28 : vector<16x16xf32>
    %c1_31 = arith.constant 1 : index
    %c3_32 = arith.constant 3 : index
    %c0_33 = arith.constant 0 : index
    %30 = vector.load %arg0[%c1_31, %c3_32, %c0_33] : memref<20x20x32xf32, #tpu.memory_space<vmem>>, vector<16x16x32xf32>
    %cst_34 = arith.constant dense<0.000000e+00> : vector<16x16xf32>
    %31 = vector.multi_reduction <add>, %30, %cst_34 [2] : vector<16x16x32xf32> to vector<16x16xf32>
    %32 = arith.addf %29, %31 : vector<16x16xf32>
    %c1_35 = arith.constant 1 : index
    %c4_36 = arith.constant 4 : index
    %c0_37 = arith.constant 0 : index
    %33 = vector.load %arg0[%c1_35, %c4_36, %c0_37] : memref<20x20x32xf32, #tpu.memory_space<vmem>>, vector<16x16x32xf32>
    %cst_38 = arith.constant dense<0.000000e+00> : vector<16x16xf32>
    %34 = vector.multi_reduction <add>, %33, %cst_38 [2] : vector<16x16x32xf32> to vector<16x16xf32>
    %35 = arith.addf %32, %34 : vector<16x16xf32>
    %c2_39 = arith.constant 2 : index
    %c0_40 = arith.constant 0 : index
    %c0_41 = arith.constant 0 : index
    %36 = vector.load %arg0[%c2_39, %c0_40, %c0_41] : memref<20x20x32xf32, #tpu.memory_space<vmem>>, vector<16x16x32xf32>
    %cst_42 = arith.constant dense<0.000000e+00> : vector<16x16xf32>
    %37 = vector.multi_reduction <add>, %36, %cst_42 [2] : vector<16x16x32xf32> to vector<16x16xf32>
    %38 = arith.addf %35, %37 : vector<16x16xf32>
    %c2_43 = arith.constant 2 : index
    %c1_44 = arith.constant 1 : index
    %c0_45 = arith.constant 0 : index
    %39 = vector.load %arg0[%c2_43, %c1_44, %c0_45] : memref<20x20x32xf32, #tpu.memory_space<vmem>>, vector<16x16x32xf32>
    %cst_46 = arith.constant dense<0.000000e+00> : vector<16x16xf32>
    %40 = vector.multi_reduction <add>, %39, %cst_46 [2] : vector<16x16x32xf32> to vector<16x16xf32>
    %41 = arith.addf %38, %40 : vector<16x16xf32>
    %c2_47 = arith.constant 2 : index
    %c2_48 = arith.constant 2 : index
    %c0_49 = arith.constant 0 : index
    %42 = vector.load %arg0[%c2_47, %c2_48, %c0_49] : memref<20x20x32xf32, #tpu.memory_space<vmem>>, vector<16x16x32xf32>
    %cst_50 = arith.constant dense<0.000000e+00> : vector<16x16xf32>
    %43 = vector.multi_reduction <add>, %42, %cst_50 [2] : vector<16x16x32xf32> to vector<16x16xf32>
    %44 = arith.addf %41, %43 : vector<16x16xf32>
    %c2_51 = arith.constant 2 : index
    %c3_52 = arith.constant 3 : index
    %c0_53 = arith.constant 0 : index
    %45 = vector.load %arg0[%c2_51, %c3_52, %c0_53] : memref<20x20x32xf32, #tpu.memory_space<vmem>>, vector<16x16x32xf32>
    %cst_54 = arith.constant dense<0.000000e+00> : vector<16x16xf32>
    %46 = vector.multi_reduction <add>, %45, %cst_54 [2] : vector<16x16x32xf32> to vector<16x16xf32>
    %47 = arith.addf %44, %46 : vector<16x16xf32>
    %c2_55 = arith.constant 2 : index
    %c4_56 = arith.constant 4 : index
    %c0_57 = arith.constant 0 : index
    %48 = vector.load %arg0[%c2_55, %c4_56, %c0_57] : memref<20x20x32xf32, #tpu.memory_space<vmem>>, vector<16x16x32xf32>
    %cst_58 = arith.constant dense<0.000000e+00> : vector<16x16xf32>
    %49 = vector.multi_reduction <add>, %48, %cst_58 [2] : vector<16x16x32xf32> to vector<16x16xf32>
    %50 = arith.addf %47, %49 : vector<16x16xf32>
    %c3_59 = arith.constant 3 : index
    %c0_60 = arith.constant 0 : index
    %c0_61 = arith.constant 0 : index
    %51 = vector.load %arg0[%c3_59, %c0_60, %c0_61] : memref<20x20x32xf32, #tpu.memory_space<vmem>>, vector<16x16x32xf32>
    %cst_62 = arith.constant dense<0.000000e+00> : vector<16x16xf32>
    %52 = vector.multi_reduction <add>, %51, %cst_62 [2] : vector<16x16x32xf32> to vector<16x16xf32>
    %53 = arith.addf %50, %52 : vector<16x16xf32>
    %c3_63 = arith.constant 3 : index
    %c1_64 = arith.constant 1 : index
    %c0_65 = arith.constant 0 : index
    %54 = vector.load %arg0[%c3_63, %c1_64, %c0_65] : memref<20x20x32xf32, #tpu.memory_space<vmem>>, vector<16x16x32xf32>
    %cst_66 = arith.constant dense<0.000000e+00> : vector<16x16xf32>
    %55 = vector.multi_reduction <add>, %54, %cst_66 [2] : vector<16x16x32xf32> to vector<16x16xf32>
    %56 = arith.addf %53, %55 : vector<16x16xf32>
    %c3_67 = arith.constant 3 : index
    %c2_68 = arith.constant 2 : index
    %c0_69 = arith.constant 0 : index
    %57 = vector.load %arg0[%c3_67, %c2_68, %c0_69] : memref<20x20x32xf32, #tpu.memory_space<vmem>>, vector<16x16x32xf32>
    %cst_70 = arith.constant dense<0.000000e+00> : vector<16x16xf32>
    %58 = vector.multi_reduction <add>, %57, %cst_70 [2] : vector<16x16x32xf32> to vector<16x16xf32>
    %59 = arith.addf %56, %58 : vector<16x16xf32>
    %c3_71 = arith.constant 3 : index
    %c3_72 = arith.constant 3 : index
    %c0_73 = arith.constant 0 : index
    %60 = vector.load %arg0[%c3_71, %c3_72, %c0_73] : memref<20x20x32xf32, #tpu.memory_space<vmem>>, vector<16x16x32xf32>
    %cst_74 = arith.constant dense<0.000000e+00> : vector<16x16xf32>
    %61 = vector.multi_reduction <add>, %60, %cst_74 [2] : vector<16x16x32xf32> to vector<16x16xf32>
    %62 = arith.addf %59, %61 : vector<16x16xf32>
    %c3_75 = arith.constant 3 : index
    %c4_76 = arith.constant 4 : index
    %c0_77 = arith.constant 0 : index
    %63 = vector.load %arg0[%c3_75, %c4_76, %c0_77] : memref<20x20x32xf32, #tpu.memory_space<vmem>>, vector<16x16x32xf32>
    %cst_78 = arith.constant dense<0.000000e+00> : vector<16x16xf32>
    %64 = vector.multi_reduction <add>, %63, %cst_78 [2] : vector<16x16x32xf32> to vector<16x16xf32>
    %65 = arith.addf %62, %64 : vector<16x16xf32>
    %c4_79 = arith.constant 4 : index
    %c0_80 = arith.constant 0 : index
    %c0_81 = arith.constant 0 : index
    %66 = vector.load %arg0[%c4_79, %c0_80, %c0_81] : memref<20x20x32xf32, #tpu.memory_space<vmem>>, vector<16x16x32xf32>
    %cst_82 = arith.constant dense<0.000000e+00> : vector<16x16xf32>
    %67 = vector.multi_reduction <add>, %66, %cst_82 [2] : vector<16x16x32xf32> to vector<16x16xf32>
    %68 = arith.addf %65, %67 : vector<16x16xf32>
    %c4_83 = arith.constant 4 : index
    %c1_84 = arith.constant 1 : index
    %c0_85 = arith.constant 0 : index
    %69 = vector.load %arg0[%c4_83, %c1_84, %c0_85] : memref<20x20x32xf32, #tpu.memory_space<vmem>>, vector<16x16x32xf32>
    %cst_86 = arith.constant dense<0.000000e+00> : vector<16x16xf32>
    %70 = vector.multi_reduction <add>, %69, %cst_86 [2] : vector<16x16x32xf32> to vector<16x16xf32>
    %71 = arith.addf %68, %70 : vector<16x16xf32>
    %c4_87 = arith.constant 4 : index
    %c2_88 = arith.constant 2 : index
    %c0_89 = arith.constant 0 : index
    %72 = vector.load %arg0[%c4_87, %c2_88, %c0_89] : memref<20x20x32xf32, #tpu.memory_space<vmem>>, vector<16x16x32xf32>
    %cst_90 = arith.constant dense<0.000000e+00> : vector<16x16xf32>
    %73 = vector.multi_reduction <add>, %72, %cst_90 [2] : vector<16x16x32xf32> to vector<16x16xf32>
    %74 = arith.addf %71, %73 : vector<16x16xf32>
    %c4_91 = arith.constant 4 : index
    %c3_92 = arith.constant 3 : index
    %c0_93 = arith.constant 0 : index
    %75 = vector.load %arg0[%c4_91, %c3_92, %c0_93] : memref<20x20x32xf32, #tpu.memory_space<vmem>>, vector<16x16x32xf32>
    %cst_94 = arith.constant dense<0.000000e+00> : vector<16x16xf32>
    %76 = vector.multi_reduction <add>, %75, %cst_94 [2] : vector<16x16x32xf32> to vector<16x16xf32>
    %77 = arith.addf %74, %76 : vector<16x16xf32>
    %c4_95 = arith.constant 4 : index
    %c4_96 = arith.constant 4 : index
    %c0_97 = arith.constant 0 : index
    %78 = vector.load %arg0[%c4_95, %c4_96, %c0_97] : memref<20x20x32xf32, #tpu.memory_space<vmem>>, vector<16x16x32xf32>
    %cst_98 = arith.constant dense<0.000000e+00> : vector<16x16xf32>
    %79 = vector.multi_reduction <add>, %78, %cst_98 [2] : vector<16x16x32xf32> to vector<16x16xf32>
    %80 = arith.addf %77, %79 : vector<16x16xf32>
    %81 = vector.broadcast %4 : f32 to vector<16x16xf32>
    %82 = arith.subf %80, %81 : vector<16x16xf32>
    %83 = math.absf %82 : vector<16x16xf32>
    %cst_99 = arith.constant 6.250000e-03 : f32
    %84 = vector.broadcast %cst_99 : f32 to vector<16x16xf32>
    %85 = arith.mulf %83, %84 : vector<16x16xf32>
    %c0_100 = arith.constant 0 : index
    %c0_101 = arith.constant 0 : index
    %86 = vector.load %arg2[%c0_100, %c0_101] : memref<16x16xf32, #tpu.memory_space<vmem>>, vector<16x16xf32>
    tpu.vector_store %arg2[%c0_100, %c0_101], %85 {strides = array<i32>} : memref<16x16xf32, #tpu.memory_space<vmem>>, vector<16x16xf32>,
    return
  }
}

</mosaic_0001>

<llo_original>
// kernel: rpn_forward.8
$region0: #{rpn_forward.8}
  #allocation0 [shape = 'u32[]', space=smem, size = 0x4, offset = 0x4, fixed_abs, tag = 'smem constant byte address 0x4 - core index']
  #allocation1 [shape = 'u32[144,128]{1,0:T(1,128)}', space=vmem, size = 0x12000, scoped, tag = 'internal scratch']
  %s0 = inlined_call_operand.vmem [shape: bf16[32,32], index: 0, kind: input, shape index: {}]
  %s1 = inlined_call_operand.vmem [shape: bf16[32,32], index: 1, kind: input, shape index: {}]
  %s2 = inlined_call_operand.vmem [shape: f32[1,32], index: 2, kind: input, shape index: {}]
  %s3 = inlined_call_operand.vmem [shape: f32[32,32], index: 3, kind: output, shape index: {}]
  %s4 = sld [smem:[#allocation0]]
  $region22: #{rpn_forward.8} parent=0
    _
  %s6 = ssub.s32 1, %s4
  %s7 = scalar_select 0, %s6, %s4
  // Predicated region
  $region2: #{rpn_forward.8} parent=0 // pred_check
    _
  $region3: #{rpn_forward.8} parent=0 // pred_check_branch
    %9 = sbr.rel (0) target = $region5
  $region4: #{rpn_forward.8} parent=0 // pred_region
    _
  $region5: #{rpn_forward.8} parent=0 // pred_fallthru
    _
  // Predicated region
  $region6: #{rpn_forward.8} parent=0 // pred_check
    _
  $region7: #{rpn_forward.8} parent=0 // pred_check_branch
    %11 = sbr.rel (0) target = $region9
  $region8: #{rpn_forward.8} parent=0 // pred_region
    _
  $region9: #{rpn_forward.8} parent=0 // pred_fallthru
    _
  // Predicated region
  $region10: #{rpn_forward.8} parent=0 // pred_check
    _
  $region11: #{rpn_forward.8} parent=0 // pred_check_branch
    %13 = sbr.rel (0) target = $region13
  $region12: #{rpn_forward.8} parent=0 // pred_region
    _
  $region13: #{rpn_forward.8} parent=0 // pred_fallthru
    _
  %v15 = vld [vmem:[%s0] sm:$0xf]
  %v16 = vld [vmem:[%s0 + $0x4] sm:$0xf]
  %v17 = vld [vmem:[%s0 + $0x8] sm:$0xf]
  %v18 = vld [vmem:[%s0 + $0xc] sm:$0xf]
  %v19 = vld [vmem:[%s1] sm:$0xf]
  %v20 = vld [vmem:[%s1 + $0x4] sm:$0xf]
  %v21 = vld [vmem:[%s1 + $0x8] sm:$0xf]
  %v22 = vld [vmem:[%s1 + $0xc] sm:$0xf]
  %v23 = vld [vmem:[%s2] sm:$0x1]
  %v25 = vlaneseq
  %v26 = vshrl.u32 %v25, 7
  %v27 = vsub.s32 0, %v26
  %v28 = vrot.slane %v23, %v27
  %v34 = vunpack.c.l.b16 %v15
  %v35 = vunpack.c.l.b16 %v16
  %v36 = vunpack.c.l.b16 %v17
  %v37 = vunpack.c.l.b16 %v18
  %v38 = vpack.c.b16 %v35, %v34
  %v39 = vpack.c.b16 %v37, %v36
  %v44 = vunpack.c.l.b16 %v19
  %v45 = vunpack.c.l.b16 %v20
  %v46 = vunpack.c.l.b16 %v21
  %v47 = vunpack.c.l.b16 %v22
  %v48 = vpack.c.b16 %v45, %v44
  %v49 = vpack.c.b16 %v47, %v46
  %vm52 = vcmask 261120
  %v54 = vsel %vm52, %v38, 0
  %v57 = vsel %vm52, %v39, 0
  %59 = vmatprep.subr.bf16.mxu0 0
  %60 = vmatpush1.bf16.msra.mxu0 %v48
  %61 = vmatprep.subr.bf16.mxu0 0
  %62 = vmatpush1.bf16.msra.mxu0 %v49
  %63 = vmatprep.subr.bf16.mxu0 0
  %64 = vmatpush1.bf16.msra.mxu0 0
  %65 = vmatprep.subr.bf16.mxu0 0
  %66 = vmatpush1.bf16.msra.mxu0 0
  %67 = vmatprep.subr.bf16.mxu0 0
  %68 = vmatpush1.bf16.msra.mxu0 0
  %69 = vmatprep.subr.bf16.mxu0 0
  %70 = vmatpush1.bf16.msra.mxu0 0
  %71 = vmatprep.subr.bf16.mxu0 0
  %72 = vmatpush1.bf16.msra.mxu0 0
  %73 = vmatprep.subr.bf16.mxu0 0
  %74 = vmatpush1.bf16.msra.mxu0 0
  %75 = vmatprep.subr.bf16.mxu0 0
  %76 = vmatpush1.bf16.msra.mxu0 0
  %77 = vmatprep.subr.bf16.mxu0 0
  %78 = vmatpush1.bf16.msra.mxu0 0
  %79 = vmatprep.subr.bf16.mxu0 0
  %80 = vmatpush1.bf16.msra.mxu0 0
  %81 = vmatprep.subr.bf16.mxu0 0
  %82 = vmatpush1.bf16.msra.mxu0 0
  %83 = vmatprep.subr.bf16.mxu0 0
  %84 = vmatpush1.bf16.msra.mxu0 0
  %85 = vmatprep.subr.bf16.mxu0 0
  %86 = vmatpush1.bf16.msra.mxu0 0
  %87 = vmatprep.subr.bf16.mxu0 0
  %88 = vmatpush1.bf16.msra.mxu0 0
  %89 = vmatprep.subr.bf16.mxu0 0
  %90 = vmatpush1.bf16.msra.mxu0 0
  %91 = vmatprep.mubr.bf16.mxu0 0
  %92 = vmatmul.mubr.bf16.gmra.mrb[0].mxu0 %v54
  %v93 = vpop.f32.mrb[0].mxu0
  %v94 = vadd.f32 %v28, %v93
  %v95 = vpop.f32.mrb[0].mxu0
  %v96 = vpop.f32.mrb[0].mxu0
  %v97 = vadd.f32 %v28, %v96
  %v98 = vpop.f32.mrb[0].mxu0
  %99 = vmatprep.mubr.bf16.mxu0 0
  %100 = vmatmul.mubr.bf16.gmra.mrb[0].mxu0 %v57
  %v101 = vpop.f32.mrb[0].mxu0
  %v102 = vadd.f32 %v28, %v101
  %v103 = vpop.f32.mrb[0].mxu0
  %v104 = vpop.f32.mrb[0].mxu0
  %v105 = vadd.f32 %v28, %v104
  %v106 = vpop.f32.mrb[0].mxu0
  %107 = vdwg.mxu0
  %v108 = vmax.f32 %v94, 0.0
  %v109 = vmax.f32 %v97, 0.0
  %v110 = vmax.f32 %v102, 0.0
  %v111 = vmax.f32 %v105, 0.0
  %112 = vst.msk [vmem:[%s3] sm:$0xff] %vm52, %v108
  %113 = vst.msk [vmem:[%s3 + $0x8] sm:$0xff] %vm52, %v109
  %114 = vst.msk [vmem:[%s3 + $0x10] sm:$0xff] %vm52, %v110
  %115 = vst.msk [vmem:[%s3 + $0x18] sm:$0xff] %vm52, %v111
  // Predicated region
  $region14: #{rpn_forward.8} parent=0 // pred_check
    _
  $region15: #{rpn_forward.8} parent=0 // pred_check_branch
    %117 = sbr.rel (0) target = $region17
  $region16: #{rpn_forward.8} parent=0 // pred_region
    _
  $region17: #{rpn_forward.8} parent=0 // pred_fallthru
    _
  // Predicated region
  $region18: #{rpn_forward.8} parent=0 // pred_check
    _
  $region19: #{rpn_forward.8} parent=0 // pred_check_branch
    %119 = sbr.rel (0) target = $region21
  $region20: #{rpn_forward.8} parent=0 // pred_region
    _
  $region21: #{rpn_forward.8} parent=0 // pred_fallthru
    _

// kernel: rpn_forward.7
$region0: #{rpn_forward.7}
  #allocation0 [shape = 'u32[]', space=smem, size = 0x4, offset = 0x4, fixed_abs, tag = 'smem constant byte address 0x4 - core index']
  #allocation1 [shape = 'u32[144,128]{1,0:T(1,128)}', space=vmem, size = 0x12000, scoped, tag = 'internal scratch']
  %s0 = inlined_call_operand.vmem [shape: bf16[256,32], index: 0, kind: input, shape index: {}]
  %s1 = inlined_call_operand.vmem [shape: bf16[32,32], index: 1, kind: input, shape index: {}]
  %s2 = inlined_call_operand.vmem [shape: f32[1,32], index: 2, kind: input, shape index: {}]
  %s3 = inlined_call_operand.vmem [shape: f32[256,32], index: 3, kind: output, shape index: {}]
  %s4 = sld [smem:[#allocation0]]
  $region22: #{rpn_forward.7} parent=0
    _
  %s6 = ssub.s32 1, %s4
  %s7 = scalar_select 0, %s6, %s4
  // Predicated region
  $region2: #{rpn_forward.7} parent=0 // pred_check
    _
  $region3: #{rpn_forward.7} parent=0 // pred_check_branch
    %9 = sbr.rel (0) target = $region5
  $region4: #{rpn_forward.7} parent=0 // pred_region
    _
  $region5: #{rpn_forward.7} parent=0 // pred_fallthru
    _
  // Predicated region
  $region6: #{rpn_forward.7} parent=0 // pred_check
    _
  $region7: #{rpn_forward.7} parent=0 // pred_check_branch
    %11 = sbr.rel (0) target = $region9
  $region8: #{rpn_forward.7} parent=0 // pred_region
    _
  $region9: #{rpn_forward.7} parent=0 // pred_fallthru
    _
  // Predicated region
  $region10: #{rpn_forward.7} parent=0 // pred_check
    _
  $region11: #{rpn_forward.7} parent=0 // pred_check_branch
    %13 = sbr.rel (0) target = $region13
  $region12: #{rpn_forward.7} parent=0 // pred_region
    _
  $region13: #{rpn_forward.7} parent=0 // pred_fallthru
    _
  %v15 = vld [vmem:[%s0] sm:$0xf]
  %v16 = vld [vmem:[%s0 + $0x4] sm:$0xf]
  %v17 = vld [vmem:[%s0 + $0x8] sm:$0xf]
  %v18 = vld [vmem:[%s0 + $0xc] sm:$0xf]
  %v19 = vld [vmem:[%s0 + $0x10] sm:$0xf]
  %v20 = vld [vmem:[%s0 + $0x14] sm:$0xf]
  %v21 = vld [vmem:[%s0 + $0x18] sm:$0xf]
  %v22 = vld [vmem:[%s0 + $0x1c] sm:$0xf]
  %v23 = vld [vmem:[%s0 + $0x20] sm:$0xf]
  %v24 = vld [vmem:[%s0 + $0x24] sm:$0xf]
  %v25 = vld [vmem:[%s0 + $0x28] sm:$0xf]
  %v26 = vld [vmem:[%s0 + $0x2c] sm:$0xf]
  %v27 = vld [vmem:[%s0 + $0x30] sm:$0xf]
  %v28 = vld [vmem:[%s0 + $0x34] sm:$0xf]
  %v29 = vld [vmem:[%s0 + $0x38] sm:$0xf]
  %v30 = vld [vmem:[%s0 + $0x3c] sm:$0xf]
  %v31 = vld [vmem:[%s0 + $0x40] sm:$0xf]
  %v32 = vld [vmem:[%s0 + $0x44] sm:$0xf]
  %v33 = vld [vmem:[%s0 + $0x48] sm:$0xf]
  %v34 = vld [vmem:[%s0 + $0x4c] sm:$0xf]
  %v35 = vld [vmem:[%s0 + $0x50] sm:$0xf]
  %v36 = vld [vmem:[%s0 + $0x54] sm:$0xf]
  %v37 = vld [vmem:[%s0 + $0x58] sm:$0xf]
  %v38 = vld [vmem:[%s0 + $0x5c] sm:$0xf]
  %v39 = vld [vmem:[%s0 + $0x60] sm:$0xf]
  %v40 = vld [vmem:[%s0 + $0x64] sm:$0xf]
  %v41 = vld [vmem:[%s0 + $0x68] sm:$0xf]
  %v42 = vld [vmem:[%s0 + $0x6c] sm:$0xf]
  %v43 = vld [vmem:[%s0 + $0x70] sm:$0xf]
  %v44 = vld [vmem:[%s0 + $0x74] sm:$0xf]
  %v45 = vld [vmem:[%s0 + $0x78] sm:$0xf]
  %v46 = vld [vmem:[%s0 + $0x7c] sm:$0xf]
  %v47 = vld [vmem:[%s1] sm:$0xf]
  %v48 = vld [vmem:[%s1 + $0x4] sm:$0xf]
  %v49 = vld [vmem:[%s1 + $0x8] sm:$0xf]
  %v50 = vld [vmem:[%s1 + $0xc] sm:$0xf]
  %v51 = vld [vmem:[%s2] sm:$0x1]
  %v53 = vlaneseq
  %v54 = vshrl.u32 %v53, 7
  %v55 = vsub.s32 0, %v54
  %v56 = vrot.slane %v51, %v55
  %v90 = vunpack.c.l.b16 %v15
  %v91 = vunpack.c.l.b16 %v16
  %v92 = vunpack.c.l.b16 %v17
  %v93 = vunpack.c.l.b16 %v18
  %v94 = vunpack.c.l.b16 %v19
  %v95 = vunpack.c.l.b16 %v20
  %v96 = vunpack.c.l.b16 %v21
  %v97 = vunpack.c.l.b16 %v22
  %v98 = vunpack.c.l.b16 %v23
  %v99 = vunpack.c.l.b16 %v24
  %v100 = vunpack.c.l.b16 %v25
  %v101 = vunpack.c.l.b16 %v26
  %v102 = vunpack.c.l.b16 %v27
  %v103 = vunpack.c.l.b16 %v28
  %v104 = vunpack.c.l.b16 %v29
  %v105 = vunpack.c.l.b16 %v30
  %v106 = vunpack.c.l.b16 %v31
  %v107 = vunpack.c.l.b16 %v32
  %v108 = vunpack.c.l.b16 %v33
  %v109 = vunpack.c.l.b16 %v34
  %v110 = vunpack.c.l.b16 %v35
  %v111 = vunpack.c.l.b16 %v36
  %v112 = vunpack.c.l.b16 %v37
  %v113 = vunpack.c.l.b16 %v38
  %v114 = vunpack.c.l.b16 %v39
  %v115 = vunpack.c.l.b16 %v40
  %v116 = vunpack.c.l.b16 %v41
  %v117 = vunpack.c.l.b16 %v42
  %v118 = vunpack.c.l.b16 %v43
  %v119 = vunpack.c.l.b16 %v44
  %v120 = vunpack.c.l.b16 %v45
  %v121 = vunpack.c.l.b16 %v46
  %v122 = vpack.c.b16 %v91, %v90
  %v123 = vpack.c.b16 %v93, %v92
  %v124 = vpack.c.b16 %v95, %v94
  %v125 = vpack.c.b16 %v97, %v96
  %v126 = vpack.c.b16 %v99, %v98
  %v127 = vpack.c.b16 %v101, %v100
  %v128 = vpack.c.b16 %v103, %v102
  %v129 = vpack.c.b16 %v105, %v104
  %v130 = vpack.c.b16 %v107, %v106
  %v131 = vpack.c.b16 %v109, %v108
  %v132 = vpack.c.b16 %v111, %v110
  %v133 = vpack.c.b16 %v113, %v112
  %v134 = vpack.c.b16 %v115, %v114
  %v135 = vpack.c.b16 %v117, %v116
  %v136 = vpack.c.b16 %v119, %v118
  %v137 = vpack.c.b16 %v121, %v120
  %v142 = vunpack.c.l.b16 %v47
  %v143 = vunpack.c.l.b16 %v48
  %v144 = vunpack.c.l.b16 %v49
  %v145 = vunpack.c.l.b16 %v50
  %v146 = vpack.c.b16 %v143, %v142
  %v147 = vpack.c.b16 %v145, %v144
  %vm150 = vcmask 261120
  %v152 = vsel %vm150, %v122, 0
  %v155 = vsel %vm150, %v123, 0
  %v158 = vsel %vm150, %v124, 0
  %v161 = vsel %vm150, %v125, 0
  %v164 = vsel %vm150, %v126, 0
  %v167 = vsel %vm150, %v127, 0
  %v170 = vsel %vm150, %v128, 0
  %v173 = vsel %vm150, %v129, 0
  %v176 = vsel %vm150, %v130, 0
  %v179 = vsel %vm150, %v131, 0
  %v182 = vsel %vm150, %v132, 0
  %v185 = vsel %vm150, %v133, 0
  %v188 = vsel %vm150, %v134, 0
  %v191 = vsel %vm150, %v135, 0
  %v194 = vsel %vm150, %v136, 0
  %v197 = vsel %vm150, %v137, 0
  %199 = vmatprep.subr.bf16.mxu0 0
  %200 = vmatpush1.bf16.msra.mxu0 %v146
  %201 = vmatprep.subr.bf16.mxu0 0
  %202 = vmatpush1.bf16.msra.mxu0 %v147
  %203 = vmatprep.subr.bf16.mxu0 0
  %204 = vmatpush1.bf16.msra.mxu0 0
  %205 = vmatprep.subr.bf16.mxu0 0
  %206 = vmatpush1.bf16.msra.mxu0 0
  %207 = vmatprep.subr.bf16.mxu0 0
  %208 = vmatpush1.bf16.msra.mxu0 0
  %209 = vmatprep.subr.bf16.mxu0 0
  %210 = vmatpush1.bf16.msra.mxu0 0
  %211 = vmatprep.subr.bf16.mxu0 0
  %212 = vmatpush1.bf16.msra.mxu0 0
  %213 = vmatprep.subr.bf16.mxu0 0
  %214 = vmatpush1.bf16.msra.mxu0 0
  %215 = vmatprep.subr.bf16.mxu0 0
  %216 = vmatpush1.bf16.msra.mxu0 0
  %217 = vmatprep.subr.bf16.mxu0 0
  %218 = vmatpush1.bf16.msra.mxu0 0
  %219 = vmatprep.subr.bf16.mxu0 0
  %220 = vmatpush1.bf16.msra.mxu0 0
  %221 = vmatprep.subr.bf16.mxu0 0
  %222 = vmatpush1.bf16.msra.mxu0 0
  %223 = vmatprep.subr.bf16.mxu0 0
  %224 = vmatpush1.bf16.msra.mxu0 0
  %225 = vmatprep.subr.bf16.mxu0 0
  %226 = vmatpush1.bf16.msra.mxu0 0
  %227 = vmatprep.subr.bf16.mxu0 0
  %228 = vmatpush1.bf16.msra.mxu0 0
  %229 = vmatprep.subr.bf16.mxu0 0
  %230 = vmatpush1.bf16.msra.mxu0 0
  %231 = vmatprep.mubr.bf16.mxu0 0
  %232 = vmatmul.mubr.bf16.gmra.mrb[0].mxu0 %v152
  %v233 = vpop.f32.mrb[0].mxu0
  %v234 = vadd.f32 %v56, %v233
  %v235 = vpop.f32.mrb[0].mxu0
  %v236 = vpop.f32.mrb[0].mxu0
  %v237 = vadd.f32 %v56, %v236
  %v238 = vpop.f32.mrb[0].mxu0
  %239 = vmatprep.mubr.bf16.mxu0 0
  %240 = vmatmul.mubr.bf16.gmra.mrb[0].mxu0 %v155
  %v241 = vpop.f32.mrb[0].mxu0
  %v242 = vadd.f32 %v56, %v241
  %v243 = vpop.f32.mrb[0].mxu0
  %v244 = vpop.f32.mrb[0].mxu0
  %v245 = vadd.f32 %v56, %v244
  %v246 = vpop.f32.mrb[0].mxu0
  %247 = vmatprep.mubr.bf16.mxu0 0
  %248 = vmatmul.mubr.bf16.gmra.mrb[0].mxu0 %v158
  %v249 = vpop.f32.mrb[0].mxu0
  %v250 = vadd.f32 %v56, %v249
  %v251 = vpop.f32.mrb[0].mxu0
  %v252 = vpop.f32.mrb[0].mxu0
  %v253 = vadd.f32 %v56, %v252
  %v254 = vpop.f32.mrb[0].mxu0
  %255 = vmatprep.mubr.bf16.mxu0 0
  %256 = vmatmul.mubr.bf16.gmra.mrb[0].mxu0 %v161
  %v257 = vpop.f32.mrb[0].mxu0
  %v258 = vadd.f32 %v56, %v257
  %v259 = vpop.f32.mrb[0].mxu0
  %v260 = vpop.f32.mrb[0].mxu0
  %v261 = vadd.f32 %v56, %v260
  %v262 = vpop.f32.mrb[0].mxu0
  %263 = vmatprep.mubr.bf16.mxu0 0
  %264 = vmatmul.mubr.bf16.gmra.mrb[0].mxu0 %v164
  %v265 = vpop.f32.mrb[0].mxu0
  %v266 = vadd.f32 %v56, %v265
  %v267 = vpop.f32.mrb[0].mxu0
  %v268 = vpop.f32.mrb[0].mxu0
  %v269 = vadd.f32 %v56, %v268
  %v270 = vpop.f32.mrb[0].mxu0
  %271 = vmatprep.mubr.bf16.mxu0 0
  %272 = vmatmul.mubr.bf16.gmra.mrb[0].mxu0 %v167
  %v273 = vpop.f32.mrb[0].mxu0
  %v274 = vadd.f32 %v56, %v273
  %v275 = vpop.f32.mrb[0].mxu0
  %v276 = vpop.f32.mrb[0].mxu0
  %v277 = vadd.f32 %v56, %v276
  %v278 = vpop.f32.mrb[0].mxu0
  %279 = vmatprep.mubr.bf16.mxu0 0
  %280 = vmatmul.mubr.bf16.gmra.mrb[0].mxu0 %v170
  %v281 = vpop.f32.mrb[0].mxu0
  %v282 = vadd.f32 %v56, %v281
  %v283 = vpop.f32.mrb[0].mxu0
  %v284 = vpop.f32.mrb[0].mxu0
  %v285 = vadd.f32 %v56, %v284
  %v286 = vpop.f32.mrb[0].mxu0
  %287 = vmatprep.mubr.bf16.mxu0 0
  %288 = vmatmul.mubr.bf16.gmra.mrb[0].mxu0 %v173
  %v289 = vpop.f32.mrb[0].mxu0
  %v290 = vadd.f32 %v56, %v289
  %v291 = vpop.f32.mrb[0].mxu0
  %v292 = vpop.f32.mrb[0].mxu0
  %v293 = vadd.f32 %v56, %v292
  %v294 = vpop.f32.mrb[0].mxu0
  %295 = vmatprep.mubr.bf16.mxu0 0
  %296 = vmatmul.mubr.bf16.gmra.mrb[0].mxu0 %v176
  %v297 = vpop.f32.mrb[0].mxu0
  %v298 = vadd.f32 %v56, %v297
  %v299 = vpop.f32.mrb[0].mxu0
  %v300 = vpop.f32.mrb[0].mxu0
  %v301 = vadd.f32 %v56, %v300
  %v302 = vpop.f32.mrb[0].mxu0
  %303 = vmatprep.mubr.bf16.mxu0 0
  %304 = vmatmul.mubr.bf16.gmra.mrb[0].mxu0 %v179
  %v305 = vpop.f32.mrb[0].mxu0
  %v306 = vadd.f32 %v56, %v305
  %v307 = vpop.f32.mrb[0].mxu0
  %v308 = vpop.f32.mrb[0].mxu0
  %v309 = vadd.f32 %v56, %v308
  %v310 = vpop.f32.mrb[0].mxu0
  %311 = vmatprep.mubr.bf16.mxu0 0
  %312 = vmatmul.mubr.bf16.gmra.mrb[0].mxu0 %v182
  %v313 = vpop.f32.mrb[0].mxu0
  %v314 = vadd.f32 %v56, %v313
  %v315 = vpop.f32.mrb[0].mxu0
  %v316 = vpop.f32.mrb[0].mxu0
  %v317 = vadd.f32 %v56, %v316
  %v318 = vpop.f32.mrb[0].mxu0
  %319 = vmatprep.mubr.bf16.mxu0 0
  %320 = vmatmul.mubr.bf16.gmra.mrb[0].mxu0 %v185
  %v321 = vpop.f32.mrb[0].mxu0
  %v322 = vadd.f32 %v56, %v321
  %v323 = vpop.f32.mrb[0].mxu0
  %v324 = vpop.f32.mrb[0].mxu0
  %v325 = vadd.f32 %v56, %v324
  %v326 = vpop.f32.mrb[0].mxu0
  %327 = vmatprep.mubr.bf16.mxu0 0
  %328 = vmatmul.mubr.bf16.gmra.mrb[0].mxu0 %v188
  %v329 = vpop.f32.mrb[0].mxu0
  %v330 = vadd.f32 %v56, %v329
  %v331 = vpop.f32.mrb[0].mxu0
  %v332 = vpop.f32.mrb[0].mxu0
  %v333 = vadd.f32 %v56, %v332
  %v334 = vpop.f32.mrb[0].mxu0
  %335 = vmatprep.mubr.bf16.mxu0 0
  %336 = vmatmul.mubr.bf16.gmra.mrb[0].mxu0 %v191
  %v337 = vpop.f32.mrb[0].mxu0
  %v338 = vadd.f32 %v56, %v337
  %v339 = vpop.f32.mrb[0].mxu0
  %v340 = vpop.f32.mrb[0].mxu0
  %v341 = vadd.f32 %v56, %v340
  %v342 = vpop.f32.mrb[0].mxu0
  %343 = vmatprep.mubr.bf16.mxu0 0
  %344 = vmatmul.mubr.bf16.gmra.mrb[0].mxu0 %v194
  %v345 = vpop.f32.mrb[0].mxu0
  %v346 = vadd.f32 %v56, %v345
  %v347 = vpop.f32.mrb[0].mxu0
  %v348 = vpop.f32.mrb[0].mxu0
  %v349 = vadd.f32 %v56, %v348
  %v350 = vpop.f32.mrb[0].mxu0
  %351 = vmatprep.mubr.bf16.mxu0 0
  %352 = vmatmul.mubr.bf16.gmra.mrb[0].mxu0 %v197
  %v353 = vpop.f32.mrb[0].mxu0
  %v354 = vadd.f32 %v56, %v353
  %v355 = vpop.f32.mrb[0].mxu0
  %v356 = vpop.f32.mrb[0].mxu0
  %v357 = vadd.f32 %v56, %v356
  %v358 = vpop.f32.mrb[0].mxu0
  %359 = vdwg.mxu0
  %v360 = vmax.f32 %v234, 0.0
  %v361 = vmax.f32 %v237, 0.0
  %v362 = vmax.f32 %v242, 0.0
  %v363 = vmax.f32 %v245, 0.0
  %v364 = vmax.f32 %v250, 0.0
  %v365 = vmax.f32 %v253, 0.0
  %v366 = vmax.f32 %v258, 0.0
  %v367 = vmax.f32 %v261, 0.0
  %v368 = vmax.f32 %v266, 0.0
  %v369 = vmax.f32 %v269, 0.0
  %v370 = vmax.f32 %v274, 0.0
  %v371 = vmax.f32 %v277, 0.0
  %v372 = vmax.f32 %v282, 0.0
  %v373 = vmax.f32 %v285, 0.0
  %v374 = vmax.f32 %v290, 0.0
  %v375 = vmax.f32 %v293, 0.0
  %v376 = vmax.f32 %v298, 0.0
  %v377 = vmax.f32 %v301, 0.0
  %v378 = vmax.f32 %v306, 0.0
  %v379 = vmax.f32 %v309, 0.0
  %v380 = vmax.f32 %v314, 0.0
  %v381 = vmax.f32 %v317, 0.0
  %v382 = vmax.f32 %v322, 0.0
  %v383 = vmax.f32 %v325, 0.0
  %v384 = vmax.f32 %v330, 0.0
  %v385 = vmax.f32 %v333, 0.0
  %v386 = vmax.f32 %v338, 0.0
  %v387 = vmax.f32 %v341, 0.0
  %v388 = vmax.f32 %v346, 0.0
  %v389 = vmax.f32 %v349, 0.0
  %v390 = vmax.f32 %v354, 0.0
  %v391 = vmax.f32 %v357, 0.0
  %392 = vst.msk [vmem:[%s3] sm:$0xff] %vm150, %v360
  %393 = vst.msk [vmem:[%s3 + $0x8] sm:$0xff] %vm150, %v361
  %394 = vst.msk [vmem:[%s3 + $0x10] sm:$0xff] %vm150, %v362
  %395 = vst.msk [vmem:[%s3 + $0x18] sm:$0xff] %vm150, %v363
  %396 = vst.msk [vmem:[%s3 + $0x20] sm:$0xff] %vm150, %v364
  %397 = vst.msk [vmem:[%s3 + $0x28] sm:$0xff] %vm150, %v365
  %398 = vst.msk [vmem:[%s3 + $0x30] sm:$0xff] %vm150, %v366
  %399 = vst.msk [vmem:[%s3 + $0x38] sm:$0xff] %vm150, %v367
  %400 = vst.msk [vmem:[%s3 + $0x40] sm:$0xff] %vm150, %v368
  %401 = vst.msk [vmem:[%s3 + $0x48] sm:$0xff] %vm150, %v369
  %402 = vst.msk [vmem:[%s3 + $0x50] sm:$0xff] %vm150, %v370
  %403 = vst.msk [vmem:[%s3 + $0x58] sm:$0xff] %vm150, %v371
  %404 = vst.msk [vmem:[%s3 + $0x60] sm:$0xff] %vm150, %v372
  %405 = vst.msk [vmem:[%s3 + $0x68] sm:$0xff] %vm150, %v373
  %406 = vst.msk [vmem:[%s3 + $0x70] sm:$0xff] %vm150, %v374
  %407 = vst.msk [vmem:[%s3 + $0x78] sm:$0xff] %vm150, %v375
  %408 = vst.msk [vmem:[%s3 + $0x80] sm:$0xff] %vm150, %v376
  %409 = vst.msk [vmem:[%s3 + $0x88] sm:$0xff] %vm150, %v377
  %410 = vst.msk [vmem:[%s3 + $0x90] sm:$0xff] %vm150, %v378
  %411 = vst.msk [vmem:[%s3 + $0x98] sm:$0xff] %vm150, %v379
  %412 = vst.msk [vmem:[%s3 + $0xa0] sm:$0xff] %vm150, %v380
  %413 = vst.msk [vmem:[%s3 + $0xa8] sm:$0xff] %vm150, %v381
  %414 = vst.msk [vmem:[%s3 + $0xb0] sm:$0xff] %vm150, %v382
  %415 = vst.msk [vmem:[%s3 + $0xb8] sm:$0xff] %vm150, %v383
  %416 = vst.msk [vmem:[%s3 + $0xc0] sm:$0xff] %vm150, %v384
  %417 = vst.msk [vmem:[%s3 + $0xc8] sm:$0xff] %vm150, %v385
  %418 = vst.msk [vmem:[%s3 + $0xd0] sm:$0xff] %vm150, %v386
  %419 = vst.msk [vmem:[%s3 + $0xd8] sm:$0xff] %vm150, %v387
  %420 = vst.msk [vmem:[%s3 + $0xe0] sm:$0xff] %vm150, %v388
  %421 = vst.msk [vmem:[%s3 + $0xe8] sm:$0xff] %vm150, %v389
  %422 = vst.msk [vmem:[%s3 + $0xf0] sm:$0xff] %vm150, %v390
  %423 = vst.msk [vmem:[%s3 + $0xf8] sm:$0xff] %vm150, %v391
  // Predicated region
  $region14: #{rpn_forward.7} parent=0 // pred_check
    _
  $region15: #{rpn_forward.7} parent=0 // pred_check_branch
    %425 = sbr.rel (0) target = $region17
  $region16: #{rpn_forward.7} parent=0 // pred_region
    _
  $region17: #{rpn_forward.7} parent=0 // pred_fallthru
    _
  // Predicated region
  $region18: #{rpn_forward.7} parent=0 // pred_check
    _
  $region19: #{rpn_forward.7} parent=0 // pred_check_branch
    %427 = sbr.rel (0) target = $region21
  $region20: #{rpn_forward.7} parent=0 // pred_region
    _
  $region21: #{rpn_forward.7} parent=0 // pred_fallthru
    _

// kernel: rpn_forward.10
$region0: #{rpn_forward.10}
  #allocation0 [shape = 'u32[]', space=smem, size = 0x4, offset = 0x4, fixed_abs, tag = 'smem constant byte address 0x4 - core index']
  #allocation1 [shape = 'u32[144,128]{1,0:T(1,128)}', space=vmem, size = 0x12000, scoped, tag = 'internal scratch']
  %s0 = inlined_call_operand.vmem [shape: bf16[8,800], index: 0, kind: input, shape index: {}]
  %s1 = inlined_call_operand.vmem [shape: bf16[800,32], index: 1, kind: input, shape index: {}]
  %s2 = inlined_call_operand.vmem [shape: f32[1,32], index: 2, kind: input, shape index: {}]
  %s3 = inlined_call_operand.vmem [shape: f32[8,32], index: 3, kind: output, shape index: {}]
  %s4 = sld [smem:[#allocation0]]
  $region22: #{rpn_forward.10} parent=0
    _
  %s6 = ssub.s32 1, %s4
  %s7 = scalar_select 0, %s6, %s4
  // Predicated region
  $region2: #{rpn_forward.10} parent=0 // pred_check
    _
  $region3: #{rpn_forward.10} parent=0 // pred_check_branch
    %9 = sbr.rel (0) target = $region5
  $region4: #{rpn_forward.10} parent=0 // pred_region
    _
  $region5: #{rpn_forward.10} parent=0 // pred_fallthru
    _
  // Predicated region
  $region6: #{rpn_forward.10} parent=0 // pred_check
    _
  $region7: #{rpn_forward.10} parent=0 // pred_check_branch
    %11 = sbr.rel (0) target = $region9
  $region8: #{rpn_forward.10} parent=0 // pred_region
    _
  $region9: #{rpn_forward.10} parent=0 // pred_fallthru
    _
  // Predicated region
  $region10: #{rpn_forward.10} parent=0 // pred_check
    _
  $region11: #{rpn_forward.10} parent=0 // pred_check_branch
    %13 = sbr.rel (0) target = $region13
  $region12: #{rpn_forward.10} parent=0 // pred_region
    _
  $region13: #{rpn_forward.10} parent=0 // pred_fallthru
    _
  %v15 = vld [vmem:[%s0] sm:$0xff]
  %v16 = vld [vmem:[%s0 + $0x8] sm:$0xff]
  %v17 = vld [vmem:[%s0 + $0x10] sm:$0xff]
  %v18 = vld [vmem:[%s0 + $0x18] sm:$0xf]
  %v19 = vld [vmem:[%s1] sm:$0xf]
  %v20 = vld [vmem:[%s1 + $0x4] sm:$0xf]
  %v21 = vld [vmem:[%s1 + $0x8] sm:$0xf]
  %v22 = vld [vmem:[%s1 + $0xc] sm:$0xf]
  %v23 = vld [vmem:[%s1 + $0x10] sm:$0xf]
  %v24 = vld [vmem:[%s1 + $0x14] sm:$0xf]
  %v25 = vld [vmem:[%s1 + $0x18] sm:$0xf]
  %v26 = vld [vmem:[%s1 + $0x1c] sm:$0xf]
  %v27 = vld [vmem:[%s1 + $0x20] sm:$0xf]
  %v28 = vld [vmem:[%s1 + $0x24] sm:$0xf]
  %v29 = vld [vmem:[%s1 + $0x28] sm:$0xf]
  %v30 = vld [vmem:[%s1 + $0x2c] sm:$0xf]
  %v31 = vld [vmem:[%s1 + $0x30] sm:$0xf]
  %v32 = vld [vmem:[%s1 + $0x34] sm:$0xf]
  %v33 = vld [vmem:[%s1 + $0x38] sm:$0xf]
  %v34 = vld [vmem:[%s1 + $0x3c] sm:$0xf]
  %v35 = vld [vmem:[%s1 + $0x40] sm:$0xf]
  %v36 = vld [vmem:[%s1 + $0x44] sm:$0xf]
  %v37 = vld [vmem:[%s1 + $0x48] sm:$0xf]
  %v38 = vld [vmem:[%s1 + $0x4c] sm:$0xf]
  %v39 = vld [vmem:[%s1 + $0x50] sm:$0xf]
  %v40 = vld [vmem:[%s1 + $0x54] sm:$0xf]
  %v41 = vld [vmem:[%s1 + $0x58] sm:$0xf]
  %v42 = vld [vmem:[%s1 + $0x5c] sm:$0xf]
  %v43 = vld [vmem:[%s1 + $0x60] sm:$0xf]
  %v44 = vld [vmem:[%s1 + $0x64] sm:$0xf]
  %v45 = vld [vmem:[%s1 + $0x68] sm:$0xf]
  %v46 = vld [vmem:[%s1 + $0x6c] sm:$0xf]
  %v47 = vld [vmem:[%s1 + $0x70] sm:$0xf]
  %v48 = vld [vmem:[%s1 + $0x74] sm:$0xf]
  %v49 = vld [vmem:[%s1 + $0x78] sm:$0xf]
  %v50 = vld [vmem:[%s1 + $0x7c] sm:$0xf]
  %v51 = vld [vmem:[%s1 + $0x80] sm:$0xf]
  %v52 = vld [vmem:[%s1 + $0x84] sm:$0xf]
  %v53 = vld [vmem:[%s1 + $0x88] sm:$0xf]
  %v54 = vld [vmem:[%s1 + $0x8c] sm:$0xf]
  %v55 = vld [vmem:[%s1 + $0x90] sm:$0xf]
  %v56 = vld [vmem:[%s1 + $0x94] sm:$0xf]
  %v57 = vld [vmem:[%s1 + $0x98] sm:$0xf]
  %v58 = vld [vmem:[%s1 + $0x9c] sm:$0xf]
  %v59 = vld [vmem:[%s1 + $0xa0] sm:$0xf]
  %v60 = vld [vmem:[%s1 + $0xa4] sm:$0xf]
  %v61 = vld [vmem:[%s1 + $0xa8] sm:$0xf]
  %v62 = vld [vmem:[%s1 + $0xac] sm:$0xf]
  %v63 = vld [vmem:[%s1 + $0xb0] sm:$0xf]
  %v64 = vld [vmem:[%s1 + $0xb4] sm:$0xf]
  %v65 = vld [vmem:[%s1 + $0xb8] sm:$0xf]
  %v66 = vld [vmem:[%s1 + $0xbc] sm:$0xf]
  %v67 = vld [vmem:[%s1 + $0xc0] sm:$0xf]
  %v68 = vld [vmem:[%s1 + $0xc4] sm:$0xf]
  %v69 = vld [vmem:[%s1 + $0xc8] sm:$0xf]
  %v70 = vld [vmem:[%s1 + $0xcc] sm:$0xf]
  %v71 = vld [vmem:[%s1 + $0xd0] sm:$0xf]
  %v72 = vld [vmem:[%s1 + $0xd4] sm:$0xf]
  %v73 = vld [vmem:[%s1 + $0xd8] sm:$0xf]
  %v74 = vld [vmem:[%s1 + $0xdc] sm:$0xf]
  %v75 = vld [vmem:[%s1 + $0xe0] sm:$0xf]
  %v76 = vld [vmem:[%s1 + $0xe4] sm:$0xf]
  %v77 = vld [vmem:[%s1 + $0xe8] sm:$0xf]
  %v78 = vld [vmem:[%s1 + $0xec] sm:$0xf]
  %v79 = vld [vmem:[%s1 + $0xf0] sm:$0xf]
  %v80 = vld [vmem:[%s1 + $0xf4] sm:$0xf]
  %v81 = vld [vmem:[%s1 + $0xf8] sm:$0xf]
  %v82 = vld [vmem:[%s1 + $0xfc] sm:$0xf]
  %v83 = vld [vmem:[%s1 + $0x100] sm:$0xf]
  %v84 = vld [vmem:[%s1 + $0x104] sm:$0xf]
  %v85 = vld [vmem:[%s1 + $0x108] sm:$0xf]
  %v86 = vld [vmem:[%s1 + $0x10c] sm:$0xf]
  %v87 = vld [vmem:[%s1 + $0x110] sm:$0xf]
  %v88 = vld [vmem:[%s1 + $0x114] sm:$0xf]
  %v89 = vld [vmem:[%s1 + $0x118] sm:$0xf]
  %v90 = vld [vmem:[%s1 + $0x11c] sm:$0xf]
  %v91 = vld [vmem:[%s1 + $0x120] sm:$0xf]
  %v92 = vld [vmem:[%s1 + $0x124] sm:$0xf]
  %v93 = vld [vmem:[%s1 + $0x128] sm:$0xf]
  %v94 = vld [vmem:[%s1 + $0x12c] sm:$0xf]
  %v95 = vld [vmem:[%s1 + $0x130] sm:$0xf]
  %v96 = vld [vmem:[%s1 + $0x134] sm:$0xf]
  %v97 = vld [vmem:[%s1 + $0x138] sm:$0xf]
  %v98 = vld [vmem:[%s1 + $0x13c] sm:$0xf]
  %v99 = vld [vmem:[%s1 + $0x140] sm:$0xf]
  %v100 = vld [vmem:[%s1 + $0x144] sm:$0xf]
  %v101 = vld [vmem:[%s1 + $0x148] sm:$0xf]
  %v102 = vld [vmem:[%s1 + $0x14c] sm:$0xf]
  %v103 = vld [vmem:[%s1 + $0x150] sm:$0xf]
  %v104 = vld [vmem:[%s1 + $0x154] sm:$0xf]
  %v105 = vld [vmem:[%s1 + $0x158] sm:$0xf]
  %v106 = vld [vmem:[%s1 + $0x15c] sm:$0xf]
  %v107 = vld [vmem:[%s1 + $0x160] sm:$0xf]
  %v108 = vld [vmem:[%s1 + $0x164] sm:$0xf]
  %v109 = vld [vmem:[%s1 + $0x168] sm:$0xf]
  %v110 = vld [vmem:[%s1 + $0x16c] sm:$0xf]
  %v111 = vld [vmem:[%s1 + $0x170] sm:$0xf]
  %v112 = vld [vmem:[%s1 + $0x174] sm:$0xf]
  %v113 = vld [vmem:[%s1 + $0x178] sm:$0xf]
  %v114 = vld [vmem:[%s1 + $0x17c] sm:$0xf]
  %v115 = vld [vmem:[%s1 + $0x180] sm:$0xf]
  %v116 = vld [vmem:[%s1 + $0x184] sm:$0xf]
  %v117 = vld [vmem:[%s1 + $0x188] sm:$0xf]
  %v118 = vld [vmem:[%s1 + $0x18c] sm:$0xf]
  %v119 = vld [vmem:[%s2] sm:$0x1]
  %v121 = vlaneseq
  %v122 = vshrl.u32 %v121, 7
  %v123 = vsub.s32 0, %v122
  %v124 = vrot.slane %v119, %v123
  %v130 = vunpack.c.l.b16 %v15
  %v131 = vunpack.c.h.b16 %v15
  %v132 = vunpack.c.l.b16 %v16
  %v133 = vunpack.c.h.b16 %v16
  %v134 = vunpack.c.l.b16 %v17
  %v135 = vunpack.c.h.b16 %v17
  %v136 = vunpack.c.l.b16 %v18
  %v137 = vpack.c.b16 %v130, %v130
  %v138 = vpack.c.b16 %v131, %v131
  %v139 = vpack.c.b16 %v132, %v132
  %v140 = vpack.c.b16 %v133, %v133
  %v141 = vpack.c.b16 %v134, %v134
  %v142 = vpack.c.b16 %v135, %v135
  %v143 = vpack.c.b16 %v136, %v136
  %v250 = vunpack.c.l.b16 %v19
  %v251 = vunpack.c.l.b16 %v20
  %v252 = vunpack.c.l.b16 %v21
  %v253 = vunpack.c.l.b16 %v22
  %v254 = vunpack.c.l.b16 %v23
  %v255 = vunpack.c.l.b16 %v24
  %v256 = vunpack.c.l.b16 %v25
  %v257 = vunpack.c.l.b16 %v26
  %v258 = vunpack.c.l.b16 %v27
  %v259 = vunpack.c.l.b16 %v28
  %v260 = vunpack.c.l.b16 %v29
  %v261 = vunpack.c.l.b16 %v30
  %v262 = vunpack.c.l.b16 %v31
  %v263 = vunpack.c.l.b16 %v32
  %v264 = vunpack.c.l.b16 %v33
  %v265 = vunpack.c.l.b16 %v34
  %v266 = vunpack.c.l.b16 %v35
  %v267 = vunpack.c.l.b16 %v36
  %v268 = vunpack.c.l.b16 %v37
  %v269 = vunpack.c.l.b16 %v38
  %v270 = vunpack.c.l.b16 %v39
  %v271 = vunpack.c.l.b16 %v40
  %v272 = vunpack.c.l.b16 %v41
  %v273 = vunpack.c.l.b16 %v42
  %v274 = vunpack.c.l.b16 %v43
  %v275 = vunpack.c.l.b16 %v44
  %v276 = vunpack.c.l.b16 %v45
  %v277 = vunpack.c.l.b16 %v46
  %v278 = vunpack.c.l.b16 %v47
  %v279 = vunpack.c.l.b16 %v48
  %v280 = vunpack.c.l.b16 %v49
  %v281 = vunpack.c.l.b16 %v50
  %v282 = vunpack.c.l.b16 %v51
  %v283 = vunpack.c.l.b16 %v52
  %v284 = vunpack.c.l.b16 %v53
  %v285 = vunpack.c.l.b16 %v54
  %v286 = vunpack.c.l.b16 %v55
  %v287 = vunpack.c.l.b16 %v56
  %v288 = vunpack.c.l.b16 %v57
  %v289 = vunpack.c.l.b16 %v58
  %v290 = vunpack.c.l.b16 %v59
  %v291 = vunpack.c.l.b16 %v60
  %v292 = vunpack.c.l.b16 %v61
  %v293 = vunpack.c.l.b16 %v62
  %v294 = vunpack.c.l.b16 %v63
  %v295 = vunpack.c.l.b16 %v64
  %v296 = vunpack.c.l.b16 %v65
  %v297 = vunpack.c.l.b16 %v66
  %v298 = vunpack.c.l.b16 %v67
  %v299 = vunpack.c.l.b16 %v68
  %v300 = vunpack.c.l.b16 %v69
  %v301 = vunpack.c.l.b16 %v70
  %v302 = vunpack.c.l.b16 %v71
  %v303 = vunpack.c.l.b16 %v72
  %v304 = vunpack.c.l.b16 %v73
  %v305 = vunpack.c.l.b16 %v74
  %v306 = vunpack.c.l.b16 %v75
  %v307 = vunpack.c.l.b16 %v76
  %v308 = vunpack.c.l.b16 %v77
  %v309 = vunpack.c.l.b16 %v78
  %v310 = vunpack.c.l.b16 %v79
  %v311 = vunpack.c.l.b16 %v80
  %v312 = vunpack.c.l.b16 %v81
  %v313 = vunpack.c.l.b16 %v82
  %v314 = vunpack.c.l.b16 %v83
  %v315 = vunpack.c.l.b16 %v84
  %v316 = vunpack.c.l.b16 %v85
  %v317 = vunpack.c.l.b16 %v86
  %v318 = vunpack.c.l.b16 %v87
  %v319 = vunpack.c.l.b16 %v88
  %v320 = vunpack.c.l.b16 %v89
  %v321 = vunpack.c.l.b16 %v90
  %v322 = vunpack.c.l.b16 %v91
  %v323 = vunpack.c.l.b16 %v92
  %v324 = vunpack.c.l.b16 %v93
  %v325 = vunpack.c.l.b16 %v94
  %v326 = vunpack.c.l.b16 %v95
  %v327 = vunpack.c.l.b16 %v96
  %v328 = vunpack.c.l.b16 %v97
  %v329 = vunpack.c.l.b16 %v98
  %v330 = vunpack.c.l.b16 %v99
  %v331 = vunpack.c.l.b16 %v100
  %v332 = vunpack.c.l.b16 %v101
  %v333 = vunpack.c.l.b16 %v102
  %v334 = vunpack.c.l.b16 %v103
  %v335 = vunpack.c.l.b16 %v104
  %v336 = vunpack.c.l.b16 %v105
  %v337 = vunpack.c.l.b16 %v106
  %v338 = vunpack.c.l.b16 %v107
  %v339 = vunpack.c.l.b16 %v108
  %v340 = vunpack.c.l.b16 %v109
  %v341 = vunpack.c.l.b16 %v110
  %v342 = vunpack.c.l.b16 %v111
  %v343 = vunpack.c.l.b16 %v112
  %v344 = vunpack.c.l.b16 %v113
  %v345 = vunpack.c.l.b16 %v114
  %v346 = vunpack.c.l.b16 %v115
  %v347 = vunpack.c.l.b16 %v116
  %v348 = vunpack.c.l.b16 %v117
  %v349 = vunpack.c.l.b16 %v118
  %v350 = vpack.c.b16 %v251, %v250
  %v351 = vpack.c.b16 %v253, %v252
  %v352 = vpack.c.b16 %v255, %v254
  %v353 = vpack.c.b16 %v257, %v256
  %v354 = vpack.c.b16 %v259, %v258
  %v355 = vpack.c.b16 %v261, %v260
  %v356 = vpack.c.b16 %v263, %v262
  %v357 = vpack.c.b16 %v265, %v264
  %v358 = vpack.c.b16 %v267, %v266
  %v359 = vpack.c.b16 %v269, %v268
  %v360 = vpack.c.b16 %v271, %v270
  %v361 = vpack.c.b16 %v273, %v272
  %v362 = vpack.c.b16 %v275, %v274
  %v363 = vpack.c.b16 %v277, %v276
  %v364 = vpack.c.b16 %v279, %v278
  %v365 = vpack.c.b16 %v281, %v280
  %v366 = vpack.c.b16 %v283, %v282
  %v367 = vpack.c.b16 %v285, %v284
  %v368 = vpack.c.b16 %v287, %v286
  %v369 = vpack.c.b16 %v289, %v288
  %v370 = vpack.c.b16 %v291, %v290
  %v371 = vpack.c.b16 %v293, %v292
  %v372 = vpack.c.b16 %v295, %v294
  %v373 = vpack.c.b16 %v297, %v296
  %v374 = vpack.c.b16 %v299, %v298
  %v375 = vpack.c.b16 %v301, %v300
  %v376 = vpack.c.b16 %v303, %v302
  %v377 = vpack.c.b16 %v305, %v304
  %v378 = vpack.c.b16 %v307, %v306
  %v379 = vpack.c.b16 %v309, %v308
  %v380 = vpack.c.b16 %v311, %v310
  %v381 = vpack.c.b16 %v313, %v312
  %v382 = vpack.c.b16 %v315, %v314
  %v383 = vpack.c.b16 %v317, %v316
  %v384 = vpack.c.b16 %v319, %v318
  %v385 = vpack.c.b16 %v321, %v320
  %v386 = vpack.c.b16 %v323, %v322
  %v387 = vpack.c.b16 %v325, %v324
  %v388 = vpack.c.b16 %v327, %v326
  %v389 = vpack.c.b16 %v329, %v328
  %v390 = vpack.c.b16 %v331, %v330
  %v391 = vpack.c.b16 %v333, %v332
  %v392 = vpack.c.b16 %v335, %v334
  %v393 = vpack.c.b16 %v337, %v336
  %v394 = vpack.c.b16 %v339, %v338
  %v395 = vpack.c.b16 %v341, %v340
  %v396 = vpack.c.b16 %v343, %v342
  %v397 = vpack.c.b16 %v345, %v344
  %v398 = vpack.c.b16 %v347, %v346
  %v399 = vpack.c.b16 %v349, %v348
  %vm450 = vcmask 261120
  %v452 = vsel %vm450, %v143, 0
  %454 = vmatprep.subr.bf16.mxu0 0
  %455 = vmatpush1.bf16.msra.mxu0 %v350
  %456 = vmatprep.subr.bf16.mxu0 0
  %457 = vmatpush1.bf16.msra.mxu0 %v351
  %458 = vmatprep.subr.bf16.mxu0 0
  %459 = vmatpush1.bf16.msra.mxu0 %v352
  %460 = vmatprep.subr.bf16.mxu0 0
  %461 = vmatpush1.bf16.msra.mxu0 %v353
  %462 = vmatprep.subr.bf16.mxu0 0
  %463 = vmatpush1.bf16.msra.mxu0 %v354
  %464 = vmatprep.subr.bf16.mxu0 0
  %465 = vmatpush1.bf16.msra.mxu0 %v355
  %466 = vmatprep.subr.bf16.mxu0 0
  %467 = vmatpush1.bf16.msra.mxu0 %v356
  %468 = vmatprep.subr.bf16.mxu0 0
  %469 = vmatpush1.bf16.msra.mxu0 %v357
  %470 = vmatprep.subr.bf16.mxu0 0
  %471 = vmatpush1.bf16.msra.mxu0 %v358
  %472 = vmatprep.subr.bf16.mxu0 0
  %473 = vmatpush1.bf16.msra.mxu0 %v359
  %474 = vmatprep.subr.bf16.mxu0 0
  %475 = vmatpush1.bf16.msra.mxu0 %v360
  %476 = vmatprep.subr.bf16.mxu0 0
  %477 = vmatpush1.bf16.msra.mxu0 %v361
  %478 = vmatprep.subr.bf16.mxu0 0
  %479 = vmatpush1.bf16.msra.mxu0 %v362
  %480 = vmatprep.subr.bf16.mxu0 0
  %481 = vmatpush1.bf16.msra.mxu0 %v363
  %482 = vmatprep.subr.bf16.mxu0 0
  %483 = vmatpush1.bf16.msra.mxu0 %v364
  %484 = vmatprep.subr.bf16.mxu0 0
  %485 = vmatpush1.bf16.msra.mxu0 %v365
  %486 = vmatprep.mubr.bf16.mxu0 %v138
  %487 = vmatmul.mubr.bf16.gmra.mrb[0].mxu0 %v137
  %v488 = vpop.f32.mrb[0].mxu0
  %v489 = vadd.f32 %v124, %v488
  %v490 = vpop.f32.mrb[0].mxu0
  %v491 = vpop.f32.mrb[0].mxu0
  %v492 = vpop.f32.mrb[0].mxu0
  %493 = vdwg.mxu0
  %494 = vmatprep.subr.bf16.mxu0 0
  %495 = vmatpush1.bf16.msra.mxu0 %v366
  %496 = vmatprep.subr.bf16.mxu0 0
  %497 = vmatpush1.bf16.msra.mxu0 %v367
  %498 = vmatprep.subr.bf16.mxu0 0
  %499 = vmatpush1.bf16.msra.mxu0 %v368
  %500 = vmatprep.subr.bf16.mxu0 0
  %501 = vmatpush1.bf16.msra.mxu0 %v369
  %502 = vmatprep.subr.bf16.mxu0 0
  %503 = vmatpush1.bf16.msra.mxu0 %v370
  %504 = vmatprep.subr.bf16.mxu0 0
  %505 = vmatpush1.bf16.msra.mxu0 %v371
  %506 = vmatprep.subr.bf16.mxu0 0
  %507 = vmatpush1.bf16.msra.mxu0 %v372
  %508 = vmatprep.subr.bf16.mxu0 0
  %509 = vmatpush1.bf16.msra.mxu0 %v373
  %510 = vmatprep.subr.bf16.mxu0 0
  %511 = vmatpush1.bf16.msra.mxu0 %v374
  %512 = vmatprep.subr.bf16.mxu0 0
  %513 = vmatpush1.bf16.msra.mxu0 %v375
  %514 = vmatprep.subr.bf16.mxu0 0
  %515 = vmatpush1.bf16.msra.mxu0 %v376
  %516 = vmatprep.subr.bf16.mxu0 0
  %517 = vmatpush1.bf16.msra.mxu0 %v377
  %518 = vmatprep.subr.bf16.mxu0 0
  %519 = vmatpush1.bf16.msra.mxu0 %v378
  %520 = vmatprep.subr.bf16.mxu0 0
  %521 = vmatpush1.bf16.msra.mxu0 %v379
  %522 = vmatprep.subr.bf16.mxu0 0
  %523 = vmatpush1.bf16.msra.mxu0 %v380
  %524 = vmatprep.subr.bf16.mxu0 0
  %525 = vmatpush1.bf16.msra.mxu0 %v381
  %526 = vmatprep.mubr.bf16.mxu0 %v140
  %527 = vmatmul.mubr.bf16.gmra.mrb[0].mxu0 %v139
  %v528 = vpop.f32.mrb[0].mxu0
  %v529 = vadd.f32 %v489, %v528
  %v530 = vpop.f32.mrb[0].mxu0
  %v531 = vpop.f32.mrb[0].mxu0
  %v532 = vpop.f32.mrb[0].mxu0
  %533 = vdwg.mxu0
  %534 = vmatprep.subr.bf16.mxu0 0
  %535 = vmatpush1.bf16.msra.mxu0 %v382
  %536 = vmatprep.subr.bf16.mxu0 0
  %537 = vmatpush1.bf16.msra.mxu0 %v383
  %538 = vmatprep.subr.bf16.mxu0 0
  %539 = vmatpush1.bf16.msra.mxu0 %v384
  %540 = vmatprep.subr.bf16.mxu0 0
  %541 = vmatpush1.bf16.msra.mxu0 %v385
  %542 = vmatprep.subr.bf16.mxu0 0
  %543 = vmatpush1.bf16.msra.mxu0 %v386
  %544 = vmatprep.subr.bf16.mxu0 0
  %545 = vmatpush1.bf16.msra.mxu0 %v387
  %546 = vmatprep.subr.bf16.mxu0 0
  %547 = vmatpush1.bf16.msra.mxu0 %v388
  %548 = vmatprep.subr.bf16.mxu0 0
  %549 = vmatpush1.bf16.msra.mxu0 %v389
  %550 = vmatprep.subr.bf16.mxu0 0
  %551 = vmatpush1.bf16.msra.mxu0 %v390
  %552 = vmatprep.subr.bf16.mxu0 0
  %553 = vmatpush1.bf16.msra.mxu0 %v391
  %554 = vmatprep.subr.bf16.mxu0 0
  %555 = vmatpush1.bf16.msra.mxu0 %v392
  %556 = vmatprep.subr.bf16.mxu0 0
  %557 = vmatpush1.bf16.msra.mxu0 %v393
  %558 = vmatprep.subr.bf16.mxu0 0
  %559 = vmatpush1.bf16.msra.mxu0 %v394
  %560 = vmatprep.subr.bf16.mxu0 0
  %561 = vmatpush1.bf16.msra.mxu0 %v395
  %562 = vmatprep.subr.bf16.mxu0 0
  %563 = vmatpush1.bf16.msra.mxu0 %v396
  %564 = vmatprep.subr.bf16.mxu0 0
  %565 = vmatpush1.bf16.msra.mxu0 %v397
  %566 = vmatprep.mubr.bf16.mxu0 %v142
  %567 = vmatmul.mubr.bf16.gmra.mrb[0].mxu0 %v141
  %v568 = vpop.f32.mrb[0].mxu0
  %v569 = vadd.f32 %v529, %v568
  %v570 = vpop.f32.mrb[0].mxu0
  %v571 = vpop.f32.mrb[0].mxu0
  %v572 = vpop.f32.mrb[0].mxu0
  %573 = vdwg.mxu0
  %574 = vmatprep.subr.bf16.mxu0 0
  %575 = vmatpush1.bf16.msra.mxu0 %v398
  %576 = vmatprep.subr.bf16.mxu0 0
  %577 = vmatpush1.bf16.msra.mxu0 %v399
  %578 = vmatprep.subr.bf16.mxu0 0
  %579 = vmatpush1.bf16.msra.mxu0 0
  %580 = vmatprep.subr.bf16.mxu0 0
  %581 = vmatpush1.bf16.msra.mxu0 0
  %582 = vmatprep.subr.bf16.mxu0 0
  %583 = vmatpush1.bf16.msra.mxu0 0
  %584 = vmatprep.subr.bf16.mxu0 0
  %585 = vmatpush1.bf16.msra.mxu0 0
  %586 = vmatprep.subr.bf16.mxu0 0
  %587 = vmatpush1.bf16.msra.mxu0 0
  %588 = vmatprep.subr.bf16.mxu0 0
  %589 = vmatpush1.bf16.msra.mxu0 0
  %590 = vmatprep.subr.bf16.mxu0 0
  %591 = vmatpush1.bf16.msra.mxu0 0
  %592 = vmatprep.subr.bf16.mxu0 0
  %593 = vmatpush1.bf16.msra.mxu0 0
  %594 = vmatprep.subr.bf16.mxu0 0
  %595 = vmatpush1.bf16.msra.mxu0 0
  %596 = vmatprep.subr.bf16.mxu0 0
  %597 = vmatpush1.bf16.msra.mxu0 0
  %598 = vmatprep.subr.bf16.mxu0 0
  %599 = vmatpush1.bf16.msra.mxu0 0
  %600 = vmatprep.subr.bf16.mxu0 0
  %601 = vmatpush1.bf16.msra.mxu0 0
  %602 = vmatprep.subr.bf16.mxu0 0
  %603 = vmatpush1.bf16.msra.mxu0 0
  %604 = vmatprep.subr.bf16.mxu0 0
  %605 = vmatpush1.bf16.msra.mxu0 0
  %606 = vmatprep.mubr.bf16.mxu0 0
  %607 = vmatmul.mubr.bf16.gmra.mrb[0].mxu0 %v452
  %v608 = vpop.f32.mrb[0].mxu0
  %v609 = vadd.f32 %v569, %v608
  %v610 = vpop.f32.mrb[0].mxu0
  %v611 = vpop.f32.mrb[0].mxu0
  %v612 = vpop.f32.mrb[0].mxu0
  %613 = vdwg.mxu0
  %v614 = vmax.f32 %v609, 0.0
  %615 = vst.msk [vmem:[%s3] sm:$0xff] %vm450, %v614
  // Predicated region
  $region14: #{rpn_forward.10} parent=0 // pred_check
    _
  $region15: #{rpn_forward.10} parent=0 // pred_check_branch
    %617 = sbr.rel (0) target = $region17
  $region16: #{rpn_forward.10} parent=0 // pred_region
    _
  $region17: #{rpn_forward.10} parent=0 // pred_fallthru
    _
  // Predicated region
  $region18: #{rpn_forward.10} parent=0 // pred_check
    _
  $region19: #{rpn_forward.10} parent=0 // pred_check_branch
    %619 = sbr.rel (0) target = $region21
  $region20: #{rpn_forward.10} parent=0 // pred_region
    _
  $region21: #{rpn_forward.10} parent=0 // pred_fallthru
    _

// kernel: rpn_forward.13
$region0: #{rpn_forward.13}
  #allocation0 [shape = 'u32[]', space=smem, size = 0x4, offset = 0x4, fixed_abs, tag = 'smem constant byte address 0x4 - core index']
  #allocation1 [shape = 'u32[144,128]{1,0:T(1,128)}', space=vmem, size = 0x12000, scoped, tag = 'internal scratch']
  %s0 = inlined_call_operand.vmem [shape: bf16[256,32], index: 0, kind: input, shape index: {}]
  %s1 = inlined_call_operand.vmem [shape: bf16[32,54], index: 1, kind: input, shape index: {}]
  %s2 = inlined_call_operand.vmem [shape: f32[1,54], index: 2, kind: input, shape index: {}]
  %s3 = inlined_call_operand.vmem [shape: f32[256,54], index: 3, kind: output, shape index: {}]
  %s4 = sld [smem:[#allocation0]]
  $region22: #{rpn_forward.13} parent=0
    _
  %s6 = ssub.s32 1, %s4
  %s7 = scalar_select 0, %s6, %s4
  // Predicated region
  $region2: #{rpn_forward.13} parent=0 // pred_check
    _
  $region3: #{rpn_forward.13} parent=0 // pred_check_branch
    %9 = sbr.rel (0) target = $region5
  $region4: #{rpn_forward.13} parent=0 // pred_region
    _
  $region5: #{rpn_forward.13} parent=0 // pred_fallthru
    _
  // Predicated region
  $region6: #{rpn_forward.13} parent=0 // pred_check
    _
  $region7: #{rpn_forward.13} parent=0 // pred_check_branch
    %11 = sbr.rel (0) target = $region9
  $region8: #{rpn_forward.13} parent=0 // pred_region
    _
  $region9: #{rpn_forward.13} parent=0 // pred_fallthru
    _
  // Predicated region
  $region10: #{rpn_forward.13} parent=0 // pred_check
    _
  $region11: #{rpn_forward.13} parent=0 // pred_check_branch
    %13 = sbr.rel (0) target = $region13
  $region12: #{rpn_forward.13} parent=0 // pred_region
    _
  $region13: #{rpn_forward.13} parent=0 // pred_fallthru
    _
  %v15 = vld [vmem:[%s0] sm:$0xf]
  %v16 = vld [vmem:[%s0 + $0x4] sm:$0xf]
  %v17 = vld [vmem:[%s0 + $0x8] sm:$0xf]
  %v18 = vld [vmem:[%s0 + $0xc] sm:$0xf]
  %v19 = vld [vmem:[%s0 + $0x10] sm:$0xf]
  %v20 = vld [vmem:[%s0 + $0x14] sm:$0xf]
  %v21 = vld [vmem:[%s0 + $0x18] sm:$0xf]
  %v22 = vld [vmem:[%s0 + $0x1c] sm:$0xf]
  %v23 = vld [vmem:[%s0 + $0x20] sm:$0xf]
  %v24 = vld [vmem:[%s0 + $0x24] sm:$0xf]
  %v25 = vld [vmem:[%s0 + $0x28] sm:$0xf]
  %v26 = vld [vmem:[%s0 + $0x2c] sm:$0xf]
  %v27 = vld [vmem:[%s0 + $0x30] sm:$0xf]
  %v28 = vld [vmem:[%s0 + $0x34] sm:$0xf]
  %v29 = vld [vmem:[%s0 + $0x38] sm:$0xf]
  %v30 = vld [vmem:[%s0 + $0x3c] sm:$0xf]
  %v31 = vld [vmem:[%s0 + $0x40] sm:$0xf]
  %v32 = vld [vmem:[%s0 + $0x44] sm:$0xf]
  %v33 = vld [vmem:[%s0 + $0x48] sm:$0xf]
  %v34 = vld [vmem:[%s0 + $0x4c] sm:$0xf]
  %v35 = vld [vmem:[%s0 + $0x50] sm:$0xf]
  %v36 = vld [vmem:[%s0 + $0x54] sm:$0xf]
  %v37 = vld [vmem:[%s0 + $0x58] sm:$0xf]
  %v38 = vld [vmem:[%s0 + $0x5c] sm:$0xf]
  %v39 = vld [vmem:[%s0 + $0x60] sm:$0xf]
  %v40 = vld [vmem:[%s0 + $0x64] sm:$0xf]
  %v41 = vld [vmem:[%s0 + $0x68] sm:$0xf]
  %v42 = vld [vmem:[%s0 + $0x6c] sm:$0xf]
  %v43 = vld [vmem:[%s0 + $0x70] sm:$0xf]
  %v44 = vld [vmem:[%s0 + $0x74] sm:$0xf]
  %v45 = vld [vmem:[%s0 + $0x78] sm:$0xf]
  %v46 = vld [vmem:[%s0 + $0x7c] sm:$0xf]
  %v47 = vld [vmem:[%s1] sm:$0xf]
  %v48 = vld [vmem:[%s1 + $0x4] sm:$0xf]
  %v49 = vld [vmem:[%s1 + $0x8] sm:$0xf]
  %v50 = vld [vmem:[%s1 + $0xc] sm:$0xf]
  %v51 = vld [vmem:[%s2] sm:$0x1]
  %v53 = vlaneseq
  %v54 = vshrl.u32 %v53, 7
  %v55 = vsub.s32 0, %v54
  %v56 = vrot.slane %v51, %v55
  %v90 = vunpack.c.l.b16 %v15
  %v91 = vunpack.c.l.b16 %v16
  %v92 = vunpack.c.l.b16 %v17
  %v93 = vunpack.c.l.b16 %v18
  %v94 = vunpack.c.l.b16 %v19
  %v95 = vunpack.c.l.b16 %v20
  %v96 = vunpack.c.l.b16 %v21
  %v97 = vunpack.c.l.b16 %v22
  %v98 = vunpack.c.l.b16 %v23
  %v99 = vunpack.c.l.b16 %v24
  %v100 = vunpack.c.l.b16 %v25
  %v101 = vunpack.c.l.b16 %v26
  %v102 = vunpack.c.l.b16 %v27
  %v103 = vunpack.c.l.b16 %v28
  %v104 = vunpack.c.l.b16 %v29
  %v105 = vunpack.c.l.b16 %v30
  %v106 = vunpack.c.l.b16 %v31
  %v107 = vunpack.c.l.b16 %v32
  %v108 = vunpack.c.l.b16 %v33
  %v109 = vunpack.c.l.b16 %v34
  %v110 = vunpack.c.l.b16 %v35
  %v111 = vunpack.c.l.b16 %v36
  %v112 = vunpack.c.l.b16 %v37
  %v113 = vunpack.c.l.b16 %v38
  %v114 = vunpack.c.l.b16 %v39
  %v115 = vunpack.c.l.b16 %v40
  %v116 = vunpack.c.l.b16 %v41
  %v117 = vunpack.c.l.b16 %v42
  %v118 = vunpack.c.l.b16 %v43
  %v119 = vunpack.c.l.b16 %v44
  %v120 = vunpack.c.l.b16 %v45
  %v121 = vunpack.c.l.b16 %v46
  %v122 = vpack.c.b16 %v91, %v90
  %v123 = vpack.c.b16 %v93, %v92
  %v124 = vpack.c.b16 %v95, %v94
  %v125 = vpack.c.b16 %v97, %v96
  %v126 = vpack.c.b16 %v99, %v98
  %v127 = vpack.c.b16 %v101, %v100
  %v128 = vpack.c.b16 %v103, %v102
  %v129 = vpack.c.b16 %v105, %v104
  %v130 = vpack.c.b16 %v107, %v106
  %v131 = vpack.c.b16 %v109, %v108
  %v132 = vpack.c.b16 %v111, %v110
  %v133 = vpack.c.b16 %v113, %v112
  %v134 = vpack.c.b16 %v115, %v114
  %v135 = vpack.c.b16 %v117, %v116
  %v136 = vpack.c.b16 %v119, %v118
  %v137 = vpack.c.b16 %v121, %v120
  %v142 = vunpack.c.l.b16 %v47
  %v143 = vunpack.c.l.b16 %v48
  %v144 = vunpack.c.l.b16 %v49
  %v145 = vunpack.c.l.b16 %v50
  %v146 = vpack.c.b16 %v143, %v142
  %v147 = vpack.c.b16 %v145, %v144
  %vm150 = vcmask 261120
  %v152 = vsel %vm150, %v122, 0
  %v155 = vsel %vm150, %v123, 0
  %v158 = vsel %vm150, %v124, 0
  %v161 = vsel %vm150, %v125, 0
  %v164 = vsel %vm150, %v126, 0
  %v167 = vsel %vm150, %v127, 0
  %v170 = vsel %vm150, %v128, 0
  %v173 = vsel %vm150, %v129, 0
  %v176 = vsel %vm150, %v130, 0
  %v179 = vsel %vm150, %v131, 0
  %v182 = vsel %vm150, %v132, 0
  %v185 = vsel %vm150, %v133, 0
  %v188 = vsel %vm150, %v134, 0
  %v191 = vsel %vm150, %v135, 0
  %v194 = vsel %vm150, %v136, 0
  %v197 = vsel %vm150, %v137, 0
  %199 = vmatprep.subr.bf16.mxu0 0
  %200 = vmatpush1.bf16.msra.mxu0 %v146
  %201 = vmatprep.subr.bf16.mxu0 0
  %202 = vmatpush1.bf16.msra.mxu0 %v147
  %203 = vmatprep.subr.bf16.mxu0 0
  %204 = vmatpush1.bf16.msra.mxu0 0
  %205 = vmatprep.subr.bf16.mxu0 0
  %206 = vmatpush1.bf16.msra.mxu0 0
  %207 = vmatprep.subr.bf16.mxu0 0
  %208 = vmatpush1.bf16.msra.mxu0 0
  %209 = vmatprep.subr.bf16.mxu0 0
  %210 = vmatpush1.bf16.msra.mxu0 0
  %211 = vmatprep.subr.bf16.mxu0 0
  %212 = vmatpush1.bf16.msra.mxu0 0
  %213 = vmatprep.subr.bf16.mxu0 0
  %214 = vmatpush1.bf16.msra.mxu0 0
  %215 = vmatprep.subr.bf16.mxu0 0
  %216 = vmatpush1.bf16.msra.mxu0 0
  %217 = vmatprep.subr.bf16.mxu0 0
  %218 = vmatpush1.bf16.msra.mxu0 0
  %219 = vmatprep.subr.bf16.mxu0 0
  %220 = vmatpush1.bf16.msra.mxu0 0
  %221 = vmatprep.subr.bf16.mxu0 0
  %222 = vmatpush1.bf16.msra.mxu0 0
  %223 = vmatprep.subr.bf16.mxu0 0
  %224 = vmatpush1.bf16.msra.mxu0 0
  %225 = vmatprep.subr.bf16.mxu0 0
  %226 = vmatpush1.bf16.msra.mxu0 0
  %227 = vmatprep.subr.bf16.mxu0 0
  %228 = vmatpush1.bf16.msra.mxu0 0
  %229 = vmatprep.subr.bf16.mxu0 0
  %230 = vmatpush1.bf16.msra.mxu0 0
  %231 = vmatprep.mubr.bf16.mxu0 0
  %232 = vmatmul.mubr.bf16.gmra.mrb[0].mxu0 %v152
  %v233 = vpop.f32.mrb[0].mxu0
  %v234 = vadd.f32 %v56, %v233
  %v235 = vpop.f32.mrb[0].mxu0
  %v236 = vpop.f32.mrb[0].mxu0
  %v237 = vadd.f32 %v56, %v236
  %v238 = vpop.f32.mrb[0].mxu0
  %239 = vmatprep.mubr.bf16.mxu0 0
  %240 = vmatmul.mubr.bf16.gmra.mrb[0].mxu0 %v155
  %v241 = vpop.f32.mrb[0].mxu0
  %v242 = vadd.f32 %v56, %v241
  %v243 = vpop.f32.mrb[0].mxu0
  %v244 = vpop.f32.mrb[0].mxu0
  %v245 = vadd.f32 %v56, %v244
  %v246 = vpop.f32.mrb[0].mxu0
  %247 = vmatprep.mubr.bf16.mxu0 0
  %248 = vmatmul.mubr.bf16.gmra.mrb[0].mxu0 %v158
  %v249 = vpop.f32.mrb[0].mxu0
  %v250 = vadd.f32 %v56, %v249
  %v251 = vpop.f32.mrb[0].mxu0
  %v252 = vpop.f32.mrb[0].mxu0
  %v253 = vadd.f32 %v56, %v252
  %v254 = vpop.f32.mrb[0].mxu0
  %255 = vmatprep.mubr.bf16.mxu0 0
  %256 = vmatmul.mubr.bf16.gmra.mrb[0].mxu0 %v161
  %v257 = vpop.f32.mrb[0].mxu0
  %v258 = vadd.f32 %v56, %v257
  %v259 = vpop.f32.mrb[0].mxu0
  %v260 = vpop.f32.mrb[0].mxu0
  %v261 = vadd.f32 %v56, %v260
  %v262 = vpop.f32.mrb[0].mxu0
  %263 = vmatprep.mubr.bf16.mxu0 0
  %264 = vmatmul.mubr.bf16.gmra.mrb[0].mxu0 %v164
  %v265 = vpop.f32.mrb[0].mxu0
  %v266 = vadd.f32 %v56, %v265
  %v267 = vpop.f32.mrb[0].mxu0
  %v268 = vpop.f32.mrb[0].mxu0
  %v269 = vadd.f32 %v56, %v268
  %v270 = vpop.f32.mrb[0].mxu0
  %271 = vmatprep.mubr.bf16.mxu0 0
  %272 = vmatmul.mubr.bf16.gmra.mrb[0].mxu0 %v167
  %v273 = vpop.f32.mrb[0].mxu0
  %v274 = vadd.f32 %v56, %v273
  %v275 = vpop.f32.mrb[0].mxu0
  %v276 = vpop.f32.mrb[0].mxu0
  %v277 = vadd.f32 %v56, %v276
  %v278 = vpop.f32.mrb[0].mxu0
  %279 = vmatprep.mubr.bf16.mxu0 0
  %280 = vmatmul.mubr.bf16.gmra.mrb[0].mxu0 %v170
  %v281 = vpop.f32.mrb[0].mxu0
  %v282 = vadd.f32 %v56, %v281
  %v283 = vpop.f32.mrb[0].mxu0
  %v284 = vpop.f32.mrb[0].mxu0
  %v285 = vadd.f32 %v56, %v284
  %v286 = vpop.f32.mrb[0].mxu0
  %287 = vmatprep.mubr.bf16.mxu0 0
  %288 = vmatmul.mubr.bf16.gmra.mrb[0].mxu0 %v173
  %v289 = vpop.f32.mrb[0].mxu0
  %v290 = vadd.f32 %v56, %v289
  %v291 = vpop.f32.mrb[0].mxu0
  %v292 = vpop.f32.mrb[0].mxu0
  %v293 = vadd.f32 %v56, %v292
  %v294 = vpop.f32.mrb[0].mxu0
  %295 = vmatprep.mubr.bf16.mxu0 0
  %296 = vmatmul.mubr.bf16.gmra.mrb[0].mxu0 %v176
  %v297 = vpop.f32.mrb[0].mxu0
  %v298 = vadd.f32 %v56, %v297
  %v299 = vpop.f32.mrb[0].mxu0
  %v300 = vpop.f32.mrb[0].mxu0
  %v301 = vadd.f32 %v56, %v300
  %v302 = vpop.f32.mrb[0].mxu0
  %303 = vmatprep.mubr.bf16.mxu0 0
  %304 = vmatmul.mubr.bf16.gmra.mrb[0].mxu0 %v179
  %v305 = vpop.f32.mrb[0].mxu0
  %v306 = vadd.f32 %v56, %v305
  %v307 = vpop.f32.mrb[0].mxu0
  %v308 = vpop.f32.mrb[0].mxu0
  %v309 = vadd.f32 %v56, %v308
  %v310 = vpop.f32.mrb[0].mxu0
  %311 = vmatprep.mubr.bf16.mxu0 0
  %312 = vmatmul.mubr.bf16.gmra.mrb[0].mxu0 %v182
  %v313 = vpop.f32.mrb[0].mxu0
  %v314 = vadd.f32 %v56, %v313
  %v315 = vpop.f32.mrb[0].mxu0
  %v316 = vpop.f32.mrb[0].mxu0
  %v317 = vadd.f32 %v56, %v316
  %v318 = vpop.f32.mrb[0].mxu0
  %319 = vmatprep.mubr.bf16.mxu0 0
  %320 = vmatmul.mubr.bf16.gmra.mrb[0].mxu0 %v185
  %v321 = vpop.f32.mrb[0].mxu0
  %v322 = vadd.f32 %v56, %v321
  %v323 = vpop.f32.mrb[0].mxu0
  %v324 = vpop.f32.mrb[0].mxu0
  %v325 = vadd.f32 %v56, %v324
  %v326 = vpop.f32.mrb[0].mxu0
  %327 = vmatprep.mubr.bf16.mxu0 0
  %328 = vmatmul.mubr.bf16.gmra.mrb[0].mxu0 %v188
  %v329 = vpop.f32.mrb[0].mxu0
  %v330 = vadd.f32 %v56, %v329
  %v331 = vpop.f32.mrb[0].mxu0
  %v332 = vpop.f32.mrb[0].mxu0
  %v333 = vadd.f32 %v56, %v332
  %v334 = vpop.f32.mrb[0].mxu0
  %335 = vmatprep.mubr.bf16.mxu0 0
  %336 = vmatmul.mubr.bf16.gmra.mrb[0].mxu0 %v191
  %v337 = vpop.f32.mrb[0].mxu0
  %v338 = vadd.f32 %v56, %v337
  %v339 = vpop.f32.mrb[0].mxu0
  %v340 = vpop.f32.mrb[0].mxu0
  %v341 = vadd.f32 %v56, %v340
  %v342 = vpop.f32.mrb[0].mxu0
  %343 = vmatprep.mubr.bf16.mxu0 0
  %344 = vmatmul.mubr.bf16.gmra.mrb[0].mxu0 %v194
  %v345 = vpop.f32.mrb[0].mxu0
  %v346 = vadd.f32 %v56, %v345
  %v347 = vpop.f32.mrb[0].mxu0
  %v348 = vpop.f32.mrb[0].mxu0
  %v349 = vadd.f32 %v56, %v348
  %v350 = vpop.f32.mrb[0].mxu0
  %351 = vmatprep.mubr.bf16.mxu0 0
  %352 = vmatmul.mubr.bf16.gmra.mrb[0].mxu0 %v197
  %v353 = vpop.f32.mrb[0].mxu0
  %v354 = vadd.f32 %v56, %v353
  %v355 = vpop.f32.mrb[0].mxu0
  %v356 = vpop.f32.mrb[0].mxu0
  %v357 = vadd.f32 %v56, %v356
  %v358 = vpop.f32.mrb[0].mxu0
  %359 = vdwg.mxu0
  %vm360 = vcmask 441344
  %361 = vst.msk [vmem:[%s3] sm:$0xff] %vm360, %v234
  %362 = vst.msk [vmem:[%s3 + $0x8] sm:$0xff] %vm360, %v237
  %363 = vst.msk [vmem:[%s3 + $0x10] sm:$0xff] %vm360, %v242
  %364 = vst.msk [vmem:[%s3 + $0x18] sm:$0xff] %vm360, %v245
  %365 = vst.msk [vmem:[%s3 + $0x20] sm:$0xff] %vm360, %v250
  %366 = vst.msk [vmem:[%s3 + $0x28] sm:$0xff] %vm360, %v253
  %367 = vst.msk [vmem:[%s3 + $0x30] sm:$0xff] %vm360, %v258
  %368 = vst.msk [vmem:[%s3 + $0x38] sm:$0xff] %vm360, %v261
  %369 = vst.msk [vmem:[%s3 + $0x40] sm:$0xff] %vm360, %v266
  %370 = vst.msk [vmem:[%s3 + $0x48] sm:$0xff] %vm360, %v269
  %371 = vst.msk [vmem:[%s3 + $0x50] sm:$0xff] %vm360, %v274
  %372 = vst.msk [vmem:[%s3 + $0x58] sm:$0xff] %vm360, %v277
  %373 = vst.msk [vmem:[%s3 + $0x60] sm:$0xff] %vm360, %v282
  %374 = vst.msk [vmem:[%s3 + $0x68] sm:$0xff] %vm360, %v285
  %375 = vst.msk [vmem:[%s3 + $0x70] sm:$0xff] %vm360, %v290
  %376 = vst.msk [vmem:[%s3 + $0x78] sm:$0xff] %vm360, %v293
  %377 = vst.msk [vmem:[%s3 + $0x80] sm:$0xff] %vm360, %v298
  %378 = vst.msk [vmem:[%s3 + $0x88] sm:$0xff] %vm360, %v301
  %379 = vst.msk [vmem:[%s3 + $0x90] sm:$0xff] %vm360, %v306
  %380 = vst.msk [vmem:[%s3 + $0x98] sm:$0xff] %vm360, %v309
  %381 = vst.msk [vmem:[%s3 + $0xa0] sm:$0xff] %vm360, %v314
  %382 = vst.msk [vmem:[%s3 + $0xa8] sm:$0xff] %vm360, %v317
  %383 = vst.msk [vmem:[%s3 + $0xb0] sm:$0xff] %vm360, %v322
  %384 = vst.msk [vmem:[%s3 + $0xb8] sm:$0xff] %vm360, %v325
  %385 = vst.msk [vmem:[%s3 + $0xc0] sm:$0xff] %vm360, %v330
  %386 = vst.msk [vmem:[%s3 + $0xc8] sm:$0xff] %vm360, %v333
  %387 = vst.msk [vmem:[%s3 + $0xd0] sm:$0xff] %vm360, %v338
  %388 = vst.msk [vmem:[%s3 + $0xd8] sm:$0xff] %vm360, %v341
  %389 = vst.msk [vmem:[%s3 + $0xe0] sm:$0xff] %vm360, %v346
  %390 = vst.msk [vmem:[%s3 + $0xe8] sm:$0xff] %vm360, %v349
  %391 = vst.msk [vmem:[%s3 + $0xf0] sm:$0xff] %vm360, %v354
  %392 = vst.msk [vmem:[%s3 + $0xf8] sm:$0xff] %vm360, %v357
  // Predicated region
  $region14: #{rpn_forward.13} parent=0 // pred_check
    _
  $region15: #{rpn_forward.13} parent=0 // pred_check_branch
    %394 = sbr.rel (0) target = $region17
  $region16: #{rpn_forward.13} parent=0 // pred_region
    _
  $region17: #{rpn_forward.13} parent=0 // pred_fallthru
    _
  // Predicated region
  $region18: #{rpn_forward.13} parent=0 // pred_check
    _
  $region19: #{rpn_forward.13} parent=0 // pred_check_branch
    %396 = sbr.rel (0) target = $region21
  $region20: #{rpn_forward.13} parent=0 // pred_region
    _
  $region21: #{rpn_forward.13} parent=0 // pred_fallthru
    _

// kernel: rpn_forward.12
$region0: #{rpn_forward.12}
  #allocation0 [shape = 'u32[]', space=smem, size = 0x4, offset = 0x4, fixed_abs, tag = 'smem constant byte address 0x4 - core index']
  #allocation1 [shape = 'u32[144,128]{1,0:T(1,128)}', space=vmem, size = 0x12000, scoped, tag = 'internal scratch']
  %s0 = inlined_call_operand.vmem [shape: bf16[256,800], index: 0, kind: input, shape index: {}]
  %s1 = inlined_call_operand.vmem [shape: bf16[800,32], index: 1, kind: input, shape index: {}]
  %s2 = inlined_call_operand.vmem [shape: f32[1,32], index: 2, kind: input, shape index: {}]
  %s3 = inlined_call_operand.vmem [shape: f32[256,32], index: 3, kind: output, shape index: {}]
  %s4 = sld [smem:[#allocation0]]
  $region22: #{rpn_forward.12} parent=0
    _
  %s6 = ssub.s32 1, %s4
  %s7 = scalar_select 0, %s6, %s4
  // Predicated region
  $region2: #{rpn_forward.12} parent=0 // pred_check
    _
  $region3: #{rpn_forward.12} parent=0 // pred_check_branch
    %9 = sbr.rel (0) target = $region5
  $region4: #{rpn_forward.12} parent=0 // pred_region
    _
  $region5: #{rpn_forward.12} parent=0 // pred_fallthru
    _
  // Predicated region
  $region6: #{rpn_forward.12} parent=0 // pred_check
    _
  $region7: #{rpn_forward.12} parent=0 // pred_check_branch
    %11 = sbr.rel (0) target = $region9
  $region8: #{rpn_forward.12} parent=0 // pred_region
    _
  $region9: #{rpn_forward.12} parent=0 // pred_fallthru
    _
  // Predicated region
  $region10: #{rpn_forward.12} parent=0 // pred_check
    _
  $region11: #{rpn_forward.12} parent=0 // pred_check_branch
    %13 = sbr.rel (0) target = $region13
  $region12: #{rpn_forward.12} parent=0 // pred_region
    _
  $region13: #{rpn_forward.12} parent=0 // pred_fallthru
    _
  %v15 = vld [vmem:[%s0] sm:$0xff]
  %v16 = vld [vmem:[%s0 + $0x8] sm:$0xff]
  %v17 = vld [vmem:[%s0 + $0x10] sm:$0xff]
  %v18 = vld [vmem:[%s0 + $0x18] sm:$0xf]
  %v19 = vld [vmem:[%s0 + $0x1c] sm:$0xff]
  %v20 = vld [vmem:[%s0 + $0x24] sm:$0xff]
  %v21 = vld [vmem:[%s0 + $0x2c] sm:$0xff]
  %v22 = vld [vmem:[%s0 + $0x34] sm:$0xf]
  %v23 = vld [vmem:[%s0 + $0x38] sm:$0xff]
  %v24 = vld [vmem:[%s0 + $0x40] sm:$0xff]
  %v25 = vld [vmem:[%s0 + $0x48] sm:$0xff]
  %v26 = vld [vmem:[%s0 + $0x50] sm:$0xf]
  %v27 = vld [vmem:[%s0 + $0x54] sm:$0xff]
  %v28 = vld [vmem:[%s0 + $0x5c] sm:$0xff]
  %v29 = vld [vmem:[%s0 + $0x64] sm:$0xff]
  %v30 = vld [vmem:[%s0 + $0x6c] sm:$0xf]
  %v31 = vld [vmem:[%s0 + $0x70] sm:$0xff]
  %v32 = vld [vmem:[%s0 + $0x78] sm:$0xff]
  %v33 = vld [vmem:[%s0 + $0x80] sm:$0xff]
  %v34 = vld [vmem:[%s0 + $0x88] sm:$0xf]
  %v35 = vld [vmem:[%s0 + $0x8c] sm:$0xff]
  %v36 = vld [vmem:[%s0 + $0x94] sm:$0xff]
  %v37 = vld [vmem:[%s0 + $0x9c] sm:$0xff]
  %v38 = vld [vmem:[%s0 + $0xa4] sm:$0xf]
  %v39 = vld [vmem:[%s0 + $0xa8] sm:$0xff]
  %v40 = vld [vmem:[%s0 + $0xb0] sm:$0xff]
  %v41 = vld [vmem:[%s0 + $0xb8] sm:$0xff]
  %v42 = vld [vmem:[%s0 + $0xc0] sm:$0xf]
  %v43 = vld [vmem:[%s0 + $0xc4] sm:$0xff]
  %v44 = vld [vmem:[%s0 + $0xcc] sm:$0xff]
  %v45 = vld [vmem:[%s0 + $0xd4] sm:$0xff]
  %v46 = vld [vmem:[%s0 + $0xdc] sm:$0xf]
  %v47 = vld [vmem:[%s0 + $0xe0] sm:$0xff]
  %v48 = vld [vmem:[%s0 + $0xe8] sm:$0xff]
  %v49 = vld [vmem:[%s0 + $0xf0] sm:$0xff]
  %v50 = vld [vmem:[%s0 + $0xf8] sm:$0xf]
  %v51 = vld [vmem:[%s0 + $0xfc] sm:$0xff]
  %v52 = vld [vmem:[%s0 + $0x104] sm:$0xff]
  %v53 = vld [vmem:[%s0 + $0x10c] sm:$0xff]
  %v54 = vld [vmem:[%s0 + $0x114] sm:$0xf]
  %v55 = vld [vmem:[%s0 + $0x118] sm:$0xff]
  %v56 = vld [vmem:[%s0 + $0x120] sm:$0xff]
  %v57 = vld [vmem:[%s0 + $0x128] sm:$0xff]
  %v58 = vld [vmem:[%s0 + $0x130] sm:$0xf]
  %v59 = vld [vmem:[%s0 + $0x134] sm:$0xff]
  %v60 = vld [vmem:[%s0 + $0x13c] sm:$0xff]
  %v61 = vld [vmem:[%s0 + $0x144] sm:$0xff]
  %v62 = vld [vmem:[%s0 + $0x14c] sm:$0xf]
  %v63 = vld [vmem:[%s0 + $0x150] sm:$0xff]
  %v64 = vld [vmem:[%s0 + $0x158] sm:$0xff]
  %v65 = vld [vmem:[%s0 + $0x160] sm:$0xff]
  %v66 = vld [vmem:[%s0 + $0x168] sm:$0xf]
  %v67 = vld [vmem:[%s0 + $0x16c] sm:$0xff]
  %v68 = vld [vmem:[%s0 + $0x174] sm:$0xff]
  %v69 = vld [vmem:[%s0 + $0x17c] sm:$0xff]
  %v70 = vld [vmem:[%s0 + $0x184] sm:$0xf]
  %v71 = vld [vmem:[%s0 + $0x188] sm:$0xff]
  %v72 = vld [vmem:[%s0 + $0x190] sm:$0xff]
  %v73 = vld [vmem:[%s0 + $0x198] sm:$0xff]
  %v74 = vld [vmem:[%s0 + $0x1a0] sm:$0xf]
  %v75 = vld [vmem:[%s0 + $0x1a4] sm:$0xff]
  %v76 = vld [vmem:[%s0 + $0x1ac] sm:$0xff]
  %v77 = vld [vmem:[%s0 + $0x1b4] sm:$0xff]
  %v78 = vld [vmem:[%s0 + $0x1bc] sm:$0xf]
  %v79 = vld [vmem:[%s0 + $0x1c0] sm:$0xff]
  %v80 = vld [vmem:[%s0 + $0x1c8] sm:$0xff]
  %v81 = vld [vmem:[%s0 + $0x1d0] sm:$0xff]
  %v82 = vld [vmem:[%s0 + $0x1d8] sm:$0xf]
  %v83 = vld [vmem:[%s0 + $0x1dc] sm:$0xff]
  %v84 = vld [vmem:[%s0 + $0x1e4] sm:$0xff]
  %v85 = vld [vmem:[%s0 + $0x1ec] sm:$0xff]
  %v86 = vld [vmem:[%s0 + $0x1f4] sm:$0xf]
  %v87 = vld [vmem:[%s0 + $0x1f8] sm:$0xff]
  %v88 = vld [vmem:[%s0 + $0x200] sm:$0xff]
  %v89 = vld [vmem:[%s0 + $0x208] sm:$0xff]
  %v90 = vld [vmem:[%s0 + $0x210] sm:$0xf]
  %v91 = vld [vmem:[%s0 + $0x214] sm:$0xff]
  %v92 = vld [vmem:[%s0 + $0x21c] sm:$0xff]
  %v93 = vld [vmem:[%s0 + $0x224] sm:$0xff]
  %v94 = vld [vmem:[%s0 + $0x22c] sm:$0xf]
  %v95 = vld [vmem:[%s0 + $0x230] sm:$0xff]
  %v96 = vld [vmem:[%s0 + $0x238] sm:$0xff]
  %v97 = vld [vmem:[%s0 + $0x240] sm:$0xff]
  %v98 = vld [vmem:[%s0 + $0x248] sm:$0xf]
  %v99 = vld [vmem:[%s0 + $0x24c] sm:$0xff]
  %v100 = vld [vmem:[%s0 + $0x254] sm:$0xff]
  %v101 = vld [vmem:[%s0 + $0x25c] sm:$0xff]
  %v102 = vld [vmem:[%s0 + $0x264] sm:$0xf]
  %v103 = vld [vmem:[%s0 + $0x268] sm:$0xff]
  %v104 = vld [vmem:[%s0 + $0x270] sm:$0xff]
  %v105 = vld [vmem:[%s0 + $0x278] sm:$0xff]
  %v106 = vld [vmem:[%s0 + $0x280] sm:$0xf]
  %v107 = vld [vmem:[%s0 + $0x284] sm:$0xff]
  %v108 = vld [vmem:[%s0 + $0x28c] sm:$0xff]
  %v109 = vld [vmem:[%s0 + $0x294] sm:$0xff]
  %v110 = vld [vmem:[%s0 + $0x29c] sm:$0xf]
  %v111 = vld [vmem:[%s0 + $0x2a0] sm:$0xff]
  %v112 = vld [vmem:[%s0 + $0x2a8] sm:$0xff]
  %v113 = vld [vmem:[%s0 + $0x2b0] sm:$0xff]
  %v114 = vld [vmem:[%s0 + $0x2b8] sm:$0xf]
  %v115 = vld [vmem:[%s0 + $0x2bc] sm:$0xff]
  %v116 = vld [vmem:[%s0 + $0x2c4] sm:$0xff]
  %v117 = vld [vmem:[%s0 + $0x2cc] sm:$0xff]
  %v118 = vld [vmem:[%s0 + $0x2d4] sm:$0xf]
  %v119 = vld [vmem:[%s0 + $0x2d8] sm:$0xff]
  %v120 = vld [vmem:[%s0 + $0x2e0] sm:$0xff]
  %v121 = vld [vmem:[%s0 + $0x2e8] sm:$0xff]
  %v122 = vld [vmem:[%s0 + $0x2f0] sm:$0xf]
  %v123 = vld [vmem:[%s0 + $0x2f4] sm:$0xff]
  %v124 = vld [vmem:[%s0 + $0x2fc] sm:$0xff]
  %v125 = vld [vmem:[%s0 + $0x304] sm:$0xff]
  %v126 = vld [vmem:[%s0 + $0x30c] sm:$0xf]
  %v127 = vld [vmem:[%s0 + $0x310] sm:$0xff]
  %v128 = vld [vmem:[%s0 + $0x318] sm:$0xff]
  %v129 = vld [vmem:[%s0 + $0x320] sm:$0xff]
  %v130 = vld [vmem:[%s0 + $0x328] sm:$0xf]
  %v131 = vld [vmem:[%s0 + $0x32c] sm:$0xff]
  %v132 = vld [vmem:[%s0 + $0x334] sm:$0xff]
  %v133 = vld [vmem:[%s0 + $0x33c] sm:$0xff]
  %v134 = vld [vmem:[%s0 + $0x344] sm:$0xf]
  %v135 = vld [vmem:[%s0 + $0x348] sm:$0xff]
  %v136 = vld [vmem:[%s0 + $0x350] sm:$0xff]
  %v137 = vld [vmem:[%s0 + $0x358] sm:$0xff]
  %v138 = vld [vmem:[%s0 + $0x360] sm:$0xf]
  %v139 = vld [vmem:[%s0 + $0x364] sm:$0xff]
  %v140 = vld [vmem:[%s0 + $0x36c] sm:$0xff]
  %v141 = vld [vmem:[%s0 + $0x374] sm:$0xff]
  %v142 = vld [vmem:[%s0 + $0x37c] sm:$0xf]
  %v143 = vld [vmem:[%s1] sm:$0xf]
  %v144 = vld [vmem:[%s1 + $0x4] sm:$0xf]
  %v145 = vld [vmem:[%s1 + $0x8] sm:$0xf]
  %v146 = vld [vmem:[%s1 + $0xc] sm:$0xf]
  %v147 = vld [vmem:[%s1 + $0x10] sm:$0xf]
  %v148 = vld [vmem:[%s1 + $0x14] sm:$0xf]
  %v149 = vld [vmem:[%s1 + $0x18] sm:$0xf]
  %v150 = vld [vmem:[%s1 + $0x1c] sm:$0xf]
  %v151 = vld [vmem:[%s1 + $0x20] sm:$0xf]
  %v152 = vld [vmem:[%s1 + $0x24] sm:$0xf]
  %v153 = vld [vmem:[%s1 + $0x28] sm:$0xf]
  %v154 = vld [vmem:[%s1 + $0x2c] sm:$0xf]
  %v155 = vld [vmem:[%s1 + $0x30] sm:$0xf]
  %v156 = vld [vmem:[%s1 + $0x34] sm:$0xf]
  %v157 = vld [vmem:[%s1 + $0x38] sm:$0xf]
  %v158 = vld [vmem:[%s1 + $0x3c] sm:$0xf]
  %v159 = vld [vmem:[%s1 + $0x40] sm:$0xf]
  %v160 = vld [vmem:[%s1 + $0x44] sm:$0xf]
  %v161 = vld [vmem:[%s1 + $0x48] sm:$0xf]
  %v162 = vld [vmem:[%s1 + $0x4c] sm:$0xf]
  %v163 = vld [vmem:[%s1 + $0x50] sm:$0xf]
  %v164 = vld [vmem:[%s1 + $0x54] sm:$0xf]
  %v165 = vld [vmem:[%s1 + $0x58] sm:$0xf]
  %v166 = vld [vmem:[%s1 + $0x5c] sm:$0xf]
  %v167 = vld [vmem:[%s1 + $0x60] sm:$0xf]
  %v168 = vld [vmem:[%s1 + $0x64] sm:$0xf]
  %v169 = vld [vmem:[%s1 + $0x68] sm:$0xf]
  %v170 = vld [vmem:[%s1 + $0x6c] sm:$0xf]
  %v171 = vld [vmem:[%s1 + $0x70] sm:$0xf]
  %v172 = vld [vmem:[%s1 + $0x74] sm:$0xf]
  %v173 = vld [vmem:[%s1 + $0x78] sm:$0xf]
  %v174 = vld [vmem:[%s1 + $0x7c] sm:$0xf]
  %v175 = vld [vmem:[%s1 + $0x80] sm:$0xf]
  %v176 = vld [vmem:[%s1 + $0x84] sm:$0xf]
  %v177 = vld [vmem:[%s1 + $0x88] sm:$0xf]
  %v178 = vld [vmem:[%s1 + $0x8c] sm:$0xf]
  %v179 = vld [vmem:[%s1 + $0x90] sm:$0xf]
  %v180 = vld [vmem:[%s1 + $0x94] sm:$0xf]
  %v181 = vld [vmem:[%s1 + $0x98] sm:$0xf]
  %v182 = vld [vmem:[%s1 + $0x9c] sm:$0xf]
  %v183 = vld [vmem:[%s1 + $0xa0] sm:$0xf]
  %v184 = vld [vmem:[%s1 + $0xa4] sm:$0xf]
  %v185 = vld [vmem:[%s1 + $0xa8] sm:$0xf]
  %v186 = vld [vmem:[%s1 + $0xac] sm:$0xf]
  %v187 = vld [vmem:[%s1 + $0xb0] sm:$0xf]
  %v188 = vld [vmem:[%s1 + $0xb4] sm:$0xf]
  %v189 = vld [vmem:[%s1 + $0xb8] sm:$0xf]
  %v190 = vld [vmem:[%s1 + $0xbc] sm:$0xf]
  %v191 = vld [vmem:[%s1 + $0xc0] sm:$0xf]
  %v192 = vld [vmem:[%s1 + $0xc4] sm:$0xf]
  %v193 = vld [vmem:[%s1 + $0xc8] sm:$0xf]
  %v194 = vld [vmem:[%s1 + $0xcc] sm:$0xf]
  %v195 = vld [vmem:[%s1 + $0xd0] sm:$0xf]
  %v196 = vld [vmem:[%s1 + $0xd4] sm:$0xf]
  %v197 = vld [vmem:[%s1 + $0xd8] sm:$0xf]
  %v198 = vld [vmem:[%s1 + $0xdc] sm:$0xf]
  %v199 = vld [vmem:[%s1 + $0xe0] sm:$0xf]
  %v200 = vld [vmem:[%s1 + $0xe4] sm:$0xf]
  %v201 = vld [vmem:[%s1 + $0xe8] sm:$0xf]
  %v202 = vld [vmem:[%s1 + $0xec] sm:$0xf]
  %v203 = vld [vmem:[%s1 + $0xf0] sm:$0xf]
  %v204 = vld [vmem:[%s1 + $0xf4] sm:$0xf]
  %v205 = vld [vmem:[%s1 + $0xf8] sm:$0xf]
  %v206 = vld [vmem:[%s1 + $0xfc] sm:$0xf]
  %v207 = vld [vmem:[%s1 + $0x100] sm:$0xf]
  %v208 = vld [vmem:[%s1 + $0x104] sm:$0xf]
  %v209 = vld [vmem:[%s1 + $0x108] sm:$0xf]
  %v210 = vld [vmem:[%s1 + $0x10c] sm:$0xf]
  %v211 = vld [vmem:[%s1 + $0x110] sm:$0xf]
  %v212 = vld [vmem:[%s1 + $0x114] sm:$0xf]
  %v213 = vld [vmem:[%s1 + $0x118] sm:$0xf]
  %v214 = vld [vmem:[%s1 + $0x11c] sm:$0xf]
  %v215 = vld [vmem:[%s1 + $0x120] sm:$0xf]
  %v216 = vld [vmem:[%s1 + $0x124] sm:$0xf]
  %v217 = vld [vmem:[%s1 + $0x128] sm:$0xf]
  %v218 = vld [vmem:[%s1 + $0x12c] sm:$0xf]
  %v219 = vld [vmem:[%s1 + $0x130] sm:$0xf]
  %v220 = vld [vmem:[%s1 + $0x134] sm:$0xf]
  %v221 = vld [vmem:[%s1 + $0x138] sm:$0xf]
  %v222 = vld [vmem:[%s1 + $0x13c] sm:$0xf]
  %v223 = vld [vmem:[%s1 + $0x140] sm:$0xf]
  %v224 = vld [vmem:[%s1 + $0x144] sm:$0xf]
  %v225 = vld [vmem:[%s1 + $0x148] sm:$0xf]
  %v226 = vld [vmem:[%s1 + $0x14c] sm:$0xf]
  %v227 = vld [vmem:[%s1 + $0x150] sm:$0xf]
  %v228 = vld [vmem:[%s1 + $0x154] sm:$0xf]
  %v229 = vld [vmem:[%s1 + $0x158] sm:$0xf]
  %v230 = vld [vmem:[%s1 + $0x15c] sm:$0xf]
  %v231 = vld [vmem:[%s1 + $0x160] sm:$0xf]
  %v232 = vld [vmem:[%s1 + $0x164] sm:$0xf]
  %v233 = vld [vmem:[%s1 + $0x168] sm:$0xf]
  %v234 = vld [vmem:[%s1 + $0x16c] sm:$0xf]
  %v235 = vld [vmem:[%s1 + $0x170] sm:$0xf]
  %v236 = vld [vmem:[%s1 + $0x174] sm:$0xf]
  %v237 = vld [vmem:[%s1 + $0x178] sm:$0xf]
  %v238 = vld [vmem:[%s1 + $0x17c] sm:$0xf]
  %v239 = vld [vmem:[%s1 + $0x180] sm:$0xf]
  %v240 = vld [vmem:[%s1 + $0x184] sm:$0xf]
  %v241 = vld [vmem:[%s1 + $0x188] sm:$0xf]
  %v242 = vld [vmem:[%s1 + $0x18c] sm:$0xf]
  %v243 = vld [vmem:[%s2] sm:$0x1]
  %v245 = vlaneseq
  %v246 = vshrl.u32 %v245, 7
  %v247 = vsub.s32 0, %v246
  %v248 = vrot.slane %v243, %v247
  %v378 = vunpack.c.l.b16 %v15
  %v379 = vunpack.c.h.b16 %v15
  %v380 = vunpack.c.l.b16 %v16
  %v381 = vunpack.c.h.b16 %v16
  %v382 = vunpack.c.l.b16 %v17
  %v383 = vunpack.c.h.b16 %v17
  %v384 = vunpack.c.l.b16 %v18
  %v385 = vunpack.c.l.b16 %v19
  %v386 = vunpack.c.h.b16 %v19
  %v387 = vunpack.c.l.b16 %v20
  %v388 = vunpack.c.h.b16 %v20
  %v389 = vunpack.c.l.b16 %v21
  %v390 = vunpack.c.h.b16 %v21
  %v391 = vunpack.c.l.b16 %v22
  %v392 = vunpack.c.l.b16 %v23
  %v393 = vunpack.c.h.b16 %v23
  %v394 = vunpack.c.l.b16 %v24
  %v395 = vunpack.c.h.b16 %v24
  %v396 = vunpack.c.l.b16 %v25
  %v397 = vunpack.c.h.b16 %v25
  %v398 = vunpack.c.l.b16 %v26
  %v399 = vunpack.c.l.b16 %v27
  %v400 = vunpack.c.h.b16 %v27
  %v401 = vunpack.c.l.b16 %v28
  %v402 = vunpack.c.h.b16 %v28
  %v403 = vunpack.c.l.b16 %v29
  %v404 = vunpack.c.h.b16 %v29
  %v405 = vunpack.c.l.b16 %v30
  %v406 = vunpack.c.l.b16 %v31
  %v407 = vunpack.c.h.b16 %v31
  %v408 = vunpack.c.l.b16 %v32
  %v409 = vunpack.c.h.b16 %v32
  %v410 = vunpack.c.l.b16 %v33
  %v411 = vunpack.c.h.b16 %v33
  %v412 = vunpack.c.l.b16 %v34
  %v413 = vunpack.c.l.b16 %v35
  %v414 = vunpack.c.h.b16 %v35
  %v415 = vunpack.c.l.b16 %v36
  %v416 = vunpack.c.h.b16 %v36
  %v417 = vunpack.c.l.b16 %v37
  %v418 = vunpack.c.h.b16 %v37
  %v419 = vunpack.c.l.b16 %v38
  %v420 = vunpack.c.l.b16 %v39
  %v421 = vunpack.c.h.b16 %v39
  %v422 = vunpack.c.l.b16 %v40
  %v423 = vunpack.c.h.b16 %v40
  %v424 = vunpack.c.l.b16 %v41
  %v425 = vunpack.c.h.b16 %v41
  %v426 = vunpack.c.l.b16 %v42
  %v427 = vunpack.c.l.b16 %v43
  %v428 = vunpack.c.h.b16 %v43
  %v429 = vunpack.c.l.b16 %v44
  %v430 = vunpack.c.h.b16 %v44
  %v431 = vunpack.c.l.b16 %v45
  %v432 = vunpack.c.h.b16 %v45
  %v433 = vunpack.c.l.b16 %v46
  %v434 = vunpack.c.l.b16 %v47
  %v435 = vunpack.c.h.b16 %v47
  %v436 = vunpack.c.l.b16 %v48
  %v437 = vunpack.c.h.b16 %v48
  %v438 = vunpack.c.l.b16 %v49
  %v439 = vunpack.c.h.b16 %v49
  %v440 = vunpack.c.l.b16 %v50
  %v441 = vunpack.c.l.b16 %v51
  %v442 = vunpack.c.h.b16 %v51
  %v443 = vunpack.c.l.b16 %v52
  %v444 = vunpack.c.h.b16 %v52
  %v445 = vunpack.c.l.b16 %v53
  %v446 = vunpack.c.h.b16 %v53
  %v447 = vunpack.c.l.b16 %v54
  %v448 = vunpack.c.l.b16 %v55
  %v449 = vunpack.c.h.b16 %v55
  %v450 = vunpack.c.l.b16 %v56
  %v451 = vunpack.c.h.b16 %v56
  %v452 = vunpack.c.l.b16 %v57
  %v453 = vunpack.c.h.b16 %v57
  %v454 = vunpack.c.l.b16 %v58
  %v455 = vunpack.c.l.b16 %v59
  %v456 = vunpack.c.h.b16 %v59
  %v457 = vunpack.c.l.b16 %v60
  %v458 = vunpack.c.h.b16 %v60
  %v459 = vunpack.c.l.b16 %v61
  %v460 = vunpack.c.h.b16 %v61
  %v461 = vunpack.c.l.b16 %v62
  %v462 = vunpack.c.l.b16 %v63
  %v463 = vunpack.c.h.b16 %v63
  %v464 = vunpack.c.l.b16 %v64
  %v465 = vunpack.c.h.b16 %v64
  %v466 = vunpack.c.l.b16 %v65
  %v467 = vunpack.c.h.b16 %v65
  %v468 = vunpack.c.l.b16 %v66
  %v469 = vunpack.c.l.b16 %v67
  %v470 = vunpack.c.h.b16 %v67
  %v471 = vunpack.c.l.b16 %v68
  %v472 = vunpack.c.h.b16 %v68
  %v473 = vunpack.c.l.b16 %v69
  %v474 = vunpack.c.h.b16 %v69
  %v475 = vunpack.c.l.b16 %v70
  %v476 = vunpack.c.l.b16 %v71
  %v477 = vunpack.c.h.b16 %v71
  %v478 = vunpack.c.l.b16 %v72
  %v479 = vunpack.c.h.b16 %v72
  %v480 = vunpack.c.l.b16 %v73
  %v481 = vunpack.c.h.b16 %v73
  %v482 = vunpack.c.l.b16 %v74
  %v483 = vunpack.c.l.b16 %v75
  %v484 = vunpack.c.h.b16 %v75
  %v485 = vunpack.c.l.b16 %v76
  %v486 = vunpack.c.h.b16 %v76
  %v487 = vunpack.c.l.b16 %v77
  %v488 = vunpack.c.h.b16 %v77
  %v489 = vunpack.c.l.b16 %v78
  %v490 = vunpack.c.l.b16 %v79
  %v491 = vunpack.c.h.b16 %v79
  %v492 = vunpack.c.l.b16 %v80
  %v493 = vunpack.c.h.b16 %v80
  %v494 = vunpack.c.l.b16 %v81
  %v495 = vunpack.c.h.b16 %v81
  %v496 = vunpack.c.l.b16 %v82
  %v497 = vunpack.c.l.b16 %v83
  %v498 = vunpack.c.h.b16 %v83
  %v499 = vunpack.c.l.b16 %v84
  %v500 = vunpack.c.h.b16 %v84
  %v501 = vunpack.c.l.b16 %v85
  %v502 = vunpack.c.h.b16 %v85
  %v503 = vunpack.c.l.b16 %v86
  %v504 = vunpack.c.l.b16 %v87
  %v505 = vunpack.c.h.b16 %v87
  %v506 = vunpack.c.l.b16 %v88
  %v507 = vunpack.c.h.b16 %v88
  %v508 = vunpack.c.l.b16 %v89
  %v509 = vunpack.c.h.b16 %v89
  %v510 = vunpack.c.l.b16 %v90
  %v511 = vunpack.c.l.b16 %v91
  %v512 = vunpack.c.h.b16 %v91
  %v513 = vunpack.c.l.b16 %v92
  %v514 = vunpack.c.h.b16 %v92
  %v515 = vunpack.c.l.b16 %v93
  %v516 = vunpack.c.h.b16 %v93
  %v517 = vunpack.c.l.b16 %v94
  %v518 = vunpack.c.l.b16 %v95
  %v519 = vunpack.c.h.b16 %v95
  %v520 = vunpack.c.l.b16 %v96
  %v521 = vunpack.c.h.b16 %v96
  %v522 = vunpack.c.l.b16 %v97
  %v523 = vunpack.c.h.b16 %v97
  %v524 = vunpack.c.l.b16 %v98
  %v525 = vunpack.c.l.b16 %v99
  %v526 = vunpack.c.h.b16 %v99
  %v527 = vunpack.c.l.b16 %v100
  %v528 = vunpack.c.h.b16 %v100
  %v529 = vunpack.c.l.b16 %v101
  %v530 = vunpack.c.h.b16 %v101
  %v531 = vunpack.c.l.b16 %v102
  %v532 = vunpack.c.l.b16 %v103
  %v533 = vunpack.c.h.b16 %v103
  %v534 = vunpack.c.l.b16 %v104
  %v535 = vunpack.c.h.b16 %v104
  %v536 = vunpack.c.l.b16 %v105
  %v537 = vunpack.c.h.b16 %v105
  %v538 = vunpack.c.l.b16 %v106
  %v539 = vunpack.c.l.b16 %v107
  %v540 = vunpack.c.h.b16 %v107
  %v541 = vunpack.c.l.b16 %v108
  %v542 = vunpack.c.h.b16 %v108
  %v543 = vunpack.c.l.b16 %v109
  %v544 = vunpack.c.h.b16 %v109
  %v545 = vunpack.c.l.b16 %v110
  %v546 = vunpack.c.l.b16 %v111
  %v547 = vunpack.c.h.b16 %v111
  %v548 = vunpack.c.l.b16 %v112
  %v549 = vunpack.c.h.b16 %v112
  %v550 = vunpack.c.l.b16 %v113
  %v551 = vunpack.c.h.b16 %v113
  %v552 = vunpack.c.l.b16 %v114
  %v553 = vunpack.c.l.b16 %v115
  %v554 = vunpack.c.h.b16 %v115
  %v555 = vunpack.c.l.b16 %v116
  %v556 = vunpack.c.h.b16 %v116
  %v557 = vunpack.c.l.b16 %v117
  %v558 = vunpack.c.h.b16 %v117
  %v559 = vunpack.c.l.b16 %v118
  %v560 = vunpack.c.l.b16 %v119
  %v561 = vunpack.c.h.b16 %v119
  %v562 = vunpack.c.l.b16 %v120
  %v563 = vunpack.c.h.b16 %v120
  %v564 = vunpack.c.l.b16 %v121
  %v565 = vunpack.c.h.b16 %v121
  %v566 = vunpack.c.l.b16 %v122
  %v567 = vunpack.c.l.b16 %v123
  %v568 = vunpack.c.h.b16 %v123
  %v569 = vunpack.c.l.b16 %v124
  %v570 = vunpack.c.h.b16 %v124
  %v571 = vunpack.c.l.b16 %v125
  %v572 = vunpack.c.h.b16 %v125
  %v573 = vunpack.c.l.b16 %v126
  %v574 = vunpack.c.l.b16 %v127
  %v575 = vunpack.c.h.b16 %v127
  %v576 = vunpack.c.l.b16 %v128
  %v577 = vunpack.c.h.b16 %v128
  %v578 = vunpack.c.l.b16 %v129
  %v579 = vunpack.c.h.b16 %v129
  %v580 = vunpack.c.l.b16 %v130
  %v581 = vunpack.c.l.b16 %v131
  %v582 = vunpack.c.h.b16 %v131
  %v583 = vunpack.c.l.b16 %v132
  %v584 = vunpack.c.h.b16 %v132
  %v585 = vunpack.c.l.b16 %v133
  %v586 = vunpack.c.h.b16 %v133
  %v587 = vunpack.c.l.b16 %v134
  %v588 = vunpack.c.l.b16 %v135
  %v589 = vunpack.c.h.b16 %v135
  %v590 = vunpack.c.l.b16 %v136
  %v591 = vunpack.c.h.b16 %v136
  %v592 = vunpack.c.l.b16 %v137
  %v593 = vunpack.c.h.b16 %v137
  %v594 = vunpack.c.l.b16 %v138
  %v595 = vunpack.c.l.b16 %v139
  %v596 = vunpack.c.h.b16 %v139
  %v597 = vunpack.c.l.b16 %v140
  %v598 = vunpack.c.h.b16 %v140
  %v599 = vunpack.c.l.b16 %v141
  %v600 = vunpack.c.h.b16 %v141
  %v601 = vunpack.c.l.b16 %v142
  %v602 = vpack.c.b16 %v385, %v378
  %v603 = vpack.c.b16 %v386, %v379
  %v604 = vpack.c.b16 %v387, %v380
  %v605 = vpack.c.b16 %v388, %v381
  %v606 = vpack.c.b16 %v389, %v382
  %v607 = vpack.c.b16 %v390, %v383
  %v608 = vpack.c.b16 %v391, %v384
  %v609 = vpack.c.b16 %v399, %v392
  %v610 = vpack.c.b16 %v400, %v393
  %v611 = vpack.c.b16 %v401, %v394
  %v612 = vpack.c.b16 %v402, %v395
  %v613 = vpack.c.b16 %v403, %v396
  %v614 = vpack.c.b16 %v404, %v397
  %v615 = vpack.c.b16 %v405, %v398
  %v616 = vpack.c.b16 %v413, %v406
  %v617 = vpack.c.b16 %v414, %v407
  %v618 = vpack.c.b16 %v415, %v408
  %v619 = vpack.c.b16 %v416, %v409
  %v620 = vpack.c.b16 %v417, %v410
  %v621 = vpack.c.b16 %v418, %v411
  %v622 = vpack.c.b16 %v419, %v412
  %v623 = vpack.c.b16 %v427, %v420
  %v624 = vpack.c.b16 %v428, %v421
  %v625 = vpack.c.b16 %v429, %v422
  %v626 = vpack.c.b16 %v430, %v423
  %v627 = vpack.c.b16 %v431, %v424
  %v628 = vpack.c.b16 %v432, %v425
  %v629 = vpack.c.b16 %v433, %v426
  %v630 = vpack.c.b16 %v441, %v434
  %v631 = vpack.c.b16 %v442, %v435
  %v632 = vpack.c.b16 %v443, %v436
  %v633 = vpack.c.b16 %v444, %v437
  %v634 = vpack.c.b16 %v445, %v438
  %v635 = vpack.c.b16 %v446, %v439
  %v636 = vpack.c.b16 %v447, %v440
  %v637 = vpack.c.b16 %v455, %v448
  %v638 = vpack.c.b16 %v456, %v449
  %v639 = vpack.c.b16 %v457, %v450
  %v640 = vpack.c.b16 %v458, %v451
  %v641 = vpack.c.b16 %v459, %v452
  %v642 = vpack.c.b16 %v460, %v453
  %v643 = vpack.c.b16 %v461, %v454
  %v644 = vpack.c.b16 %v469, %v462
  %v645 = vpack.c.b16 %v470, %v463
  %v646 = vpack.c.b16 %v471, %v464
  %v647 = vpack.c.b16 %v472, %v465
  %v648 = vpack.c.b16 %v473, %v466
  %v649 = vpack.c.b16 %v474, %v467
  %v650 = vpack.c.b16 %v475, %v468
  %v651 = vpack.c.b16 %v483, %v476
  %v652 = vpack.c.b16 %v484, %v477
  %v653 = vpack.c.b16 %v485, %v478
  %v654 = vpack.c.b16 %v486, %v479
  %v655 = vpack.c.b16 %v487, %v480
  %v656 = vpack.c.b16 %v488, %v481
  %v657 = vpack.c.b16 %v489, %v482
  %v658 = vpack.c.b16 %v497, %v490
  %v659 = vpack.c.b16 %v498, %v491
  %v660 = vpack.c.b16 %v499, %v492
  %v661 = vpack.c.b16 %v500, %v493
  %v662 = vpack.c.b16 %v501, %v494
  %v663 = vpack.c.b16 %v502, %v495
  %v664 = vpack.c.b16 %v503, %v496
  %v665 = vpack.c.b16 %v511, %v504
  %v666 = vpack.c.b16 %v512, %v505
  %v667 = vpack.c.b16 %v513, %v506
  %v668 = vpack.c.b16 %v514, %v507
  %v669 = vpack.c.b16 %v515, %v508
  %v670 = vpack.c.b16 %v516, %v509
  %v671 = vpack.c.b16 %v517, %v510
  %v672 = vpack.c.b16 %v525, %v518
  %v673 = vpack.c.b16 %v526, %v519
  %v674 = vpack.c.b16 %v527, %v520
  %v675 = vpack.c.b16 %v528, %v521
  %v676 = vpack.c.b16 %v529, %v522
  %v677 = vpack.c.b16 %v530, %v523
  %v678 = vpack.c.b16 %v531, %v524
  %v679 = vpack.c.b16 %v539, %v532
  %v680 = vpack.c.b16 %v540, %v533
  %v681 = vpack.c.b16 %v541, %v534
  %v682 = vpack.c.b16 %v542, %v535
  %v683 = vpack.c.b16 %v543, %v536
  %v684 = vpack.c.b16 %v544, %v537
  %v685 = vpack.c.b16 %v545, %v538
  %v686 = vpack.c.b16 %v553, %v546
  %v687 = vpack.c.b16 %v554, %v547
  %v688 = vpack.c.b16 %v555, %v548
  %v689 = vpack.c.b16 %v556, %v549
  %v690 = vpack.c.b16 %v557, %v550
  %v691 = vpack.c.b16 %v558, %v551
  %v692 = vpack.c.b16 %v559, %v552
  %v693 = vpack.c.b16 %v567, %v560
  %v694 = vpack.c.b16 %v568, %v561
  %v695 = vpack.c.b16 %v569, %v562
  %v696 = vpack.c.b16 %v570, %v563
  %v697 = vpack.c.b16 %v571, %v564
  %v698 = vpack.c.b16 %v572, %v565
  %v699 = vpack.c.b16 %v573, %v566
  %v700 = vpack.c.b16 %v581, %v574
  %v701 = vpack.c.b16 %v582, %v575
  %v702 = vpack.c.b16 %v583, %v576
  %v703 = vpack.c.b16 %v584, %v577
  %v704 = vpack.c.b16 %v585, %v578
  %v705 = vpack.c.b16 %v586, %v579
  %v706 = vpack.c.b16 %v587, %v580
  %v707 = vpack.c.b16 %v595, %v588
  %v708 = vpack.c.b16 %v596, %v589
  %v709 = vpack.c.b16 %v597, %v590
  %v710 = vpack.c.b16 %v598, %v591
  %v711 = vpack.c.b16 %v599, %v592
  %v712 = vpack.c.b16 %v600, %v593
  %v713 = vpack.c.b16 %v601, %v594
  %v910 = vunpack.c.l.b16 %v143
  %v911 = vunpack.c.l.b16 %v144
  %v912 = vunpack.c.l.b16 %v145
  %v913 = vunpack.c.l.b16 %v146
  %v914 = vunpack.c.l.b16 %v147
  %v915 = vunpack.c.l.b16 %v148
  %v916 = vunpack.c.l.b16 %v149
  %v917 = vunpack.c.l.b16 %v150
  %v918 = vunpack.c.l.b16 %v151
  %v919 = vunpack.c.l.b16 %v152
  %v920 = vunpack.c.l.b16 %v153
  %v921 = vunpack.c.l.b16 %v154
  %v922 = vunpack.c.l.b16 %v155
  %v923 = vunpack.c.l.b16 %v156
  %v924 = vunpack.c.l.b16 %v157
  %v925 = vunpack.c.l.b16 %v158
  %v926 = vunpack.c.l.b16 %v159
  %v927 = vunpack.c.l.b16 %v160
  %v928 = vunpack.c.l.b16 %v161
  %v929 = vunpack.c.l.b16 %v162
  %v930 = vunpack.c.l.b16 %v163
  %v931 = vunpack.c.l.b16 %v164
  %v932 = vunpack.c.l.b16 %v165
  %v933 = vunpack.c.l.b16 %v166
  %v934 = vunpack.c.l.b16 %v167
  %v935 = vunpack.c.l.b16 %v168
  %v936 = vunpack.c.l.b16 %v169
  %v937 = vunpack.c.l.b16 %v170
  %v938 = vunpack.c.l.b16 %v171
  %v939 = vunpack.c.l.b16 %v172
  %v940 = vunpack.c.l.b16 %v173
  %v941 = vunpack.c.l.b16 %v174
  %v942 = vunpack.c.l.b16 %v175
  %v943 = vunpack.c.l.b16 %v176
  %v944 = vunpack.c.l.b16 %v177
  %v945 = vunpack.c.l.b16 %v178
  %v946 = vunpack.c.l.b16 %v179
  %v947 = vunpack.c.l.b16 %v180
  %v948 = vunpack.c.l.b16 %v181
  %v949 = vunpack.c.l.b16 %v182
  %v950 = vunpack.c.l.b16 %v183
  %v951 = vunpack.c.l.b16 %v184
  %v952 = vunpack.c.l.b16 %v185
  %v953 = vunpack.c.l.b16 %v186
  %v954 = vunpack.c.l.b16 %v187
  %v955 = vunpack.c.l.b16 %v188
  %v956 = vunpack.c.l.b16 %v189
  %v957 = vunpack.c.l.b16 %v190
  %v958 = vunpack.c.l.b16 %v191
  %v959 = vunpack.c.l.b16 %v192
  %v960 = vunpack.c.l.b16 %v193
  %v961 = vunpack.c.l.b16 %v194
  %v962 = vunpack.c.l.b16 %v195
  %v963 = vunpack.c.l.b16 %v196
  %v964 = vunpack.c.l.b16 %v197
  %v965 = vunpack.c.l.b16 %v198
  %v966 = vunpack.c.l.b16 %v199
  %v967 = vunpack.c.l.b16 %v200
  %v968 = vunpack.c.l.b16 %v201
  %v969 = vunpack.c.l.b16 %v202
  %v970 = vunpack.c.l.b16 %v203
  %v971 = vunpack.c.l.b16 %v204
  %v972 = vunpack.c.l.b16 %v205
  %v973 = vunpack.c.l.b16 %v206
  %v974 = vunpack.c.l.b16 %v207
  %v975 = vunpack.c.l.b16 %v208
  %v976 = vunpack.c.l.b16 %v209
  %v977 = vunpack.c.l.b16 %v210
  %v978 = vunpack.c.l.b16 %v211
  %v979 = vunpack.c.l.b16 %v212
  %v980 = vunpack.c.l.b16 %v213
  %v981 = vunpack.c.l.b16 %v214
  %v982 = vunpack.c.l.b16 %v215
  %v983 = vunpack.c.l.b16 %v216
  %v984 = vunpack.c.l.b16 %v217
  %v985 = vunpack.c.l.b16 %v218
  %v986 = vunpack.c.l.b16 %v219
  %v987 = vunpack.c.l.b16 %v220
  %v988 = vunpack.c.l.b16 %v221
  %v989 = vunpack.c.l.b16 %v222
  %v990 = vunpack.c.l.b16 %v223
  %v991 = vunpack.c.l.b16 %v224
  %v992 = vunpack.c.l.b16 %v225
  %v993 = vunpack.c.l.b16 %v226
  %v994 = vunpack.c.l.b16 %v227
  %v995 = vunpack.c.l.b16 %v228
  %v996 = vunpack.c.l.b16 %v229
  %v997 = vunpack.c.l.b16 %v230
  %v998 = vunpack.c.l.b16 %v231
  %v999 = vunpack.c.l.b16 %v232
  %v1000 = vunpack.c.l.b16 %v233
  %v1001 = vunpack.c.l.b16 %v234
  %v1002 = vunpack.c.l.b16 %v235
  %v1003 = vunpack.c.l.b16 %v236
  %v1004 = vunpack.c.l.b16 %v237
  %v1005 = vunpack.c.l.b16 %v238
  %v1006 = vunpack.c.l.b16 %v239
  %v1007 = vunpack.c.l.b16 %v240
  %v1008 = vunpack.c.l.b16 %v241
  %v1009 = vunpack.c.l.b16 %v242
  %v1010 = vpack.c.b16 %v911, %v910
  %v1011 = vpack.c.b16 %v913, %v912
  %v1012 = vpack.c.b16 %v915, %v914
  %v1013 = vpack.c.b16 %v917, %v916
  %v1014 = vpack.c.b16 %v919, %v918
  %v1015 = vpack.c.b16 %v921, %v920
  %v1016 = vpack.c.b16 %v923, %v922
  %v1017 = vpack.c.b16 %v925, %v924
  %v1018 = vpack.c.b16 %v927, %v926
  %v1019 = vpack.c.b16 %v929, %v928
  %v1020 = vpack.c.b16 %v931, %v930
  %v1021 = vpack.c.b16 %v933, %v932
  %v1022 = vpack.c.b16 %v935, %v934
  %v1023 = vpack.c.b16 %v937, %v936
  %v1024 = vpack.c.b16 %v939, %v938
  %v1025 = vpack.c.b16 %v941, %v940
  %v1026 = vpack.c.b16 %v943, %v942
  %v1027 = vpack.c.b16 %v945, %v944
  %v1028 = vpack.c.b16 %v947, %v946
  %v1029 = vpack.c.b16 %v949, %v948
  %v1030 = vpack.c.b16 %v951, %v950
  %v1031 = vpack.c.b16 %v953, %v952
  %v1032 = vpack.c.b16 %v955, %v954
  %v1033 = vpack.c.b16 %v957, %v956
  %v1034 = vpack.c.b16 %v959, %v958
  %v1035 = vpack.c.b16 %v961, %v960
  %v1036 = vpack.c.b16 %v963, %v962
  %v1037 = vpack.c.b16 %v965, %v964
  %v1038 = vpack.c.b16 %v967, %v966
  %v1039 = vpack.c.b16 %v969, %v968
  %v1040 = vpack.c.b16 %v971, %v970
  %v1041 = vpack.c.b16 %v973, %v972
  %v1042 = vpack.c.b16 %v975, %v974
  %v1043 = vpack.c.b16 %v977, %v976
  %v1044 = vpack.c.b16 %v979, %v978
  %v1045 = vpack.c.b16 %v981, %v980
  %v1046 = vpack.c.b16 %v983, %v982
  %v1047 = vpack.c.b16 %v985, %v984
  %v1048 = vpack.c.b16 %v987, %v986
  %v1049 = vpack.c.b16 %v989, %v988
  %v1050 = vpack.c.b16 %v991, %v990
  %v1051 = vpack.c.b16 %v993, %v992
  %v1052 = vpack.c.b16 %v995, %v994
  %v1053 = vpack.c.b16 %v997, %v996
  %v1054 = vpack.c.b16 %v999, %v998
  %v1055 = vpack.c.b16 %v1001, %v1000
  %v1056 = vpack.c.b16 %v1003, %v1002
  %v1057 = vpack.c.b16 %v1005, %v1004
  %v1058 = vpack.c.b16 %v1007, %v1006
  %v1059 = vpack.c.b16 %v1009, %v1008
  %vm1110 = vcmask 261120
  %v1112 = vsel %vm1110, %v608, 0
  %v1115 = vsel %vm1110, %v615, 0
  %v1118 = vsel %vm1110, %v622, 0
  %v1121 = vsel %vm1110, %v629, 0
  %v1124 = vsel %vm1110, %v636, 0
  %v1127 = vsel %vm1110, %v643, 0
  %v1130 = vsel %vm1110, %v650, 0
  %v1133 = vsel %vm1110, %v657, 0
  %v1136 = vsel %vm1110, %v664, 0
  %v1139 = vsel %vm1110, %v671, 0
  %v1142 = vsel %vm1110, %v678, 0
  %v1145 = vsel %vm1110, %v685, 0
  %v1148 = vsel %vm1110, %v692, 0
  %v1151 = vsel %vm1110, %v699, 0
  %v1154 = vsel %vm1110, %v706, 0
  %v1157 = vsel %vm1110, %v713, 0
  %1159 = vmatprep.subr.bf16.mxu0 0
  %1160 = vmatpush1.bf16.msra.mxu0 %v1010
  %1161 = vmatprep.subr.bf16.mxu0 0
  %1162 = vmatpush1.bf16.msra.mxu0 %v1011
  %1163 = vmatprep.subr.bf16.mxu0 0
  %1164 = vmatpush1.bf16.msra.mxu0 %v1012
  %1165 = vmatprep.subr.bf16.mxu0 0
  %1166 = vmatpush1.bf16.msra.mxu0 %v1013
  %1167 = vmatprep.subr.bf16.mxu0 0
  %1168 = vmatpush1.bf16.msra.mxu0 %v1014
  %1169 = vmatprep.subr.bf16.mxu0 0
  %1170 = vmatpush1.bf16.msra.mxu0 %v1015
  %1171 = vmatprep.subr.bf16.mxu0 0
  %1172 = vmatpush1.bf16.msra.mxu0 %v1016
  %1173 = vmatprep.subr.bf16.mxu0 0
  %1174 = vmatpush1.bf16.msra.mxu0 %v1017
  %1175 = vmatprep.subr.bf16.mxu0 0
  %1176 = vmatpush1.bf16.msra.mxu0 %v1018
  %1177 = vmatprep.subr.bf16.mxu0 0
  %1178 = vmatpush1.bf16.msra.mxu0 %v1019
  %1179 = vmatprep.subr.bf16.mxu0 0
  %1180 = vmatpush1.bf16.msra.mxu0 %v1020
  %1181 = vmatprep.subr.bf16.mxu0 0
  %1182 = vmatpush1.bf16.msra.mxu0 %v1021
  %1183 = vmatprep.subr.bf16.mxu0 0
  %1184 = vmatpush1.bf16.msra.mxu0 %v1022
  %1185 = vmatprep.subr.bf16.mxu0 0
  %1186 = vmatpush1.bf16.msra.mxu0 %v1023
  %1187 = vmatprep.subr.bf16.mxu0 0
  %1188 = vmatpush1.bf16.msra.mxu0 %v1024
  %1189 = vmatprep.subr.bf16.mxu0 0
  %1190 = vmatpush1.bf16.msra.mxu0 %v1025
  %1191 = vmatprep.mubr.bf16.mxu0 %v603
  %1192 = vmatmul.mubr.bf16.gmra.mrb[0].mxu0 %v602
  %v1193 = vpop.f32.mrb[0].mxu0
  %v1194 = vadd.f32 %v248, %v1193
  %v1195 = vpop.f32.mrb[0].mxu0
  %v1196 = vpop.f32.mrb[0].mxu0
  %v1197 = vadd.f32 %v248, %v1196
  %v1198 = vpop.f32.mrb[0].mxu0
  %1199 = vmatprep.mubr.bf16.mxu0 %v610
  %1200 = vmatmul.mubr.bf16.gmra.mrb[0].mxu0 %v609
  %v1201 = vpop.f32.mrb[0].mxu0
  %v1202 = vadd.f32 %v248, %v1201
  %v1203 = vpop.f32.mrb[0].mxu0
  %v1204 = vpop.f32.mrb[0].mxu0
  %v1205 = vadd.f32 %v248, %v1204
  %v1206 = vpop.f32.mrb[0].mxu0
  %1207 = vmatprep.mubr.bf16.mxu0 %v617
  %1208 = vmatmul.mubr.bf16.gmra.mrb[0].mxu0 %v616
  %v1209 = vpop.f32.mrb[0].mxu0
  %v1210 = vadd.f32 %v248, %v1209
  %v1211 = vpop.f32.mrb[0].mxu0
  %v1212 = vpop.f32.mrb[0].mxu0
  %v1213 = vadd.f32 %v248, %v1212
  %v1214 = vpop.f32.mrb[0].mxu0
  %1215 = vmatprep.mubr.bf16.mxu0 %v624
  %1216 = vmatmul.mubr.bf16.gmra.mrb[0].mxu0 %v623
  %v1217 = vpop.f32.mrb[0].mxu0
  %v1218 = vadd.f32 %v248, %v1217
  %v1219 = vpop.f32.mrb[0].mxu0
  %v1220 = vpop.f32.mrb[0].mxu0
  %v1221 = vadd.f32 %v248, %v1220
  %v1222 = vpop.f32.mrb[0].mxu0
  %1223 = vmatprep.mubr.bf16.mxu0 %v631
  %1224 = vmatmul.mubr.bf16.gmra.mrb[0].mxu0 %v630
  %v1225 = vpop.f32.mrb[0].mxu0
  %v1226 = vadd.f32 %v248, %v1225
  %v1227 = vpop.f32.mrb[0].mxu0
  %v1228 = vpop.f32.mrb[0].mxu0
  %v1229 = vadd.f32 %v248, %v1228
  %v1230 = vpop.f32.mrb[0].mxu0
  %1231 = vmatprep.mubr.bf16.mxu0 %v638
  %1232 = vmatmul.mubr.bf16.gmra.mrb[0].mxu0 %v637
  %v1233 = vpop.f32.mrb[0].mxu0
  %v1234 = vadd.f32 %v248, %v1233
  %v1235 = vpop.f32.mrb[0].mxu0
  %v1236 = vpop.f32.mrb[0].mxu0
  %v1237 = vadd.f32 %v248, %v1236
  %v1238 = vpop.f32.mrb[0].mxu0
  %1239 = vmatprep.mubr.bf16.mxu0 %v645
  %1240 = vmatmul.mubr.bf16.gmra.mrb[0].mxu0 %v644
  %v1241 = vpop.f32.mrb[0].mxu0
  %v1242 = vadd.f32 %v248, %v1241
  %v1243 = vpop.f32.mrb[0].mxu0
  %v1244 = vpop.f32.mrb[0].mxu0
  %v1245 = vadd.f32 %v248, %v1244
  %v1246 = vpop.f32.mrb[0].mxu0
  %1247 = vmatprep.mubr.bf16.mxu0 %v652
  %1248 = vmatmul.mubr.bf16.gmra.mrb[0].mxu0 %v651
  %v1249 = vpop.f32.mrb[0].mxu0
  %v1250 = vadd.f32 %v248, %v1249
  %v1251 = vpop.f32.mrb[0].mxu0
  %v1252 = vpop.f32.mrb[0].mxu0
  %v1253 = vadd.f32 %v248, %v1252
  %v1254 = vpop.f32.mrb[0].mxu0
  %1255 = vmatprep.mubr.bf16.mxu0 %v659
  %1256 = vmatmul.mubr.bf16.gmra.mrb[0].mxu0 %v658
  %v1257 = vpop.f32.mrb[0].mxu0
  %v1258 = vadd.f32 %v248, %v1257
  %v1259 = vpop.f32.mrb[0].mxu0
  %v1260 = vpop.f32.mrb[0].mxu0
  %v1261 = vadd.f32 %v248, %v1260
  %v1262 = vpop.f32.mrb[0].mxu0
  %1263 = vmatprep.mubr.bf16.mxu0 %v666
  %1264 = vmatmul.mubr.bf16.gmra.mrb[0].mxu0 %v665
  %v1265 = vpop.f32.mrb[0].mxu0
  %v1266 = vadd.f32 %v248, %v1265
  %v1267 = vpop.f32.mrb[0].mxu0
  %v1268 = vpop.f32.mrb[0].mxu0
  %v1269 = vadd.f32 %v248, %v1268
  %v1270 = vpop.f32.mrb[0].mxu0
  %1271 = vmatprep.mubr.bf16.mxu0 %v673
  %1272 = vmatmul.mubr.bf16.gmra.mrb[0].mxu0 %v672
  %v1273 = vpop.f32.mrb[0].mxu0
  %v1274 = vadd.f32 %v248, %v1273
  %v1275 = vpop.f32.mrb[0].mxu0
  %v1276 = vpop.f32.mrb[0].mxu0
  %v1277 = vadd.f32 %v248, %v1276
  %v1278 = vpop.f32.mrb[0].mxu0
  %1279 = vmatprep.mubr.bf16.mxu0 %v680
  %1280 = vmatmul.mubr.bf16.gmra.mrb[0].mxu0 %v679
  %v1281 = vpop.f32.mrb[0].mxu0
  %v1282 = vadd.f32 %v248, %v1281
  %v1283 = vpop.f32.mrb[0].mxu0
  %v1284 = vpop.f32.mrb[0].mxu0
  %v1285 = vadd.f32 %v248, %v1284
  %v1286 = vpop.f32.mrb[0].mxu0
  %1287 = vmatprep.mubr.bf16.mxu0 %v687
  %1288 = vmatmul.mubr.bf16.gmra.mrb[0].mxu0 %v686
  %v1289 = vpop.f32.mrb[0].mxu0
  %v1290 = vadd.f32 %v248, %v1289
  %v1291 = vpop.f32.mrb[0].mxu0
  %v1292 = vpop.f32.mrb[0].mxu0
  %v1293 = vadd.f32 %v248, %v1292
  %v1294 = vpop.f32.mrb[0].mxu0
  %1295 = vmatprep.mubr.bf16.mxu0 %v694
  %1296 = vmatmul.mubr.bf16.gmra.mrb[0].mxu0 %v693
  %v1297 = vpop.f32.mrb[0].mxu0
  %v1298 = vadd.f32 %v248, %v1297
  %v1299 = vpop.f32.mrb[0].mxu0
  %v1300 = vpop.f32.mrb[0].mxu0
  %v1301 = vadd.f32 %v248, %v1300
  %v1302 = vpop.f32.mrb[0].mxu0
  %1303 = vmatprep.mubr.bf16.mxu0 %v701
  %1304 = vmatmul.mubr.bf16.gmra.mrb[0].mxu0 %v700
  %v1305 = vpop.f32.mrb[0].mxu0
  %v1306 = vadd.f32 %v248, %v1305
  %v1307 = vpop.f32.mrb[0].mxu0
  %v1308 = vpop.f32.mrb[0].mxu0
  %v1309 = vadd.f32 %v248, %v1308
  %v1310 = vpop.f32.mrb[0].mxu0
  %1311 = vmatprep.mubr.bf16.mxu0 %v708
  %1312 = vmatmul.mubr.bf16.gmra.mrb[0].mxu0 %v707
  %v1313 = vpop.f32.mrb[0].mxu0
  %v1314 = vadd.f32 %v248, %v1313
  %v1315 = vpop.f32.mrb[0].mxu0
  %v1316 = vpop.f32.mrb[0].mxu0
  %v1317 = vadd.f32 %v248, %v1316
  %v1318 = vpop.f32.mrb[0].mxu0
  %1319 = vdwg.mxu0
  %1320 = vmatprep.subr.bf16.mxu0 0
  %1321 = vmatpush1.bf16.msra.mxu0 %v1026
  %1322 = vmatprep.subr.bf16.mxu0 0
  %1323 = vmatpush1.bf16.msra.mxu0 %v1027
  %1324 = vmatprep.subr.bf16.mxu0 0
  %1325 = vmatpush1.bf16.msra.mxu0 %v1028
  %1326 = vmatprep.subr.bf16.mxu0 0
  %1327 = vmatpush1.bf16.msra.mxu0 %v1029
  %1328 = vmatprep.subr.bf16.mxu0 0
  %1329 = vmatpush1.bf16.msra.mxu0 %v1030
  %1330 = vmatprep.subr.bf16.mxu0 0
  %1331 = vmatpush1.bf16.msra.mxu0 %v1031
  %1332 = vmatprep.subr.bf16.mxu0 0
  %1333 = vmatpush1.bf16.msra.mxu0 %v1032
  %1334 = vmatprep.subr.bf16.mxu0 0
  %1335 = vmatpush1.bf16.msra.mxu0 %v1033
  %1336 = vmatprep.subr.bf16.mxu0 0
  %1337 = vmatpush1.bf16.msra.mxu0 %v1034
  %1338 = vmatprep.subr.bf16.mxu0 0
  %1339 = vmatpush1.bf16.msra.mxu0 %v1035
  %1340 = vmatprep.subr.bf16.mxu0 0
  %1341 = vmatpush1.bf16.msra.mxu0 %v1036
  %1342 = vmatprep.subr.bf16.mxu0 0
  %1343 = vmatpush1.bf16.msra.mxu0 %v1037
  %1344 = vmatprep.subr.bf16.mxu0 0
  %1345 = vmatpush1.bf16.msra.mxu0 %v1038
  %1346 = vmatprep.subr.bf16.mxu0 0
  %1347 = vmatpush1.bf16.msra.mxu0 %v1039
  %1348 = vmatprep.subr.bf16.mxu0 0
  %1349 = vmatpush1.bf16.msra.mxu0 %v1040
  %1350 = vmatprep.subr.bf16.mxu0 0
  %1351 = vmatpush1.bf16.msra.mxu0 %v1041
  %1352 = vmatprep.mubr.bf16.mxu0 %v605
  %1353 = vmatmul.mubr.bf16.gmra.mrb[0].mxu0 %v604
  %v1354 = vpop.f32.mrb[0].mxu0
  %v1355 = vadd.f32 %v1194, %v1354
  %v1356 = vpop.f32.mrb[0].mxu0
  %v1357 = vpop.f32.mrb[0].mxu0
  %v1358 = vadd.f32 %v1197, %v1357
  %v1359 = vpop.f32.mrb[0].mxu0
  %1360 = vmatprep.mubr.bf16.mxu0 %v612
  %1361 = vmatmul.mubr.bf16.gmra.mrb[0].mxu0 %v611
  %v1362 = vpop.f32.mrb[0].mxu0
  %v1363 = vadd.f32 %v1202, %v1362
  %v1364 = vpop.f32.mrb[0].mxu0
  %v1365 = vpop.f32.mrb[0].mxu0
  %v1366 = vadd.f32 %v1205, %v1365
  %v1367 = vpop.f32.mrb[0].mxu0
  %1368 = vmatprep.mubr.bf16.mxu0 %v619
  %1369 = vmatmul.mubr.bf16.gmra.mrb[0].mxu0 %v618
  %v1370 = vpop.f32.mrb[0].mxu0
  %v1371 = vadd.f32 %v1210, %v1370
  %v1372 = vpop.f32.mrb[0].mxu0
  %v1373 = vpop.f32.mrb[0].mxu0
  %v1374 = vadd.f32 %v1213, %v1373
  %v1375 = vpop.f32.mrb[0].mxu0
  %1376 = vmatprep.mubr.bf16.mxu0 %v626
  %1377 = vmatmul.mubr.bf16.gmra.mrb[0].mxu0 %v625
  %v1378 = vpop.f32.mrb[0].mxu0
  %v1379 = vadd.f32 %v1218, %v1378
  %v1380 = vpop.f32.mrb[0].mxu0
  %v1381 = vpop.f32.mrb[0].mxu0
  %v1382 = vadd.f32 %v1221, %v1381
  %v1383 = vpop.f32.mrb[0].mxu0
  %1384 = vmatprep.mubr.bf16.mxu0 %v633
  %1385 = vmatmul.mubr.bf16.gmra.mrb[0].mxu0 %v632
  %v1386 = vpop.f32.mrb[0].mxu0
  %v1387 = vadd.f32 %v1226, %v1386
  %v1388 = vpop.f32.mrb[0].mxu0
  %v1389 = vpop.f32.mrb[0].mxu0
  %v1390 = vadd.f32 %v1229, %v1389
  %v1391 = vpop.f32.mrb[0].mxu0
  %1392 = vmatprep.mubr.bf16.mxu0 %v640
  %1393 = vmatmul.mubr.bf16.gmra.mrb[0].mxu0 %v639
  %v1394 = vpop.f32.mrb[0].mxu0
  %v1395 = vadd.f32 %v1234, %v1394
  %v1396 = vpop.f32.mrb[0].mxu0
  %v1397 = vpop.f32.mrb[0].mxu0
  %v1398 = vadd.f32 %v1237, %v1397
  %v1399 = vpop.f32.mrb[0].mxu0
  %1400 = vmatprep.mubr.bf16.mxu0 %v647
  %1401 = vmatmul.mubr.bf16.gmra.mrb[0].mxu0 %v646
  %v1402 = vpop.f32.mrb[0].mxu0
  %v1403 = vadd.f32 %v1242, %v1402
  %v1404 = vpop.f32.mrb[0].mxu0
  %v1405 = vpop.f32.mrb[0].mxu0
  %v1406 = vadd.f32 %v1245, %v1405
  %v1407 = vpop.f32.mrb[0].mxu0
  %1408 = vmatprep.mubr.bf16.mxu0 %v654
  %1409 = vmatmul.mubr.bf16.gmra.mrb[0].mxu0 %v653
  %v1410 = vpop.f32.mrb[0].mxu0
  %v1411 = vadd.f32 %v1250, %v1410
  %v1412 = vpop.f32.mrb[0].mxu0
  %v1413 = vpop.f32.mrb[0].mxu0
  %v1414 = vadd.f32 %v1253, %v1413
  %v1415 = vpop.f32.mrb[0].mxu0
  %1416 = vmatprep.mubr.bf16.mxu0 %v661
  %1417 = vmatmul.mubr.bf16.gmra.mrb[0].mxu0 %v660
  %v1418 = vpop.f32.mrb[0].mxu0
  %v1419 = vadd.f32 %v1258, %v1418
  %v1420 = vpop.f32.mrb[0].mxu0
  %v1421 = vpop.f32.mrb[0].mxu0
  %v1422 = vadd.f32 %v1261, %v1421
  %v1423 = vpop.f32.mrb[0].mxu0
  %1424 = vmatprep.mubr.bf16.mxu0 %v668
  %1425 = vmatmul.mubr.bf16.gmra.mrb[0].mxu0 %v667
  %v1426 = vpop.f32.mrb[0].mxu0
  %v1427 = vadd.f32 %v1266, %v1426
  %v1428 = vpop.f32.mrb[0].mxu0
  %v1429 = vpop.f32.mrb[0].mxu0
  %v1430 = vadd.f32 %v1269, %v1429
  %v1431 = vpop.f32.mrb[0].mxu0
  %1432 = vmatprep.mubr.bf16.mxu0 %v675
  %1433 = vmatmul.mubr.bf16.gmra.mrb[0].mxu0 %v674
  %v1434 = vpop.f32.mrb[0].mxu0
  %v1435 = vadd.f32 %v1274, %v1434
  %v1436 = vpop.f32.mrb[0].mxu0
  %v1437 = vpop.f32.mrb[0].mxu0
  %v1438 = vadd.f32 %v1277, %v1437
  %v1439 = vpop.f32.mrb[0].mxu0
  %1440 = vmatprep.mubr.bf16.mxu0 %v682
  %1441 = vmatmul.mubr.bf16.gmra.mrb[0].mxu0 %v681
  %v1442 = vpop.f32.mrb[0].mxu0
  %v1443 = vadd.f32 %v1282, %v1442
  %v1444 = vpop.f32.mrb[0].mxu0
  %v1445 = vpop.f32.mrb[0].mxu0
  %v1446 = vadd.f32 %v1285, %v1445
  %v1447 = vpop.f32.mrb[0].mxu0
  %1448 = vmatprep.mubr.bf16.mxu0 %v689
  %1449 = vmatmul.mubr.bf16.gmra.mrb[0].mxu0 %v688
  %v1450 = vpop.f32.mrb[0].mxu0
  %v1451 = vadd.f32 %v1290, %v1450
  %v1452 = vpop.f32.mrb[0].mxu0
  %v1453 = vpop.f32.mrb[0].mxu0
  %v1454 = vadd.f32 %v1293, %v1453
  %v1455 = vpop.f32.mrb[0].mxu0
  %1456 = vmatprep.mubr.bf16.mxu0 %v696
  %1457 = vmatmul.mubr.bf16.gmra.mrb[0].mxu0 %v695
  %v1458 = vpop.f32.mrb[0].mxu0
  %v1459 = vadd.f32 %v1298, %v1458
  %v1460 = vpop.f32.mrb[0].mxu0
  %v1461 = vpop.f32.mrb[0].mxu0
  %v1462 = vadd.f32 %v1301, %v1461
  %v1463 = vpop.f32.mrb[0].mxu0
  %1464 = vmatprep.mubr.bf16.mxu0 %v703
  %1465 = vmatmul.mubr.bf16.gmra.mrb[0].mxu0 %v702
  %v1466 = vpop.f32.mrb[0].mxu0
  %v1467 = vadd.f32 %v1306, %v1466
  %v1468 = vpop.f32.mrb[0].mxu0
  %v1469 = vpop.f32.mrb[0].mxu0
  %v1470 = vadd.f32 %v1309, %v1469
  %v1471 = vpop.f32.mrb[0].mxu0
  %1472 = vmatprep.mubr.bf16.mxu0 %v710
  %1473 = vmatmul.mubr.bf16.gmra.mrb[0].mxu0 %v709
  %v1474 = vpop.f32.mrb[0].mxu0
  %v1475 = vadd.f32 %v1314, %v1474
  %v1476 = vpop.f32.mrb[0].mxu0
  %v1477 = vpop.f32.mrb[0].mxu0
  %v1478 = vadd.f32 %v1317, %v1477
  %v1479 = vpop.f32.mrb[0].mxu0
  %1480 = vdwg.mxu0
  %1481 = vmatprep.subr.bf16.mxu0 0
  %1482 = vmatpush1.bf16.msra.mxu0 %v1042
  %1483 = vmatprep.subr.bf16.mxu0 0
  %1484 = vmatpush1.bf16.msra.mxu0 %v1043
  %1485 = vmatprep.subr.bf16.mxu0 0
  %1486 = vmatpush1.bf16.msra.mxu0 %v1044
  %1487 = vmatprep.subr.bf16.mxu0 0
  %1488 = vmatpush1.bf16.msra.mxu0 %v1045
  %1489 = vmatprep.subr.bf16.mxu0 0
  %1490 = vmatpush1.bf16.msra.mxu0 %v1046
  %1491 = vmatprep.subr.bf16.mxu0 0
  %1492 = vmatpush1.bf16.msra.mxu0 %v1047
  %1493 = vmatprep.subr.bf16.mxu0 0
  %1494 = vmatpush1.bf16.msra.mxu0 %v1048
  %1495 = vmatprep.subr.bf16.mxu0 0
  %1496 = vmatpush1.bf16.msra.mxu0 %v1049
  %1497 = vmatprep.subr.bf16.mxu0 0
  %1498 = vmatpush1.bf16.msra.mxu0 %v1050
  %1499 = vmatprep.subr.bf16.mxu0 0
  %1500 = vmatpush1.bf16.msra.mxu0 %v1051
  %1501 = vmatprep.subr.bf16.mxu0 0
  %1502 = vmatpush1.bf16.msra.mxu0 %v1052
  %1503 = vmatprep.subr.bf16.mxu0 0
  %1504 = vmatpush1.bf16.msra.mxu0 %v1053
  %1505 = vmatprep.subr.bf16.mxu0 0
  %1506 = vmatpush1.bf16.msra.mxu0 %v1054
  %1507 = vmatprep.subr.bf16.mxu0 0
  %1508 = vmatpush1.bf16.msra.mxu0 %v1055
  %1509 = vmatprep.subr.bf16.mxu0 0
  %1510 = vmatpush1.bf16.msra.mxu0 %v1056
  %1511 = vmatprep.subr.bf16.mxu0 0
  %1512 = vmatpush1.bf16.msra.mxu0 %v1057
  %1513 = vmatprep.mubr.bf16.mxu0 %v607
  %1514 = vmatmul.mubr.bf16.gmra.mrb[0].mxu0 %v606
  %v1515 = vpop.f32.mrb[0].mxu0
  %v1516 = vadd.f32 %v1355, %v1515
  %v1517 = vpop.f32.mrb[0].mxu0
  %v1518 = vpop.f32.mrb[0].mxu0
  %v1519 = vadd.f32 %v1358, %v1518
  %v1520 = vpop.f32.mrb[0].mxu0
  %1521 = vmatprep.mubr.bf16.mxu0 %v614
  %1522 = vmatmul.mubr.bf16.gmra.mrb[0].mxu0 %v613
  %v1523 = vpop.f32.mrb[0].mxu0
  %v1524 = vadd.f32 %v1363, %v1523
  %v1525 = vpop.f32.mrb[0].mxu0
  %v1526 = vpop.f32.mrb[0].mxu0
  %v1527 = vadd.f32 %v1366, %v1526
  %v1528 = vpop.f32.mrb[0].mxu0
  %1529 = vmatprep.mubr.bf16.mxu0 %v621
  %1530 = vmatmul.mubr.bf16.gmra.mrb[0].mxu0 %v620
  %v1531 = vpop.f32.mrb[0].mxu0
  %v1532 = vadd.f32 %v1371, %v1531
  %v1533 = vpop.f32.mrb[0].mxu0
  %v1534 = vpop.f32.mrb[0].mxu0
  %v1535 = vadd.f32 %v1374, %v1534
  %v1536 = vpop.f32.mrb[0].mxu0
  %1537 = vmatprep.mubr.bf16.mxu0 %v628
  %1538 = vmatmul.mubr.bf16.gmra.mrb[0].mxu0 %v627
  %v1539 = vpop.f32.mrb[0].mxu0
  %v1540 = vadd.f32 %v1379, %v1539
  %v1541 = vpop.f32.mrb[0].mxu0
  %v1542 = vpop.f32.mrb[0].mxu0
  %v1543 = vadd.f32 %v1382, %v1542
  %v1544 = vpop.f32.mrb[0].mxu0
  %1545 = vmatprep.mubr.bf16.mxu0 %v635
  %1546 = vmatmul.mubr.bf16.gmra.mrb[0].mxu0 %v634
  %v1547 = vpop.f32.mrb[0].mxu0
  %v1548 = vadd.f32 %v1387, %v1547
  %v1549 = vpop.f32.mrb[0].mxu0
  %v1550 = vpop.f32.mrb[0].mxu0
  %v1551 = vadd.f32 %v1390, %v1550
  %v1552 = vpop.f32.mrb[0].mxu0
  %1553 = vmatprep.mubr.bf16.mxu0 %v642
  %1554 = vmatmul.mubr.bf16.gmra.mrb[0].mxu0 %v641
  %v1555 = vpop.f32.mrb[0].mxu0
  %v1556 = vadd.f32 %v1395, %v1555
  %v1557 = vpop.f32.mrb[0].mxu0
  %v1558 = vpop.f32.mrb[0].mxu0
  %v1559 = vadd.f32 %v1398, %v1558
  %v1560 = vpop.f32.mrb[0].mxu0
  %1561 = vmatprep.mubr.bf16.mxu0 %v649
  %1562 = vmatmul.mubr.bf16.gmra.mrb[0].mxu0 %v648
  %v1563 = vpop.f32.mrb[0].mxu0
  %v1564 = vadd.f32 %v1403, %v1563
  %v1565 = vpop.f32.mrb[0].mxu0
  %v1566 = vpop.f32.mrb[0].mxu0
  %v1567 = vadd.f32 %v1406, %v1566
  %v1568 = vpop.f32.mrb[0].mxu0
  %1569 = vmatprep.mubr.bf16.mxu0 %v656
  %1570 = vmatmul.mubr.bf16.gmra.mrb[0].mxu0 %v655
  %v1571 = vpop.f32.mrb[0].mxu0
  %v1572 = vadd.f32 %v1411, %v1571
  %v1573 = vpop.f32.mrb[0].mxu0
  %v1574 = vpop.f32.mrb[0].mxu0
  %v1575 = vadd.f32 %v1414, %v1574
  %v1576 = vpop.f32.mrb[0].mxu0
  %1577 = vmatprep.mubr.bf16.mxu0 %v663
  %1578 = vmatmul.mubr.bf16.gmra.mrb[0].mxu0 %v662
  %v1579 = vpop.f32.mrb[0].mxu0
  %v1580 = vadd.f32 %v1419, %v1579
  %v1581 = vpop.f32.mrb[0].mxu0
  %v1582 = vpop.f32.mrb[0].mxu0
  %v1583 = vadd.f32 %v1422, %v1582
  %v1584 = vpop.f32.mrb[0].mxu0
  %1585 = vmatprep.mubr.bf16.mxu0 %v670
  %1586 = vmatmul.mubr.bf16.gmra.mrb[0].mxu0 %v669
  %v1587 = vpop.f32.mrb[0].mxu0
  %v1588 = vadd.f32 %v1427, %v1587
  %v1589 = vpop.f32.mrb[0].mxu0
  %v1590 = vpop.f32.mrb[0].mxu0
  %v1591 = vadd.f32 %v1430, %v1590
  %v1592 = vpop.f32.mrb[0].mxu0
  %1593 = vmatprep.mubr.bf16.mxu0 %v677
  %1594 = vmatmul.mubr.bf16.gmra.mrb[0].mxu0 %v676
  %v1595 = vpop.f32.mrb[0].mxu0
  %v1596 = vadd.f32 %v1435, %v1595
  %v1597 = vpop.f32.mrb[0].mxu0
  %v1598 = vpop.f32.mrb[0].mxu0
  %v1599 = vadd.f32 %v1438, %v1598
  %v1600 = vpop.f32.mrb[0].mxu0
  %1601 = vmatprep.mubr.bf16.mxu0 %v684
  %1602 = vmatmul.mubr.bf16.gmra.mrb[0].mxu0 %v683
  %v1603 = vpop.f32.mrb[0].mxu0
  %v1604 = vadd.f32 %v1443, %v1603
  %v1605 = vpop.f32.mrb[0].mxu0
  %v1606 = vpop.f32.mrb[0].mxu0
  %v1607 = vadd.f32 %v1446, %v1606
  %v1608 = vpop.f32.mrb[0].mxu0
  %1609 = vmatprep.mubr.bf16.mxu0 %v691
  %1610 = vmatmul.mubr.bf16.gmra.mrb[0].mxu0 %v690
  %v1611 = vpop.f32.mrb[0].mxu0
  %v1612 = vadd.f32 %v1451, %v1611
  %v1613 = vpop.f32.mrb[0].mxu0
  %v1614 = vpop.f32.mrb[0].mxu0
  %v1615 = vadd.f32 %v1454, %v1614
  %v1616 = vpop.f32.mrb[0].mxu0
  %1617 = vmatprep.mubr.bf16.mxu0 %v698
  %1618 = vmatmul.mubr.bf16.gmra.mrb[0].mxu0 %v697
  %v1619 = vpop.f32.mrb[0].mxu0
  %v1620 = vadd.f32 %v1459, %v1619
  %v1621 = vpop.f32.mrb[0].mxu0
  %v1622 = vpop.f32.mrb[0].mxu0
  %v1623 = vadd.f32 %v1462, %v1622
  %v1624 = vpop.f32.mrb[0].mxu0
  %1625 = vmatprep.mubr.bf16.mxu0 %v705
  %1626 = vmatmul.mubr.bf16.gmra.mrb[0].mxu0 %v704
  %v1627 = vpop.f32.mrb[0].mxu0
  %v1628 = vadd.f32 %v1467, %v1627
  %v1629 = vpop.f32.mrb[0].mxu0
  %v1630 = vpop.f32.mrb[0].mxu0
  %v1631 = vadd.f32 %v1470, %v1630
  %v1632 = vpop.f32.mrb[0].mxu0
  %1633 = vmatprep.mubr.bf16.mxu0 %v712
  %1634 = vmatmul.mubr.bf16.gmra.mrb[0].mxu0 %v711
  %v1635 = vpop.f32.mrb[0].mxu0
  %v1636 = vadd.f32 %v1475, %v1635
  %v1637 = vpop.f32.mrb[0].mxu0
  %v1638 = vpop.f32.mrb[0].mxu0
  %v1639 = vadd.f32 %v1478, %v1638
  %v1640 = vpop.f32.mrb[0].mxu0
  %1641 = vdwg.mxu0
  %1642 = vmatprep.subr.bf16.mxu0 0
  %1643 = vmatpush1.bf16.msra.mxu0 %v1058
  %1644 = vmatprep.subr.bf16.mxu0 0
  %1645 = vmatpush1.bf16.msra.mxu0 %v1059
  %1646 = vmatprep.subr.bf16.mxu0 0
  %1647 = vmatpush1.bf16.msra.mxu0 0
  %1648 = vmatprep.subr.bf16.mxu0 0
  %1649 = vmatpush1.bf16.msra.mxu0 0
  %1650 = vmatprep.subr.bf16.mxu0 0
  %1651 = vmatpush1.bf16.msra.mxu0 0
  %1652 = vmatprep.subr.bf16.mxu0 0
  %1653 = vmatpush1.bf16.msra.mxu0 0
  %1654 = vmatprep.subr.bf16.mxu0 0
  %1655 = vmatpush1.bf16.msra.mxu0 0
  %1656 = vmatprep.subr.bf16.mxu0 0
  %1657 = vmatpush1.bf16.msra.mxu0 0
  %1658 = vmatprep.subr.bf16.mxu0 0
  %1659 = vmatpush1.bf16.msra.mxu0 0
  %1660 = vmatprep.subr.bf16.mxu0 0
  %1661 = vmatpush1.bf16.msra.mxu0 0
  %1662 = vmatprep.subr.bf16.mxu0 0
  %1663 = vmatpush1.bf16.msra.mxu0 0
  %1664 = vmatprep.subr.bf16.mxu0 0
  %1665 = vmatpush1.bf16.msra.mxu0 0
  %1666 = vmatprep.subr.bf16.mxu0 0
  %1667 = vmatpush1.bf16.msra.mxu0 0
  %1668 = vmatprep.subr.bf16.mxu0 0
  %1669 = vmatpush1.bf16.msra.mxu0 0
  %1670 = vmatprep.subr.bf16.mxu0 0
  %1671 = vmatpush1.bf16.msra.mxu0 0
  %1672 = vmatprep.subr.bf16.mxu0 0
  %1673 = vmatpush1.bf16.msra.mxu0 0
  %1674 = vmatprep.mubr.bf16.mxu0 0
  %1675 = vmatmul.mubr.bf16.gmra.mrb[0].mxu0 %v1112
  %v1676 = vpop.f32.mrb[0].mxu0
  %v1677 = vadd.f32 %v1516, %v1676
  %v1678 = vpop.f32.mrb[0].mxu0
  %v1679 = vpop.f32.mrb[0].mxu0
  %v1680 = vadd.f32 %v1519, %v1679
  %v1681 = vpop.f32.mrb[0].mxu0
  %1682 = vmatprep.mubr.bf16.mxu0 0
  %1683 = vmatmul.mubr.bf16.gmra.mrb[0].mxu0 %v1115
  %v1684 = vpop.f32.mrb[0].mxu0
  %v1685 = vadd.f32 %v1524, %v1684
  %v1686 = vpop.f32.mrb[0].mxu0
  %v1687 = vpop.f32.mrb[0].mxu0
  %v1688 = vadd.f32 %v1527, %v1687
  %v1689 = vpop.f32.mrb[0].mxu0
  %1690 = vmatprep.mubr.bf16.mxu0 0
  %1691 = vmatmul.mubr.bf16.gmra.mrb[0].mxu0 %v1118
  %v1692 = vpop.f32.mrb[0].mxu0
  %v1693 = vadd.f32 %v1532, %v1692
  %v1694 = vpop.f32.mrb[0].mxu0
  %v1695 = vpop.f32.mrb[0].mxu0
  %v1696 = vadd.f32 %v1535, %v1695
  %v1697 = vpop.f32.mrb[0].mxu0
  %1698 = vmatprep.mubr.bf16.mxu0 0
  %1699 = vmatmul.mubr.bf16.gmra.mrb[0].mxu0 %v1121
  %v1700 = vpop.f32.mrb[0].mxu0
  %v1701 = vadd.f32 %v1540, %v1700
  %v1702 = vpop.f32.mrb[0].mxu0
  %v1703 = vpop.f32.mrb[0].mxu0
  %v1704 = vadd.f32 %v1543, %v1703
  %v1705 = vpop.f32.mrb[0].mxu0
  %1706 = vmatprep.mubr.bf16.mxu0 0
  %1707 = vmatmul.mubr.bf16.gmra.mrb[0].mxu0 %v1124
  %v1708 = vpop.f32.mrb[0].mxu0
  %v1709 = vadd.f32 %v1548, %v1708
  %v1710 = vpop.f32.mrb[0].mxu0
  %v1711 = vpop.f32.mrb[0].mxu0
  %v1712 = vadd.f32 %v1551, %v1711
  %v1713 = vpop.f32.mrb[0].mxu0
  %1714 = vmatprep.mubr.bf16.mxu0 0
  %1715 = vmatmul.mubr.bf16.gmra.mrb[0].mxu0 %v1127
  %v1716 = vpop.f32.mrb[0].mxu0
  %v1717 = vadd.f32 %v1556, %v1716
  %v1718 = vpop.f32.mrb[0].mxu0
  %v1719 = vpop.f32.mrb[0].mxu0
  %v1720 = vadd.f32 %v1559, %v1719
  %v1721 = vpop.f32.mrb[0].mxu0
  %1722 = vmatprep.mubr.bf16.mxu0 0
  %1723 = vmatmul.mubr.bf16.gmra.mrb[0].mxu0 %v1130
  %v1724 = vpop.f32.mrb[0].mxu0
  %v1725 = vadd.f32 %v1564, %v1724
  %v1726 = vpop.f32.mrb[0].mxu0
  %v1727 = vpop.f32.mrb[0].mxu0
  %v1728 = vadd.f32 %v1567, %v1727
  %v1729 = vpop.f32.mrb[0].mxu0
  %1730 = vmatprep.mubr.bf16.mxu0 0
  %1731 = vmatmul.mubr.bf16.gmra.mrb[0].mxu0 %v1133
  %v1732 = vpop.f32.mrb[0].mxu0
  %v1733 = vadd.f32 %v1572, %v1732
  %v1734 = vpop.f32.mrb[0].mxu0
  %v1735 = vpop.f32.mrb[0].mxu0
  %v1736 = vadd.f32 %v1575, %v1735
  %v1737 = vpop.f32.mrb[0].mxu0
  %1738 = vmatprep.mubr.bf16.mxu0 0
  %1739 = vmatmul.mubr.bf16.gmra.mrb[0].mxu0 %v1136
  %v1740 = vpop.f32.mrb[0].mxu0
  %v1741 = vadd.f32 %v1580, %v1740
  %v1742 = vpop.f32.mrb[0].mxu0
  %v1743 = vpop.f32.mrb[0].mxu0
  %v1744 = vadd.f32 %v1583, %v1743
  %v1745 = vpop.f32.mrb[0].mxu0
  %1746 = vmatprep.mubr.bf16.mxu0 0
  %1747 = vmatmul.mubr.bf16.gmra.mrb[0].mxu0 %v1139
  %v1748 = vpop.f32.mrb[0].mxu0
  %v1749 = vadd.f32 %v1588, %v1748
  %v1750 = vpop.f32.mrb[0].mxu0
  %v1751 = vpop.f32.mrb[0].mxu0
  %v1752 = vadd.f32 %v1591, %v1751
  %v1753 = vpop.f32.mrb[0].mxu0
  %1754 = vmatprep.mubr.bf16.mxu0 0
  %1755 = vmatmul.mubr.bf16.gmra.mrb[0].mxu0 %v1142
  %v1756 = vpop.f32.mrb[0].mxu0
  %v1757 = vadd.f32 %v1596, %v1756
  %v1758 = vpop.f32.mrb[0].mxu0
  %v1759 = vpop.f32.mrb[0].mxu0
  %v1760 = vadd.f32 %v1599, %v1759
  %v1761 = vpop.f32.mrb[0].mxu0
  %1762 = vmatprep.mubr.bf16.mxu0 0
  %1763 = vmatmul.mubr.bf16.gmra.mrb[0].mxu0 %v1145
  %v1764 = vpop.f32.mrb[0].mxu0
  %v1765 = vadd.f32 %v1604, %v1764
  %v1766 = vpop.f32.mrb[0].mxu0
  %v1767 = vpop.f32.mrb[0].mxu0
  %v1768 = vadd.f32 %v1607, %v1767
  %v1769 = vpop.f32.mrb[0].mxu0
  %1770 = vmatprep.mubr.bf16.mxu0 0
  %1771 = vmatmul.mubr.bf16.gmra.mrb[0].mxu0 %v1148
  %v1772 = vpop.f32.mrb[0].mxu0
  %v1773 = vadd.f32 %v1612, %v1772
  %v1774 = vpop.f32.mrb[0].mxu0
  %v1775 = vpop.f32.mrb[0].mxu0
  %v1776 = vadd.f32 %v1615, %v1775
  %v1777 = vpop.f32.mrb[0].mxu0
  %1778 = vmatprep.mubr.bf16.mxu0 0
  %1779 = vmatmul.mubr.bf16.gmra.mrb[0].mxu0 %v1151
  %v1780 = vpop.f32.mrb[0].mxu0
  %v1781 = vadd.f32 %v1620, %v1780
  %v1782 = vpop.f32.mrb[0].mxu0
  %v1783 = vpop.f32.mrb[0].mxu0
  %v1784 = vadd.f32 %v1623, %v1783
  %v1785 = vpop.f32.mrb[0].mxu0
  %1786 = vmatprep.mubr.bf16.mxu0 0
  %1787 = vmatmul.mubr.bf16.gmra.mrb[0].mxu0 %v1154
  %v1788 = vpop.f32.mrb[0].mxu0
  %v1789 = vadd.f32 %v1628, %v1788
  %v1790 = vpop.f32.mrb[0].mxu0
  %v1791 = vpop.f32.mrb[0].mxu0
  %v1792 = vadd.f32 %v1631, %v1791
  %v1793 = vpop.f32.mrb[0].mxu0
  %1794 = vmatprep.mubr.bf16.mxu0 0
  %1795 = vmatmul.mubr.bf16.gmra.mrb[0].mxu0 %v1157
  %v1796 = vpop.f32.mrb[0].mxu0
  %v1797 = vadd.f32 %v1636, %v1796
  %v1798 = vpop.f32.mrb[0].mxu0
  %v1799 = vpop.f32.mrb[0].mxu0
  %v1800 = vadd.f32 %v1639, %v1799
  %v1801 = vpop.f32.mrb[0].mxu0
  %1802 = vdwg.mxu0
  %v1803 = vmax.f32 %v1677, 0.0
  %v1804 = vmax.f32 %v1680, 0.0
  %v1805 = vmax.f32 %v1685, 0.0
  %v1806 = vmax.f32 %v1688, 0.0
  %v1807 = vmax.f32 %v1693, 0.0
  %v1808 = vmax.f32 %v1696, 0.0
  %v1809 = vmax.f32 %v1701, 0.0
  %v1810 = vmax.f32 %v1704, 0.0
  %v1811 = vmax.f32 %v1709, 0.0
  %v1812 = vmax.f32 %v1712, 0.0
  %v1813 = vmax.f32 %v1717, 0.0
  %v1814 = vmax.f32 %v1720, 0.0
  %v1815 = vmax.f32 %v1725, 0.0
  %v1816 = vmax.f32 %v1728, 0.0
  %v1817 = vmax.f32 %v1733, 0.0
  %v1818 = vmax.f32 %v1736, 0.0
  %v1819 = vmax.f32 %v1741, 0.0
  %v1820 = vmax.f32 %v1744, 0.0
  %v1821 = vmax.f32 %v1749, 0.0
  %v1822 = vmax.f32 %v1752, 0.0
  %v1823 = vmax.f32 %v1757, 0.0
  %v1824 = vmax.f32 %v1760, 0.0
  %v1825 = vmax.f32 %v1765, 0.0
  %v1826 = vmax.f32 %v1768, 0.0
  %v1827 = vmax.f32 %v1773, 0.0
  %v1828 = vmax.f32 %v1776, 0.0
  %v1829 = vmax.f32 %v1781, 0.0
  %v1830 = vmax.f32 %v1784, 0.0
  %v1831 = vmax.f32 %v1789, 0.0
  %v1832 = vmax.f32 %v1792, 0.0
  %v1833 = vmax.f32 %v1797, 0.0
  %v1834 = vmax.f32 %v1800, 0.0
  %1835 = vst.msk [vmem:[%s3] sm:$0xff] %vm1110, %v1803
  %1836 = vst.msk [vmem:[%s3 + $0x8] sm:$0xff] %vm1110, %v1804
  %1837 = vst.msk [vmem:[%s3 + $0x10] sm:$0xff] %vm1110, %v1805
  %1838 = vst.msk [vmem:[%s3 + $0x18] sm:$0xff] %vm1110, %v1806
  %1839 = vst.msk [vmem:[%s3 + $0x20] sm:$0xff] %vm1110, %v1807
  %1840 = vst.msk [vmem:[%s3 + $0x28] sm:$0xff] %vm1110, %v1808
  %1841 = vst.msk [vmem:[%s3 + $0x30] sm:$0xff] %vm1110, %v1809
  %1842 = vst.msk [vmem:[%s3 + $0x38] sm:$0xff] %vm1110, %v1810
  %1843 = vst.msk [vmem:[%s3 + $0x40] sm:$0xff] %vm1110, %v1811
  %1844 = vst.msk [vmem:[%s3 + $0x48] sm:$0xff] %vm1110, %v1812
  %1845 = vst.msk [vmem:[%s3 + $0x50] sm:$0xff] %vm1110, %v1813
  %1846 = vst.msk [vmem:[%s3 + $0x58] sm:$0xff] %vm1110, %v1814
  %1847 = vst.msk [vmem:[%s3 + $0x60] sm:$0xff] %vm1110, %v1815
  %1848 = vst.msk [vmem:[%s3 + $0x68] sm:$0xff] %vm1110, %v1816
  %1849 = vst.msk [vmem:[%s3 + $0x70] sm:$0xff] %vm1110, %v1817
  %1850 = vst.msk [vmem:[%s3 + $0x78] sm:$0xff] %vm1110, %v1818
  %1851 = vst.msk [vmem:[%s3 + $0x80] sm:$0xff] %vm1110, %v1819
  %1852 = vst.msk [vmem:[%s3 + $0x88] sm:$0xff] %vm1110, %v1820
  %1853 = vst.msk [vmem:[%s3 + $0x90] sm:$0xff] %vm1110, %v1821
  %1854 = vst.msk [vmem:[%s3 + $0x98] sm:$0xff] %vm1110, %v1822
  %1855 = vst.msk [vmem:[%s3 + $0xa0] sm:$0xff] %vm1110, %v1823
  %1856 = vst.msk [vmem:[%s3 + $0xa8] sm:$0xff] %vm1110, %v1824
  %1857 = vst.msk [vmem:[%s3 + $0xb0] sm:$0xff] %vm1110, %v1825
  %1858 = vst.msk [vmem:[%s3 + $0xb8] sm:$0xff] %vm1110, %v1826
  %1859 = vst.msk [vmem:[%s3 + $0xc0] sm:$0xff] %vm1110, %v1827
  %1860 = vst.msk [vmem:[%s3 + $0xc8] sm:$0xff] %vm1110, %v1828
  %1861 = vst.msk [vmem:[%s3 + $0xd0] sm:$0xff] %vm1110, %v1829
  %1862 = vst.msk [vmem:[%s3 + $0xd8] sm:$0xff] %vm1110, %v1830
  %1863 = vst.msk [vmem:[%s3 + $0xe0] sm:$0xff] %vm1110, %v1831
  %1864 = vst.msk [vmem:[%s3 + $0xe8] sm:$0xff] %vm1110, %v1832
  %1865 = vst.msk [vmem:[%s3 + $0xf0] sm:$0xff] %vm1110, %v1833
  %1866 = vst.msk [vmem:[%s3 + $0xf8] sm:$0xff] %vm1110, %v1834
  // Predicated region
  $region14: #{rpn_forward.12} parent=0 // pred_check
    _
  $region15: #{rpn_forward.12} parent=0 // pred_check_branch
    %1868 = sbr.rel (0) target = $region17
  $region16: #{rpn_forward.12} parent=0 // pred_region
    _
  $region17: #{rpn_forward.12} parent=0 // pred_fallthru
    _
  // Predicated region
  $region18: #{rpn_forward.12} parent=0 // pred_check
    _
  $region19: #{rpn_forward.12} parent=0 // pred_check_branch
    %1870 = sbr.rel (0) target = $region21
  $region20: #{rpn_forward.12} parent=0 // pred_region
    _
  $region21: #{rpn_forward.12} parent=0 // pred_fallthru
    _

// kernel: rpn_forward.9
$region0: #{rpn_forward.9}
  #allocation0 [shape = 'u32[]', space=smem, size = 0x4, offset = 0x4, fixed_abs, tag = 'smem constant byte address 0x4 - core index']
  #allocation1 [shape = 'u32[144,128]{1,0:T(1,128)}', space=vmem, size = 0x12000, scoped, tag = 'internal scratch']
  %s0 = inlined_call_operand.vmem [shape: f32[20,20,32], index: 0, kind: input, shape index: {}]
  %s1 = inlined_call_operand.vmem [shape: f32[5,5,32], index: 1, kind: input, shape index: {}]
  %s2 = inlined_call_operand.hbm [shape: f32[16,16], index: 2, kind: output, shape index: {}]
  %s3 = sld [smem:[#allocation0]]
  $region18: #{rpn_forward.9} parent=0
    _
  %s5 = ssub.s32 1, %s3
  %s6 = scalar_select 0, %s5, %s3
  $region1: #{rpn_forward.9} parent=0
    #allocation2 [shape = 'u8[8192]{0}', space=vmem, size = 0x2000, scoped, tag = 'output window, operand 0, single buffered']
    #allocation3 [shape = 's32[1]{0}', space=sflag, size = 0x4, scoped, tag = 'scoped memory for rpn_forward.9']
    %7 = vsyncpa [#allocation3], 0
    // Predicated region
    $region2: #{rpn_forward.9} parent=1 // pred_check
      _
    $region3: #{rpn_forward.9} parent=1 // pred_check_branch
      %9 = sbr.rel (0) target = $region5
    $region4: #{rpn_forward.9} parent=1 // pred_region
      _
    $region5: #{rpn_forward.9} parent=1 // pred_fallthru
      _
    // Predicated region
    $region6: #{rpn_forward.9} parent=1 // pred_check
      _
    $region7: #{rpn_forward.9} parent=1 // pred_check_branch
      %11 = sbr.rel (0) target = $region9
    $region8: #{rpn_forward.9} parent=1 // pred_region
      _
    $region9: #{rpn_forward.9} parent=1 // pred_fallthru
      _
    %v12 = vld [vmem:[%s1] sm:$0x1f]
    %v13 = vld [vmem:[%s1 + $0x8] sm:$0x1f]
    %v14 = vld [vmem:[%s1 + $0x10] sm:$0x1f]
    %v15 = vld [vmem:[%s1 + $0x18] sm:$0x1f]
    %v16 = vld [vmem:[%s1 + $0x20] sm:$0x1f]
    %vm17 = vcmask 258048
    %v18 = vsel %vm17, %v12, 0.0
    %v19 = vsel %vm17, %v13, 0.0
    %v20 = vadd.f32 %v18, %v19
    %v21 = vsel %vm17, %v14, 0.0
    %v22 = vadd.f32 %v20, %v21
    %v23 = vsel %vm17, %v15, 0.0
    %v24 = vadd.f32 %v22, %v23
    %v25 = vsel %vm17, %v16, 0.0
    %v26 = vadd.f32 %v24, %v25
    %27 = vadd.xlane.f32.xlu0 %v26
    %v28 = vpop.xlane.xlu0 %27
    %v29 = vrot.slane %v28, 4
    %v30 = vadd.f32 %v28, %v29
    %v31 = vrot.slane %v30, 2
    %v32 = vadd.f32 %v30, %v31
    %v33 = vrot.slane %v32, 1
    %v34 = vadd.f32 %v32, %v33
    %s35 = vtos %v34
    %v36 = vld [vmem:[%s0] sm:$0xff]
    %v37 = vld [vmem:[%s0 + $0x8] sm:$0xff]
    %v38 = vld [vmem:[%s0 + $0x18] sm:$0xff]
    %v39 = vld [vmem:[%s0 + $0x20] sm:$0xff]
    %v40 = vld [vmem:[%s0 + $0x30] sm:$0xff]
    %v41 = vld [vmem:[%s0 + $0x38] sm:$0xff]
    %v42 = vld [vmem:[%s0 + $0x48] sm:$0xff]
    %v43 = vld [vmem:[%s0 + $0x50] sm:$0xff]
    %v44 = vld [vmem:[%s0 + $0x60] sm:$0xff]
    %v45 = vld [vmem:[%s0 + $0x68] sm:$0xff]
    %v46 = vld [vmem:[%s0 + $0x78] sm:$0xff]
    %v47 = vld [vmem:[%s0 + $0x80] sm:$0xff]
    %v48 = vld [vmem:[%s0 + $0x90] sm:$0xff]
    %v49 = vld [vmem:[%s0 + $0x98] sm:$0xff]
    %v50 = vld [vmem:[%s0 + $0xa8] sm:$0xff]
    %v51 = vld [vmem:[%s0 + $0xb0] sm:$0xff]
    %v52 = vld [vmem:[%s0 + $0xc0] sm:$0xff]
    %v53 = vld [vmem:[%s0 + $0xc8] sm:$0xff]
    %v54 = vld [vmem:[%s0 + $0xd8] sm:$0xff]
    %v55 = vld [vmem:[%s0 + $0xe0] sm:$0xff]
    %v56 = vld [vmem:[%s0 + $0xf0] sm:$0xff]
    %v57 = vld [vmem:[%s0 + $0xf8] sm:$0xff]
    %v58 = vld [vmem:[%s0 + $0x108] sm:$0xff]
    %v59 = vld [vmem:[%s0 + $0x110] sm:$0xff]
    %v60 = vld [vmem:[%s0 + $0x120] sm:$0xff]
    %v61 = vld [vmem:[%s0 + $0x128] sm:$0xff]
    %v62 = vld [vmem:[%s0 + $0x138] sm:$0xff]
    %v63 = vld [vmem:[%s0 + $0x140] sm:$0xff]
    %v64 = vld [vmem:[%s0 + $0x150] sm:$0xff]
    %v65 = vld [vmem:[%s0 + $0x158] sm:$0xff]
    %v66 = vld [vmem:[%s0 + $0x168] sm:$0xff]
    %v67 = vld [vmem:[%s0 + $0x170] sm:$0xff]
    %vm68 = vcmask 261120
    %v69 = vsel %vm68, %v36, 0.0
    %70 = vadd.xlane.f32.xlu0 %v69
    %v71 = vpop.xlane.xlu0 %70
    %v72 = vsel %vm68, %v37, 0.0
    %73 = vadd.xlane.f32.xlu0 %v72
    %v74 = vpop.xlane.xlu0 %73
    %v75 = vsel %vm68, %v38, 0.0
    %76 = vadd.xlane.f32.xlu0 %v75
    %v77 = vpop.xlane.xlu0 %76
    %v78 = vsel %vm68, %v39, 0.0
    %79 = vadd.xlane.f32.xlu0 %v78
    %v80 = vpop.xlane.xlu0 %79
    %v81 = vsel %vm68, %v40, 0.0
    %82 = vadd.xlane.f32.xlu0 %v81
    %v83 = vpop.xlane.xlu0 %82
    %v84 = vsel %vm68, %v41, 0.0
    %85 = vadd.xlane.f32.xlu0 %v84
    %v86 = vpop.xlane.xlu0 %85
    %v87 = vsel %vm68, %v42, 0.0
    %88 = vadd.xlane.f32.xlu0 %v87
    %v89 = vpop.xlane.xlu0 %88
    %v90 = vsel %vm68, %v43, 0.0
    %91 = vadd.xlane.f32.xlu0 %v90
    %v92 = vpop.xlane.xlu0 %91
    %v93 = vsel %vm68, %v44, 0.0
    %94 = vadd.xlane.f32.xlu0 %v93
    %v95 = vpop.xlane.xlu0 %94
    %v96 = vsel %vm68, %v45, 0.0
    %97 = vadd.xlane.f32.xlu0 %v96
    %v98 = vpop.xlane.xlu0 %97
    %v99 = vsel %vm68, %v46, 0.0
    %100 = vadd.xlane.f32.xlu0 %v99
    %v101 = vpop.xlane.xlu0 %100
    %v102 = vsel %vm68, %v47, 0.0
    %103 = vadd.xlane.f32.xlu0 %v102
    %v104 = vpop.xlane.xlu0 %103
    %v105 = vsel %vm68, %v48, 0.0
    %106 = vadd.xlane.f32.xlu0 %v105
    %v107 = vpop.xlane.xlu0 %106
    %v108 = vsel %vm68, %v49, 0.0
    %109 = vadd.xlane.f32.xlu0 %v108
    %v110 = vpop.xlane.xlu0 %109
    %v111 = vsel %vm68, %v50, 0.0
    %112 = vadd.xlane.f32.xlu0 %v111
    %v113 = vpop.xlane.xlu0 %112
    %v114 = vsel %vm68, %v51, 0.0
    %115 = vadd.xlane.f32.xlu0 %v114
    %v116 = vpop.xlane.xlu0 %115
    %v117 = vsel %vm68, %v52, 0.0
    %118 = vadd.xlane.f32.xlu0 %v117
    %v119 = vpop.xlane.xlu0 %118
    %v120 = vsel %vm68, %v53, 0.0
    %121 = vadd.xlane.f32.xlu0 %v120
    %v122 = vpop.xlane.xlu0 %121
    %v123 = vsel %vm68, %v54, 0.0
    %124 = vadd.xlane.f32.xlu0 %v123
    %v125 = vpop.xlane.xlu0 %124
    %v126 = vsel %vm68, %v55, 0.0
    %127 = vadd.xlane.f32.xlu0 %v126
    %v128 = vpop.xlane.xlu0 %127
    %v129 = vsel %vm68, %v56, 0.0
    %130 = vadd.xlane.f32.xlu0 %v129
    %v131 = vpop.xlane.xlu0 %130
    %v132 = vsel %vm68, %v57, 0.0
    %133 = vadd.xlane.f32.xlu0 %v132
    %v134 = vpop.xlane.xlu0 %133
    %v135 = vsel %vm68, %v58, 0.0
    %136 = vadd.xlane.f32.xlu0 %v135
    %v137 = vpop.xlane.xlu0 %136
    %v138 = vsel %vm68, %v59, 0.0
    %139 = vadd.xlane.f32.xlu0 %v138
    %v140 = vpop.xlane.xlu0 %139
    %v141 = vsel %vm68, %v60, 0.0
    %142 = vadd.xlane.f32.xlu0 %v141
    %v143 = vpop.xlane.xlu0 %142
    %v144 = vsel %vm68, %v61, 0.0
    %145 = vadd.xlane.f32.xlu0 %v144
    %v146 = vpop.xlane.xlu0 %145
    %v147 = vsel %vm68, %v62, 0.0
    %148 = vadd.xlane.f32.xlu0 %v147
    %v149 = vpop.xlane.xlu0 %148
    %v150 = vsel %vm68, %v63, 0.0
    %151 = vadd.xlane.f32.xlu0 %v150
    %v152 = vpop.xlane.xlu0 %151
    %v153 = vsel %vm68, %v64, 0.0
    %154 = vadd.xlane.f32.xlu0 %v153
    %v155 = vpop.xlane.xlu0 %154
    %v156 = vsel %vm68, %v65, 0.0
    %157 = vadd.xlane.f32.xlu0 %v156
    %v158 = vpop.xlane.xlu0 %157
    %v159 = vsel %vm68, %v66, 0.0
    %160 = vadd.xlane.f32.xlu0 %v159
    %v161 = vpop.xlane.xlu0 %160
    %v162 = vsel %vm68, %v67, 0.0
    %163 = vadd.xlane.f32.xlu0 %v162
    %v164 = vpop.xlane.xlu0 %163
    %v165 = vadd.f32 %v71, 0.0
    %v166 = vadd.f32 %v74, 0.0
    %v167 = vadd.f32 %v77, 0.0
    %v168 = vadd.f32 %v80, 0.0
    %v169 = vadd.f32 %v83, 0.0
    %v170 = vadd.f32 %v86, 0.0
    %v171 = vadd.f32 %v89, 0.0
    %v172 = vadd.f32 %v92, 0.0
    %v173 = vadd.f32 %v95, 0.0
    %v174 = vadd.f32 %v98, 0.0
    %v175 = vadd.f32 %v101, 0.0
    %v176 = vadd.f32 %v104, 0.0
    %v177 = vadd.f32 %v107, 0.0
    %v178 = vadd.f32 %v110, 0.0
    %v179 = vadd.f32 %v113, 0.0
    %v180 = vadd.f32 %v116, 0.0
    %v181 = vadd.f32 %v119, 0.0
    %v182 = vadd.f32 %v122, 0.0
    %v183 = vadd.f32 %v125, 0.0
    %v184 = vadd.f32 %v128, 0.0
    %v185 = vadd.f32 %v131, 0.0
    %v186 = vadd.f32 %v134, 0.0
    %v187 = vadd.f32 %v137, 0.0
    %v188 = vadd.f32 %v140, 0.0
    %v189 = vadd.f32 %v143, 0.0
    %v190 = vadd.f32 %v146, 0.0
    %v191 = vadd.f32 %v149, 0.0
    %v192 = vadd.f32 %v152, 0.0
    %v193 = vadd.f32 %v155, 0.0
    %v194 = vadd.f32 %v158, 0.0
    %v195 = vadd.f32 %v161, 0.0
    %v196 = vadd.f32 %v164, 0.0
    %v197 = vld [vmem:[%s0 + $0x1] sm:$0xff]
    %v198 = vld [vmem:[%s0 + $0x9] sm:$0xff]
    %v199 = vld [vmem:[%s0 + $0x19] sm:$0xff]
    %v200 = vld [vmem:[%s0 + $0x21] sm:$0xff]
    %v201 = vld [vmem:[%s0 + $0x31] sm:$0xff]
    %v202 = vld [vmem:[%s0 + $0x39] sm:$0xff]
    %v203 = vld [vmem:[%s0 + $0x49] sm:$0xff]
    %v204 = vld [vmem:[%s0 + $0x51] sm:$0xff]
    %v205 = vld [vmem:[%s0 + $0x61] sm:$0xff]
    %v206 = vld [vmem:[%s0 + $0x69] sm:$0xff]
    %v207 = vld [vmem:[%s0 + $0x79] sm:$0xff]
    %v208 = vld [vmem:[%s0 + $0x81] sm:$0xff]
    %v209 = vld [vmem:[%s0 + $0x91] sm:$0xff]
    %v210 = vld [vmem:[%s0 + $0x99] sm:$0xff]
    %v211 = vld [vmem:[%s0 + $0xa9] sm:$0xff]
    %v212 = vld [vmem:[%s0 + $0xb1] sm:$0xff]
    %v213 = vld [vmem:[%s0 + $0xc1] sm:$0xff]
    %v214 = vld [vmem:[%s0 + $0xc9] sm:$0xff]
    %v215 = vld [vmem:[%s0 + $0xd9] sm:$0xff]
    %v216 = vld [vmem:[%s0 + $0xe1] sm:$0xff]
    %v217 = vld [vmem:[%s0 + $0xf1] sm:$0xff]
    %v218 = vld [vmem:[%s0 + $0xf9] sm:$0xff]
    %v219 = vld [vmem:[%s0 + $0x109] sm:$0xff]
    %v220 = vld [vmem:[%s0 + $0x111] sm:$0xff]
    %v221 = vld [vmem:[%s0 + $0x121] sm:$0xff]
    %v222 = vld [vmem:[%s0 + $0x129] sm:$0xff]
    %v223 = vld [vmem:[%s0 + $0x139] sm:$0xff]
    %v224 = vld [vmem:[%s0 + $0x141] sm:$0xff]
    %v225 = vld [vmem:[%s0 + $0x151] sm:$0xff]
    %v226 = vld [vmem:[%s0 + $0x159] sm:$0xff]
    %v227 = vld [vmem:[%s0 + $0x169] sm:$0xff]
    %v228 = vld [vmem:[%s0 + $0x171] sm:$0xff]
    %v229 = vsel %vm68, %v197, 0.0
    %230 = vadd.xlane.f32.xlu0 %v229
    %v231 = vpop.xlane.xlu0 %230
    %v232 = vsel %vm68, %v198, 0.0
    %233 = vadd.xlane.f32.xlu0 %v232
    %v234 = vpop.xlane.xlu0 %233
    %v235 = vsel %vm68, %v199, 0.0
    %236 = vadd.xlane.f32.xlu0 %v235
    %v237 = vpop.xlane.xlu0 %236
    %v238 = vsel %vm68, %v200, 0.0
    %239 = vadd.xlane.f32.xlu0 %v238
    %v240 = vpop.xlane.xlu0 %239
    %v241 = vsel %vm68, %v201, 0.0
    %242 = vadd.xlane.f32.xlu0 %v241
    %v243 = vpop.xlane.xlu0 %242
    %v244 = vsel %vm68, %v202, 0.0
    %245 = vadd.xlane.f32.xlu0 %v244
    %v246 = vpop.xlane.xlu0 %245
    %v247 = vsel %vm68, %v203, 0.0
    %248 = vadd.xlane.f32.xlu0 %v247
    %v249 = vpop.xlane.xlu0 %248
    %v250 = vsel %vm68, %v204, 0.0
    %251 = vadd.xlane.f32.xlu0 %v250
    %v252 = vpop.xlane.xlu0 %251
    %v253 = vsel %vm68, %v205, 0.0
    %254 = vadd.xlane.f32.xlu0 %v253
    %v255 = vpop.xlane.xlu0 %254
    %v256 = vsel %vm68, %v206, 0.0
    %257 = vadd.xlane.f32.xlu0 %v256
    %v258 = vpop.xlane.xlu0 %257
    %v259 = vsel %vm68, %v207, 0.0
    %260 = vadd.xlane.f32.xlu0 %v259
    %v261 = vpop.xlane.xlu0 %260
    %v262 = vsel %vm68, %v208, 0.0
    %263 = vadd.xlane.f32.xlu0 %v262
    %v264 = vpop.xlane.xlu0 %263
    %v265 = vsel %vm68, %v209, 0.0
    %266 = vadd.xlane.f32.xlu0 %v265
    %v267 = vpop.xlane.xlu0 %266
    %v268 = vsel %vm68, %v210, 0.0
    %269 = vadd.xlane.f32.xlu0 %v268
    %v270 = vpop.xlane.xlu0 %269
    %v271 = vsel %vm68, %v211, 0.0
    %272 = vadd.xlane.f32.xlu0 %v271
    %v273 = vpop.xlane.xlu0 %272
    %v274 = vsel %vm68, %v212, 0.0
    %275 = vadd.xlane.f32.xlu0 %v274
    %v276 = vpop.xlane.xlu0 %275
    %v277 = vsel %vm68, %v213, 0.0
    %278 = vadd.xlane.f32.xlu0 %v277
    %v279 = vpop.xlane.xlu0 %278
    %v280 = vsel %vm68, %v214, 0.0
    %281 = vadd.xlane.f32.xlu0 %v280
    %v282 = vpop.xlane.xlu0 %281
    %v283 = vsel %vm68, %v215, 0.0
    %284 = vadd.xlane.f32.xlu0 %v283
    %v285 = vpop.xlane.xlu0 %284
    %v286 = vsel %vm68, %v216, 0.0
    %287 = vadd.xlane.f32.xlu0 %v286
    %v288 = vpop.xlane.xlu0 %287
    %v289 = vsel %vm68, %v217, 0.0
    %290 = vadd.xlane.f32.xlu0 %v289
    %v291 = vpop.xlane.xlu0 %290
    %v292 = vsel %vm68, %v218, 0.0
    %293 = vadd.xlane.f32.xlu0 %v292
    %v294 = vpop.xlane.xlu0 %293
    %v295 = vsel %vm68, %v219, 0.0
    %296 = vadd.xlane.f32.xlu0 %v295
    %v297 = vpop.xlane.xlu0 %296
    %v298 = vsel %vm68, %v220, 0.0
    %299 = vadd.xlane.f32.xlu0 %v298
    %v300 = vpop.xlane.xlu0 %299
    %v301 = vsel %vm68, %v221, 0.0
    %302 = vadd.xlane.f32.xlu0 %v301
    %v303 = vpop.xlane.xlu0 %302
    %v304 = vsel %vm68, %v222, 0.0
    %305 = vadd.xlane.f32.xlu0 %v304
    %v306 = vpop.xlane.xlu0 %305
    %v307 = vsel %vm68, %v223, 0.0
    %308 = vadd.xlane.f32.xlu0 %v307
    %v309 = vpop.xlane.xlu0 %308
    %v310 = vsel %vm68, %v224, 0.0
    %311 = vadd.xlane.f32.xlu0 %v310
    %v312 = vpop.xlane.xlu0 %311
    %v313 = vsel %vm68, %v225, 0.0
    %314 = vadd.xlane.f32.xlu0 %v313
    %v315 = vpop.xlane.xlu0 %314
    %v316 = vsel %vm68, %v226, 0.0
    %317 = vadd.xlane.f32.xlu0 %v316
    %v318 = vpop.xlane.xlu0 %317
    %v319 = vsel %vm68, %v227, 0.0
    %320 = vadd.xlane.f32.xlu0 %v319
    %v321 = vpop.xlane.xlu0 %320
    %v322 = vsel %vm68, %v228, 0.0
    %323 = vadd.xlane.f32.xlu0 %v322
    %v324 = vpop.xlane.xlu0 %323
    %v325 = vadd.f32 %v165, %v231
    %v326 = vadd.f32 %v166, %v234
    %v327 = vadd.f32 %v167, %v237
    %v328 = vadd.f32 %v168, %v240
    %v329 = vadd.f32 %v169, %v243
    %v330 = vadd.f32 %v170, %v246
    %v331 = vadd.f32 %v171, %v249
    %v332 = vadd.f32 %v172, %v252
    %v333 = vadd.f32 %v173, %v255
    %v334 = vadd.f32 %v174, %v258
    %v335 = vadd.f32 %v175, %v261
    %v336 = vadd.f32 %v176, %v264
    %v337 = vadd.f32 %v177, %v267
    %v338 = vadd.f32 %v178, %v270
    %v339 = vadd.f32 %v179, %v273
    %v340 = vadd.f32 %v180, %v276
    %v341 = vadd.f32 %v181, %v279
    %v342 = vadd.f32 %v182, %v282
    %v343 = vadd.f32 %v183, %v285
    %v344 = vadd.f32 %v184, %v288
    %v345 = vadd.f32 %v185, %v291
    %v346 = vadd.f32 %v186, %v294
    %v347 = vadd.f32 %v187, %v297
    %v348 = vadd.f32 %v188, %v300
    %v349 = vadd.f32 %v189, %v303
    %v350 = vadd.f32 %v190, %v306
    %v351 = vadd.f32 %v191, %v309
    %v352 = vadd.f32 %v192, %v312
    %v353 = vadd.f32 %v193, %v315
    %v354 = vadd.f32 %v194, %v318
    %v355 = vadd.f32 %v195, %v321
    %v356 = vadd.f32 %v196, %v324
    %v357 = vld [vmem:[%s0 + $0x2] sm:$0xff]
    %v358 = vld [vmem:[%s0 + $0xa] sm:$0xff]
    %v359 = vld [vmem:[%s0 + $0x1a] sm:$0xff]
    %v360 = vld [vmem:[%s0 + $0x22] sm:$0xff]
    %v361 = vld [vmem:[%s0 + $0x32] sm:$0xff]
    %v362 = vld [vmem:[%s0 + $0x3a] sm:$0xff]
    %v363 = vld [vmem:[%s0 + $0x4a] sm:$0xff]
    %v364 = vld [vmem:[%s0 + $0x52] sm:$0xff]
    %v365 = vld [vmem:[%s0 + $0x62] sm:$0xff]
    %v366 = vld [vmem:[%s0 + $0x6a] sm:$0xff]
    %v367 = vld [vmem:[%s0 + $0x7a] sm:$0xff]
    %v368 = vld [vmem:[%s0 + $0x82] sm:$0xff]
    %v369 = vld [vmem:[%s0 + $0x92] sm:$0xff]
    %v370 = vld [vmem:[%s0 + $0x9a] sm:$0xff]
    %v371 = vld [vmem:[%s0 + $0xaa] sm:$0xff]
    %v372 = vld [vmem:[%s0 + $0xb2] sm:$0xff]
    %v373 = vld [vmem:[%s0 + $0xc2] sm:$0xff]
    %v374 = vld [vmem:[%s0 + $0xca] sm:$0xff]
    %v375 = vld [vmem:[%s0 + $0xda] sm:$0xff]
    %v376 = vld [vmem:[%s0 + $0xe2] sm:$0xff]
    %v377 = vld [vmem:[%s0 + $0xf2] sm:$0xff]
    %v378 = vld [vmem:[%s0 + $0xfa] sm:$0xff]
    %v379 = vld [vmem:[%s0 + $0x10a] sm:$0xff]
    %v380 = vld [vmem:[%s0 + $0x112] sm:$0xff]
    %v381 = vld [vmem:[%s0 + $0x122] sm:$0xff]
    %v382 = vld [vmem:[%s0 + $0x12a] sm:$0xff]
    %v383 = vld [vmem:[%s0 + $0x13a] sm:$0xff]
    %v384 = vld [vmem:[%s0 + $0x142] sm:$0xff]
    %v385 = vld [vmem:[%s0 + $0x152] sm:$0xff]
    %v386 = vld [vmem:[%s0 + $0x15a] sm:$0xff]
    %v387 = vld [vmem:[%s0 + $0x16a] sm:$0xff]
    %v388 = vld [vmem:[%s0 + $0x172] sm:$0xff]
    %v389 = vsel %vm68, %v357, 0.0
    %390 = vadd.xlane.f32.xlu0 %v389
    %v391 = vpop.xlane.xlu0 %390
    %v392 = vsel %vm68, %v358, 0.0
    %393 = vadd.xlane.f32.xlu0 %v392
    %v394 = vpop.xlane.xlu0 %393
    %v395 = vsel %vm68, %v359, 0.0
    %396 = vadd.xlane.f32.xlu0 %v395
    %v397 = vpop.xlane.xlu0 %396
    %v398 = vsel %vm68, %v360, 0.0
    %399 = vadd.xlane.f32.xlu0 %v398
    %v400 = vpop.xlane.xlu0 %399
    %v401 = vsel %vm68, %v361, 0.0
    %402 = vadd.xlane.f32.xlu0 %v401
    %v403 = vpop.xlane.xlu0 %402
    %v404 = vsel %vm68, %v362, 0.0
    %405 = vadd.xlane.f32.xlu0 %v404
    %v406 = vpop.xlane.xlu0 %405
    %v407 = vsel %vm68, %v363, 0.0
    %408 = vadd.xlane.f32.xlu0 %v407
    %v409 = vpop.xlane.xlu0 %408
    %v410 = vsel %vm68, %v364, 0.0
    %411 = vadd.xlane.f32.xlu0 %v410
    %v412 = vpop.xlane.xlu0 %411
    %v413 = vsel %vm68, %v365, 0.0
    %414 = vadd.xlane.f32.xlu0 %v413
    %v415 = vpop.xlane.xlu0 %414
    %v416 = vsel %vm68, %v366, 0.0
    %417 = vadd.xlane.f32.xlu0 %v416
    %v418 = vpop.xlane.xlu0 %417
    %v419 = vsel %vm68, %v367, 0.0
    %420 = vadd.xlane.f32.xlu0 %v419
    %v421 = vpop.xlane.xlu0 %420
    %v422 = vsel %vm68, %v368, 0.0
    %423 = vadd.xlane.f32.xlu0 %v422
    %v424 = vpop.xlane.xlu0 %423
    %v425 = vsel %vm68, %v369, 0.0
    %426 = vadd.xlane.f32.xlu0 %v425
    %v427 = vpop.xlane.xlu0 %426
    %v428 = vsel %vm68, %v370, 0.0
    %429 = vadd.xlane.f32.xlu0 %v428
    %v430 = vpop.xlane.xlu0 %429
    %v431 = vsel %vm68, %v371, 0.0
    %432 = vadd.xlane.f32.xlu0 %v431
    %v433 = vpop.xlane.xlu0 %432
    %v434 = vsel %vm68, %v372, 0.0
    %435 = vadd.xlane.f32.xlu0 %v434
    %v436 = vpop.xlane.xlu0 %435
    %v437 = vsel %vm68, %v373, 0.0
    %438 = vadd.xlane.f32.xlu0 %v437
    %v439 = vpop.xlane.xlu0 %438
    %v440 = vsel %vm68, %v374, 0.0
    %441 = vadd.xlane.f32.xlu0 %v440
    %v442 = vpop.xlane.xlu0 %441
    %v443 = vsel %vm68, %v375, 0.0
    %444 = vadd.xlane.f32.xlu0 %v443
    %v445 = vpop.xlane.xlu0 %444
    %v446 = vsel %vm68, %v376, 0.0
    %447 = vadd.xlane.f32.xlu0 %v446
    %v448 = vpop.xlane.xlu0 %447
    %v449 = vsel %vm68, %v377, 0.0
    %450 = vadd.xlane.f32.xlu0 %v449
    %v451 = vpop.xlane.xlu0 %450
    %v452 = vsel %vm68, %v378, 0.0
    %453 = vadd.xlane.f32.xlu0 %v452
    %v454 = vpop.xlane.xlu0 %453
    %v455 = vsel %vm68, %v379, 0.0
    %456 = vadd.xlane.f32.xlu0 %v455
    %v457 = vpop.xlane.xlu0 %456
    %v458 = vsel %vm68, %v380, 0.0
    %459 = vadd.xlane.f32.xlu0 %v458
    %v460 = vpop.xlane.xlu0 %459
    %v461 = vsel %vm68, %v381, 0.0
    %462 = vadd.xlane.f32.xlu0 %v461
    %v463 = vpop.xlane.xlu0 %462
    %v464 = vsel %vm68, %v382, 0.0
    %465 = vadd.xlane.f32.xlu0 %v464
    %v466 = vpop.xlane.xlu0 %465
    %v467 = vsel %vm68, %v383, 0.0
    %468 = vadd.xlane.f32.xlu0 %v467
    %v469 = vpop.xlane.xlu0 %468
    %v470 = vsel %vm68, %v384, 0.0
    %471 = vadd.xlane.f32.xlu0 %v470
    %v472 = vpop.xlane.xlu0 %471
    %v473 = vsel %vm68, %v385, 0.0
    %474 = vadd.xlane.f32.xlu0 %v473
    %v475 = vpop.xlane.xlu0 %474
    %v476 = vsel %vm68, %v386, 0.0
    %477 = vadd.xlane.f32.xlu0 %v476
    %v478 = vpop.xlane.xlu0 %477
    %v479 = vsel %vm68, %v387, 0.0
    %480 = vadd.xlane.f32.xlu0 %v479
    %v481 = vpop.xlane.xlu0 %480
    %v482 = vsel %vm68, %v388, 0.0
    %483 = vadd.xlane.f32.xlu0 %v482
    %v484 = vpop.xlane.xlu0 %483
    %v485 = vadd.f32 %v325, %v391
    %v486 = vadd.f32 %v326, %v394
    %v487 = vadd.f32 %v327, %v397
    %v488 = vadd.f32 %v328, %v400
    %v489 = vadd.f32 %v329, %v403
    %v490 = vadd.f32 %v330, %v406
    %v491 = vadd.f32 %v331, %v409
    %v492 = vadd.f32 %v332, %v412
    %v493 = vadd.f32 %v333, %v415
    %v494 = vadd.f32 %v334, %v418
    %v495 = vadd.f32 %v335, %v421
    %v496 = vadd.f32 %v336, %v424
    %v497 = vadd.f32 %v337, %v427
    %v498 = vadd.f32 %v338, %v430
    %v499 = vadd.f32 %v339, %v433
    %v500 = vadd.f32 %v340, %v436
    %v501 = vadd.f32 %v341, %v439
    %v502 = vadd.f32 %v342, %v442
    %v503 = vadd.f32 %v343, %v445
    %v504 = vadd.f32 %v344, %v448
    %v505 = vadd.f32 %v345, %v451
    %v506 = vadd.f32 %v346, %v454
    %v507 = vadd.f32 %v347, %v457
    %v508 = vadd.f32 %v348, %v460
    %v509 = vadd.f32 %v349, %v463
    %v510 = vadd.f32 %v350, %v466
    %v511 = vadd.f32 %v351, %v469
    %v512 = vadd.f32 %v352, %v472
    %v513 = vadd.f32 %v353, %v475
    %v514 = vadd.f32 %v354, %v478
    %v515 = vadd.f32 %v355, %v481
    %v516 = vadd.f32 %v356, %v484
    %v517 = vld [vmem:[%s0 + $0x3] sm:$0xff]
    %v518 = vld [vmem:[%s0 + $0xb] sm:$0xff]
    %v519 = vld [vmem:[%s0 + $0x1b] sm:$0xff]
    %v520 = vld [vmem:[%s0 + $0x23] sm:$0xff]
    %v521 = vld [vmem:[%s0 + $0x33] sm:$0xff]
    %v522 = vld [vmem:[%s0 + $0x3b] sm:$0xff]
    %v523 = vld [vmem:[%s0 + $0x4b] sm:$0xff]
    %v524 = vld [vmem:[%s0 + $0x53] sm:$0xff]
    %v525 = vld [vmem:[%s0 + $0x63] sm:$0xff]
    %v526 = vld [vmem:[%s0 + $0x6b] sm:$0xff]
    %v527 = vld [vmem:[%s0 + $0x7b] sm:$0xff]
    %v528 = vld [vmem:[%s0 + $0x83] sm:$0xff]
    %v529 = vld [vmem:[%s0 + $0x93] sm:$0xff]
    %v530 = vld [vmem:[%s0 + $0x9b] sm:$0xff]
    %v531 = vld [vmem:[%s0 + $0xab] sm:$0xff]
    %v532 = vld [vmem:[%s0 + $0xb3] sm:$0xff]
    %v533 = vld [vmem:[%s0 + $0xc3] sm:$0xff]
    %v534 = vld [vmem:[%s0 + $0xcb] sm:$0xff]
    %v535 = vld [vmem:[%s0 + $0xdb] sm:$0xff]
    %v536 = vld [vmem:[%s0 + $0xe3] sm:$0xff]
    %v537 = vld [vmem:[%s0 + $0xf3] sm:$0xff]
    %v538 = vld [vmem:[%s0 + $0xfb] sm:$0xff]
    %v539 = vld [vmem:[%s0 + $0x10b] sm:$0xff]
    %v540 = vld [vmem:[%s0 + $0x113] sm:$0xff]
    %v541 = vld [vmem:[%s0 + $0x123] sm:$0xff]
    %v542 = vld [vmem:[%s0 + $0x12b] sm:$0xff]
    %v543 = vld [vmem:[%s0 + $0x13b] sm:$0xff]
    %v544 = vld [vmem:[%s0 + $0x143] sm:$0xff]
    %v545 = vld [vmem:[%s0 + $0x153] sm:$0xff]
    %v546 = vld [vmem:[%s0 + $0x15b] sm:$0xff]
    %v547 = vld [vmem:[%s0 + $0x16b] sm:$0xff]
    %v548 = vld [vmem:[%s0 + $0x173] sm:$0xff]
    %v549 = vsel %vm68, %v517, 0.0
    %550 = vadd.xlane.f32.xlu0 %v549
    %v551 = vpop.xlane.xlu0 %550
    %v552 = vsel %vm68, %v518, 0.0
    %553 = vadd.xlane.f32.xlu0 %v552
    %v554 = vpop.xlane.xlu0 %553
    %v555 = vsel %vm68, %v519, 0.0
    %556 = vadd.xlane.f32.xlu0 %v555
    %v557 = vpop.xlane.xlu0 %556
    %v558 = vsel %vm68, %v520, 0.0
    %559 = vadd.xlane.f32.xlu0 %v558
    %v560 = vpop.xlane.xlu0 %559
    %v561 = vsel %vm68, %v521, 0.0
    %562 = vadd.xlane.f32.xlu0 %v561
    %v563 = vpop.xlane.xlu0 %562
    %v564 = vsel %vm68, %v522, 0.0
    %565 = vadd.xlane.f32.xlu0 %v564
    %v566 = vpop.xlane.xlu0 %565
    %v567 = vsel %vm68, %v523, 0.0
    %568 = vadd.xlane.f32.xlu0 %v567
    %v569 = vpop.xlane.xlu0 %568
    %v570 = vsel %vm68, %v524, 0.0
    %571 = vadd.xlane.f32.xlu0 %v570
    %v572 = vpop.xlane.xlu0 %571
    %v573 = vsel %vm68, %v525, 0.0
    %574 = vadd.xlane.f32.xlu0 %v573
    %v575 = vpop.xlane.xlu0 %574
    %v576 = vsel %vm68, %v526, 0.0
    %577 = vadd.xlane.f32.xlu0 %v576
    %v578 = vpop.xlane.xlu0 %577
    %v579 = vsel %vm68, %v527, 0.0
    %580 = vadd.xlane.f32.xlu0 %v579
    %v581 = vpop.xlane.xlu0 %580
    %v582 = vsel %vm68, %v528, 0.0
    %583 = vadd.xlane.f32.xlu0 %v582
    %v584 = vpop.xlane.xlu0 %583
    %v585 = vsel %vm68, %v529, 0.0
    %586 = vadd.xlane.f32.xlu0 %v585
    %v587 = vpop.xlane.xlu0 %586
    %v588 = vsel %vm68, %v530, 0.0
    %589 = vadd.xlane.f32.xlu0 %v588
    %v590 = vpop.xlane.xlu0 %589
    %v591 = vsel %vm68, %v531, 0.0
    %592 = vadd.xlane.f32.xlu0 %v591
    %v593 = vpop.xlane.xlu0 %592
    %v594 = vsel %vm68, %v532, 0.0
    %595 = vadd.xlane.f32.xlu0 %v594
    %v596 = vpop.xlane.xlu0 %595
    %v597 = vsel %vm68, %v533, 0.0
    %598 = vadd.xlane.f32.xlu0 %v597
    %v599 = vpop.xlane.xlu0 %598
    %v600 = vsel %vm68, %v534, 0.0
    %601 = vadd.xlane.f32.xlu0 %v600
    %v602 = vpop.xlane.xlu0 %601
    %v603 = vsel %vm68, %v535, 0.0
    %604 = vadd.xlane.f32.xlu0 %v603
    %v605 = vpop.xlane.xlu0 %604
    %v606 = vsel %vm68, %v536, 0.0
    %607 = vadd.xlane.f32.xlu0 %v606
    %v608 = vpop.xlane.xlu0 %607
    %v609 = vsel %vm68, %v537, 0.0
    %610 = vadd.xlane.f32.xlu0 %v609
    %v611 = vpop.xlane.xlu0 %610
    %v612 = vsel %vm68, %v538, 0.0
    %613 = vadd.xlane.f32.xlu0 %v612
    %v614 = vpop.xlane.xlu0 %613
    %v615 = vsel %vm68, %v539, 0.0
    %616 = vadd.xlane.f32.xlu0 %v615
    %v617 = vpop.xlane.xlu0 %616
    %v618 = vsel %vm68, %v540, 0.0
    %619 = vadd.xlane.f32.xlu0 %v618
    %v620 = vpop.xlane.xlu0 %619
    %v621 = vsel %vm68, %v541, 0.0
    %622 = vadd.xlane.f32.xlu0 %v621
    %v623 = vpop.xlane.xlu0 %622
    %v624 = vsel %vm68, %v542, 0.0
    %625 = vadd.xlane.f32.xlu0 %v624
    %v626 = vpop.xlane.xlu0 %625
    %v627 = vsel %vm68, %v543, 0.0
    %628 = vadd.xlane.f32.xlu0 %v627
    %v629 = vpop.xlane.xlu0 %628
    %v630 = vsel %vm68, %v544, 0.0
    %631 = vadd.xlane.f32.xlu0 %v630
    %v632 = vpop.xlane.xlu0 %631
    %v633 = vsel %vm68, %v545, 0.0
    %634 = vadd.xlane.f32.xlu0 %v633
    %v635 = vpop.xlane.xlu0 %634
    %v636 = vsel %vm68, %v546, 0.0
    %637 = vadd.xlane.f32.xlu0 %v636
    %v638 = vpop.xlane.xlu0 %637
    %v639 = vsel %vm68, %v547, 0.0
    %640 = vadd.xlane.f32.xlu0 %v639
    %v641 = vpop.xlane.xlu0 %640
    %v642 = vsel %vm68, %v548, 0.0
    %643 = vadd.xlane.f32.xlu0 %v642
    %v644 = vpop.xlane.xlu0 %643
    %v645 = vadd.f32 %v485, %v551
    %v646 = vadd.f32 %v486, %v554
    %v647 = vadd.f32 %v487, %v557
    %v648 = vadd.f32 %v488, %v560
    %v649 = vadd.f32 %v489, %v563
    %v650 = vadd.f32 %v490, %v566
    %v651 = vadd.f32 %v491, %v569
    %v652 = vadd.f32 %v492, %v572
    %v653 = vadd.f32 %v493, %v575
    %v654 = vadd.f32 %v494, %v578
    %v655 = vadd.f32 %v495, %v581
    %v656 = vadd.f32 %v496, %v584
    %v657 = vadd.f32 %v497, %v587
    %v658 = vadd.f32 %v498, %v590
    %v659 = vadd.f32 %v499, %v593
    %v660 = vadd.f32 %v500, %v596
    %v661 = vadd.f32 %v501, %v599
    %v662 = vadd.f32 %v502, %v602
    %v663 = vadd.f32 %v503, %v605
    %v664 = vadd.f32 %v504, %v608
    %v665 = vadd.f32 %v505, %v611
    %v666 = vadd.f32 %v506, %v614
    %v667 = vadd.f32 %v507, %v617
    %v668 = vadd.f32 %v508, %v620
    %v669 = vadd.f32 %v509, %v623
    %v670 = vadd.f32 %v510, %v626
    %v671 = vadd.f32 %v511, %v629
    %v672 = vadd.f32 %v512, %v632
    %v673 = vadd.f32 %v513, %v635
    %v674 = vadd.f32 %v514, %v638
    %v675 = vadd.f32 %v515, %v641
    %v676 = vadd.f32 %v516, %v644
    %v677 = vld [vmem:[%s0 + $0x4] sm:$0xff]
    %v678 = vld [vmem:[%s0 + $0xc] sm:$0xff]
    %v679 = vld [vmem:[%s0 + $0x1c] sm:$0xff]
    %v680 = vld [vmem:[%s0 + $0x24] sm:$0xff]
    %v681 = vld [vmem:[%s0 + $0x34] sm:$0xff]
    %v682 = vld [vmem:[%s0 + $0x3c] sm:$0xff]
    %v683 = vld [vmem:[%s0 + $0x4c] sm:$0xff]
    %v684 = vld [vmem:[%s0 + $0x54] sm:$0xff]
    %v685 = vld [vmem:[%s0 + $0x64] sm:$0xff]
    %v686 = vld [vmem:[%s0 + $0x6c] sm:$0xff]
    %v687 = vld [vmem:[%s0 + $0x7c] sm:$0xff]
    %v688 = vld [vmem:[%s0 + $0x84] sm:$0xff]
    %v689 = vld [vmem:[%s0 + $0x94] sm:$0xff]
    %v690 = vld [vmem:[%s0 + $0x9c] sm:$0xff]
    %v691 = vld [vmem:[%s0 + $0xac] sm:$0xff]
    %v692 = vld [vmem:[%s0 + $0xb4] sm:$0xff]
    %v693 = vld [vmem:[%s0 + $0xc4] sm:$0xff]
    %v694 = vld [vmem:[%s0 + $0xcc] sm:$0xff]
    %v695 = vld [vmem:[%s0 + $0xdc] sm:$0xff]
    %v696 = vld [vmem:[%s0 + $0xe4] sm:$0xff]
    %v697 = vld [vmem:[%s0 + $0xf4] sm:$0xff]
    %v698 = vld [vmem:[%s0 + $0xfc] sm:$0xff]
    %v699 = vld [vmem:[%s0 + $0x10c] sm:$0xff]
    %v700 = vld [vmem:[%s0 + $0x114] sm:$0xff]
    %v701 = vld [vmem:[%s0 + $0x124] sm:$0xff]
    %v702 = vld [vmem:[%s0 + $0x12c] sm:$0xff]
    %v703 = vld [vmem:[%s0 + $0x13c] sm:$0xff]
    %v704 = vld [vmem:[%s0 + $0x144] sm:$0xff]
    %v705 = vld [vmem:[%s0 + $0x154] sm:$0xff]
    %v706 = vld [vmem:[%s0 + $0x15c] sm:$0xff]
    %v707 = vld [vmem:[%s0 + $0x16c] sm:$0xff]
    %v708 = vld [vmem:[%s0 + $0x174] sm:$0xff]
    %v709 = vsel %vm68, %v677, 0.0
    %710 = vadd.xlane.f32.xlu0 %v709
    %v711 = vpop.xlane.xlu0 %710
    %v712 = vsel %vm68, %v678, 0.0
    %713 = vadd.xlane.f32.xlu0 %v712
    %v714 = vpop.xlane.xlu0 %713
    %v715 = vsel %vm68, %v679, 0.0
    %716 = vadd.xlane.f32.xlu0 %v715
    %v717 = vpop.xlane.xlu0 %716
    %v718 = vsel %vm68, %v680, 0.0
    %719 = vadd.xlane.f32.xlu0 %v718
    %v720 = vpop.xlane.xlu0 %719
    %v721 = vsel %vm68, %v681, 0.0
    %722 = vadd.xlane.f32.xlu0 %v721
    %v723 = vpop.xlane.xlu0 %722
    %v724 = vsel %vm68, %v682, 0.0
    %725 = vadd.xlane.f32.xlu0 %v724
    %v726 = vpop.xlane.xlu0 %725
    %v727 = vsel %vm68, %v683, 0.0
    %728 = vadd.xlane.f32.xlu0 %v727
    %v729 = vpop.xlane.xlu0 %728
    %v730 = vsel %vm68, %v684, 0.0
    %731 = vadd.xlane.f32.xlu0 %v730
    %v732 = vpop.xlane.xlu0 %731
    %v733 = vsel %vm68, %v685, 0.0
    %734 = vadd.xlane.f32.xlu0 %v733
    %v735 = vpop.xlane.xlu0 %734
    %v736 = vsel %vm68, %v686, 0.0
    %737 = vadd.xlane.f32.xlu0 %v736
    %v738 = vpop.xlane.xlu0 %737
    %v739 = vsel %vm68, %v687, 0.0
    %740 = vadd.xlane.f32.xlu0 %v739
    %v741 = vpop.xlane.xlu0 %740
    %v742 = vsel %vm68, %v688, 0.0
    %743 = vadd.xlane.f32.xlu0 %v742
    %v744 = vpop.xlane.xlu0 %743
    %v745 = vsel %vm68, %v689, 0.0
    %746 = vadd.xlane.f32.xlu0 %v745
    %v747 = vpop.xlane.xlu0 %746
    %v748 = vsel %vm68, %v690, 0.0
    %749 = vadd.xlane.f32.xlu0 %v748
    %v750 = vpop.xlane.xlu0 %749
    %v751 = vsel %vm68, %v691, 0.0
    %752 = vadd.xlane.f32.xlu0 %v751
    %v753 = vpop.xlane.xlu0 %752
    %v754 = vsel %vm68, %v692, 0.0
    %755 = vadd.xlane.f32.xlu0 %v754
    %v756 = vpop.xlane.xlu0 %755
    %v757 = vsel %vm68, %v693, 0.0
    %758 = vadd.xlane.f32.xlu0 %v757
    %v759 = vpop.xlane.xlu0 %758
    %v760 = vsel %vm68, %v694, 0.0
    %761 = vadd.xlane.f32.xlu0 %v760
    %v762 = vpop.xlane.xlu0 %761
    %v763 = vsel %vm68, %v695, 0.0
    %764 = vadd.xlane.f32.xlu0 %v763
    %v765 = vpop.xlane.xlu0 %764
    %v766 = vsel %vm68, %v696, 0.0
    %767 = vadd.xlane.f32.xlu0 %v766
    %v768 = vpop.xlane.xlu0 %767
    %v769 = vsel %vm68, %v697, 0.0
    %770 = vadd.xlane.f32.xlu0 %v769
    %v771 = vpop.xlane.xlu0 %770
    %v772 = vsel %vm68, %v698, 0.0
    %773 = vadd.xlane.f32.xlu0 %v772
    %v774 = vpop.xlane.xlu0 %773
    %v775 = vsel %vm68, %v699, 0.0
    %776 = vadd.xlane.f32.xlu0 %v775
    %v777 = vpop.xlane.xlu0 %776
    %v778 = vsel %vm68, %v700, 0.0
    %779 = vadd.xlane.f32.xlu0 %v778
    %v780 = vpop.xlane.xlu0 %779
    %v781 = vsel %vm68, %v701, 0.0
    %782 = vadd.xlane.f32.xlu0 %v781
    %v783 = vpop.xlane.xlu0 %782
    %v784 = vsel %vm68, %v702, 0.0
    %785 = vadd.xlane.f32.xlu0 %v784
    %v786 = vpop.xlane.xlu0 %785
    %v787 = vsel %vm68, %v703, 0.0
    %788 = vadd.xlane.f32.xlu0 %v787
    %v789 = vpop.xlane.xlu0 %788
    %v790 = vsel %vm68, %v704, 0.0
    %791 = vadd.xlane.f32.xlu0 %v790
    %v792 = vpop.xlane.xlu0 %791
    %v793 = vsel %vm68, %v705, 0.0
    %794 = vadd.xlane.f32.xlu0 %v793
    %v795 = vpop.xlane.xlu0 %794
    %v796 = vsel %vm68, %v706, 0.0
    %797 = vadd.xlane.f32.xlu0 %v796
    %v798 = vpop.xlane.xlu0 %797
    %v799 = vsel %vm68, %v707, 0.0
    %800 = vadd.xlane.f32.xlu0 %v799
    %v801 = vpop.xlane.xlu0 %800
    %v802 = vsel %vm68, %v708, 0.0
    %803 = vadd.xlane.f32.xlu0 %v802
    %v804 = vpop.xlane.xlu0 %803
    %v805 = vadd.f32 %v645, %v711
    %v806 = vadd.f32 %v646, %v714
    %v807 = vadd.f32 %v647, %v717
    %v808 = vadd.f32 %v648, %v720
    %v809 = vadd.f32 %v649, %v723
    %v810 = vadd.f32 %v650, %v726
    %v811 = vadd.f32 %v651, %v729
    %v812 = vadd.f32 %v652, %v732
    %v813 = vadd.f32 %v653, %v735
    %v814 = vadd.f32 %v654, %v738
    %v815 = vadd.f32 %v655, %v741
    %v816 = vadd.f32 %v656, %v744
    %v817 = vadd.f32 %v657, %v747
    %v818 = vadd.f32 %v658, %v750
    %v819 = vadd.f32 %v659, %v753
    %v820 = vadd.f32 %v660, %v756
    %v821 = vadd.f32 %v661, %v759
    %v822 = vadd.f32 %v662, %v762
    %v823 = vadd.f32 %v663, %v765
    %v824 = vadd.f32 %v664, %v768
    %v825 = vadd.f32 %v665, %v771
    %v826 = vadd.f32 %v666, %v774
    %v827 = vadd.f32 %v667, %v777
    %v828 = vadd.f32 %v668, %v780
    %v829 = vadd.f32 %v669, %v783
    %v830 = vadd.f32 %v670, %v786
    %v831 = vadd.f32 %v671, %v789
    %v832 = vadd.f32 %v672, %v792
    %v833 = vadd.f32 %v673, %v795
    %v834 = vadd.f32 %v674, %v798
    %v835 = vadd.f32 %v675, %v801
    %v836 = vadd.f32 %v676, %v804
    %s837 = scalar_lea.vmem %s0, 24
    %v838 = vld [vmem:[%s837] sm:$0xff]
    %v839 = vld [vmem:[%s837 + $0x8] sm:$0xff]
    %v840 = vld [vmem:[%s837 + $0x18] sm:$0xff]
    %v841 = vld [vmem:[%s837 + $0x20] sm:$0xff]
    %v842 = vld [vmem:[%s837 + $0x30] sm:$0xff]
    %v843 = vld [vmem:[%s837 + $0x38] sm:$0xff]
    %v844 = vld [vmem:[%s837 + $0x48] sm:$0xff]
    %v845 = vld [vmem:[%s837 + $0x50] sm:$0xff]
    %v846 = vld [vmem:[%s837 + $0x60] sm:$0xff]
    %v847 = vld [vmem:[%s837 + $0x68] sm:$0xff]
    %v848 = vld [vmem:[%s837 + $0x78] sm:$0xff]
    %v849 = vld [vmem:[%s837 + $0x80] sm:$0xff]
    %v850 = vld [vmem:[%s837 + $0x90] sm:$0xff]
    %v851 = vld [vmem:[%s837 + $0x98] sm:$0xff]
    %v852 = vld [vmem:[%s837 + $0xa8] sm:$0xff]
    %v853 = vld [vmem:[%s837 + $0xb0] sm:$0xff]
    %v854 = vld [vmem:[%s837 + $0xc0] sm:$0xff]
    %v855 = vld [vmem:[%s837 + $0xc8] sm:$0xff]
    %v856 = vld [vmem:[%s837 + $0xd8] sm:$0xff]
    %v857 = vld [vmem:[%s837 + $0xe0] sm:$0xff]
    %v858 = vld [vmem:[%s837 + $0xf0] sm:$0xff]
    %v859 = vld [vmem:[%s837 + $0xf8] sm:$0xff]
    %v860 = vld [vmem:[%s837 + $0x108] sm:$0xff]
    %v861 = vld [vmem:[%s837 + $0x110] sm:$0xff]
    %v862 = vld [vmem:[%s837 + $0x120] sm:$0xff]
    %v863 = vld [vmem:[%s837 + $0x128] sm:$0xff]
    %v864 = vld [vmem:[%s837 + $0x138] sm:$0xff]
    %v865 = vld [vmem:[%s837 + $0x140] sm:$0xff]
    %v866 = vld [vmem:[%s837 + $0x150] sm:$0xff]
    %v867 = vld [vmem:[%s837 + $0x158] sm:$0xff]
    %v868 = vld [vmem:[%s837 + $0x168] sm:$0xff]
    %v869 = vld [vmem:[%s837 + $0x170] sm:$0xff]
    %v870 = vsel %vm68, %v838, 0.0
    %871 = vadd.xlane.f32.xlu0 %v870
    %v872 = vpop.xlane.xlu0 %871
    %v873 = vsel %vm68, %v839, 0.0
    %874 = vadd.xlane.f32.xlu0 %v873
    %v875 = vpop.xlane.xlu0 %874
    %v876 = vsel %vm68, %v840, 0.0
    %877 = vadd.xlane.f32.xlu0 %v876
    %v878 = vpop.xlane.xlu0 %877
    %v879 = vsel %vm68, %v841, 0.0
    %880 = vadd.xlane.f32.xlu0 %v879
    %v881 = vpop.xlane.xlu0 %880
    %v882 = vsel %vm68, %v842, 0.0
    %883 = vadd.xlane.f32.xlu0 %v882
    %v884 = vpop.xlane.xlu0 %883
    %v885 = vsel %vm68, %v843, 0.0
    %886 = vadd.xlane.f32.xlu0 %v885
    %v887 = vpop.xlane.xlu0 %886
    %v888 = vsel %vm68, %v844, 0.0
    %889 = vadd.xlane.f32.xlu0 %v888
    %v890 = vpop.xlane.xlu0 %889
    %v891 = vsel %vm68, %v845, 0.0
    %892 = vadd.xlane.f32.xlu0 %v891
    %v893 = vpop.xlane.xlu0 %892
    %v894 = vsel %vm68, %v846, 0.0
    %895 = vadd.xlane.f32.xlu0 %v894
    %v896 = vpop.xlane.xlu0 %895
    %v897 = vsel %vm68, %v847, 0.0
    %898 = vadd.xlane.f32.xlu0 %v897
    %v899 = vpop.xlane.xlu0 %898
    %v900 = vsel %vm68, %v848, 0.0
    %901 = vadd.xlane.f32.xlu0 %v900
    %v902 = vpop.xlane.xlu0 %901
    %v903 = vsel %vm68, %v849, 0.0
    %904 = vadd.xlane.f32.xlu0 %v903
    %v905 = vpop.xlane.xlu0 %904
    %v906 = vsel %vm68, %v850, 0.0
    %907 = vadd.xlane.f32.xlu0 %v906
    %v908 = vpop.xlane.xlu0 %907
    %v909 = vsel %vm68, %v851, 0.0
    %910 = vadd.xlane.f32.xlu0 %v909
    %v911 = vpop.xlane.xlu0 %910
    %v912 = vsel %vm68, %v852, 0.0
    %913 = vadd.xlane.f32.xlu0 %v912
    %v914 = vpop.xlane.xlu0 %913
    %v915 = vsel %vm68, %v853, 0.0
    %916 = vadd.xlane.f32.xlu0 %v915
    %v917 = vpop.xlane.xlu0 %916
    %v918 = vsel %vm68, %v854, 0.0
    %919 = vadd.xlane.f32.xlu0 %v918
    %v920 = vpop.xlane.xlu0 %919
    %v921 = vsel %vm68, %v855, 0.0
    %922 = vadd.xlane.f32.xlu0 %v921
    %v923 = vpop.xlane.xlu0 %922
    %v924 = vsel %vm68, %v856, 0.0
    %925 = vadd.xlane.f32.xlu0 %v924
    %v926 = vpop.xlane.xlu0 %925
    %v927 = vsel %vm68, %v857, 0.0
    %928 = vadd.xlane.f32.xlu0 %v927
    %v929 = vpop.xlane.xlu0 %928
    %v930 = vsel %vm68, %v858, 0.0
    %931 = vadd.xlane.f32.xlu0 %v930
    %v932 = vpop.xlane.xlu0 %931
    %v933 = vsel %vm68, %v859, 0.0
    %934 = vadd.xlane.f32.xlu0 %v933
    %v935 = vpop.xlane.xlu0 %934
    %v936 = vsel %vm68, %v860, 0.0
    %937 = vadd.xlane.f32.xlu0 %v936
    %v938 = vpop.xlane.xlu0 %937
    %v939 = vsel %vm68, %v861, 0.0
    %940 = vadd.xlane.f32.xlu0 %v939
    %v941 = vpop.xlane.xlu0 %940
    %v942 = vsel %vm68, %v862, 0.0
    %943 = vadd.xlane.f32.xlu0 %v942
    %v944 = vpop.xlane.xlu0 %943
    %v945 = vsel %vm68, %v863, 0.0
    %946 = vadd.xlane.f32.xlu0 %v945
    %v947 = vpop.xlane.xlu0 %946
    %v948 = vsel %vm68, %v864, 0.0
    %949 = vadd.xlane.f32.xlu0 %v948
    %v950 = vpop.xlane.xlu0 %949
    %v951 = vsel %vm68, %v865, 0.0
    %952 = vadd.xlane.f32.xlu0 %v951
    %v953 = vpop.xlane.xlu0 %952
    %v954 = vsel %vm68, %v866, 0.0
    %955 = vadd.xlane.f32.xlu0 %v954
    %v956 = vpop.xlane.xlu0 %955
    %v957 = vsel %vm68, %v867, 0.0
    %958 = vadd.xlane.f32.xlu0 %v957
    %v959 = vpop.xlane.xlu0 %958
    %v960 = vsel %vm68, %v868, 0.0
    %961 = vadd.xlane.f32.xlu0 %v960
    %v962 = vpop.xlane.xlu0 %961
    %v963 = vsel %vm68, %v869, 0.0
    %964 = vadd.xlane.f32.xlu0 %v963
    %v965 = vpop.xlane.xlu0 %964
    %v966 = vadd.f32 %v805, %v872
    %v967 = vadd.f32 %v806, %v875
    %v968 = vadd.f32 %v807, %v878
    %v969 = vadd.f32 %v808, %v881
    %v970 = vadd.f32 %v809, %v884
    %v971 = vadd.f32 %v810, %v887
    %v972 = vadd.f32 %v811, %v890
    %v973 = vadd.f32 %v812, %v893
    %v974 = vadd.f32 %v813, %v896
    %v975 = vadd.f32 %v814, %v899
    %v976 = vadd.f32 %v815, %v902
    %v977 = vadd.f32 %v816, %v905
    %v978 = vadd.f32 %v817, %v908
    %v979 = vadd.f32 %v818, %v911
    %v980 = vadd.f32 %v819, %v914
    %v981 = vadd.f32 %v820, %v917
    %v982 = vadd.f32 %v821, %v920
    %v983 = vadd.f32 %v822, %v923
    %v984 = vadd.f32 %v823, %v926
    %v985 = vadd.f32 %v824, %v929
    %v986 = vadd.f32 %v825, %v932
    %v987 = vadd.f32 %v826, %v935
    %v988 = vadd.f32 %v827, %v938
    %v989 = vadd.f32 %v828, %v941
    %v990 = vadd.f32 %v829, %v944
    %v991 = vadd.f32 %v830, %v947
    %v992 = vadd.f32 %v831, %v950
    %v993 = vadd.f32 %v832, %v953
    %v994 = vadd.f32 %v833, %v956
    %v995 = vadd.f32 %v834, %v959
    %v996 = vadd.f32 %v835, %v962
    %v997 = vadd.f32 %v836, %v965
    %v998 = vld [vmem:[%s837 + $0x1] sm:$0xff]
    %v999 = vld [vmem:[%s837 + $0x9] sm:$0xff]
    %v1000 = vld [vmem:[%s837 + $0x19] sm:$0xff]
    %v1001 = vld [vmem:[%s837 + $0x21] sm:$0xff]
    %v1002 = vld [vmem:[%s837 + $0x31] sm:$0xff]
    %v1003 = vld [vmem:[%s837 + $0x39] sm:$0xff]
    %v1004 = vld [vmem:[%s837 + $0x49] sm:$0xff]
    %v1005 = vld [vmem:[%s837 + $0x51] sm:$0xff]
    %v1006 = vld [vmem:[%s837 + $0x61] sm:$0xff]
    %v1007 = vld [vmem:[%s837 + $0x69] sm:$0xff]
    %v1008 = vld [vmem:[%s837 + $0x79] sm:$0xff]
    %v1009 = vld [vmem:[%s837 + $0x81] sm:$0xff]
    %v1010 = vld [vmem:[%s837 + $0x91] sm:$0xff]
    %v1011 = vld [vmem:[%s837 + $0x99] sm:$0xff]
    %v1012 = vld [vmem:[%s837 + $0xa9] sm:$0xff]
    %v1013 = vld [vmem:[%s837 + $0xb1] sm:$0xff]
    %v1014 = vld [vmem:[%s837 + $0xc1] sm:$0xff]
    %v1015 = vld [vmem:[%s837 + $0xc9] sm:$0xff]
    %v1016 = vld [vmem:[%s837 + $0xd9] sm:$0xff]
    %v1017 = vld [vmem:[%s837 + $0xe1] sm:$0xff]
    %v1018 = vld [vmem:[%s837 + $0xf1] sm:$0xff]
    %v1019 = vld [vmem:[%s837 + $0xf9] sm:$0xff]
    %v1020 = vld [vmem:[%s837 + $0x109] sm:$0xff]
    %v1021 = vld [vmem:[%s837 + $0x111] sm:$0xff]
    %v1022 = vld [vmem:[%s837 + $0x121] sm:$0xff]
    %v1023 = vld [vmem:[%s837 + $0x129] sm:$0xff]
    %v1024 = vld [vmem:[%s837 + $0x139] sm:$0xff]
    %v1025 = vld [vmem:[%s837 + $0x141] sm:$0xff]
    %v1026 = vld [vmem:[%s837 + $0x151] sm:$0xff]
    %v1027 = vld [vmem:[%s837 + $0x159] sm:$0xff]
    %v1028 = vld [vmem:[%s837 + $0x169] sm:$0xff]
    %v1029 = vld [vmem:[%s837 + $0x171] sm:$0xff]
    %v1030 = vsel %vm68, %v998, 0.0
    %1031 = vadd.xlane.f32.xlu0 %v1030
    %v1032 = vpop.xlane.xlu0 %1031
    %v1033 = vsel %vm68, %v999, 0.0
    %1034 = vadd.xlane.f32.xlu0 %v1033
    %v1035 = vpop.xlane.xlu0 %1034
    %v1036 = vsel %vm68, %v1000, 0.0
    %1037 = vadd.xlane.f32.xlu0 %v1036
    %v1038 = vpop.xlane.xlu0 %1037
    %v1039 = vsel %vm68, %v1001, 0.0
    %1040 = vadd.xlane.f32.xlu0 %v1039
    %v1041 = vpop.xlane.xlu0 %1040
    %v1042 = vsel %vm68, %v1002, 0.0
    %1043 = vadd.xlane.f32.xlu0 %v1042
    %v1044 = vpop.xlane.xlu0 %1043
    %v1045 = vsel %vm68, %v1003, 0.0
    %1046 = vadd.xlane.f32.xlu0 %v1045
    %v1047 = vpop.xlane.xlu0 %1046
    %v1048 = vsel %vm68, %v1004, 0.0
    %1049 = vadd.xlane.f32.xlu0 %v1048
    %v1050 = vpop.xlane.xlu0 %1049
    %v1051 = vsel %vm68, %v1005, 0.0
    %1052 = vadd.xlane.f32.xlu0 %v1051
    %v1053 = vpop.xlane.xlu0 %1052
    %v1054 = vsel %vm68, %v1006, 0.0
    %1055 = vadd.xlane.f32.xlu0 %v1054
    %v1056 = vpop.xlane.xlu0 %1055
    %v1057 = vsel %vm68, %v1007, 0.0
    %1058 = vadd.xlane.f32.xlu0 %v1057
    %v1059 = vpop.xlane.xlu0 %1058
    %v1060 = vsel %vm68, %v1008, 0.0
    %1061 = vadd.xlane.f32.xlu0 %v1060
    %v1062 = vpop.xlane.xlu0 %1061
    %v1063 = vsel %vm68, %v1009, 0.0
    %1064 = vadd.xlane.f32.xlu0 %v1063
    %v1065 = vpop.xlane.xlu0 %1064
    %v1066 = vsel %vm68, %v1010, 0.0
    %1067 = vadd.xlane.f32.xlu0 %v1066
    %v1068 = vpop.xlane.xlu0 %1067
    %v1069 = vsel %vm68, %v1011, 0.0
    %1070 = vadd.xlane.f32.xlu0 %v1069
    %v1071 = vpop.xlane.xlu0 %1070
    %v1072 = vsel %vm68, %v1012, 0.0
    %1073 = vadd.xlane.f32.xlu0 %v1072
    %v1074 = vpop.xlane.xlu0 %1073
    %v1075 = vsel %vm68, %v1013, 0.0
    %1076 = vadd.xlane.f32.xlu0 %v1075
    %v1077 = vpop.xlane.xlu0 %1076
    %v1078 = vsel %vm68, %v1014, 0.0
    %1079 = vadd.xlane.f32.xlu0 %v1078
    %v1080 = vpop.xlane.xlu0 %1079
    %v1081 = vsel %vm68, %v1015, 0.0
    %1082 = vadd.xlane.f32.xlu0 %v1081
    %v1083 = vpop.xlane.xlu0 %1082
    %v1084 = vsel %vm68, %v1016, 0.0
    %1085 = vadd.xlane.f32.xlu0 %v1084
    %v1086 = vpop.xlane.xlu0 %1085
    %v1087 = vsel %vm68, %v1017, 0.0
    %1088 = vadd.xlane.f32.xlu0 %v1087
    %v1089 = vpop.xlane.xlu0 %1088
    %v1090 = vsel %vm68, %v1018, 0.0
    %1091 = vadd.xlane.f32.xlu0 %v1090
    %v1092 = vpop.xlane.xlu0 %1091
    %v1093 = vsel %vm68, %v1019, 0.0
    %1094 = vadd.xlane.f32.xlu0 %v1093
    %v1095 = vpop.xlane.xlu0 %1094
    %v1096 = vsel %vm68, %v1020, 0.0
    %1097 = vadd.xlane.f32.xlu0 %v1096
    %v1098 = vpop.xlane.xlu0 %1097
    %v1099 = vsel %vm68, %v1021, 0.0
    %1100 = vadd.xlane.f32.xlu0 %v1099
    %v1101 = vpop.xlane.xlu0 %1100
    %v1102 = vsel %vm68, %v1022, 0.0
    %1103 = vadd.xlane.f32.xlu0 %v1102
    %v1104 = vpop.xlane.xlu0 %1103
    %v1105 = vsel %vm68, %v1023, 0.0
    %1106 = vadd.xlane.f32.xlu0 %v1105
    %v1107 = vpop.xlane.xlu0 %1106
    %v1108 = vsel %vm68, %v1024, 0.0
    %1109 = vadd.xlane.f32.xlu0 %v1108
    %v1110 = vpop.xlane.xlu0 %1109
    %v1111 = vsel %vm68, %v1025, 0.0
    %1112 = vadd.xlane.f32.xlu0 %v1111
    %v1113 = vpop.xlane.xlu0 %1112
    %v1114 = vsel %vm68, %v1026, 0.0
    %1115 = vadd.xlane.f32.xlu0 %v1114
    %v1116 = vpop.xlane.xlu0 %1115
    %v1117 = vsel %vm68, %v1027, 0.0
    %1118 = vadd.xlane.f32.xlu0 %v1117
    %v1119 = vpop.xlane.xlu0 %1118
    %v1120 = vsel %vm68, %v1028, 0.0
    %1121 = vadd.xlane.f32.xlu0 %v1120
    %v1122 = vpop.xlane.xlu0 %1121
    %v1123 = vsel %vm68, %v1029, 0.0
    %1124 = vadd.xlane.f32.xlu0 %v1123
    %v1125 = vpop.xlane.xlu0 %1124
    %v1126 = vadd.f32 %v966, %v1032
    %v1127 = vadd.f32 %v967, %v1035
    %v1128 = vadd.f32 %v968, %v1038
    %v1129 = vadd.f32 %v969, %v1041
    %v1130 = vadd.f32 %v970, %v1044
    %v1131 = vadd.f32 %v971, %v1047
    %v1132 = vadd.f32 %v972, %v1050
    %v1133 = vadd.f32 %v973, %v1053
    %v1134 = vadd.f32 %v974, %v1056
    %v1135 = vadd.f32 %v975, %v1059
    %v1136 = vadd.f32 %v976, %v1062
    %v1137 = vadd.f32 %v977, %v1065
    %v1138 = vadd.f32 %v978, %v1068
    %v1139 = vadd.f32 %v979, %v1071
    %v1140 = vadd.f32 %v980, %v1074
    %v1141 = vadd.f32 %v981, %v1077
    %v1142 = vadd.f32 %v982, %v1080
    %v1143 = vadd.f32 %v983, %v1083
    %v1144 = vadd.f32 %v984, %v1086
    %v1145 = vadd.f32 %v985, %v1089
    %v1146 = vadd.f32 %v986, %v1092
    %v1147 = vadd.f32 %v987, %v1095
    %v1148 = vadd.f32 %v988, %v1098
    %v1149 = vadd.f32 %v989, %v1101
    %v1150 = vadd.f32 %v990, %v1104
    %v1151 = vadd.f32 %v991, %v1107
    %v1152 = vadd.f32 %v992, %v1110
    %v1153 = vadd.f32 %v993, %v1113
    %v1154 = vadd.f32 %v994, %v1116
    %v1155 = vadd.f32 %v995, %v1119
    %v1156 = vadd.f32 %v996, %v1122
    %v1157 = vadd.f32 %v997, %v1125
    %v1158 = vld [vmem:[%s837 + $0x2] sm:$0xff]
    %v1159 = vld [vmem:[%s837 + $0xa] sm:$0xff]
    %v1160 = vld [vmem:[%s837 + $0x1a] sm:$0xff]
    %v1161 = vld [vmem:[%s837 + $0x22] sm:$0xff]
    %v1162 = vld [vmem:[%s837 + $0x32] sm:$0xff]
    %v1163 = vld [vmem:[%s837 + $0x3a] sm:$0xff]
    %v1164 = vld [vmem:[%s837 + $0x4a] sm:$0xff]
    %v1165 = vld [vmem:[%s837 + $0x52] sm:$0xff]
    %v1166 = vld [vmem:[%s837 + $0x62] sm:$0xff]
    %v1167 = vld [vmem:[%s837 + $0x6a] sm:$0xff]
    %v1168 = vld [vmem:[%s837 + $0x7a] sm:$0xff]
    %v1169 = vld [vmem:[%s837 + $0x82] sm:$0xff]
    %v1170 = vld [vmem:[%s837 + $0x92] sm:$0xff]
    %v1171 = vld [vmem:[%s837 + $0x9a] sm:$0xff]
    %v1172 = vld [vmem:[%s837 + $0xaa] sm:$0xff]
    %v1173 = vld [vmem:[%s837 + $0xb2] sm:$0xff]
    %v1174 = vld [vmem:[%s837 + $0xc2] sm:$0xff]
    %v1175 = vld [vmem:[%s837 + $0xca] sm:$0xff]
    %v1176 = vld [vmem:[%s837 + $0xda] sm:$0xff]
    %v1177 = vld [vmem:[%s837 + $0xe2] sm:$0xff]
    %v1178 = vld [vmem:[%s837 + $0xf2] sm:$0xff]
    %v1179 = vld [vmem:[%s837 + $0xfa] sm:$0xff]
    %v1180 = vld [vmem:[%s837 + $0x10a] sm:$0xff]
    %v1181 = vld [vmem:[%s837 + $0x112] sm:$0xff]
    %v1182 = vld [vmem:[%s837 + $0x122] sm:$0xff]
    %v1183 = vld [vmem:[%s837 + $0x12a] sm:$0xff]
    %v1184 = vld [vmem:[%s837 + $0x13a] sm:$0xff]
    %v1185 = vld [vmem:[%s837 + $0x142] sm:$0xff]
    %v1186 = vld [vmem:[%s837 + $0x152] sm:$0xff]
    %v1187 = vld [vmem:[%s837 + $0x15a] sm:$0xff]
    %v1188 = vld [vmem:[%s837 + $0x16a] sm:$0xff]
    %v1189 = vld [vmem:[%s837 + $0x172] sm:$0xff]
    %v1190 = vsel %vm68, %v1158, 0.0
    %1191 = vadd.xlane.f32.xlu0 %v1190
    %v1192 = vpop.xlane.xlu0 %1191
    %v1193 = vsel %vm68, %v1159, 0.0
    %1194 = vadd.xlane.f32.xlu0 %v1193
    %v1195 = vpop.xlane.xlu0 %1194
    %v1196 = vsel %vm68, %v1160, 0.0
    %1197 = vadd.xlane.f32.xlu0 %v1196
    %v1198 = vpop.xlane.xlu0 %1197
    %v1199 = vsel %vm68, %v1161, 0.0
    %1200 = vadd.xlane.f32.xlu0 %v1199
    %v1201 = vpop.xlane.xlu0 %1200
    %v1202 = vsel %vm68, %v1162, 0.0
    %1203 = vadd.xlane.f32.xlu0 %v1202
    %v1204 = vpop.xlane.xlu0 %1203
    %v1205 = vsel %vm68, %v1163, 0.0
    %1206 = vadd.xlane.f32.xlu0 %v1205
    %v1207 = vpop.xlane.xlu0 %1206
    %v1208 = vsel %vm68, %v1164, 0.0
    %1209 = vadd.xlane.f32.xlu0 %v1208
    %v1210 = vpop.xlane.xlu0 %1209
    %v1211 = vsel %vm68, %v1165, 0.0
    %1212 = vadd.xlane.f32.xlu0 %v1211
    %v1213 = vpop.xlane.xlu0 %1212
    %v1214 = vsel %vm68, %v1166, 0.0
    %1215 = vadd.xlane.f32.xlu0 %v1214
    %v1216 = vpop.xlane.xlu0 %1215
    %v1217 = vsel %vm68, %v1167, 0.0
    %1218 = vadd.xlane.f32.xlu0 %v1217
    %v1219 = vpop.xlane.xlu0 %1218
    %v1220 = vsel %vm68, %v1168, 0.0
    %1221 = vadd.xlane.f32.xlu0 %v1220
    %v1222 = vpop.xlane.xlu0 %1221
    %v1223 = vsel %vm68, %v1169, 0.0
    %1224 = vadd.xlane.f32.xlu0 %v1223
    %v1225 = vpop.xlane.xlu0 %1224
    %v1226 = vsel %vm68, %v1170, 0.0
    %1227 = vadd.xlane.f32.xlu0 %v1226
    %v1228 = vpop.xlane.xlu0 %1227
    %v1229 = vsel %vm68, %v1171, 0.0
    %1230 = vadd.xlane.f32.xlu0 %v1229
    %v1231 = vpop.xlane.xlu0 %1230
    %v1232 = vsel %vm68, %v1172, 0.0
    %1233 = vadd.xlane.f32.xlu0 %v1232
    %v1234 = vpop.xlane.xlu0 %1233
    %v1235 = vsel %vm68, %v1173, 0.0
    %1236 = vadd.xlane.f32.xlu0 %v1235
    %v1237 = vpop.xlane.xlu0 %1236
    %v1238 = vsel %vm68, %v1174, 0.0
    %1239 = vadd.xlane.f32.xlu0 %v1238
    %v1240 = vpop.xlane.xlu0 %1239
    %v1241 = vsel %vm68, %v1175, 0.0
    %1242 = vadd.xlane.f32.xlu0 %v1241
    %v1243 = vpop.xlane.xlu0 %1242
    %v1244 = vsel %vm68, %v1176, 0.0
    %1245 = vadd.xlane.f32.xlu0 %v1244
    %v1246 = vpop.xlane.xlu0 %1245
    %v1247 = vsel %vm68, %v1177, 0.0
    %1248 = vadd.xlane.f32.xlu0 %v1247
    %v1249 = vpop.xlane.xlu0 %1248
    %v1250 = vsel %vm68, %v1178, 0.0
    %1251 = vadd.xlane.f32.xlu0 %v1250
    %v1252 = vpop.xlane.xlu0 %1251
    %v1253 = vsel %vm68, %v1179, 0.0
    %1254 = vadd.xlane.f32.xlu0 %v1253
    %v1255 = vpop.xlane.xlu0 %1254
    %v1256 = vsel %vm68, %v1180, 0.0
    %1257 = vadd.xlane.f32.xlu0 %v1256
    %v1258 = vpop.xlane.xlu0 %1257
    %v1259 = vsel %vm68, %v1181, 0.0
    %1260 = vadd.xlane.f32.xlu0 %v1259
    %v1261 = vpop.xlane.xlu0 %1260
    %v1262 = vsel %vm68, %v1182, 0.0
    %1263 = vadd.xlane.f32.xlu0 %v1262
    %v1264 = vpop.xlane.xlu0 %1263
    %v1265 = vsel %vm68, %v1183, 0.0
    %1266 = vadd.xlane.f32.xlu0 %v1265
    %v1267 = vpop.xlane.xlu0 %1266
    %v1268 = vsel %vm68, %v1184, 0.0
    %1269 = vadd.xlane.f32.xlu0 %v1268
    %v1270 = vpop.xlane.xlu0 %1269
    %v1271 = vsel %vm68, %v1185, 0.0
    %1272 = vadd.xlane.f32.xlu0 %v1271
    %v1273 = vpop.xlane.xlu0 %1272
    %v1274 = vsel %vm68, %v1186, 0.0
    %1275 = vadd.xlane.f32.xlu0 %v1274
    %v1276 = vpop.xlane.xlu0 %1275
    %v1277 = vsel %vm68, %v1187, 0.0
    %1278 = vadd.xlane.f32.xlu0 %v1277
    %v1279 = vpop.xlane.xlu0 %1278
    %v1280 = vsel %vm68, %v1188, 0.0
    %1281 = vadd.xlane.f32.xlu0 %v1280
    %v1282 = vpop.xlane.xlu0 %1281
    %v1283 = vsel %vm68, %v1189, 0.0
    %1284 = vadd.xlane.f32.xlu0 %v1283
    %v1285 = vpop.xlane.xlu0 %1284
    %v1286 = vadd.f32 %v1126, %v1192
    %v1287 = vadd.f32 %v1127, %v1195
    %v1288 = vadd.f32 %v1128, %v1198
    %v1289 = vadd.f32 %v1129, %v1201
    %v1290 = vadd.f32 %v1130, %v1204
    %v1291 = vadd.f32 %v1131, %v1207
    %v1292 = vadd.f32 %v1132, %v1210
    %v1293 = vadd.f32 %v1133, %v1213
    %v1294 = vadd.f32 %v1134, %v1216
    %v1295 = vadd.f32 %v1135, %v1219
    %v1296 = vadd.f32 %v1136, %v1222
    %v1297 = vadd.f32 %v1137, %v1225
    %v1298 = vadd.f32 %v1138, %v1228
    %v1299 = vadd.f32 %v1139, %v1231
    %v1300 = vadd.f32 %v1140, %v1234
    %v1301 = vadd.f32 %v1141, %v1237
    %v1302 = vadd.f32 %v1142, %v1240
    %v1303 = vadd.f32 %v1143, %v1243
    %v1304 = vadd.f32 %v1144, %v1246
    %v1305 = vadd.f32 %v1145, %v1249
    %v1306 = vadd.f32 %v1146, %v1252
    %v1307 = vadd.f32 %v1147, %v1255
    %v1308 = vadd.f32 %v1148, %v1258
    %v1309 = vadd.f32 %v1149, %v1261
    %v1310 = vadd.f32 %v1150, %v1264
    %v1311 = vadd.f32 %v1151, %v1267
    %v1312 = vadd.f32 %v1152, %v1270
    %v1313 = vadd.f32 %v1153, %v1273
    %v1314 = vadd.f32 %v1154, %v1276
    %v1315 = vadd.f32 %v1155, %v1279
    %v1316 = vadd.f32 %v1156, %v1282
    %v1317 = vadd.f32 %v1157, %v1285
    %v1318 = vld [vmem:[%s837 + $0x3] sm:$0xff]
    %v1319 = vld [vmem:[%s837 + $0xb] sm:$0xff]
    %v1320 = vld [vmem:[%s837 + $0x1b] sm:$0xff]
    %v1321 = vld [vmem:[%s837 + $0x23] sm:$0xff]
    %v1322 = vld [vmem:[%s837 + $0x33] sm:$0xff]
    %v1323 = vld [vmem:[%s837 + $0x3b] sm:$0xff]
    %v1324 = vld [vmem:[%s837 + $0x4b] sm:$0xff]
    %v1325 = vld [vmem:[%s837 + $0x53] sm:$0xff]
    %v1326 = vld [vmem:[%s837 + $0x63] sm:$0xff]
    %v1327 = vld [vmem:[%s837 + $0x6b] sm:$0xff]
    %v1328 = vld [vmem:[%s837 + $0x7b] sm:$0xff]
    %v1329 = vld [vmem:[%s837 + $0x83] sm:$0xff]
    %v1330 = vld [vmem:[%s837 + $0x93] sm:$0xff]
    %v1331 = vld [vmem:[%s837 + $0x9b] sm:$0xff]
    %v1332 = vld [vmem:[%s837 + $0xab] sm:$0xff]
    %v1333 = vld [vmem:[%s837 + $0xb3] sm:$0xff]
    %v1334 = vld [vmem:[%s837 + $0xc3] sm:$0xff]
    %v1335 = vld [vmem:[%s837 + $0xcb] sm:$0xff]
    %v1336 = vld [vmem:[%s837 + $0xdb] sm:$0xff]
    %v1337 = vld [vmem:[%s837 + $0xe3] sm:$0xff]
    %v1338 = vld [vmem:[%s837 + $0xf3] sm:$0xff]
    %v1339 = vld [vmem:[%s837 + $0xfb] sm:$0xff]
    %v1340 = vld [vmem:[%s837 + $0x10b] sm:$0xff]
    %v1341 = vld [vmem:[%s837 + $0x113] sm:$0xff]
    %v1342 = vld [vmem:[%s837 + $0x123] sm:$0xff]
    %v1343 = vld [vmem:[%s837 + $0x12b] sm:$0xff]
    %v1344 = vld [vmem:[%s837 + $0x13b] sm:$0xff]
    %v1345 = vld [vmem:[%s837 + $0x143] sm:$0xff]
    %v1346 = vld [vmem:[%s837 + $0x153] sm:$0xff]
    %v1347 = vld [vmem:[%s837 + $0x15b] sm:$0xff]
    %v1348 = vld [vmem:[%s837 + $0x16b] sm:$0xff]
    %v1349 = vld [vmem:[%s837 + $0x173] sm:$0xff]
    %v1350 = vsel %vm68, %v1318, 0.0
    %1351 = vadd.xlane.f32.xlu0 %v1350
    %v1352 = vpop.xlane.xlu0 %1351
    %v1353 = vsel %vm68, %v1319, 0.0
    %1354 = vadd.xlane.f32.xlu0 %v1353
    %v1355 = vpop.xlane.xlu0 %1354
    %v1356 = vsel %vm68, %v1320, 0.0
    %1357 = vadd.xlane.f32.xlu0 %v1356
    %v1358 = vpop.xlane.xlu0 %1357
    %v1359 = vsel %vm68, %v1321, 0.0
    %1360 = vadd.xlane.f32.xlu0 %v1359
    %v1361 = vpop.xlane.xlu0 %1360
    %v1362 = vsel %vm68, %v1322, 0.0
    %1363 = vadd.xlane.f32.xlu0 %v1362
    %v1364 = vpop.xlane.xlu0 %1363
    %v1365 = vsel %vm68, %v1323, 0.0
    %1366 = vadd.xlane.f32.xlu0 %v1365
    %v1367 = vpop.xlane.xlu0 %1366
    %v1368 = vsel %vm68, %v1324, 0.0
    %1369 = vadd.xlane.f32.xlu0 %v1368
    %v1370 = vpop.xlane.xlu0 %1369
    %v1371 = vsel %vm68, %v1325, 0.0
    %1372 = vadd.xlane.f32.xlu0 %v1371
    %v1373 = vpop.xlane.xlu0 %1372
    %v1374 = vsel %vm68, %v1326, 0.0
    %1375 = vadd.xlane.f32.xlu0 %v1374
    %v1376 = vpop.xlane.xlu0 %1375
    %v1377 = vsel %vm68, %v1327, 0.0
    %1378 = vadd.xlane.f32.xlu0 %v1377
    %v1379 = vpop.xlane.xlu0 %1378
    %v1380 = vsel %vm68, %v1328, 0.0
    %1381 = vadd.xlane.f32.xlu0 %v1380
    %v1382 = vpop.xlane.xlu0 %1381
    %v1383 = vsel %vm68, %v1329, 0.0
    %1384 = vadd.xlane.f32.xlu0 %v1383
    %v1385 = vpop.xlane.xlu0 %1384
    %v1386 = vsel %vm68, %v1330, 0.0
    %1387 = vadd.xlane.f32.xlu0 %v1386
    %v1388 = vpop.xlane.xlu0 %1387
    %v1389 = vsel %vm68, %v1331, 0.0
    %1390 = vadd.xlane.f32.xlu0 %v1389
    %v1391 = vpop.xlane.xlu0 %1390
    %v1392 = vsel %vm68, %v1332, 0.0
    %1393 = vadd.xlane.f32.xlu0 %v1392
    %v1394 = vpop.xlane.xlu0 %1393
    %v1395 = vsel %vm68, %v1333, 0.0
    %1396 = vadd.xlane.f32.xlu0 %v1395
    %v1397 = vpop.xlane.xlu0 %1396
    %v1398 = vsel %vm68, %v1334, 0.0
    %1399 = vadd.xlane.f32.xlu0 %v1398
    %v1400 = vpop.xlane.xlu0 %1399
    %v1401 = vsel %vm68, %v1335, 0.0
    %1402 = vadd.xlane.f32.xlu0 %v1401
    %v1403 = vpop.xlane.xlu0 %1402
    %v1404 = vsel %vm68, %v1336, 0.0
    %1405 = vadd.xlane.f32.xlu0 %v1404
    %v1406 = vpop.xlane.xlu0 %1405
    %v1407 = vsel %vm68, %v1337, 0.0
    %1408 = vadd.xlane.f32.xlu0 %v1407
    %v1409 = vpop.xlane.xlu0 %1408
    %v1410 = vsel %vm68, %v1338, 0.0
    %1411 = vadd.xlane.f32.xlu0 %v1410
    %v1412 = vpop.xlane.xlu0 %1411
    %v1413 = vsel %vm68, %v1339, 0.0
    %1414 = vadd.xlane.f32.xlu0 %v1413
    %v1415 = vpop.xlane.xlu0 %1414
    %v1416 = vsel %vm68, %v1340, 0.0
    %1417 = vadd.xlane.f32.xlu0 %v1416
    %v1418 = vpop.xlane.xlu0 %1417
    %v1419 = vsel %vm68, %v1341, 0.0
    %1420 = vadd.xlane.f32.xlu0 %v1419
    %v1421 = vpop.xlane.xlu0 %1420
    %v1422 = vsel %vm68, %v1342, 0.0
    %1423 = vadd.xlane.f32.xlu0 %v1422
    %v1424 = vpop.xlane.xlu0 %1423
    %v1425 = vsel %vm68, %v1343, 0.0
    %1426 = vadd.xlane.f32.xlu0 %v1425
    %v1427 = vpop.xlane.xlu0 %1426
    %v1428 = vsel %vm68, %v1344, 0.0
    %1429 = vadd.xlane.f32.xlu0 %v1428
    %v1430 = vpop.xlane.xlu0 %1429
    %v1431 = vsel %vm68, %v1345, 0.0
    %1432 = vadd.xlane.f32.xlu0 %v1431
    %v1433 = vpop.xlane.xlu0 %1432
    %v1434 = vsel %vm68, %v1346, 0.0
    %1435 = vadd.xlane.f32.xlu0 %v1434
    %v1436 = vpop.xlane.xlu0 %1435
    %v1437 = vsel %vm68, %v1347, 0.0
    %1438 = vadd.xlane.f32.xlu0 %v1437
    %v1439 = vpop.xlane.xlu0 %1438
    %v1440 = vsel %vm68, %v1348, 0.0
    %1441 = vadd.xlane.f32.xlu0 %v1440
    %v1442 = vpop.xlane.xlu0 %1441
    %v1443 = vsel %vm68, %v1349, 0.0
    %1444 = vadd.xlane.f32.xlu0 %v1443
    %v1445 = vpop.xlane.xlu0 %1444
    %v1446 = vadd.f32 %v1286, %v1352
    %v1447 = vadd.f32 %v1287, %v1355
    %v1448 = vadd.f32 %v1288, %v1358
    %v1449 = vadd.f32 %v1289, %v1361
    %v1450 = vadd.f32 %v1290, %v1364
    %v1451 = vadd.f32 %v1291, %v1367
    %v1452 = vadd.f32 %v1292, %v1370
    %v1453 = vadd.f32 %v1293, %v1373
    %v1454 = vadd.f32 %v1294, %v1376
    %v1455 = vadd.f32 %v1295, %v1379
    %v1456 = vadd.f32 %v1296, %v1382
    %v1457 = vadd.f32 %v1297, %v1385
    %v1458 = vadd.f32 %v1298, %v1388
    %v1459 = vadd.f32 %v1299, %v1391
    %v1460 = vadd.f32 %v1300, %v1394
    %v1461 = vadd.f32 %v1301, %v1397
    %v1462 = vadd.f32 %v1302, %v1400
    %v1463 = vadd.f32 %v1303, %v1403
    %v1464 = vadd.f32 %v1304, %v1406
    %v1465 = vadd.f32 %v1305, %v1409
    %v1466 = vadd.f32 %v1306, %v1412
    %v1467 = vadd.f32 %v1307, %v1415
    %v1468 = vadd.f32 %v1308, %v1418
    %v1469 = vadd.f32 %v1309, %v1421
    %v1470 = vadd.f32 %v1310, %v1424
    %v1471 = vadd.f32 %v1311, %v1427
    %v1472 = vadd.f32 %v1312, %v1430
    %v1473 = vadd.f32 %v1313, %v1433
    %v1474 = vadd.f32 %v1314, %v1436
    %v1475 = vadd.f32 %v1315, %v1439
    %v1476 = vadd.f32 %v1316, %v1442
    %v1477 = vadd.f32 %v1317, %v1445
    %v1478 = vld [vmem:[%s837 + $0x4] sm:$0xff]
    %v1479 = vld [vmem:[%s837 + $0xc] sm:$0xff]
    %v1480 = vld [vmem:[%s837 + $0x1c] sm:$0xff]
    %v1481 = vld [vmem:[%s837 + $0x24] sm:$0xff]
    %v1482 = vld [vmem:[%s837 + $0x34] sm:$0xff]
    %v1483 = vld [vmem:[%s837 + $0x3c] sm:$0xff]
    %v1484 = vld [vmem:[%s837 + $0x4c] sm:$0xff]
    %v1485 = vld [vmem:[%s837 + $0x54] sm:$0xff]
    %v1486 = vld [vmem:[%s837 + $0x64] sm:$0xff]
    %v1487 = vld [vmem:[%s837 + $0x6c] sm:$0xff]
    %v1488 = vld [vmem:[%s837 + $0x7c] sm:$0xff]
    %v1489 = vld [vmem:[%s837 + $0x84] sm:$0xff]
    %v1490 = vld [vmem:[%s837 + $0x94] sm:$0xff]
    %v1491 = vld [vmem:[%s837 + $0x9c] sm:$0xff]
    %v1492 = vld [vmem:[%s837 + $0xac] sm:$0xff]
    %v1493 = vld [vmem:[%s837 + $0xb4] sm:$0xff]
    %v1494 = vld [vmem:[%s837 + $0xc4] sm:$0xff]
    %v1495 = vld [vmem:[%s837 + $0xcc] sm:$0xff]
    %v1496 = vld [vmem:[%s837 + $0xdc] sm:$0xff]
    %v1497 = vld [vmem:[%s837 + $0xe4] sm:$0xff]
    %v1498 = vld [vmem:[%s837 + $0xf4] sm:$0xff]
    %v1499 = vld [vmem:[%s837 + $0xfc] sm:$0xff]
    %v1500 = vld [vmem:[%s837 + $0x10c] sm:$0xff]
    %v1501 = vld [vmem:[%s837 + $0x114] sm:$0xff]
    %v1502 = vld [vmem:[%s837 + $0x124] sm:$0xff]
    %v1503 = vld [vmem:[%s837 + $0x12c] sm:$0xff]
    %v1504 = vld [vmem:[%s837 + $0x13c] sm:$0xff]
    %v1505 = vld [vmem:[%s837 + $0x144] sm:$0xff]
    %v1506 = vld [vmem:[%s837 + $0x154] sm:$0xff]
    %v1507 = vld [vmem:[%s837 + $0x15c] sm:$0xff]
    %v1508 = vld [vmem:[%s837 + $0x16c] sm:$0xff]
    %v1509 = vld [vmem:[%s837 + $0x174] sm:$0xff]
    %v1510 = vsel %vm68, %v1478, 0.0
    %1511 = vadd.xlane.f32.xlu0 %v1510
    %v1512 = vpop.xlane.xlu0 %1511
    %v1513 = vsel %vm68, %v1479, 0.0
    %1514 = vadd.xlane.f32.xlu0 %v1513
    %v1515 = vpop.xlane.xlu0 %1514
    %v1516 = vsel %vm68, %v1480, 0.0
    %1517 = vadd.xlane.f32.xlu0 %v1516
    %v1518 = vpop.xlane.xlu0 %1517
    %v1519 = vsel %vm68, %v1481, 0.0
    %1520 = vadd.xlane.f32.xlu0 %v1519
    %v1521 = vpop.xlane.xlu0 %1520
    %v1522 = vsel %vm68, %v1482, 0.0
    %1523 = vadd.xlane.f32.xlu0 %v1522
    %v1524 = vpop.xlane.xlu0 %1523
    %v1525 = vsel %vm68, %v1483, 0.0
    %1526 = vadd.xlane.f32.xlu0 %v1525
    %v1527 = vpop.xlane.xlu0 %1526
    %v1528 = vsel %vm68, %v1484, 0.0
    %1529 = vadd.xlane.f32.xlu0 %v1528
    %v1530 = vpop.xlane.xlu0 %1529
    %v1531 = vsel %vm68, %v1485, 0.0
    %1532 = vadd.xlane.f32.xlu0 %v1531
    %v1533 = vpop.xlane.xlu0 %1532
    %v1534 = vsel %vm68, %v1486, 0.0
    %1535 = vadd.xlane.f32.xlu0 %v1534
    %v1536 = vpop.xlane.xlu0 %1535
    %v1537 = vsel %vm68, %v1487, 0.0
    %1538 = vadd.xlane.f32.xlu0 %v1537
    %v1539 = vpop.xlane.xlu0 %1538
    %v1540 = vsel %vm68, %v1488, 0.0
    %1541 = vadd.xlane.f32.xlu0 %v1540
    %v1542 = vpop.xlane.xlu0 %1541
    %v1543 = vsel %vm68, %v1489, 0.0
    %1544 = vadd.xlane.f32.xlu0 %v1543
    %v1545 = vpop.xlane.xlu0 %1544
    %v1546 = vsel %vm68, %v1490, 0.0
    %1547 = vadd.xlane.f32.xlu0 %v1546
    %v1548 = vpop.xlane.xlu0 %1547
    %v1549 = vsel %vm68, %v1491, 0.0
    %1550 = vadd.xlane.f32.xlu0 %v1549
    %v1551 = vpop.xlane.xlu0 %1550
    %v1552 = vsel %vm68, %v1492, 0.0
    %1553 = vadd.xlane.f32.xlu0 %v1552
    %v1554 = vpop.xlane.xlu0 %1553
    %v1555 = vsel %vm68, %v1493, 0.0
    %1556 = vadd.xlane.f32.xlu0 %v1555
    %v1557 = vpop.xlane.xlu0 %1556
    %v1558 = vsel %vm68, %v1494, 0.0
    %1559 = vadd.xlane.f32.xlu0 %v1558
    %v1560 = vpop.xlane.xlu0 %1559
    %v1561 = vsel %vm68, %v1495, 0.0
    %1562 = vadd.xlane.f32.xlu0 %v1561
    %v1563 = vpop.xlane.xlu0 %1562
    %v1564 = vsel %vm68, %v1496, 0.0
    %1565 = vadd.xlane.f32.xlu0 %v1564
    %v1566 = vpop.xlane.xlu0 %1565
    %v1567 = vsel %vm68, %v1497, 0.0
    %1568 = vadd.xlane.f32.xlu0 %v1567
    %v1569 = vpop.xlane.xlu0 %1568
    %v1570 = vsel %vm68, %v1498, 0.0
    %1571 = vadd.xlane.f32.xlu0 %v1570
    %v1572 = vpop.xlane.xlu0 %1571
    %v1573 = vsel %vm68, %v1499, 0.0
    %1574 = vadd.xlane.f32.xlu0 %v1573
    %v1575 = vpop.xlane.xlu0 %1574
    %v1576 = vsel %vm68, %v1500, 0.0
    %1577 = vadd.xlane.f32.xlu0 %v1576
    %v1578 = vpop.xlane.xlu0 %1577
    %v1579 = vsel %vm68, %v1501, 0.0
    %1580 = vadd.xlane.f32.xlu0 %v1579
    %v1581 = vpop.xlane.xlu0 %1580
    %v1582 = vsel %vm68, %v1502, 0.0
    %1583 = vadd.xlane.f32.xlu0 %v1582
    %v1584 = vpop.xlane.xlu0 %1583
    %v1585 = vsel %vm68, %v1503, 0.0
    %1586 = vadd.xlane.f32.xlu0 %v1585
    %v1587 = vpop.xlane.xlu0 %1586
    %v1588 = vsel %vm68, %v1504, 0.0
    %1589 = vadd.xlane.f32.xlu0 %v1588
    %v1590 = vpop.xlane.xlu0 %1589
    %v1591 = vsel %vm68, %v1505, 0.0
    %1592 = vadd.xlane.f32.xlu0 %v1591
    %v1593 = vpop.xlane.xlu0 %1592
    %v1594 = vsel %vm68, %v1506, 0.0
    %1595 = vadd.xlane.f32.xlu0 %v1594
    %v1596 = vpop.xlane.xlu0 %1595
    %v1597 = vsel %vm68, %v1507, 0.0
    %1598 = vadd.xlane.f32.xlu0 %v1597
    %v1599 = vpop.xlane.xlu0 %1598
    %v1600 = vsel %vm68, %v1508, 0.0
    %1601 = vadd.xlane.f32.xlu0 %v1600
    %v1602 = vpop.xlane.xlu0 %1601
    %v1603 = vsel %vm68, %v1509, 0.0
    %1604 = vadd.xlane.f32.xlu0 %v1603
    %v1605 = vpop.xlane.xlu0 %1604
    %v1606 = vadd.f32 %v1446, %v1512
    %v1607 = vadd.f32 %v1447, %v1515
    %v1608 = vadd.f32 %v1448, %v1518
    %v1609 = vadd.f32 %v1449, %v1521
    %v1610 = vadd.f32 %v1450, %v1524
    %v1611 = vadd.f32 %v1451, %v1527
    %v1612 = vadd.f32 %v1452, %v1530
    %v1613 = vadd.f32 %v1453, %v1533
    %v1614 = vadd.f32 %v1454, %v1536
    %v1615 = vadd.f32 %v1455, %v1539
    %v1616 = vadd.f32 %v1456, %v1542
    %v1617 = vadd.f32 %v1457, %v1545
    %v1618 = vadd.f32 %v1458, %v1548
    %v1619 = vadd.f32 %v1459, %v1551
    %v1620 = vadd.f32 %v1460, %v1554
    %v1621 = vadd.f32 %v1461, %v1557
    %v1622 = vadd.f32 %v1462, %v1560
    %v1623 = vadd.f32 %v1463, %v1563
    %v1624 = vadd.f32 %v1464, %v1566
    %v1625 = vadd.f32 %v1465, %v1569
    %v1626 = vadd.f32 %v1466, %v1572
    %v1627 = vadd.f32 %v1467, %v1575
    %v1628 = vadd.f32 %v1468, %v1578
    %v1629 = vadd.f32 %v1469, %v1581
    %v1630 = vadd.f32 %v1470, %v1584
    %v1631 = vadd.f32 %v1471, %v1587
    %v1632 = vadd.f32 %v1472, %v1590
    %v1633 = vadd.f32 %v1473, %v1593
    %v1634 = vadd.f32 %v1474, %v1596
    %v1635 = vadd.f32 %v1475, %v1599
    %v1636 = vadd.f32 %v1476, %v1602
    %v1637 = vadd.f32 %v1477, %v1605
    %s1638 = scalar_lea.vmem %s0, 48
    %v1639 = vld [vmem:[%s1638] sm:$0xff]
    %v1640 = vld [vmem:[%s1638 + $0x8] sm:$0xff]
    %v1641 = vld [vmem:[%s1638 + $0x18] sm:$0xff]
    %v1642 = vld [vmem:[%s1638 + $0x20] sm:$0xff]
    %v1643 = vld [vmem:[%s1638 + $0x30] sm:$0xff]
    %v1644 = vld [vmem:[%s1638 + $0x38] sm:$0xff]
    %v1645 = vld [vmem:[%s1638 + $0x48] sm:$0xff]
    %v1646 = vld [vmem:[%s1638 + $0x50] sm:$0xff]
    %v1647 = vld [vmem:[%s1638 + $0x60] sm:$0xff]
    %v1648 = vld [vmem:[%s1638 + $0x68] sm:$0xff]
    %v1649 = vld [vmem:[%s1638 + $0x78] sm:$0xff]
    %v1650 = vld [vmem:[%s1638 + $0x80] sm:$0xff]
    %v1651 = vld [vmem:[%s1638 + $0x90] sm:$0xff]
    %v1652 = vld [vmem:[%s1638 + $0x98] sm:$0xff]
    %v1653 = vld [vmem:[%s1638 + $0xa8] sm:$0xff]
    %v1654 = vld [vmem:[%s1638 + $0xb0] sm:$0xff]
    %v1655 = vld [vmem:[%s1638 + $0xc0] sm:$0xff]
    %v1656 = vld [vmem:[%s1638 + $0xc8] sm:$0xff]
    %v1657 = vld [vmem:[%s1638 + $0xd8] sm:$0xff]
    %v1658 = vld [vmem:[%s1638 + $0xe0] sm:$0xff]
    %v1659 = vld [vmem:[%s1638 + $0xf0] sm:$0xff]
    %v1660 = vld [vmem:[%s1638 + $0xf8] sm:$0xff]
    %v1661 = vld [vmem:[%s1638 + $0x108] sm:$0xff]
    %v1662 = vld [vmem:[%s1638 + $0x110] sm:$0xff]
    %v1663 = vld [vmem:[%s1638 + $0x120] sm:$0xff]
    %v1664 = vld [vmem:[%s1638 + $0x128] sm:$0xff]
    %v1665 = vld [vmem:[%s1638 + $0x138] sm:$0xff]
    %v1666 = vld [vmem:[%s1638 + $0x140] sm:$0xff]
    %v1667 = vld [vmem:[%s1638 + $0x150] sm:$0xff]
    %v1668 = vld [vmem:[%s1638 + $0x158] sm:$0xff]
    %v1669 = vld [vmem:[%s1638 + $0x168] sm:$0xff]
    %v1670 = vld [vmem:[%s1638 + $0x170] sm:$0xff]
    %v1671 = vsel %vm68, %v1639, 0.0
    %1672 = vadd.xlane.f32.xlu0 %v1671
    %v1673 = vpop.xlane.xlu0 %1672
    %v1674 = vsel %vm68, %v1640, 0.0
    %1675 = vadd.xlane.f32.xlu0 %v1674
    %v1676 = vpop.xlane.xlu0 %1675
    %v1677 = vsel %vm68, %v1641, 0.0
    %1678 = vadd.xlane.f32.xlu0 %v1677
    %v1679 = vpop.xlane.xlu0 %1678
    %v1680 = vsel %vm68, %v1642, 0.0
    %1681 = vadd.xlane.f32.xlu0 %v1680
    %v1682 = vpop.xlane.xlu0 %1681
    %v1683 = vsel %vm68, %v1643, 0.0
    %1684 = vadd.xlane.f32.xlu0 %v1683
    %v1685 = vpop.xlane.xlu0 %1684
    %v1686 = vsel %vm68, %v1644, 0.0
    %1687 = vadd.xlane.f32.xlu0 %v1686
    %v1688 = vpop.xlane.xlu0 %1687
    %v1689 = vsel %vm68, %v1645, 0.0
    %1690 = vadd.xlane.f32.xlu0 %v1689
    %v1691 = vpop.xlane.xlu0 %1690
    %v1692 = vsel %vm68, %v1646, 0.0
    %1693 = vadd.xlane.f32.xlu0 %v1692
    %v1694 = vpop.xlane.xlu0 %1693
    %v1695 = vsel %vm68, %v1647, 0.0
    %1696 = vadd.xlane.f32.xlu0 %v1695
    %v1697 = vpop.xlane.xlu0 %1696
    %v1698 = vsel %vm68, %v1648, 0.0
    %1699 = vadd.xlane.f32.xlu0 %v1698
    %v1700 = vpop.xlane.xlu0 %1699
    %v1701 = vsel %vm68, %v1649, 0.0
    %1702 = vadd.xlane.f32.xlu0 %v1701
    %v1703 = vpop.xlane.xlu0 %1702
    %v1704 = vsel %vm68, %v1650, 0.0
    %1705 = vadd.xlane.f32.xlu0 %v1704
    %v1706 = vpop.xlane.xlu0 %1705
    %v1707 = vsel %vm68, %v1651, 0.0
    %1708 = vadd.xlane.f32.xlu0 %v1707
    %v1709 = vpop.xlane.xlu0 %1708
    %v1710 = vsel %vm68, %v1652, 0.0
    %1711 = vadd.xlane.f32.xlu0 %v1710
    %v1712 = vpop.xlane.xlu0 %1711
    %v1713 = vsel %vm68, %v1653, 0.0
    %1714 = vadd.xlane.f32.xlu0 %v1713
    %v1715 = vpop.xlane.xlu0 %1714
    %v1716 = vsel %vm68, %v1654, 0.0
    %1717 = vadd.xlane.f32.xlu0 %v1716
    %v1718 = vpop.xlane.xlu0 %1717
    %v1719 = vsel %vm68, %v1655, 0.0
    %1720 = vadd.xlane.f32.xlu0 %v1719
    %v1721 = vpop.xlane.xlu0 %1720
    %v1722 = vsel %vm68, %v1656, 0.0
    %1723 = vadd.xlane.f32.xlu0 %v1722
    %v1724 = vpop.xlane.xlu0 %1723
    %v1725 = vsel %vm68, %v1657, 0.0
    %1726 = vadd.xlane.f32.xlu0 %v1725
    %v1727 = vpop.xlane.xlu0 %1726
    %v1728 = vsel %vm68, %v1658, 0.0
    %1729 = vadd.xlane.f32.xlu0 %v1728
    %v1730 = vpop.xlane.xlu0 %1729
    %v1731 = vsel %vm68, %v1659, 0.0
    %1732 = vadd.xlane.f32.xlu0 %v1731
    %v1733 = vpop.xlane.xlu0 %1732
    %v1734 = vsel %vm68, %v1660, 0.0
    %1735 = vadd.xlane.f32.xlu0 %v1734
    %v1736 = vpop.xlane.xlu0 %1735
    %v1737 = vsel %vm68, %v1661, 0.0
    %1738 = vadd.xlane.f32.xlu0 %v1737
    %v1739 = vpop.xlane.xlu0 %1738
    %v1740 = vsel %vm68, %v1662, 0.0
    %1741 = vadd.xlane.f32.xlu0 %v1740
    %v1742 = vpop.xlane.xlu0 %1741
    %v1743 = vsel %vm68, %v1663, 0.0
    %1744 = vadd.xlane.f32.xlu0 %v1743
    %v1745 = vpop.xlane.xlu0 %1744
    %v1746 = vsel %vm68, %v1664, 0.0
    %1747 = vadd.xlane.f32.xlu0 %v1746
    %v1748 = vpop.xlane.xlu0 %1747
    %v1749 = vsel %vm68, %v1665, 0.0
    %1750 = vadd.xlane.f32.xlu0 %v1749
    %v1751 = vpop.xlane.xlu0 %1750
    %v1752 = vsel %vm68, %v1666, 0.0
    %1753 = vadd.xlane.f32.xlu0 %v1752
    %v1754 = vpop.xlane.xlu0 %1753
    %v1755 = vsel %vm68, %v1667, 0.0
    %1756 = vadd.xlane.f32.xlu0 %v1755
    %v1757 = vpop.xlane.xlu0 %1756
    %v1758 = vsel %vm68, %v1668, 0.0
    %1759 = vadd.xlane.f32.xlu0 %v1758
    %v1760 = vpop.xlane.xlu0 %1759
    %v1761 = vsel %vm68, %v1669, 0.0
    %1762 = vadd.xlane.f32.xlu0 %v1761
    %v1763 = vpop.xlane.xlu0 %1762
    %v1764 = vsel %vm68, %v1670, 0.0
    %1765 = vadd.xlane.f32.xlu0 %v1764
    %v1766 = vpop.xlane.xlu0 %1765
    %v1767 = vadd.f32 %v1606, %v1673
    %v1768 = vadd.f32 %v1607, %v1676
    %v1769 = vadd.f32 %v1608, %v1679
    %v1770 = vadd.f32 %v1609, %v1682
    %v1771 = vadd.f32 %v1610, %v1685
    %v1772 = vadd.f32 %v1611, %v1688
    %v1773 = vadd.f32 %v1612, %v1691
    %v1774 = vadd.f32 %v1613, %v1694
    %v1775 = vadd.f32 %v1614, %v1697
    %v1776 = vadd.f32 %v1615, %v1700
    %v1777 = vadd.f32 %v1616, %v1703
    %v1778 = vadd.f32 %v1617, %v1706
    %v1779 = vadd.f32 %v1618, %v1709
    %v1780 = vadd.f32 %v1619, %v1712
    %v1781 = vadd.f32 %v1620, %v1715
    %v1782 = vadd.f32 %v1621, %v1718
    %v1783 = vadd.f32 %v1622, %v1721
    %v1784 = vadd.f32 %v1623, %v1724
    %v1785 = vadd.f32 %v1624, %v1727
    %v1786 = vadd.f32 %v1625, %v1730
    %v1787 = vadd.f32 %v1626, %v1733
    %v1788 = vadd.f32 %v1627, %v1736
    %v1789 = vadd.f32 %v1628, %v1739
    %v1790 = vadd.f32 %v1629, %v1742
    %v1791 = vadd.f32 %v1630, %v1745
    %v1792 = vadd.f32 %v1631, %v1748
    %v1793 = vadd.f32 %v1632, %v1751
    %v1794 = vadd.f32 %v1633, %v1754
    %v1795 = vadd.f32 %v1634, %v1757
    %v1796 = vadd.f32 %v1635, %v1760
    %v1797 = vadd.f32 %v1636, %v1763
    %v1798 = vadd.f32 %v1637, %v1766
    %v1799 = vld [vmem:[%s1638 + $0x1] sm:$0xff]
    %v1800 = vld [vmem:[%s1638 + $0x9] sm:$0xff]
    %v1801 = vld [vmem:[%s1638 + $0x19] sm:$0xff]
    %v1802 = vld [vmem:[%s1638 + $0x21] sm:$0xff]
    %v1803 = vld [vmem:[%s1638 + $0x31] sm:$0xff]
    %v1804 = vld [vmem:[%s1638 + $0x39] sm:$0xff]
    %v1805 = vld [vmem:[%s1638 + $0x49] sm:$0xff]
    %v1806 = vld [vmem:[%s1638 + $0x51] sm:$0xff]
    %v1807 = vld [vmem:[%s1638 + $0x61] sm:$0xff]
    %v1808 = vld [vmem:[%s1638 + $0x69] sm:$0xff]
    %v1809 = vld [vmem:[%s1638 + $0x79] sm:$0xff]
    %v1810 = vld [vmem:[%s1638 + $0x81] sm:$0xff]
    %v1811 = vld [vmem:[%s1638 + $0x91] sm:$0xff]
    %v1812 = vld [vmem:[%s1638 + $0x99] sm:$0xff]
    %v1813 = vld [vmem:[%s1638 + $0xa9] sm:$0xff]
    %v1814 = vld [vmem:[%s1638 + $0xb1] sm:$0xff]
    %v1815 = vld [vmem:[%s1638 + $0xc1] sm:$0xff]
    %v1816 = vld [vmem:[%s1638 + $0xc9] sm:$0xff]
    %v1817 = vld [vmem:[%s1638 + $0xd9] sm:$0xff]
    %v1818 = vld [vmem:[%s1638 + $0xe1] sm:$0xff]
    %v1819 = vld [vmem:[%s1638 + $0xf1] sm:$0xff]
    %v1820 = vld [vmem:[%s1638 + $0xf9] sm:$0xff]
    %v1821 = vld [vmem:[%s1638 + $0x109] sm:$0xff]
    %v1822 = vld [vmem:[%s1638 + $0x111] sm:$0xff]
    %v1823 = vld [vmem:[%s1638 + $0x121] sm:$0xff]
    %v1824 = vld [vmem:[%s1638 + $0x129] sm:$0xff]
    %v1825 = vld [vmem:[%s1638 + $0x139] sm:$0xff]
    %v1826 = vld [vmem:[%s1638 + $0x141] sm:$0xff]
    %v1827 = vld [vmem:[%s1638 + $0x151] sm:$0xff]
    %v1828 = vld [vmem:[%s1638 + $0x159] sm:$0xff]
    %v1829 = vld [vmem:[%s1638 + $0x169] sm:$0xff]
    %v1830 = vld [vmem:[%s1638 + $0x171] sm:$0xff]
    %v1831 = vsel %vm68, %v1799, 0.0
    %1832 = vadd.xlane.f32.xlu0 %v1831
    %v1833 = vpop.xlane.xlu0 %1832
    %v1834 = vsel %vm68, %v1800, 0.0
    %1835 = vadd.xlane.f32.xlu0 %v1834
    %v1836 = vpop.xlane.xlu0 %1835
    %v1837 = vsel %vm68, %v1801, 0.0
    %1838 = vadd.xlane.f32.xlu0 %v1837
    %v1839 = vpop.xlane.xlu0 %1838
    %v1840 = vsel %vm68, %v1802, 0.0
    %1841 = vadd.xlane.f32.xlu0 %v1840
    %v1842 = vpop.xlane.xlu0 %1841
    %v1843 = vsel %vm68, %v1803, 0.0
    %1844 = vadd.xlane.f32.xlu0 %v1843
    %v1845 = vpop.xlane.xlu0 %1844
    %v1846 = vsel %vm68, %v1804, 0.0
    %1847 = vadd.xlane.f32.xlu0 %v1846
    %v1848 = vpop.xlane.xlu0 %1847
    %v1849 = vsel %vm68, %v1805, 0.0
    %1850 = vadd.xlane.f32.xlu0 %v1849
    %v1851 = vpop.xlane.xlu0 %1850
    %v1852 = vsel %vm68, %v1806, 0.0
    %1853 = vadd.xlane.f32.xlu0 %v1852
    %v1854 = vpop.xlane.xlu0 %1853
    %v1855 = vsel %vm68, %v1807, 0.0
    %1856 = vadd.xlane.f32.xlu0 %v1855
    %v1857 = vpop.xlane.xlu0 %1856
    %v1858 = vsel %vm68, %v1808, 0.0
    %1859 = vadd.xlane.f32.xlu0 %v1858
    %v1860 = vpop.xlane.xlu0 %1859
    %v1861 = vsel %vm68, %v1809, 0.0
    %1862 = vadd.xlane.f32.xlu0 %v1861
    %v1863 = vpop.xlane.xlu0 %1862
    %v1864 = vsel %vm68, %v1810, 0.0
    %1865 = vadd.xlane.f32.xlu0 %v1864
    %v1866 = vpop.xlane.xlu0 %1865
    %v1867 = vsel %vm68, %v1811, 0.0
    %1868 = vadd.xlane.f32.xlu0 %v1867
    %v1869 = vpop.xlane.xlu0 %1868
    %v1870 = vsel %vm68, %v1812, 0.0
    %1871 = vadd.xlane.f32.xlu0 %v1870
    %v1872 = vpop.xlane.xlu0 %1871
    %v1873 = vsel %vm68, %v1813, 0.0
    %1874 = vadd.xlane.f32.xlu0 %v1873
    %v1875 = vpop.xlane.xlu0 %1874
    %v1876 = vsel %vm68, %v1814, 0.0
    %1877 = vadd.xlane.f32.xlu0 %v1876
    %v1878 = vpop.xlane.xlu0 %1877
    %v1879 = vsel %vm68, %v1815, 0.0
    %1880 = vadd.xlane.f32.xlu0 %v1879
    %v1881 = vpop.xlane.xlu0 %1880
    %v1882 = vsel %vm68, %v1816, 0.0
    %1883 = vadd.xlane.f32.xlu0 %v1882
    %v1884 = vpop.xlane.xlu0 %1883
    %v1885 = vsel %vm68, %v1817, 0.0
    %1886 = vadd.xlane.f32.xlu0 %v1885
    %v1887 = vpop.xlane.xlu0 %1886
    %v1888 = vsel %vm68, %v1818, 0.0
    %1889 = vadd.xlane.f32.xlu0 %v1888
    %v1890 = vpop.xlane.xlu0 %1889
    %v1891 = vsel %vm68, %v1819, 0.0
    %1892 = vadd.xlane.f32.xlu0 %v1891
    %v1893 = vpop.xlane.xlu0 %1892
    %v1894 = vsel %vm68, %v1820, 0.0
    %1895 = vadd.xlane.f32.xlu0 %v1894
    %v1896 = vpop.xlane.xlu0 %1895
    %v1897 = vsel %vm68, %v1821, 0.0
    %1898 = vadd.xlane.f32.xlu0 %v1897
    %v1899 = vpop.xlane.xlu0 %1898
    %v1900 = vsel %vm68, %v1822, 0.0
    %1901 = vadd.xlane.f32.xlu0 %v1900
    %v1902 = vpop.xlane.xlu0 %1901
    %v1903 = vsel %vm68, %v1823, 0.0
    %1904 = vadd.xlane.f32.xlu0 %v1903
    %v1905 = vpop.xlane.xlu0 %1904
    %v1906 = vsel %vm68, %v1824, 0.0
    %1907 = vadd.xlane.f32.xlu0 %v1906
    %v1908 = vpop.xlane.xlu0 %1907
    %v1909 = vsel %vm68, %v1825, 0.0
    %1910 = vadd.xlane.f32.xlu0 %v1909
    %v1911 = vpop.xlane.xlu0 %1910
    %v1912 = vsel %vm68, %v1826, 0.0
    %1913 = vadd.xlane.f32.xlu0 %v1912
    %v1914 = vpop.xlane.xlu0 %1913
    %v1915 = vsel %vm68, %v1827, 0.0
    %1916 = vadd.xlane.f32.xlu0 %v1915
    %v1917 = vpop.xlane.xlu0 %1916
    %v1918 = vsel %vm68, %v1828, 0.0
    %1919 = vadd.xlane.f32.xlu0 %v1918
    %v1920 = vpop.xlane.xlu0 %1919
    %v1921 = vsel %vm68, %v1829, 0.0
    %1922 = vadd.xlane.f32.xlu0 %v1921
    %v1923 = vpop.xlane.xlu0 %1922
    %v1924 = vsel %vm68, %v1830, 0.0
    %1925 = vadd.xlane.f32.xlu0 %v1924
    %v1926 = vpop.xlane.xlu0 %1925
    %v1927 = vadd.f32 %v1767, %v1833
    %v1928 = vadd.f32 %v1768, %v1836
    %v1929 = vadd.f32 %v1769, %v1839
    %v1930 = vadd.f32 %v1770, %v1842
    %v1931 = vadd.f32 %v1771, %v1845
    %v1932 = vadd.f32 %v1772, %v1848
    %v1933 = vadd.f32 %v1773, %v1851
    %v1934 = vadd.f32 %v1774, %v1854
    %v1935 = vadd.f32 %v1775, %v1857
    %v1936 = vadd.f32 %v1776, %v1860
    %v1937 = vadd.f32 %v1777, %v1863
    %v1938 = vadd.f32 %v1778, %v1866
    %v1939 = vadd.f32 %v1779, %v1869
    %v1940 = vadd.f32 %v1780, %v1872
    %v1941 = vadd.f32 %v1781, %v1875
    %v1942 = vadd.f32 %v1782, %v1878
    %v1943 = vadd.f32 %v1783, %v1881
    %v1944 = vadd.f32 %v1784, %v1884
    %v1945 = vadd.f32 %v1785, %v1887
    %v1946 = vadd.f32 %v1786, %v1890
    %v1947 = vadd.f32 %v1787, %v1893
    %v1948 = vadd.f32 %v1788, %v1896
    %v1949 = vadd.f32 %v1789, %v1899
    %v1950 = vadd.f32 %v1790, %v1902
    %v1951 = vadd.f32 %v1791, %v1905
    %v1952 = vadd.f32 %v1792, %v1908
    %v1953 = vadd.f32 %v1793, %v1911
    %v1954 = vadd.f32 %v1794, %v1914
    %v1955 = vadd.f32 %v1795, %v1917
    %v1956 = vadd.f32 %v1796, %v1920
    %v1957 = vadd.f32 %v1797, %v1923
    %v1958 = vadd.f32 %v1798, %v1926
    %v1959 = vld [vmem:[%s1638 + $0x2] sm:$0xff]
    %v1960 = vld [vmem:[%s1638 + $0xa] sm:$0xff]
    %v1961 = vld [vmem:[%s1638 + $0x1a] sm:$0xff]
    %v1962 = vld [vmem:[%s1638 + $0x22] sm:$0xff]
    %v1963 = vld [vmem:[%s1638 + $0x32] sm:$0xff]
    %v1964 = vld [vmem:[%s1638 + $0x3a] sm:$0xff]
    %v1965 = vld [vmem:[%s1638 + $0x4a] sm:$0xff]
    %v1966 = vld [vmem:[%s1638 + $0x52] sm:$0xff]
    %v1967 = vld [vmem:[%s1638 + $0x62] sm:$0xff]
    %v1968 = vld [vmem:[%s1638 + $0x6a] sm:$0xff]
    %v1969 = vld [vmem:[%s1638 + $0x7a] sm:$0xff]
    %v1970 = vld [vmem:[%s1638 + $0x82] sm:$0xff]
    %v1971 = vld [vmem:[%s1638 + $0x92] sm:$0xff]
    %v1972 = vld [vmem:[%s1638 + $0x9a] sm:$0xff]
    %v1973 = vld [vmem:[%s1638 + $0xaa] sm:$0xff]
    %v1974 = vld [vmem:[%s1638 + $0xb2] sm:$0xff]
    %v1975 = vld [vmem:[%s1638 + $0xc2] sm:$0xff]
    %v1976 = vld [vmem:[%s1638 + $0xca] sm:$0xff]
    %v1977 = vld [vmem:[%s1638 + $0xda] sm:$0xff]
    %v1978 = vld [vmem:[%s1638 + $0xe2] sm:$0xff]
    %v1979 = vld [vmem:[%s1638 + $0xf2] sm:$0xff]
    %v1980 = vld [vmem:[%s1638 + $0xfa] sm:$0xff]
    %v1981 = vld [vmem:[%s1638 + $0x10a] sm:$0xff]
    %v1982 = vld [vmem:[%s1638 + $0x112] sm:$0xff]
    %v1983 = vld [vmem:[%s1638 + $0x122] sm:$0xff]
    %v1984 = vld [vmem:[%s1638 + $0x12a] sm:$0xff]
    %v1985 = vld [vmem:[%s1638 + $0x13a] sm:$0xff]
    %v1986 = vld [vmem:[%s1638 + $0x142] sm:$0xff]
    %v1987 = vld [vmem:[%s1638 + $0x152] sm:$0xff]
    %v1988 = vld [vmem:[%s1638 + $0x15a] sm:$0xff]
    %v1989 = vld [vmem:[%s1638 + $0x16a] sm:$0xff]
    %v1990 = vld [vmem:[%s1638 + $0x172] sm:$0xff]
    %v1991 = vsel %vm68, %v1959, 0.0
    %1992 = vadd.xlane.f32.xlu0 %v1991
    %v1993 = vpop.xlane.xlu0 %1992
    %v1994 = vsel %vm68, %v1960, 0.0
    %1995 = vadd.xlane.f32.xlu0 %v1994
    %v1996 = vpop.xlane.xlu0 %1995
    %v1997 = vsel %vm68, %v1961, 0.0
    %1998 = vadd.xlane.f32.xlu0 %v1997
    %v1999 = vpop.xlane.xlu0 %1998
    %v2000 = vsel %vm68, %v1962, 0.0
    %2001 = vadd.xlane.f32.xlu0 %v2000
    %v2002 = vpop.xlane.xlu0 %2001
    %v2003 = vsel %vm68, %v1963, 0.0
    %2004 = vadd.xlane.f32.xlu0 %v2003
    %v2005 = vpop.xlane.xlu0 %2004
    %v2006 = vsel %vm68, %v1964, 0.0
    %2007 = vadd.xlane.f32.xlu0 %v2006
    %v2008 = vpop.xlane.xlu0 %2007
    %v2009 = vsel %vm68, %v1965, 0.0
    %2010 = vadd.xlane.f32.xlu0 %v2009
    %v2011 = vpop.xlane.xlu0 %2010
    %v2012 = vsel %vm68, %v1966, 0.0
    %2013 = vadd.xlane.f32.xlu0 %v2012
    %v2014 = vpop.xlane.xlu0 %2013
    %v2015 = vsel %vm68, %v1967, 0.0
    %2016 = vadd.xlane.f32.xlu0 %v2015
    %v2017 = vpop.xlane.xlu0 %2016
    %v2018 = vsel %vm68, %v1968, 0.0
    %2019 = vadd.xlane.f32.xlu0 %v2018
    %v2020 = vpop.xlane.xlu0 %2019
    %v2021 = vsel %vm68, %v1969, 0.0
    %2022 = vadd.xlane.f32.xlu0 %v2021
    %v2023 = vpop.xlane.xlu0 %2022
    %v2024 = vsel %vm68, %v1970, 0.0
    %2025 = vadd.xlane.f32.xlu0 %v2024
    %v2026 = vpop.xlane.xlu0 %2025
    %v2027 = vsel %vm68, %v1971, 0.0
    %2028 = vadd.xlane.f32.xlu0 %v2027
    %v2029 = vpop.xlane.xlu0 %2028
    %v2030 = vsel %vm68, %v1972, 0.0
    %2031 = vadd.xlane.f32.xlu0 %v2030
    %v2032 = vpop.xlane.xlu0 %2031
    %v2033 = vsel %vm68, %v1973, 0.0
    %2034 = vadd.xlane.f32.xlu0 %v2033
    %v2035 = vpop.xlane.xlu0 %2034
    %v2036 = vsel %vm68, %v1974, 0.0
    %2037 = vadd.xlane.f32.xlu0 %v2036
    %v2038 = vpop.xlane.xlu0 %2037
    %v2039 = vsel %vm68, %v1975, 0.0
    %2040 = vadd.xlane.f32.xlu0 %v2039
    %v2041 = vpop.xlane.xlu0 %2040
    %v2042 = vsel %vm68, %v1976, 0.0
    %2043 = vadd.xlane.f32.xlu0 %v2042
    %v2044 = vpop.xlane.xlu0 %2043
    %v2045 = vsel %vm68, %v1977, 0.0
    %2046 = vadd.xlane.f32.xlu0 %v2045
    %v2047 = vpop.xlane.xlu0 %2046
    %v2048 = vsel %vm68, %v1978, 0.0
    %2049 = vadd.xlane.f32.xlu0 %v2048
    %v2050 = vpop.xlane.xlu0 %2049
    %v2051 = vsel %vm68, %v1979, 0.0
    %2052 = vadd.xlane.f32.xlu0 %v2051
    %v2053 = vpop.xlane.xlu0 %2052
    %v2054 = vsel %vm68, %v1980, 0.0
    %2055 = vadd.xlane.f32.xlu0 %v2054
    %v2056 = vpop.xlane.xlu0 %2055
    %v2057 = vsel %vm68, %v1981, 0.0
    %2058 = vadd.xlane.f32.xlu0 %v2057
    %v2059 = vpop.xlane.xlu0 %2058
    %v2060 = vsel %vm68, %v1982, 0.0
    %2061 = vadd.xlane.f32.xlu0 %v2060
    %v2062 = vpop.xlane.xlu0 %2061
    %v2063 = vsel %vm68, %v1983, 0.0
    %2064 = vadd.xlane.f32.xlu0 %v2063
    %v2065 = vpop.xlane.xlu0 %2064
    %v2066 = vsel %vm68, %v1984, 0.0
    %2067 = vadd.xlane.f32.xlu0 %v2066
    %v2068 = vpop.xlane.xlu0 %2067
    %v2069 = vsel %vm68, %v1985, 0.0
    %2070 = vadd.xlane.f32.xlu0 %v2069
    %v2071 = vpop.xlane.xlu0 %2070
    %v2072 = vsel %vm68, %v1986, 0.0
    %2073 = vadd.xlane.f32.xlu0 %v2072
    %v2074 = vpop.xlane.xlu0 %2073
    %v2075 = vsel %vm68, %v1987, 0.0
    %2076 = vadd.xlane.f32.xlu0 %v2075
    %v2077 = vpop.xlane.xlu0 %2076
    %v2078 = vsel %vm68, %v1988, 0.0
    %2079 = vadd.xlane.f32.xlu0 %v2078
    %v2080 = vpop.xlane.xlu0 %2079
    %v2081 = vsel %vm68, %v1989, 0.0
    %2082 = vadd.xlane.f32.xlu0 %v2081
    %v2083 = vpop.xlane.xlu0 %2082
    %v2084 = vsel %vm68, %v1990, 0.0
    %2085 = vadd.xlane.f32.xlu0 %v2084
    %v2086 = vpop.xlane.xlu0 %2085
    %v2087 = vadd.f32 %v1927, %v1993
    %v2088 = vadd.f32 %v1928, %v1996
    %v2089 = vadd.f32 %v1929, %v1999
    %v2090 = vadd.f32 %v1930, %v2002
    %v2091 = vadd.f32 %v1931, %v2005
    %v2092 = vadd.f32 %v1932, %v2008
    %v2093 = vadd.f32 %v1933, %v2011
    %v2094 = vadd.f32 %v1934, %v2014
    %v2095 = vadd.f32 %v1935, %v2017
    %v2096 = vadd.f32 %v1936, %v2020
    %v2097 = vadd.f32 %v1937, %v2023
    %v2098 = vadd.f32 %v1938, %v2026
    %v2099 = vadd.f32 %v1939, %v2029
    %v2100 = vadd.f32 %v1940, %v2032
    %v2101 = vadd.f32 %v1941, %v2035
    %v2102 = vadd.f32 %v1942, %v2038
    %v2103 = vadd.f32 %v1943, %v2041
    %v2104 = vadd.f32 %v1944, %v2044
    %v2105 = vadd.f32 %v1945, %v2047
    %v2106 = vadd.f32 %v1946, %v2050
    %v2107 = vadd.f32 %v1947, %v2053
    %v2108 = vadd.f32 %v1948, %v2056
    %v2109 = vadd.f32 %v1949, %v2059
    %v2110 = vadd.f32 %v1950, %v2062
    %v2111 = vadd.f32 %v1951, %v2065
    %v2112 = vadd.f32 %v1952, %v2068
    %v2113 = vadd.f32 %v1953, %v2071
    %v2114 = vadd.f32 %v1954, %v2074
    %v2115 = vadd.f32 %v1955, %v2077
    %v2116 = vadd.f32 %v1956, %v2080
    %v2117 = vadd.f32 %v1957, %v2083
    %v2118 = vadd.f32 %v1958, %v2086
    %v2119 = vld [vmem:[%s1638 + $0x3] sm:$0xff]
    %v2120 = vld [vmem:[%s1638 + $0xb] sm:$0xff]
    %v2121 = vld [vmem:[%s1638 + $0x1b] sm:$0xff]
    %v2122 = vld [vmem:[%s1638 + $0x23] sm:$0xff]
    %v2123 = vld [vmem:[%s1638 + $0x33] sm:$0xff]
    %v2124 = vld [vmem:[%s1638 + $0x3b] sm:$0xff]
    %v2125 = vld [vmem:[%s1638 + $0x4b] sm:$0xff]
    %v2126 = vld [vmem:[%s1638 + $0x53] sm:$0xff]
    %v2127 = vld [vmem:[%s1638 + $0x63] sm:$0xff]
    %v2128 = vld [vmem:[%s1638 + $0x6b] sm:$0xff]
    %v2129 = vld [vmem:[%s1638 + $0x7b] sm:$0xff]
    %v2130 = vld [vmem:[%s1638 + $0x83] sm:$0xff]
    %v2131 = vld [vmem:[%s1638 + $0x93] sm:$0xff]
    %v2132 = vld [vmem:[%s1638 + $0x9b] sm:$0xff]
    %v2133 = vld [vmem:[%s1638 + $0xab] sm:$0xff]
    %v2134 = vld [vmem:[%s1638 + $0xb3] sm:$0xff]
    %v2135 = vld [vmem:[%s1638 + $0xc3] sm:$0xff]
    %v2136 = vld [vmem:[%s1638 + $0xcb] sm:$0xff]
    %v2137 = vld [vmem:[%s1638 + $0xdb] sm:$0xff]
    %v2138 = vld [vmem:[%s1638 + $0xe3] sm:$0xff]
    %v2139 = vld [vmem:[%s1638 + $0xf3] sm:$0xff]
    %v2140 = vld [vmem:[%s1638 + $0xfb] sm:$0xff]
    %v2141 = vld [vmem:[%s1638 + $0x10b] sm:$0xff]
    %v2142 = vld [vmem:[%s1638 + $0x113] sm:$0xff]
    %v2143 = vld [vmem:[%s1638 + $0x123] sm:$0xff]
    %v2144 = vld [vmem:[%s1638 + $0x12b] sm:$0xff]
    %v2145 = vld [vmem:[%s1638 + $0x13b] sm:$0xff]
    %v2146 = vld [vmem:[%s1638 + $0x143] sm:$0xff]
    %v2147 = vld [vmem:[%s1638 + $0x153] sm:$0xff]
    %v2148 = vld [vmem:[%s1638 + $0x15b] sm:$0xff]
    %v2149 = vld [vmem:[%s1638 + $0x16b] sm:$0xff]
    %v2150 = vld [vmem:[%s1638 + $0x173] sm:$0xff]
    %v2151 = vsel %vm68, %v2119, 0.0
    %2152 = vadd.xlane.f32.xlu0 %v2151
    %v2153 = vpop.xlane.xlu0 %2152
    %v2154 = vsel %vm68, %v2120, 0.0
    %2155 = vadd.xlane.f32.xlu0 %v2154
    %v2156 = vpop.xlane.xlu0 %2155
    %v2157 = vsel %vm68, %v2121, 0.0
    %2158 = vadd.xlane.f32.xlu0 %v2157
    %v2159 = vpop.xlane.xlu0 %2158
    %v2160 = vsel %vm68, %v2122, 0.0
    %2161 = vadd.xlane.f32.xlu0 %v2160
    %v2162 = vpop.xlane.xlu0 %2161
    %v2163 = vsel %vm68, %v2123, 0.0
    %2164 = vadd.xlane.f32.xlu0 %v2163
    %v2165 = vpop.xlane.xlu0 %2164
    %v2166 = vsel %vm68, %v2124, 0.0
    %2167 = vadd.xlane.f32.xlu0 %v2166
    %v2168 = vpop.xlane.xlu0 %2167
    %v2169 = vsel %vm68, %v2125, 0.0
    %2170 = vadd.xlane.f32.xlu0 %v2169
    %v2171 = vpop.xlane.xlu0 %2170
    %v2172 = vsel %vm68, %v2126, 0.0
    %2173 = vadd.xlane.f32.xlu0 %v2172
    %v2174 = vpop.xlane.xlu0 %2173
    %v2175 = vsel %vm68, %v2127, 0.0
    %2176 = vadd.xlane.f32.xlu0 %v2175
    %v2177 = vpop.xlane.xlu0 %2176
    %v2178 = vsel %vm68, %v2128, 0.0
    %2179 = vadd.xlane.f32.xlu0 %v2178
    %v2180 = vpop.xlane.xlu0 %2179
    %v2181 = vsel %vm68, %v2129, 0.0
    %2182 = vadd.xlane.f32.xlu0 %v2181
    %v2183 = vpop.xlane.xlu0 %2182
    %v2184 = vsel %vm68, %v2130, 0.0
    %2185 = vadd.xlane.f32.xlu0 %v2184
    %v2186 = vpop.xlane.xlu0 %2185
    %v2187 = vsel %vm68, %v2131, 0.0
    %2188 = vadd.xlane.f32.xlu0 %v2187
    %v2189 = vpop.xlane.xlu0 %2188
    %v2190 = vsel %vm68, %v2132, 0.0
    %2191 = vadd.xlane.f32.xlu0 %v2190
    %v2192 = vpop.xlane.xlu0 %2191
    %v2193 = vsel %vm68, %v2133, 0.0
    %2194 = vadd.xlane.f32.xlu0 %v2193
    %v2195 = vpop.xlane.xlu0 %2194
    %v2196 = vsel %vm68, %v2134, 0.0
    %2197 = vadd.xlane.f32.xlu0 %v2196
    %v2198 = vpop.xlane.xlu0 %2197
    %v2199 = vsel %vm68, %v2135, 0.0
    %2200 = vadd.xlane.f32.xlu0 %v2199
    %v2201 = vpop.xlane.xlu0 %2200
    %v2202 = vsel %vm68, %v2136, 0.0
    %2203 = vadd.xlane.f32.xlu0 %v2202
    %v2204 = vpop.xlane.xlu0 %2203
    %v2205 = vsel %vm68, %v2137, 0.0
    %2206 = vadd.xlane.f32.xlu0 %v2205
    %v2207 = vpop.xlane.xlu0 %2206
    %v2208 = vsel %vm68, %v2138, 0.0
    %2209 = vadd.xlane.f32.xlu0 %v2208
    %v2210 = vpop.xlane.xlu0 %2209
    %v2211 = vsel %vm68, %v2139, 0.0
    %2212 = vadd.xlane.f32.xlu0 %v2211
    %v2213 = vpop.xlane.xlu0 %2212
    %v2214 = vsel %vm68, %v2140, 0.0
    %2215 = vadd.xlane.f32.xlu0 %v2214
    %v2216 = vpop.xlane.xlu0 %2215
    %v2217 = vsel %vm68, %v2141, 0.0
    %2218 = vadd.xlane.f32.xlu0 %v2217
    %v2219 = vpop.xlane.xlu0 %2218
    %v2220 = vsel %vm68, %v2142, 0.0
    %2221 = vadd.xlane.f32.xlu0 %v2220
    %v2222 = vpop.xlane.xlu0 %2221
    %v2223 = vsel %vm68, %v2143, 0.0
    %2224 = vadd.xlane.f32.xlu0 %v2223
    %v2225 = vpop.xlane.xlu0 %2224
    %v2226 = vsel %vm68, %v2144, 0.0
    %2227 = vadd.xlane.f32.xlu0 %v2226
    %v2228 = vpop.xlane.xlu0 %2227
    %v2229 = vsel %vm68, %v2145, 0.0
    %2230 = vadd.xlane.f32.xlu0 %v2229
    %v2231 = vpop.xlane.xlu0 %2230
    %v2232 = vsel %vm68, %v2146, 0.0
    %2233 = vadd.xlane.f32.xlu0 %v2232
    %v2234 = vpop.xlane.xlu0 %2233
    %v2235 = vsel %vm68, %v2147, 0.0
    %2236 = vadd.xlane.f32.xlu0 %v2235
    %v2237 = vpop.xlane.xlu0 %2236
    %v2238 = vsel %vm68, %v2148, 0.0
    %2239 = vadd.xlane.f32.xlu0 %v2238
    %v2240 = vpop.xlane.xlu0 %2239
    %v2241 = vsel %vm68, %v2149, 0.0
    %2242 = vadd.xlane.f32.xlu0 %v2241
    %v2243 = vpop.xlane.xlu0 %2242
    %v2244 = vsel %vm68, %v2150, 0.0
    %2245 = vadd.xlane.f32.xlu0 %v2244
    %v2246 = vpop.xlane.xlu0 %2245
    %v2247 = vadd.f32 %v2087, %v2153
    %v2248 = vadd.f32 %v2088, %v2156
    %v2249 = vadd.f32 %v2089, %v2159
    %v2250 = vadd.f32 %v2090, %v2162
    %v2251 = vadd.f32 %v2091, %v2165
    %v2252 = vadd.f32 %v2092, %v2168
    %v2253 = vadd.f32 %v2093, %v2171
    %v2254 = vadd.f32 %v2094, %v2174
    %v2255 = vadd.f32 %v2095, %v2177
    %v2256 = vadd.f32 %v2096, %v2180
    %v2257 = vadd.f32 %v2097, %v2183
    %v2258 = vadd.f32 %v2098, %v2186
    %v2259 = vadd.f32 %v2099, %v2189
    %v2260 = vadd.f32 %v2100, %v2192
    %v2261 = vadd.f32 %v2101, %v2195
    %v2262 = vadd.f32 %v2102, %v2198
    %v2263 = vadd.f32 %v2103, %v2201
    %v2264 = vadd.f32 %v2104, %v2204
    %v2265 = vadd.f32 %v2105, %v2207
    %v2266 = vadd.f32 %v2106, %v2210
    %v2267 = vadd.f32 %v2107, %v2213
    %v2268 = vadd.f32 %v2108, %v2216
    %v2269 = vadd.f32 %v2109, %v2219
    %v2270 = vadd.f32 %v2110, %v2222
    %v2271 = vadd.f32 %v2111, %v2225
    %v2272 = vadd.f32 %v2112, %v2228
    %v2273 = vadd.f32 %v2113, %v2231
    %v2274 = vadd.f32 %v2114, %v2234
    %v2275 = vadd.f32 %v2115, %v2237
    %v2276 = vadd.f32 %v2116, %v2240
    %v2277 = vadd.f32 %v2117, %v2243
    %v2278 = vadd.f32 %v2118, %v2246
    %v2279 = vld [vmem:[%s1638 + $0x4] sm:$0xff]
    %v2280 = vld [vmem:[%s1638 + $0xc] sm:$0xff]
    %v2281 = vld [vmem:[%s1638 + $0x1c] sm:$0xff]
    %v2282 = vld [vmem:[%s1638 + $0x24] sm:$0xff]
    %v2283 = vld [vmem:[%s1638 + $0x34] sm:$0xff]
    %v2284 = vld [vmem:[%s1638 + $0x3c] sm:$0xff]
    %v2285 = vld [vmem:[%s1638 + $0x4c] sm:$0xff]
    %v2286 = vld [vmem:[%s1638 + $0x54] sm:$0xff]
    %v2287 = vld [vmem:[%s1638 + $0x64] sm:$0xff]
    %v2288 = vld [vmem:[%s1638 + $0x6c] sm:$0xff]
    %v2289 = vld [vmem:[%s1638 + $0x7c] sm:$0xff]
    %v2290 = vld [vmem:[%s1638 + $0x84] sm:$0xff]
    %v2291 = vld [vmem:[%s1638 + $0x94] sm:$0xff]
    %v2292 = vld [vmem:[%s1638 + $0x9c] sm:$0xff]
    %v2293 = vld [vmem:[%s1638 + $0xac] sm:$0xff]
    %v2294 = vld [vmem:[%s1638 + $0xb4] sm:$0xff]
    %v2295 = vld [vmem:[%s1638 + $0xc4] sm:$0xff]
    %v2296 = vld [vmem:[%s1638 + $0xcc] sm:$0xff]
    %v2297 = vld [vmem:[%s1638 + $0xdc] sm:$0xff]
    %v2298 = vld [vmem:[%s1638 + $0xe4] sm:$0xff]
    %v2299 = vld [vmem:[%s1638 + $0xf4] sm:$0xff]
    %v2300 = vld [vmem:[%s1638 + $0xfc] sm:$0xff]
    %v2301 = vld [vmem:[%s1638 + $0x10c] sm:$0xff]
    %v2302 = vld [vmem:[%s1638 + $0x114] sm:$0xff]
    %v2303 = vld [vmem:[%s1638 + $0x124] sm:$0xff]
    %v2304 = vld [vmem:[%s1638 + $0x12c] sm:$0xff]
    %v2305 = vld [vmem:[%s1638 + $0x13c] sm:$0xff]
    %v2306 = vld [vmem:[%s1638 + $0x144] sm:$0xff]
    %v2307 = vld [vmem:[%s1638 + $0x154] sm:$0xff]
    %v2308 = vld [vmem:[%s1638 + $0x15c] sm:$0xff]
    %v2309 = vld [vmem:[%s1638 + $0x16c] sm:$0xff]
    %v2310 = vld [vmem:[%s1638 + $0x174] sm:$0xff]
    %v2311 = vsel %vm68, %v2279, 0.0
    %2312 = vadd.xlane.f32.xlu0 %v2311
    %v2313 = vpop.xlane.xlu0 %2312
    %v2314 = vsel %vm68, %v2280, 0.0
    %2315 = vadd.xlane.f32.xlu0 %v2314
    %v2316 = vpop.xlane.xlu0 %2315
    %v2317 = vsel %vm68, %v2281, 0.0
    %2318 = vadd.xlane.f32.xlu0 %v2317
    %v2319 = vpop.xlane.xlu0 %2318
    %v2320 = vsel %vm68, %v2282, 0.0
    %2321 = vadd.xlane.f32.xlu0 %v2320
    %v2322 = vpop.xlane.xlu0 %2321
    %v2323 = vsel %vm68, %v2283, 0.0
    %2324 = vadd.xlane.f32.xlu0 %v2323
    %v2325 = vpop.xlane.xlu0 %2324
    %v2326 = vsel %vm68, %v2284, 0.0
    %2327 = vadd.xlane.f32.xlu0 %v2326
    %v2328 = vpop.xlane.xlu0 %2327
    %v2329 = vsel %vm68, %v2285, 0.0
    %2330 = vadd.xlane.f32.xlu0 %v2329
    %v2331 = vpop.xlane.xlu0 %2330
    %v2332 = vsel %vm68, %v2286, 0.0
    %2333 = vadd.xlane.f32.xlu0 %v2332
    %v2334 = vpop.xlane.xlu0 %2333
    %v2335 = vsel %vm68, %v2287, 0.0
    %2336 = vadd.xlane.f32.xlu0 %v2335
    %v2337 = vpop.xlane.xlu0 %2336
    %v2338 = vsel %vm68, %v2288, 0.0
    %2339 = vadd.xlane.f32.xlu0 %v2338
    %v2340 = vpop.xlane.xlu0 %2339
    %v2341 = vsel %vm68, %v2289, 0.0
    %2342 = vadd.xlane.f32.xlu0 %v2341
    %v2343 = vpop.xlane.xlu0 %2342
    %v2344 = vsel %vm68, %v2290, 0.0
    %2345 = vadd.xlane.f32.xlu0 %v2344
    %v2346 = vpop.xlane.xlu0 %2345
    %v2347 = vsel %vm68, %v2291, 0.0
    %2348 = vadd.xlane.f32.xlu0 %v2347
    %v2349 = vpop.xlane.xlu0 %2348
    %v2350 = vsel %vm68, %v2292, 0.0
    %2351 = vadd.xlane.f32.xlu0 %v2350
    %v2352 = vpop.xlane.xlu0 %2351
    %v2353 = vsel %vm68, %v2293, 0.0
    %2354 = vadd.xlane.f32.xlu0 %v2353
    %v2355 = vpop.xlane.xlu0 %2354
    %v2356 = vsel %vm68, %v2294, 0.0
    %2357 = vadd.xlane.f32.xlu0 %v2356
    %v2358 = vpop.xlane.xlu0 %2357
    %v2359 = vsel %vm68, %v2295, 0.0
    %2360 = vadd.xlane.f32.xlu0 %v2359
    %v2361 = vpop.xlane.xlu0 %2360
    %v2362 = vsel %vm68, %v2296, 0.0
    %2363 = vadd.xlane.f32.xlu0 %v2362
    %v2364 = vpop.xlane.xlu0 %2363
    %v2365 = vsel %vm68, %v2297, 0.0
    %2366 = vadd.xlane.f32.xlu0 %v2365
    %v2367 = vpop.xlane.xlu0 %2366
    %v2368 = vsel %vm68, %v2298, 0.0
    %2369 = vadd.xlane.f32.xlu0 %v2368
    %v2370 = vpop.xlane.xlu0 %2369
    %v2371 = vsel %vm68, %v2299, 0.0
    %2372 = vadd.xlane.f32.xlu0 %v2371
    %v2373 = vpop.xlane.xlu0 %2372
    %v2374 = vsel %vm68, %v2300, 0.0
    %2375 = vadd.xlane.f32.xlu0 %v2374
    %v2376 = vpop.xlane.xlu0 %2375
    %v2377 = vsel %vm68, %v2301, 0.0
    %2378 = vadd.xlane.f32.xlu0 %v2377
    %v2379 = vpop.xlane.xlu0 %2378
    %v2380 = vsel %vm68, %v2302, 0.0
    %2381 = vadd.xlane.f32.xlu0 %v2380
    %v2382 = vpop.xlane.xlu0 %2381
    %v2383 = vsel %vm68, %v2303, 0.0
    %2384 = vadd.xlane.f32.xlu0 %v2383
    %v2385 = vpop.xlane.xlu0 %2384
    %v2386 = vsel %vm68, %v2304, 0.0
    %2387 = vadd.xlane.f32.xlu0 %v2386
    %v2388 = vpop.xlane.xlu0 %2387
    %v2389 = vsel %vm68, %v2305, 0.0
    %2390 = vadd.xlane.f32.xlu0 %v2389
    %v2391 = vpop.xlane.xlu0 %2390
    %v2392 = vsel %vm68, %v2306, 0.0
    %2393 = vadd.xlane.f32.xlu0 %v2392
    %v2394 = vpop.xlane.xlu0 %2393
    %v2395 = vsel %vm68, %v2307, 0.0
    %2396 = vadd.xlane.f32.xlu0 %v2395
    %v2397 = vpop.xlane.xlu0 %2396
    %v2398 = vsel %vm68, %v2308, 0.0
    %2399 = vadd.xlane.f32.xlu0 %v2398
    %v2400 = vpop.xlane.xlu0 %2399
    %v2401 = vsel %vm68, %v2309, 0.0
    %2402 = vadd.xlane.f32.xlu0 %v2401
    %v2403 = vpop.xlane.xlu0 %2402
    %v2404 = vsel %vm68, %v2310, 0.0
    %2405 = vadd.xlane.f32.xlu0 %v2404
    %v2406 = vpop.xlane.xlu0 %2405
    %v2407 = vadd.f32 %v2247, %v2313
    %v2408 = vadd.f32 %v2248, %v2316
    %v2409 = vadd.f32 %v2249, %v2319
    %v2410 = vadd.f32 %v2250, %v2322
    %v2411 = vadd.f32 %v2251, %v2325
    %v2412 = vadd.f32 %v2252, %v2328
    %v2413 = vadd.f32 %v2253, %v2331
    %v2414 = vadd.f32 %v2254, %v2334
    %v2415 = vadd.f32 %v2255, %v2337
    %v2416 = vadd.f32 %v2256, %v2340
    %v2417 = vadd.f32 %v2257, %v2343
    %v2418 = vadd.f32 %v2258, %v2346
    %v2419 = vadd.f32 %v2259, %v2349
    %v2420 = vadd.f32 %v2260, %v2352
    %v2421 = vadd.f32 %v2261, %v2355
    %v2422 = vadd.f32 %v2262, %v2358
    %v2423 = vadd.f32 %v2263, %v2361
    %v2424 = vadd.f32 %v2264, %v2364
    %v2425 = vadd.f32 %v2265, %v2367
    %v2426 = vadd.f32 %v2266, %v2370
    %v2427 = vadd.f32 %v2267, %v2373
    %v2428 = vadd.f32 %v2268, %v2376
    %v2429 = vadd.f32 %v2269, %v2379
    %v2430 = vadd.f32 %v2270, %v2382
    %v2431 = vadd.f32 %v2271, %v2385
    %v2432 = vadd.f32 %v2272, %v2388
    %v2433 = vadd.f32 %v2273, %v2391
    %v2434 = vadd.f32 %v2274, %v2394
    %v2435 = vadd.f32 %v2275, %v2397
    %v2436 = vadd.f32 %v2276, %v2400
    %v2437 = vadd.f32 %v2277, %v2403
    %v2438 = vadd.f32 %v2278, %v2406
    %s2439 = scalar_lea.vmem %s0, 72
    %v2440 = vld [vmem:[%s2439] sm:$0xff]
    %v2441 = vld [vmem:[%s2439 + $0x8] sm:$0xff]
    %v2442 = vld [vmem:[%s2439 + $0x18] sm:$0xff]
    %v2443 = vld [vmem:[%s2439 + $0x20] sm:$0xff]
    %v2444 = vld [vmem:[%s2439 + $0x30] sm:$0xff]
    %v2445 = vld [vmem:[%s2439 + $0x38] sm:$0xff]
    %v2446 = vld [vmem:[%s2439 + $0x48] sm:$0xff]
    %v2447 = vld [vmem:[%s2439 + $0x50] sm:$0xff]
    %v2448 = vld [vmem:[%s2439 + $0x60] sm:$0xff]
    %v2449 = vld [vmem:[%s2439 + $0x68] sm:$0xff]
    %v2450 = vld [vmem:[%s2439 + $0x78] sm:$0xff]
    %v2451 = vld [vmem:[%s2439 + $0x80] sm:$0xff]
    %v2452 = vld [vmem:[%s2439 + $0x90] sm:$0xff]
    %v2453 = vld [vmem:[%s2439 + $0x98] sm:$0xff]
    %v2454 = vld [vmem:[%s2439 + $0xa8] sm:$0xff]
    %v2455 = vld [vmem:[%s2439 + $0xb0] sm:$0xff]
    %v2456 = vld [vmem:[%s2439 + $0xc0] sm:$0xff]
    %v2457 = vld [vmem:[%s2439 + $0xc8] sm:$0xff]
    %v2458 = vld [vmem:[%s2439 + $0xd8] sm:$0xff]
    %v2459 = vld [vmem:[%s2439 + $0xe0] sm:$0xff]
    %v2460 = vld [vmem:[%s2439 + $0xf0] sm:$0xff]
    %v2461 = vld [vmem:[%s2439 + $0xf8] sm:$0xff]
    %v2462 = vld [vmem:[%s2439 + $0x108] sm:$0xff]
    %v2463 = vld [vmem:[%s2439 + $0x110] sm:$0xff]
    %v2464 = vld [vmem:[%s2439 + $0x120] sm:$0xff]
    %v2465 = vld [vmem:[%s2439 + $0x128] sm:$0xff]
    %v2466 = vld [vmem:[%s2439 + $0x138] sm:$0xff]
    %v2467 = vld [vmem:[%s2439 + $0x140] sm:$0xff]
    %v2468 = vld [vmem:[%s2439 + $0x150] sm:$0xff]
    %v2469 = vld [vmem:[%s2439 + $0x158] sm:$0xff]
    %v2470 = vld [vmem:[%s2439 + $0x168] sm:$0xff]
    %v2471 = vld [vmem:[%s2439 + $0x170] sm:$0xff]
    %v2472 = vsel %vm68, %v2440, 0.0
    %2473 = vadd.xlane.f32.xlu0 %v2472
    %v2474 = vpop.xlane.xlu0 %2473
    %v2475 = vsel %vm68, %v2441, 0.0
    %2476 = vadd.xlane.f32.xlu0 %v2475
    %v2477 = vpop.xlane.xlu0 %2476
    %v2478 = vsel %vm68, %v2442, 0.0
    %2479 = vadd.xlane.f32.xlu0 %v2478
    %v2480 = vpop.xlane.xlu0 %2479
    %v2481 = vsel %vm68, %v2443, 0.0
    %2482 = vadd.xlane.f32.xlu0 %v2481
    %v2483 = vpop.xlane.xlu0 %2482
    %v2484 = vsel %vm68, %v2444, 0.0
    %2485 = vadd.xlane.f32.xlu0 %v2484
    %v2486 = vpop.xlane.xlu0 %2485
    %v2487 = vsel %vm68, %v2445, 0.0
    %2488 = vadd.xlane.f32.xlu0 %v2487
    %v2489 = vpop.xlane.xlu0 %2488
    %v2490 = vsel %vm68, %v2446, 0.0
    %2491 = vadd.xlane.f32.xlu0 %v2490
    %v2492 = vpop.xlane.xlu0 %2491
    %v2493 = vsel %vm68, %v2447, 0.0
    %2494 = vadd.xlane.f32.xlu0 %v2493
    %v2495 = vpop.xlane.xlu0 %2494
    %v2496 = vsel %vm68, %v2448, 0.0
    %2497 = vadd.xlane.f32.xlu0 %v2496
    %v2498 = vpop.xlane.xlu0 %2497
    %v2499 = vsel %vm68, %v2449, 0.0
    %2500 = vadd.xlane.f32.xlu0 %v2499
    %v2501 = vpop.xlane.xlu0 %2500
    %v2502 = vsel %vm68, %v2450, 0.0
    %2503 = vadd.xlane.f32.xlu0 %v2502
    %v2504 = vpop.xlane.xlu0 %2503
    %v2505 = vsel %vm68, %v2451, 0.0
    %2506 = vadd.xlane.f32.xlu0 %v2505
    %v2507 = vpop.xlane.xlu0 %2506
    %v2508 = vsel %vm68, %v2452, 0.0
    %2509 = vadd.xlane.f32.xlu0 %v2508
    %v2510 = vpop.xlane.xlu0 %2509
    %v2511 = vsel %vm68, %v2453, 0.0
    %2512 = vadd.xlane.f32.xlu0 %v2511
    %v2513 = vpop.xlane.xlu0 %2512
    %v2514 = vsel %vm68, %v2454, 0.0
    %2515 = vadd.xlane.f32.xlu0 %v2514
    %v2516 = vpop.xlane.xlu0 %2515
    %v2517 = vsel %vm68, %v2455, 0.0
    %2518 = vadd.xlane.f32.xlu0 %v2517
    %v2519 = vpop.xlane.xlu0 %2518
    %v2520 = vsel %vm68, %v2456, 0.0
    %2521 = vadd.xlane.f32.xlu0 %v2520
    %v2522 = vpop.xlane.xlu0 %2521
    %v2523 = vsel %vm68, %v2457, 0.0
    %2524 = vadd.xlane.f32.xlu0 %v2523
    %v2525 = vpop.xlane.xlu0 %2524
    %v2526 = vsel %vm68, %v2458, 0.0
    %2527 = vadd.xlane.f32.xlu0 %v2526
    %v2528 = vpop.xlane.xlu0 %2527
    %v2529 = vsel %vm68, %v2459, 0.0
    %2530 = vadd.xlane.f32.xlu0 %v2529
    %v2531 = vpop.xlane.xlu0 %2530
    %v2532 = vsel %vm68, %v2460, 0.0
    %2533 = vadd.xlane.f32.xlu0 %v2532
    %v2534 = vpop.xlane.xlu0 %2533
    %v2535 = vsel %vm68, %v2461, 0.0
    %2536 = vadd.xlane.f32.xlu0 %v2535
    %v2537 = vpop.xlane.xlu0 %2536
    %v2538 = vsel %vm68, %v2462, 0.0
    %2539 = vadd.xlane.f32.xlu0 %v2538
    %v2540 = vpop.xlane.xlu0 %2539
    %v2541 = vsel %vm68, %v2463, 0.0
    %2542 = vadd.xlane.f32.xlu0 %v2541
    %v2543 = vpop.xlane.xlu0 %2542
    %v2544 = vsel %vm68, %v2464, 0.0
    %2545 = vadd.xlane.f32.xlu0 %v2544
    %v2546 = vpop.xlane.xlu0 %2545
    %v2547 = vsel %vm68, %v2465, 0.0
    %2548 = vadd.xlane.f32.xlu0 %v2547
    %v2549 = vpop.xlane.xlu0 %2548
    %v2550 = vsel %vm68, %v2466, 0.0
    %2551 = vadd.xlane.f32.xlu0 %v2550
    %v2552 = vpop.xlane.xlu0 %2551
    %v2553 = vsel %vm68, %v2467, 0.0
    %2554 = vadd.xlane.f32.xlu0 %v2553
    %v2555 = vpop.xlane.xlu0 %2554
    %v2556 = vsel %vm68, %v2468, 0.0
    %2557 = vadd.xlane.f32.xlu0 %v2556
    %v2558 = vpop.xlane.xlu0 %2557
    %v2559 = vsel %vm68, %v2469, 0.0
    %2560 = vadd.xlane.f32.xlu0 %v2559
    %v2561 = vpop.xlane.xlu0 %2560
    %v2562 = vsel %vm68, %v2470, 0.0
    %2563 = vadd.xlane.f32.xlu0 %v2562
    %v2564 = vpop.xlane.xlu0 %2563
    %v2565 = vsel %vm68, %v2471, 0.0
    %2566 = vadd.xlane.f32.xlu0 %v2565
    %v2567 = vpop.xlane.xlu0 %2566
    %v2568 = vadd.f32 %v2407, %v2474
    %v2569 = vadd.f32 %v2408, %v2477
    %v2570 = vadd.f32 %v2409, %v2480
    %v2571 = vadd.f32 %v2410, %v2483
    %v2572 = vadd.f32 %v2411, %v2486
    %v2573 = vadd.f32 %v2412, %v2489
    %v2574 = vadd.f32 %v2413, %v2492
    %v2575 = vadd.f32 %v2414, %v2495
    %v2576 = vadd.f32 %v2415, %v2498
    %v2577 = vadd.f32 %v2416, %v2501
    %v2578 = vadd.f32 %v2417, %v2504
    %v2579 = vadd.f32 %v2418, %v2507
    %v2580 = vadd.f32 %v2419, %v2510
    %v2581 = vadd.f32 %v2420, %v2513
    %v2582 = vadd.f32 %v2421, %v2516
    %v2583 = vadd.f32 %v2422, %v2519
    %v2584 = vadd.f32 %v2423, %v2522
    %v2585 = vadd.f32 %v2424, %v2525
    %v2586 = vadd.f32 %v2425, %v2528
    %v2587 = vadd.f32 %v2426, %v2531
    %v2588 = vadd.f32 %v2427, %v2534
    %v2589 = vadd.f32 %v2428, %v2537
    %v2590 = vadd.f32 %v2429, %v2540
    %v2591 = vadd.f32 %v2430, %v2543
    %v2592 = vadd.f32 %v2431, %v2546
    %v2593 = vadd.f32 %v2432, %v2549
    %v2594 = vadd.f32 %v2433, %v2552
    %v2595 = vadd.f32 %v2434, %v2555
    %v2596 = vadd.f32 %v2435, %v2558
    %v2597 = vadd.f32 %v2436, %v2561
    %v2598 = vadd.f32 %v2437, %v2564
    %v2599 = vadd.f32 %v2438, %v2567
    %v2600 = vld [vmem:[%s2439 + $0x1] sm:$0xff]
    %v2601 = vld [vmem:[%s2439 + $0x9] sm:$0xff]
    %v2602 = vld [vmem:[%s2439 + $0x19] sm:$0xff]
    %v2603 = vld [vmem:[%s2439 + $0x21] sm:$0xff]
    %v2604 = vld [vmem:[%s2439 + $0x31] sm:$0xff]
    %v2605 = vld [vmem:[%s2439 + $0x39] sm:$0xff]
    %v2606 = vld [vmem:[%s2439 + $0x49] sm:$0xff]
    %v2607 = vld [vmem:[%s2439 + $0x51] sm:$0xff]
    %v2608 = vld [vmem:[%s2439 + $0x61] sm:$0xff]
    %v2609 = vld [vmem:[%s2439 + $0x69] sm:$0xff]
    %v2610 = vld [vmem:[%s2439 + $0x79] sm:$0xff]
    %v2611 = vld [vmem:[%s2439 + $0x81] sm:$0xff]
    %v2612 = vld [vmem:[%s2439 + $0x91] sm:$0xff]
    %v2613 = vld [vmem:[%s2439 + $0x99] sm:$0xff]
    %v2614 = vld [vmem:[%s2439 + $0xa9] sm:$0xff]
    %v2615 = vld [vmem:[%s2439 + $0xb1] sm:$0xff]
    %v2616 = vld [vmem:[%s2439 + $0xc1] sm:$0xff]
    %v2617 = vld [vmem:[%s2439 + $0xc9] sm:$0xff]
    %v2618 = vld [vmem:[%s2439 + $0xd9] sm:$0xff]
    %v2619 = vld [vmem:[%s2439 + $0xe1] sm:$0xff]
    %v2620 = vld [vmem:[%s2439 + $0xf1] sm:$0xff]
    %v2621 = vld [vmem:[%s2439 + $0xf9] sm:$0xff]
    %v2622 = vld [vmem:[%s2439 + $0x109] sm:$0xff]
    %v2623 = vld [vmem:[%s2439 + $0x111] sm:$0xff]
    %v2624 = vld [vmem:[%s2439 + $0x121] sm:$0xff]
    %v2625 = vld [vmem:[%s2439 + $0x129] sm:$0xff]
    %v2626 = vld [vmem:[%s2439 + $0x139] sm:$0xff]
    %v2627 = vld [vmem:[%s2439 + $0x141] sm:$0xff]
    %v2628 = vld [vmem:[%s2439 + $0x151] sm:$0xff]
    %v2629 = vld [vmem:[%s2439 + $0x159] sm:$0xff]
    %v2630 = vld [vmem:[%s2439 + $0x169] sm:$0xff]
    %v2631 = vld [vmem:[%s2439 + $0x171] sm:$0xff]
    %v2632 = vsel %vm68, %v2600, 0.0
    %2633 = vadd.xlane.f32.xlu0 %v2632
    %v2634 = vpop.xlane.xlu0 %2633
    %v2635 = vsel %vm68, %v2601, 0.0
    %2636 = vadd.xlane.f32.xlu0 %v2635
    %v2637 = vpop.xlane.xlu0 %2636
    %v2638 = vsel %vm68, %v2602, 0.0
    %2639 = vadd.xlane.f32.xlu0 %v2638
    %v2640 = vpop.xlane.xlu0 %2639
    %v2641 = vsel %vm68, %v2603, 0.0
    %2642 = vadd.xlane.f32.xlu0 %v2641
    %v2643 = vpop.xlane.xlu0 %2642
    %v2644 = vsel %vm68, %v2604, 0.0
    %2645 = vadd.xlane.f32.xlu0 %v2644
    %v2646 = vpop.xlane.xlu0 %2645
    %v2647 = vsel %vm68, %v2605, 0.0
    %2648 = vadd.xlane.f32.xlu0 %v2647
    %v2649 = vpop.xlane.xlu0 %2648
    %v2650 = vsel %vm68, %v2606, 0.0
    %2651 = vadd.xlane.f32.xlu0 %v2650
    %v2652 = vpop.xlane.xlu0 %2651
    %v2653 = vsel %vm68, %v2607, 0.0
    %2654 = vadd.xlane.f32.xlu0 %v2653
    %v2655 = vpop.xlane.xlu0 %2654
    %v2656 = vsel %vm68, %v2608, 0.0
    %2657 = vadd.xlane.f32.xlu0 %v2656
    %v2658 = vpop.xlane.xlu0 %2657
    %v2659 = vsel %vm68, %v2609, 0.0
    %2660 = vadd.xlane.f32.xlu0 %v2659
    %v2661 = vpop.xlane.xlu0 %2660
    %v2662 = vsel %vm68, %v2610, 0.0
    %2663 = vadd.xlane.f32.xlu0 %v2662
    %v2664 = vpop.xlane.xlu0 %2663
    %v2665 = vsel %vm68, %v2611, 0.0
    %2666 = vadd.xlane.f32.xlu0 %v2665
    %v2667 = vpop.xlane.xlu0 %2666
    %v2668 = vsel %vm68, %v2612, 0.0
    %2669 = vadd.xlane.f32.xlu0 %v2668
    %v2670 = vpop.xlane.xlu0 %2669
    %v2671 = vsel %vm68, %v2613, 0.0
    %2672 = vadd.xlane.f32.xlu0 %v2671
    %v2673 = vpop.xlane.xlu0 %2672
    %v2674 = vsel %vm68, %v2614, 0.0
    %2675 = vadd.xlane.f32.xlu0 %v2674
    %v2676 = vpop.xlane.xlu0 %2675
    %v2677 = vsel %vm68, %v2615, 0.0
    %2678 = vadd.xlane.f32.xlu0 %v2677
    %v2679 = vpop.xlane.xlu0 %2678
    %v2680 = vsel %vm68, %v2616, 0.0
    %2681 = vadd.xlane.f32.xlu0 %v2680
    %v2682 = vpop.xlane.xlu0 %2681
    %v2683 = vsel %vm68, %v2617, 0.0
    %2684 = vadd.xlane.f32.xlu0 %v2683
    %v2685 = vpop.xlane.xlu0 %2684
    %v2686 = vsel %vm68, %v2618, 0.0
    %2687 = vadd.xlane.f32.xlu0 %v2686
    %v2688 = vpop.xlane.xlu0 %2687
    %v2689 = vsel %vm68, %v2619, 0.0
    %2690 = vadd.xlane.f32.xlu0 %v2689
    %v2691 = vpop.xlane.xlu0 %2690
    %v2692 = vsel %vm68, %v2620, 0.0
    %2693 = vadd.xlane.f32.xlu0 %v2692
    %v2694 = vpop.xlane.xlu0 %2693
    %v2695 = vsel %vm68, %v2621, 0.0
    %2696 = vadd.xlane.f32.xlu0 %v2695
    %v2697 = vpop.xlane.xlu0 %2696
    %v2698 = vsel %vm68, %v2622, 0.0
    %2699 = vadd.xlane.f32.xlu0 %v2698
    %v2700 = vpop.xlane.xlu0 %2699
    %v2701 = vsel %vm68, %v2623, 0.0
    %2702 = vadd.xlane.f32.xlu0 %v2701
    %v2703 = vpop.xlane.xlu0 %2702
    %v2704 = vsel %vm68, %v2624, 0.0
    %2705 = vadd.xlane.f32.xlu0 %v2704
    %v2706 = vpop.xlane.xlu0 %2705
    %v2707 = vsel %vm68, %v2625, 0.0
    %2708 = vadd.xlane.f32.xlu0 %v2707
    %v2709 = vpop.xlane.xlu0 %2708
    %v2710 = vsel %vm68, %v2626, 0.0
    %2711 = vadd.xlane.f32.xlu0 %v2710
    %v2712 = vpop.xlane.xlu0 %2711
    %v2713 = vsel %vm68, %v2627, 0.0
    %2714 = vadd.xlane.f32.xlu0 %v2713
    %v2715 = vpop.xlane.xlu0 %2714
    %v2716 = vsel %vm68, %v2628, 0.0
    %2717 = vadd.xlane.f32.xlu0 %v2716
    %v2718 = vpop.xlane.xlu0 %2717
    %v2719 = vsel %vm68, %v2629, 0.0
    %2720 = vadd.xlane.f32.xlu0 %v2719
    %v2721 = vpop.xlane.xlu0 %2720
    %v2722 = vsel %vm68, %v2630, 0.0
    %2723 = vadd.xlane.f32.xlu0 %v2722
    %v2724 = vpop.xlane.xlu0 %2723
    %v2725 = vsel %vm68, %v2631, 0.0
    %2726 = vadd.xlane.f32.xlu0 %v2725
    %v2727 = vpop.xlane.xlu0 %2726
    %v2728 = vadd.f32 %v2568, %v2634
    %v2729 = vadd.f32 %v2569, %v2637
    %v2730 = vadd.f32 %v2570, %v2640
    %v2731 = vadd.f32 %v2571, %v2643
    %v2732 = vadd.f32 %v2572, %v2646
    %v2733 = vadd.f32 %v2573, %v2649
    %v2734 = vadd.f32 %v2574, %v2652
    %v2735 = vadd.f32 %v2575, %v2655
    %v2736 = vadd.f32 %v2576, %v2658
    %v2737 = vadd.f32 %v2577, %v2661
    %v2738 = vadd.f32 %v2578, %v2664
    %v2739 = vadd.f32 %v2579, %v2667
    %v2740 = vadd.f32 %v2580, %v2670
    %v2741 = vadd.f32 %v2581, %v2673
    %v2742 = vadd.f32 %v2582, %v2676
    %v2743 = vadd.f32 %v2583, %v2679
    %v2744 = vadd.f32 %v2584, %v2682
    %v2745 = vadd.f32 %v2585, %v2685
    %v2746 = vadd.f32 %v2586, %v2688
    %v2747 = vadd.f32 %v2587, %v2691
    %v2748 = vadd.f32 %v2588, %v2694
    %v2749 = vadd.f32 %v2589, %v2697
    %v2750 = vadd.f32 %v2590, %v2700
    %v2751 = vadd.f32 %v2591, %v2703
    %v2752 = vadd.f32 %v2592, %v2706
    %v2753 = vadd.f32 %v2593, %v2709
    %v2754 = vadd.f32 %v2594, %v2712
    %v2755 = vadd.f32 %v2595, %v2715
    %v2756 = vadd.f32 %v2596, %v2718
    %v2757 = vadd.f32 %v2597, %v2721
    %v2758 = vadd.f32 %v2598, %v2724
    %v2759 = vadd.f32 %v2599, %v2727
    %v2760 = vld [vmem:[%s2439 + $0x2] sm:$0xff]
    %v2761 = vld [vmem:[%s2439 + $0xa] sm:$0xff]
    %v2762 = vld [vmem:[%s2439 + $0x1a] sm:$0xff]
    %v2763 = vld [vmem:[%s2439 + $0x22] sm:$0xff]
    %v2764 = vld [vmem:[%s2439 + $0x32] sm:$0xff]
    %v2765 = vld [vmem:[%s2439 + $0x3a] sm:$0xff]
    %v2766 = vld [vmem:[%s2439 + $0x4a] sm:$0xff]
    %v2767 = vld [vmem:[%s2439 + $0x52] sm:$0xff]
    %v2768 = vld [vmem:[%s2439 + $0x62] sm:$0xff]
    %v2769 = vld [vmem:[%s2439 + $0x6a] sm:$0xff]
    %v2770 = vld [vmem:[%s2439 + $0x7a] sm:$0xff]
    %v2771 = vld [vmem:[%s2439 + $0x82] sm:$0xff]
    %v2772 = vld [vmem:[%s2439 + $0x92] sm:$0xff]
    %v2773 = vld [vmem:[%s2439 + $0x9a] sm:$0xff]
    %v2774 = vld [vmem:[%s2439 + $0xaa] sm:$0xff]
    %v2775 = vld [vmem:[%s2439 + $0xb2] sm:$0xff]
    %v2776 = vld [vmem:[%s2439 + $0xc2] sm:$0xff]
    %v2777 = vld [vmem:[%s2439 + $0xca] sm:$0xff]
    %v2778 = vld [vmem:[%s2439 + $0xda] sm:$0xff]
    %v2779 = vld [vmem:[%s2439 + $0xe2] sm:$0xff]
    %v2780 = vld [vmem:[%s2439 + $0xf2] sm:$0xff]
    %v2781 = vld [vmem:[%s2439 + $0xfa] sm:$0xff]
    %v2782 = vld [vmem:[%s2439 + $0x10a] sm:$0xff]
    %v2783 = vld [vmem:[%s2439 + $0x112] sm:$0xff]
    %v2784 = vld [vmem:[%s2439 + $0x122] sm:$0xff]
    %v2785 = vld [vmem:[%s2439 + $0x12a] sm:$0xff]
    %v2786 = vld [vmem:[%s2439 + $0x13a] sm:$0xff]
    %v2787 = vld [vmem:[%s2439 + $0x142] sm:$0xff]
    %v2788 = vld [vmem:[%s2439 + $0x152] sm:$0xff]
    %v2789 = vld [vmem:[%s2439 + $0x15a] sm:$0xff]
    %v2790 = vld [vmem:[%s2439 + $0x16a] sm:$0xff]
    %v2791 = vld [vmem:[%s2439 + $0x172] sm:$0xff]
    %v2792 = vsel %vm68, %v2760, 0.0
    %2793 = vadd.xlane.f32.xlu0 %v2792
    %v2794 = vpop.xlane.xlu0 %2793
    %v2795 = vsel %vm68, %v2761, 0.0
    %2796 = vadd.xlane.f32.xlu0 %v2795
    %v2797 = vpop.xlane.xlu0 %2796
    %v2798 = vsel %vm68, %v2762, 0.0
    %2799 = vadd.xlane.f32.xlu0 %v2798
    %v2800 = vpop.xlane.xlu0 %2799
    %v2801 = vsel %vm68, %v2763, 0.0
    %2802 = vadd.xlane.f32.xlu0 %v2801
    %v2803 = vpop.xlane.xlu0 %2802
    %v2804 = vsel %vm68, %v2764, 0.0
    %2805 = vadd.xlane.f32.xlu0 %v2804
    %v2806 = vpop.xlane.xlu0 %2805
    %v2807 = vsel %vm68, %v2765, 0.0
    %2808 = vadd.xlane.f32.xlu0 %v2807
    %v2809 = vpop.xlane.xlu0 %2808
    %v2810 = vsel %vm68, %v2766, 0.0
    %2811 = vadd.xlane.f32.xlu0 %v2810
    %v2812 = vpop.xlane.xlu0 %2811
    %v2813 = vsel %vm68, %v2767, 0.0
    %2814 = vadd.xlane.f32.xlu0 %v2813
    %v2815 = vpop.xlane.xlu0 %2814
    %v2816 = vsel %vm68, %v2768, 0.0
    %2817 = vadd.xlane.f32.xlu0 %v2816
    %v2818 = vpop.xlane.xlu0 %2817
    %v2819 = vsel %vm68, %v2769, 0.0
    %2820 = vadd.xlane.f32.xlu0 %v2819
    %v2821 = vpop.xlane.xlu0 %2820
    %v2822 = vsel %vm68, %v2770, 0.0
    %2823 = vadd.xlane.f32.xlu0 %v2822
    %v2824 = vpop.xlane.xlu0 %2823
    %v2825 = vsel %vm68, %v2771, 0.0
    %2826 = vadd.xlane.f32.xlu0 %v2825
    %v2827 = vpop.xlane.xlu0 %2826
    %v2828 = vsel %vm68, %v2772, 0.0
    %2829 = vadd.xlane.f32.xlu0 %v2828
    %v2830 = vpop.xlane.xlu0 %2829
    %v2831 = vsel %vm68, %v2773, 0.0
    %2832 = vadd.xlane.f32.xlu0 %v2831
    %v2833 = vpop.xlane.xlu0 %2832
    %v2834 = vsel %vm68, %v2774, 0.0
    %2835 = vadd.xlane.f32.xlu0 %v2834
    %v2836 = vpop.xlane.xlu0 %2835
    %v2837 = vsel %vm68, %v2775, 0.0
    %2838 = vadd.xlane.f32.xlu0 %v2837
    %v2839 = vpop.xlane.xlu0 %2838
    %v2840 = vsel %vm68, %v2776, 0.0
    %2841 = vadd.xlane.f32.xlu0 %v2840
    %v2842 = vpop.xlane.xlu0 %2841
    %v2843 = vsel %vm68, %v2777, 0.0
    %2844 = vadd.xlane.f32.xlu0 %v2843
    %v2845 = vpop.xlane.xlu0 %2844
    %v2846 = vsel %vm68, %v2778, 0.0
    %2847 = vadd.xlane.f32.xlu0 %v2846
    %v2848 = vpop.xlane.xlu0 %2847
    %v2849 = vsel %vm68, %v2779, 0.0
    %2850 = vadd.xlane.f32.xlu0 %v2849
    %v2851 = vpop.xlane.xlu0 %2850
    %v2852 = vsel %vm68, %v2780, 0.0
    %2853 = vadd.xlane.f32.xlu0 %v2852
    %v2854 = vpop.xlane.xlu0 %2853
    %v2855 = vsel %vm68, %v2781, 0.0
    %2856 = vadd.xlane.f32.xlu0 %v2855
    %v2857 = vpop.xlane.xlu0 %2856
    %v2858 = vsel %vm68, %v2782, 0.0
    %2859 = vadd.xlane.f32.xlu0 %v2858
    %v2860 = vpop.xlane.xlu0 %2859
    %v2861 = vsel %vm68, %v2783, 0.0
    %2862 = vadd.xlane.f32.xlu0 %v2861
    %v2863 = vpop.xlane.xlu0 %2862
    %v2864 = vsel %vm68, %v2784, 0.0
    %2865 = vadd.xlane.f32.xlu0 %v2864
    %v2866 = vpop.xlane.xlu0 %2865
    %v2867 = vsel %vm68, %v2785, 0.0
    %2868 = vadd.xlane.f32.xlu0 %v2867
    %v2869 = vpop.xlane.xlu0 %2868
    %v2870 = vsel %vm68, %v2786, 0.0
    %2871 = vadd.xlane.f32.xlu0 %v2870
    %v2872 = vpop.xlane.xlu0 %2871
    %v2873 = vsel %vm68, %v2787, 0.0
    %2874 = vadd.xlane.f32.xlu0 %v2873
    %v2875 = vpop.xlane.xlu0 %2874
    %v2876 = vsel %vm68, %v2788, 0.0
    %2877 = vadd.xlane.f32.xlu0 %v2876
    %v2878 = vpop.xlane.xlu0 %2877
    %v2879 = vsel %vm68, %v2789, 0.0
    %2880 = vadd.xlane.f32.xlu0 %v2879
    %v2881 = vpop.xlane.xlu0 %2880
    %v2882 = vsel %vm68, %v2790, 0.0
    %2883 = vadd.xlane.f32.xlu0 %v2882
    %v2884 = vpop.xlane.xlu0 %2883
    %v2885 = vsel %vm68, %v2791, 0.0
    %2886 = vadd.xlane.f32.xlu0 %v2885
    %v2887 = vpop.xlane.xlu0 %2886
    %v2888 = vadd.f32 %v2728, %v2794
    %v2889 = vadd.f32 %v2729, %v2797
    %v2890 = vadd.f32 %v2730, %v2800
    %v2891 = vadd.f32 %v2731, %v2803
    %v2892 = vadd.f32 %v2732, %v2806
    %v2893 = vadd.f32 %v2733, %v2809
    %v2894 = vadd.f32 %v2734, %v2812
    %v2895 = vadd.f32 %v2735, %v2815
    %v2896 = vadd.f32 %v2736, %v2818
    %v2897 = vadd.f32 %v2737, %v2821
    %v2898 = vadd.f32 %v2738, %v2824
    %v2899 = vadd.f32 %v2739, %v2827
    %v2900 = vadd.f32 %v2740, %v2830
    %v2901 = vadd.f32 %v2741, %v2833
    %v2902 = vadd.f32 %v2742, %v2836
    %v2903 = vadd.f32 %v2743, %v2839
    %v2904 = vadd.f32 %v2744, %v2842
    %v2905 = vadd.f32 %v2745, %v2845
    %v2906 = vadd.f32 %v2746, %v2848
    %v2907 = vadd.f32 %v2747, %v2851
    %v2908 = vadd.f32 %v2748, %v2854
    %v2909 = vadd.f32 %v2749, %v2857
    %v2910 = vadd.f32 %v2750, %v2860
    %v2911 = vadd.f32 %v2751, %v2863
    %v2912 = vadd.f32 %v2752, %v2866
    %v2913 = vadd.f32 %v2753, %v2869
    %v2914 = vadd.f32 %v2754, %v2872
    %v2915 = vadd.f32 %v2755, %v2875
    %v2916 = vadd.f32 %v2756, %v2878
    %v2917 = vadd.f32 %v2757, %v2881
    %v2918 = vadd.f32 %v2758, %v2884
    %v2919 = vadd.f32 %v2759, %v2887
    %v2920 = vld [vmem:[%s2439 + $0x3] sm:$0xff]
    %v2921 = vld [vmem:[%s2439 + $0xb] sm:$0xff]
    %v2922 = vld [vmem:[%s2439 + $0x1b] sm:$0xff]
    %v2923 = vld [vmem:[%s2439 + $0x23] sm:$0xff]
    %v2924 = vld [vmem:[%s2439 + $0x33] sm:$0xff]
    %v2925 = vld [vmem:[%s2439 + $0x3b] sm:$0xff]
    %v2926 = vld [vmem:[%s2439 + $0x4b] sm:$0xff]
    %v2927 = vld [vmem:[%s2439 + $0x53] sm:$0xff]
    %v2928 = vld [vmem:[%s2439 + $0x63] sm:$0xff]
    %v2929 = vld [vmem:[%s2439 + $0x6b] sm:$0xff]
    %v2930 = vld [vmem:[%s2439 + $0x7b] sm:$0xff]
    %v2931 = vld [vmem:[%s2439 + $0x83] sm:$0xff]
    %v2932 = vld [vmem:[%s2439 + $0x93] sm:$0xff]
    %v2933 = vld [vmem:[%s2439 + $0x9b] sm:$0xff]
    %v2934 = vld [vmem:[%s2439 + $0xab] sm:$0xff]
    %v2935 = vld [vmem:[%s2439 + $0xb3] sm:$0xff]
    %v2936 = vld [vmem:[%s2439 + $0xc3] sm:$0xff]
    %v2937 = vld [vmem:[%s2439 + $0xcb] sm:$0xff]
    %v2938 = vld [vmem:[%s2439 + $0xdb] sm:$0xff]
    %v2939 = vld [vmem:[%s2439 + $0xe3] sm:$0xff]
    %v2940 = vld [vmem:[%s2439 + $0xf3] sm:$0xff]
    %v2941 = vld [vmem:[%s2439 + $0xfb] sm:$0xff]
    %v2942 = vld [vmem:[%s2439 + $0x10b] sm:$0xff]
    %v2943 = vld [vmem:[%s2439 + $0x113] sm:$0xff]
    %v2944 = vld [vmem:[%s2439 + $0x123] sm:$0xff]
    %v2945 = vld [vmem:[%s2439 + $0x12b] sm:$0xff]
    %v2946 = vld [vmem:[%s2439 + $0x13b] sm:$0xff]
    %v2947 = vld [vmem:[%s2439 + $0x143] sm:$0xff]
    %v2948 = vld [vmem:[%s2439 + $0x153] sm:$0xff]
    %v2949 = vld [vmem:[%s2439 + $0x15b] sm:$0xff]
    %v2950 = vld [vmem:[%s2439 + $0x16b] sm:$0xff]
    %v2951 = vld [vmem:[%s2439 + $0x173] sm:$0xff]
    %v2952 = vsel %vm68, %v2920, 0.0
    %2953 = vadd.xlane.f32.xlu0 %v2952
    %v2954 = vpop.xlane.xlu0 %2953
    %v2955 = vsel %vm68, %v2921, 0.0
    %2956 = vadd.xlane.f32.xlu0 %v2955
    %v2957 = vpop.xlane.xlu0 %2956
    %v2958 = vsel %vm68, %v2922, 0.0
    %2959 = vadd.xlane.f32.xlu0 %v2958
    %v2960 = vpop.xlane.xlu0 %2959
    %v2961 = vsel %vm68, %v2923, 0.0
    %2962 = vadd.xlane.f32.xlu0 %v2961
    %v2963 = vpop.xlane.xlu0 %2962
    %v2964 = vsel %vm68, %v2924, 0.0
    %2965 = vadd.xlane.f32.xlu0 %v2964
    %v2966 = vpop.xlane.xlu0 %2965
    %v2967 = vsel %vm68, %v2925, 0.0
    %2968 = vadd.xlane.f32.xlu0 %v2967
    %v2969 = vpop.xlane.xlu0 %2968
    %v2970 = vsel %vm68, %v2926, 0.0
    %2971 = vadd.xlane.f32.xlu0 %v2970
    %v2972 = vpop.xlane.xlu0 %2971
    %v2973 = vsel %vm68, %v2927, 0.0
    %2974 = vadd.xlane.f32.xlu0 %v2973
    %v2975 = vpop.xlane.xlu0 %2974
    %v2976 = vsel %vm68, %v2928, 0.0
    %2977 = vadd.xlane.f32.xlu0 %v2976
    %v2978 = vpop.xlane.xlu0 %2977
    %v2979 = vsel %vm68, %v2929, 0.0
    %2980 = vadd.xlane.f32.xlu0 %v2979
    %v2981 = vpop.xlane.xlu0 %2980
    %v2982 = vsel %vm68, %v2930, 0.0
    %2983 = vadd.xlane.f32.xlu0 %v2982
    %v2984 = vpop.xlane.xlu0 %2983
    %v2985 = vsel %vm68, %v2931, 0.0
    %2986 = vadd.xlane.f32.xlu0 %v2985
    %v2987 = vpop.xlane.xlu0 %2986
    %v2988 = vsel %vm68, %v2932, 0.0
    %2989 = vadd.xlane.f32.xlu0 %v2988
    %v2990 = vpop.xlane.xlu0 %2989
    %v2991 = vsel %vm68, %v2933, 0.0
    %2992 = vadd.xlane.f32.xlu0 %v2991
    %v2993 = vpop.xlane.xlu0 %2992
    %v2994 = vsel %vm68, %v2934, 0.0
    %2995 = vadd.xlane.f32.xlu0 %v2994
    %v2996 = vpop.xlane.xlu0 %2995
    %v2997 = vsel %vm68, %v2935, 0.0
    %2998 = vadd.xlane.f32.xlu0 %v2997
    %v2999 = vpop.xlane.xlu0 %2998
    %v3000 = vsel %vm68, %v2936, 0.0
    %3001 = vadd.xlane.f32.xlu0 %v3000
    %v3002 = vpop.xlane.xlu0 %3001
    %v3003 = vsel %vm68, %v2937, 0.0
    %3004 = vadd.xlane.f32.xlu0 %v3003
    %v3005 = vpop.xlane.xlu0 %3004
    %v3006 = vsel %vm68, %v2938, 0.0
    %3007 = vadd.xlane.f32.xlu0 %v3006
    %v3008 = vpop.xlane.xlu0 %3007
    %v3009 = vsel %vm68, %v2939, 0.0
    %3010 = vadd.xlane.f32.xlu0 %v3009
    %v3011 = vpop.xlane.xlu0 %3010
    %v3012 = vsel %vm68, %v2940, 0.0
    %3013 = vadd.xlane.f32.xlu0 %v3012
    %v3014 = vpop.xlane.xlu0 %3013
    %v3015 = vsel %vm68, %v2941, 0.0
    %3016 = vadd.xlane.f32.xlu0 %v3015
    %v3017 = vpop.xlane.xlu0 %3016
    %v3018 = vsel %vm68, %v2942, 0.0
    %3019 = vadd.xlane.f32.xlu0 %v3018
    %v3020 = vpop.xlane.xlu0 %3019
    %v3021 = vsel %vm68, %v2943, 0.0
    %3022 = vadd.xlane.f32.xlu0 %v3021
    %v3023 = vpop.xlane.xlu0 %3022
    %v3024 = vsel %vm68, %v2944, 0.0
    %3025 = vadd.xlane.f32.xlu0 %v3024
    %v3026 = vpop.xlane.xlu0 %3025
    %v3027 = vsel %vm68, %v2945, 0.0
    %3028 = vadd.xlane.f32.xlu0 %v3027
    %v3029 = vpop.xlane.xlu0 %3028
    %v3030 = vsel %vm68, %v2946, 0.0
    %3031 = vadd.xlane.f32.xlu0 %v3030
    %v3032 = vpop.xlane.xlu0 %3031
    %v3033 = vsel %vm68, %v2947, 0.0
    %3034 = vadd.xlane.f32.xlu0 %v3033
    %v3035 = vpop.xlane.xlu0 %3034
    %v3036 = vsel %vm68, %v2948, 0.0
    %3037 = vadd.xlane.f32.xlu0 %v3036
    %v3038 = vpop.xlane.xlu0 %3037
    %v3039 = vsel %vm68, %v2949, 0.0
    %3040 = vadd.xlane.f32.xlu0 %v3039
    %v3041 = vpop.xlane.xlu0 %3040
    %v3042 = vsel %vm68, %v2950, 0.0
    %3043 = vadd.xlane.f32.xlu0 %v3042
    %v3044 = vpop.xlane.xlu0 %3043
    %v3045 = vsel %vm68, %v2951, 0.0
    %3046 = vadd.xlane.f32.xlu0 %v3045
    %v3047 = vpop.xlane.xlu0 %3046
    %v3048 = vadd.f32 %v2888, %v2954
    %v3049 = vadd.f32 %v2889, %v2957
    %v3050 = vadd.f32 %v2890, %v2960
    %v3051 = vadd.f32 %v2891, %v2963
    %v3052 = vadd.f32 %v2892, %v2966
    %v3053 = vadd.f32 %v2893, %v2969
    %v3054 = vadd.f32 %v2894, %v2972
    %v3055 = vadd.f32 %v2895, %v2975
    %v3056 = vadd.f32 %v2896, %v2978
    %v3057 = vadd.f32 %v2897, %v2981
    %v3058 = vadd.f32 %v2898, %v2984
    %v3059 = vadd.f32 %v2899, %v2987
    %v3060 = vadd.f32 %v2900, %v2990
    %v3061 = vadd.f32 %v2901, %v2993
    %v3062 = vadd.f32 %v2902, %v2996
    %v3063 = vadd.f32 %v2903, %v2999
    %v3064 = vadd.f32 %v2904, %v3002
    %v3065 = vadd.f32 %v2905, %v3005
    %v3066 = vadd.f32 %v2906, %v3008
    %v3067 = vadd.f32 %v2907, %v3011
    %v3068 = vadd.f32 %v2908, %v3014
    %v3069 = vadd.f32 %v2909, %v3017
    %v3070 = vadd.f32 %v2910, %v3020
    %v3071 = vadd.f32 %v2911, %v3023
    %v3072 = vadd.f32 %v2912, %v3026
    %v3073 = vadd.f32 %v2913, %v3029
    %v3074 = vadd.f32 %v2914, %v3032
    %v3075 = vadd.f32 %v2915, %v3035
    %v3076 = vadd.f32 %v2916, %v3038
    %v3077 = vadd.f32 %v2917, %v3041
    %v3078 = vadd.f32 %v2918, %v3044
    %v3079 = vadd.f32 %v2919, %v3047
    %v3080 = vld [vmem:[%s2439 + $0x4] sm:$0xff]
    %v3081 = vld [vmem:[%s2439 + $0xc] sm:$0xff]
    %v3082 = vld [vmem:[%s2439 + $0x1c] sm:$0xff]
    %v3083 = vld [vmem:[%s2439 + $0x24] sm:$0xff]
    %v3084 = vld [vmem:[%s2439 + $0x34] sm:$0xff]
    %v3085 = vld [vmem:[%s2439 + $0x3c] sm:$0xff]
    %v3086 = vld [vmem:[%s2439 + $0x4c] sm:$0xff]
    %v3087 = vld [vmem:[%s2439 + $0x54] sm:$0xff]
    %v3088 = vld [vmem:[%s2439 + $0x64] sm:$0xff]
    %v3089 = vld [vmem:[%s2439 + $0x6c] sm:$0xff]
    %v3090 = vld [vmem:[%s2439 + $0x7c] sm:$0xff]
    %v3091 = vld [vmem:[%s2439 + $0x84] sm:$0xff]
    %v3092 = vld [vmem:[%s2439 + $0x94] sm:$0xff]
    %v3093 = vld [vmem:[%s2439 + $0x9c] sm:$0xff]
    %v3094 = vld [vmem:[%s2439 + $0xac] sm:$0xff]
    %v3095 = vld [vmem:[%s2439 + $0xb4] sm:$0xff]
    %v3096 = vld [vmem:[%s2439 + $0xc4] sm:$0xff]
    %v3097 = vld [vmem:[%s2439 + $0xcc] sm:$0xff]
    %v3098 = vld [vmem:[%s2439 + $0xdc] sm:$0xff]
    %v3099 = vld [vmem:[%s2439 + $0xe4] sm:$0xff]
    %v3100 = vld [vmem:[%s2439 + $0xf4] sm:$0xff]
    %v3101 = vld [vmem:[%s2439 + $0xfc] sm:$0xff]
    %v3102 = vld [vmem:[%s2439 + $0x10c] sm:$0xff]
    %v3103 = vld [vmem:[%s2439 + $0x114] sm:$0xff]
    %v3104 = vld [vmem:[%s2439 + $0x124] sm:$0xff]
    %v3105 = vld [vmem:[%s2439 + $0x12c] sm:$0xff]
    %v3106 = vld [vmem:[%s2439 + $0x13c] sm:$0xff]
    %v3107 = vld [vmem:[%s2439 + $0x144] sm:$0xff]
    %v3108 = vld [vmem:[%s2439 + $0x154] sm:$0xff]
    %v3109 = vld [vmem:[%s2439 + $0x15c] sm:$0xff]
    %v3110 = vld [vmem:[%s2439 + $0x16c] sm:$0xff]
    %v3111 = vld [vmem:[%s2439 + $0x174] sm:$0xff]
    %v3112 = vsel %vm68, %v3080, 0.0
    %3113 = vadd.xlane.f32.xlu0 %v3112
    %v3114 = vpop.xlane.xlu0 %3113
    %v3115 = vsel %vm68, %v3081, 0.0
    %3116 = vadd.xlane.f32.xlu0 %v3115
    %v3117 = vpop.xlane.xlu0 %3116
    %v3118 = vsel %vm68, %v3082, 0.0
    %3119 = vadd.xlane.f32.xlu0 %v3118
    %v3120 = vpop.xlane.xlu0 %3119
    %v3121 = vsel %vm68, %v3083, 0.0
    %3122 = vadd.xlane.f32.xlu0 %v3121
    %v3123 = vpop.xlane.xlu0 %3122
    %v3124 = vsel %vm68, %v3084, 0.0
    %3125 = vadd.xlane.f32.xlu0 %v3124
    %v3126 = vpop.xlane.xlu0 %3125
    %v3127 = vsel %vm68, %v3085, 0.0
    %3128 = vadd.xlane.f32.xlu0 %v3127
    %v3129 = vpop.xlane.xlu0 %3128
    %v3130 = vsel %vm68, %v3086, 0.0
    %3131 = vadd.xlane.f32.xlu0 %v3130
    %v3132 = vpop.xlane.xlu0 %3131
    %v3133 = vsel %vm68, %v3087, 0.0
    %3134 = vadd.xlane.f32.xlu0 %v3133
    %v3135 = vpop.xlane.xlu0 %3134
    %v3136 = vsel %vm68, %v3088, 0.0
    %3137 = vadd.xlane.f32.xlu0 %v3136
    %v3138 = vpop.xlane.xlu0 %3137
    %v3139 = vsel %vm68, %v3089, 0.0
    %3140 = vadd.xlane.f32.xlu0 %v3139
    %v3141 = vpop.xlane.xlu0 %3140
    %v3142 = vsel %vm68, %v3090, 0.0
    %3143 = vadd.xlane.f32.xlu0 %v3142
    %v3144 = vpop.xlane.xlu0 %3143
    %v3145 = vsel %vm68, %v3091, 0.0
    %3146 = vadd.xlane.f32.xlu0 %v3145
    %v3147 = vpop.xlane.xlu0 %3146
    %v3148 = vsel %vm68, %v3092, 0.0
    %3149 = vadd.xlane.f32.xlu0 %v3148
    %v3150 = vpop.xlane.xlu0 %3149
    %v3151 = vsel %vm68, %v3093, 0.0
    %3152 = vadd.xlane.f32.xlu0 %v3151
    %v3153 = vpop.xlane.xlu0 %3152
    %v3154 = vsel %vm68, %v3094, 0.0
    %3155 = vadd.xlane.f32.xlu0 %v3154
    %v3156 = vpop.xlane.xlu0 %3155
    %v3157 = vsel %vm68, %v3095, 0.0
    %3158 = vadd.xlane.f32.xlu0 %v3157
    %v3159 = vpop.xlane.xlu0 %3158
    %v3160 = vsel %vm68, %v3096, 0.0
    %3161 = vadd.xlane.f32.xlu0 %v3160
    %v3162 = vpop.xlane.xlu0 %3161
    %v3163 = vsel %vm68, %v3097, 0.0
    %3164 = vadd.xlane.f32.xlu0 %v3163
    %v3165 = vpop.xlane.xlu0 %3164
    %v3166 = vsel %vm68, %v3098, 0.0
    %3167 = vadd.xlane.f32.xlu0 %v3166
    %v3168 = vpop.xlane.xlu0 %3167
    %v3169 = vsel %vm68, %v3099, 0.0
    %3170 = vadd.xlane.f32.xlu0 %v3169
    %v3171 = vpop.xlane.xlu0 %3170
    %v3172 = vsel %vm68, %v3100, 0.0
    %3173 = vadd.xlane.f32.xlu0 %v3172
    %v3174 = vpop.xlane.xlu0 %3173
    %v3175 = vsel %vm68, %v3101, 0.0
    %3176 = vadd.xlane.f32.xlu0 %v3175
    %v3177 = vpop.xlane.xlu0 %3176
    %v3178 = vsel %vm68, %v3102, 0.0
    %3179 = vadd.xlane.f32.xlu0 %v3178
    %v3180 = vpop.xlane.xlu0 %3179
    %v3181 = vsel %vm68, %v3103, 0.0
    %3182 = vadd.xlane.f32.xlu0 %v3181
    %v3183 = vpop.xlane.xlu0 %3182
    %v3184 = vsel %vm68, %v3104, 0.0
    %3185 = vadd.xlane.f32.xlu0 %v3184
    %v3186 = vpop.xlane.xlu0 %3185
    %v3187 = vsel %vm68, %v3105, 0.0
    %3188 = vadd.xlane.f32.xlu0 %v3187
    %v3189 = vpop.xlane.xlu0 %3188
    %v3190 = vsel %vm68, %v3106, 0.0
    %3191 = vadd.xlane.f32.xlu0 %v3190
    %v3192 = vpop.xlane.xlu0 %3191
    %v3193 = vsel %vm68, %v3107, 0.0
    %3194 = vadd.xlane.f32.xlu0 %v3193
    %v3195 = vpop.xlane.xlu0 %3194
    %v3196 = vsel %vm68, %v3108, 0.0
    %3197 = vadd.xlane.f32.xlu0 %v3196
    %v3198 = vpop.xlane.xlu0 %3197
    %v3199 = vsel %vm68, %v3109, 0.0
    %3200 = vadd.xlane.f32.xlu0 %v3199
    %v3201 = vpop.xlane.xlu0 %3200
    %v3202 = vsel %vm68, %v3110, 0.0
    %3203 = vadd.xlane.f32.xlu0 %v3202
    %v3204 = vpop.xlane.xlu0 %3203
    %v3205 = vsel %vm68, %v3111, 0.0
    %3206 = vadd.xlane.f32.xlu0 %v3205
    %v3207 = vpop.xlane.xlu0 %3206
    %v3208 = vadd.f32 %v3048, %v3114
    %v3209 = vadd.f32 %v3049, %v3117
    %v3210 = vadd.f32 %v3050, %v3120
    %v3211 = vadd.f32 %v3051, %v3123
    %v3212 = vadd.f32 %v3052, %v3126
    %v3213 = vadd.f32 %v3053, %v3129
    %v3214 = vadd.f32 %v3054, %v3132
    %v3215 = vadd.f32 %v3055, %v3135
    %v3216 = vadd.f32 %v3056, %v3138
    %v3217 = vadd.f32 %v3057, %v3141
    %v3218 = vadd.f32 %v3058, %v3144
    %v3219 = vadd.f32 %v3059, %v3147
    %v3220 = vadd.f32 %v3060, %v3150
    %v3221 = vadd.f32 %v3061, %v3153
    %v3222 = vadd.f32 %v3062, %v3156
    %v3223 = vadd.f32 %v3063, %v3159
    %v3224 = vadd.f32 %v3064, %v3162
    %v3225 = vadd.f32 %v3065, %v3165
    %v3226 = vadd.f32 %v3066, %v3168
    %v3227 = vadd.f32 %v3067, %v3171
    %v3228 = vadd.f32 %v3068, %v3174
    %v3229 = vadd.f32 %v3069, %v3177
    %v3230 = vadd.f32 %v3070, %v3180
    %v3231 = vadd.f32 %v3071, %v3183
    %v3232 = vadd.f32 %v3072, %v3186
    %v3233 = vadd.f32 %v3073, %v3189
    %v3234 = vadd.f32 %v3074, %v3192
    %v3235 = vadd.f32 %v3075, %v3195
    %v3236 = vadd.f32 %v3076, %v3198
    %v3237 = vadd.f32 %v3077, %v3201
    %v3238 = vadd.f32 %v3078, %v3204
    %v3239 = vadd.f32 %v3079, %v3207
    %s3240 = scalar_lea.vmem %s0, 96
    %v3241 = vld [vmem:[%s3240] sm:$0xff]
    %v3242 = vld [vmem:[%s3240 + $0x8] sm:$0xff]
    %v3243 = vld [vmem:[%s3240 + $0x18] sm:$0xff]
    %v3244 = vld [vmem:[%s3240 + $0x20] sm:$0xff]
    %v3245 = vld [vmem:[%s3240 + $0x30] sm:$0xff]
    %v3246 = vld [vmem:[%s3240 + $0x38] sm:$0xff]
    %v3247 = vld [vmem:[%s3240 + $0x48] sm:$0xff]
    %v3248 = vld [vmem:[%s3240 + $0x50] sm:$0xff]
    %v3249 = vld [vmem:[%s3240 + $0x60] sm:$0xff]
    %v3250 = vld [vmem:[%s3240 + $0x68] sm:$0xff]
    %v3251 = vld [vmem:[%s3240 + $0x78] sm:$0xff]
    %v3252 = vld [vmem:[%s3240 + $0x80] sm:$0xff]
    %v3253 = vld [vmem:[%s3240 + $0x90] sm:$0xff]
    %v3254 = vld [vmem:[%s3240 + $0x98] sm:$0xff]
    %v3255 = vld [vmem:[%s3240 + $0xa8] sm:$0xff]
    %v3256 = vld [vmem:[%s3240 + $0xb0] sm:$0xff]
    %v3257 = vld [vmem:[%s3240 + $0xc0] sm:$0xff]
    %v3258 = vld [vmem:[%s3240 + $0xc8] sm:$0xff]
    %v3259 = vld [vmem:[%s3240 + $0xd8] sm:$0xff]
    %v3260 = vld [vmem:[%s3240 + $0xe0] sm:$0xff]
    %v3261 = vld [vmem:[%s3240 + $0xf0] sm:$0xff]
    %v3262 = vld [vmem:[%s3240 + $0xf8] sm:$0xff]
    %v3263 = vld [vmem:[%s3240 + $0x108] sm:$0xff]
    %v3264 = vld [vmem:[%s3240 + $0x110] sm:$0xff]
    %v3265 = vld [vmem:[%s3240 + $0x120] sm:$0xff]
    %v3266 = vld [vmem:[%s3240 + $0x128] sm:$0xff]
    %v3267 = vld [vmem:[%s3240 + $0x138] sm:$0xff]
    %v3268 = vld [vmem:[%s3240 + $0x140] sm:$0xff]
    %v3269 = vld [vmem:[%s3240 + $0x150] sm:$0xff]
    %v3270 = vld [vmem:[%s3240 + $0x158] sm:$0xff]
    %v3271 = vld [vmem:[%s3240 + $0x168] sm:$0xff]
    %v3272 = vld [vmem:[%s3240 + $0x170] sm:$0xff]
    %v3273 = vsel %vm68, %v3241, 0.0
    %3274 = vadd.xlane.f32.xlu0 %v3273
    %v3275 = vpop.xlane.xlu0 %3274
    %v3276 = vsel %vm68, %v3242, 0.0
    %3277 = vadd.xlane.f32.xlu0 %v3276
    %v3278 = vpop.xlane.xlu0 %3277
    %v3279 = vsel %vm68, %v3243, 0.0
    %3280 = vadd.xlane.f32.xlu0 %v3279
    %v3281 = vpop.xlane.xlu0 %3280
    %v3282 = vsel %vm68, %v3244, 0.0
    %3283 = vadd.xlane.f32.xlu0 %v3282
    %v3284 = vpop.xlane.xlu0 %3283
    %v3285 = vsel %vm68, %v3245, 0.0
    %3286 = vadd.xlane.f32.xlu0 %v3285
    %v3287 = vpop.xlane.xlu0 %3286
    %v3288 = vsel %vm68, %v3246, 0.0
    %3289 = vadd.xlane.f32.xlu0 %v3288
    %v3290 = vpop.xlane.xlu0 %3289
    %v3291 = vsel %vm68, %v3247, 0.0
    %3292 = vadd.xlane.f32.xlu0 %v3291
    %v3293 = vpop.xlane.xlu0 %3292
    %v3294 = vsel %vm68, %v3248, 0.0
    %3295 = vadd.xlane.f32.xlu0 %v3294
    %v3296 = vpop.xlane.xlu0 %3295
    %v3297 = vsel %vm68, %v3249, 0.0
    %3298 = vadd.xlane.f32.xlu0 %v3297
    %v3299 = vpop.xlane.xlu0 %3298
    %v3300 = vsel %vm68, %v3250, 0.0
    %3301 = vadd.xlane.f32.xlu0 %v3300
    %v3302 = vpop.xlane.xlu0 %3301
    %v3303 = vsel %vm68, %v3251, 0.0
    %3304 = vadd.xlane.f32.xlu0 %v3303
    %v3305 = vpop.xlane.xlu0 %3304
    %v3306 = vsel %vm68, %v3252, 0.0
    %3307 = vadd.xlane.f32.xlu0 %v3306
    %v3308 = vpop.xlane.xlu0 %3307
    %v3309 = vsel %vm68, %v3253, 0.0
    %3310 = vadd.xlane.f32.xlu0 %v3309
    %v3311 = vpop.xlane.xlu0 %3310
    %v3312 = vsel %vm68, %v3254, 0.0
    %3313 = vadd.xlane.f32.xlu0 %v3312
    %v3314 = vpop.xlane.xlu0 %3313
    %v3315 = vsel %vm68, %v3255, 0.0
    %3316 = vadd.xlane.f32.xlu0 %v3315
    %v3317 = vpop.xlane.xlu0 %3316
    %v3318 = vsel %vm68, %v3256, 0.0
    %3319 = vadd.xlane.f32.xlu0 %v3318
    %v3320 = vpop.xlane.xlu0 %3319
    %v3321 = vsel %vm68, %v3257, 0.0
    %3322 = vadd.xlane.f32.xlu0 %v3321
    %v3323 = vpop.xlane.xlu0 %3322
    %v3324 = vsel %vm68, %v3258, 0.0
    %3325 = vadd.xlane.f32.xlu0 %v3324
    %v3326 = vpop.xlane.xlu0 %3325
    %v3327 = vsel %vm68, %v3259, 0.0
    %3328 = vadd.xlane.f32.xlu0 %v3327
    %v3329 = vpop.xlane.xlu0 %3328
    %v3330 = vsel %vm68, %v3260, 0.0
    %3331 = vadd.xlane.f32.xlu0 %v3330
    %v3332 = vpop.xlane.xlu0 %3331
    %v3333 = vsel %vm68, %v3261, 0.0
    %3334 = vadd.xlane.f32.xlu0 %v3333
    %v3335 = vpop.xlane.xlu0 %3334
    %v3336 = vsel %vm68, %v3262, 0.0
    %3337 = vadd.xlane.f32.xlu0 %v3336
    %v3338 = vpop.xlane.xlu0 %3337
    %v3339 = vsel %vm68, %v3263, 0.0
    %3340 = vadd.xlane.f32.xlu0 %v3339
    %v3341 = vpop.xlane.xlu0 %3340
    %v3342 = vsel %vm68, %v3264, 0.0
    %3343 = vadd.xlane.f32.xlu0 %v3342
    %v3344 = vpop.xlane.xlu0 %3343
    %v3345 = vsel %vm68, %v3265, 0.0
    %3346 = vadd.xlane.f32.xlu0 %v3345
    %v3347 = vpop.xlane.xlu0 %3346
    %v3348 = vsel %vm68, %v3266, 0.0
    %3349 = vadd.xlane.f32.xlu0 %v3348
    %v3350 = vpop.xlane.xlu0 %3349
    %v3351 = vsel %vm68, %v3267, 0.0
    %3352 = vadd.xlane.f32.xlu0 %v3351
    %v3353 = vpop.xlane.xlu0 %3352
    %v3354 = vsel %vm68, %v3268, 0.0
    %3355 = vadd.xlane.f32.xlu0 %v3354
    %v3356 = vpop.xlane.xlu0 %3355
    %v3357 = vsel %vm68, %v3269, 0.0
    %3358 = vadd.xlane.f32.xlu0 %v3357
    %v3359 = vpop.xlane.xlu0 %3358
    %v3360 = vsel %vm68, %v3270, 0.0
    %3361 = vadd.xlane.f32.xlu0 %v3360
    %v3362 = vpop.xlane.xlu0 %3361
    %v3363 = vsel %vm68, %v3271, 0.0
    %3364 = vadd.xlane.f32.xlu0 %v3363
    %v3365 = vpop.xlane.xlu0 %3364
    %v3366 = vsel %vm68, %v3272, 0.0
    %3367 = vadd.xlane.f32.xlu0 %v3366
    %v3368 = vpop.xlane.xlu0 %3367
    %v3369 = vadd.f32 %v3208, %v3275
    %v3370 = vadd.f32 %v3209, %v3278
    %v3371 = vadd.f32 %v3210, %v3281
    %v3372 = vadd.f32 %v3211, %v3284
    %v3373 = vadd.f32 %v3212, %v3287
    %v3374 = vadd.f32 %v3213, %v3290
    %v3375 = vadd.f32 %v3214, %v3293
    %v3376 = vadd.f32 %v3215, %v3296
    %v3377 = vadd.f32 %v3216, %v3299
    %v3378 = vadd.f32 %v3217, %v3302
    %v3379 = vadd.f32 %v3218, %v3305
    %v3380 = vadd.f32 %v3219, %v3308
    %v3381 = vadd.f32 %v3220, %v3311
    %v3382 = vadd.f32 %v3221, %v3314
    %v3383 = vadd.f32 %v3222, %v3317
    %v3384 = vadd.f32 %v3223, %v3320
    %v3385 = vadd.f32 %v3224, %v3323
    %v3386 = vadd.f32 %v3225, %v3326
    %v3387 = vadd.f32 %v3226, %v3329
    %v3388 = vadd.f32 %v3227, %v3332
    %v3389 = vadd.f32 %v3228, %v3335
    %v3390 = vadd.f32 %v3229, %v3338
    %v3391 = vadd.f32 %v3230, %v3341
    %v3392 = vadd.f32 %v3231, %v3344
    %v3393 = vadd.f32 %v3232, %v3347
    %v3394 = vadd.f32 %v3233, %v3350
    %v3395 = vadd.f32 %v3234, %v3353
    %v3396 = vadd.f32 %v3235, %v3356
    %v3397 = vadd.f32 %v3236, %v3359
    %v3398 = vadd.f32 %v3237, %v3362
    %v3399 = vadd.f32 %v3238, %v3365
    %v3400 = vadd.f32 %v3239, %v3368
    %v3401 = vld [vmem:[%s3240 + $0x1] sm:$0xff]
    %v3402 = vld [vmem:[%s3240 + $0x9] sm:$0xff]
    %v3403 = vld [vmem:[%s3240 + $0x19] sm:$0xff]
    %v3404 = vld [vmem:[%s3240 + $0x21] sm:$0xff]
    %v3405 = vld [vmem:[%s3240 + $0x31] sm:$0xff]
    %v3406 = vld [vmem:[%s3240 + $0x39] sm:$0xff]
    %v3407 = vld [vmem:[%s3240 + $0x49] sm:$0xff]
    %v3408 = vld [vmem:[%s3240 + $0x51] sm:$0xff]
    %v3409 = vld [vmem:[%s3240 + $0x61] sm:$0xff]
    %v3410 = vld [vmem:[%s3240 + $0x69] sm:$0xff]
    %v3411 = vld [vmem:[%s3240 + $0x79] sm:$0xff]
    %v3412 = vld [vmem:[%s3240 + $0x81] sm:$0xff]
    %v3413 = vld [vmem:[%s3240 + $0x91] sm:$0xff]
    %v3414 = vld [vmem:[%s3240 + $0x99] sm:$0xff]
    %v3415 = vld [vmem:[%s3240 + $0xa9] sm:$0xff]
    %v3416 = vld [vmem:[%s3240 + $0xb1] sm:$0xff]
    %v3417 = vld [vmem:[%s3240 + $0xc1] sm:$0xff]
    %v3418 = vld [vmem:[%s3240 + $0xc9] sm:$0xff]
    %v3419 = vld [vmem:[%s3240 + $0xd9] sm:$0xff]
    %v3420 = vld [vmem:[%s3240 + $0xe1] sm:$0xff]
    %v3421 = vld [vmem:[%s3240 + $0xf1] sm:$0xff]
    %v3422 = vld [vmem:[%s3240 + $0xf9] sm:$0xff]
    %v3423 = vld [vmem:[%s3240 + $0x109] sm:$0xff]
    %v3424 = vld [vmem:[%s3240 + $0x111] sm:$0xff]
    %v3425 = vld [vmem:[%s3240 + $0x121] sm:$0xff]
    %v3426 = vld [vmem:[%s3240 + $0x129] sm:$0xff]
    %v3427 = vld [vmem:[%s3240 + $0x139] sm:$0xff]
    %v3428 = vld [vmem:[%s3240 + $0x141] sm:$0xff]
    %v3429 = vld [vmem:[%s3240 + $0x151] sm:$0xff]
    %v3430 = vld [vmem:[%s3240 + $0x159] sm:$0xff]
    %v3431 = vld [vmem:[%s3240 + $0x169] sm:$0xff]
    %v3432 = vld [vmem:[%s3240 + $0x171] sm:$0xff]
    %v3433 = vsel %vm68, %v3401, 0.0
    %3434 = vadd.xlane.f32.xlu0 %v3433
    %v3435 = vpop.xlane.xlu0 %3434
    %v3436 = vsel %vm68, %v3402, 0.0
    %3437 = vadd.xlane.f32.xlu0 %v3436
    %v3438 = vpop.xlane.xlu0 %3437
    %v3439 = vsel %vm68, %v3403, 0.0
    %3440 = vadd.xlane.f32.xlu0 %v3439
    %v3441 = vpop.xlane.xlu0 %3440
    %v3442 = vsel %vm68, %v3404, 0.0
    %3443 = vadd.xlane.f32.xlu0 %v3442
    %v3444 = vpop.xlane.xlu0 %3443
    %v3445 = vsel %vm68, %v3405, 0.0
    %3446 = vadd.xlane.f32.xlu0 %v3445
    %v3447 = vpop.xlane.xlu0 %3446
    %v3448 = vsel %vm68, %v3406, 0.0
    %3449 = vadd.xlane.f32.xlu0 %v3448
    %v3450 = vpop.xlane.xlu0 %3449
    %v3451 = vsel %vm68, %v3407, 0.0
    %3452 = vadd.xlane.f32.xlu0 %v3451
    %v3453 = vpop.xlane.xlu0 %3452
    %v3454 = vsel %vm68, %v3408, 0.0
    %3455 = vadd.xlane.f32.xlu0 %v3454
    %v3456 = vpop.xlane.xlu0 %3455
    %v3457 = vsel %vm68, %v3409, 0.0
    %3458 = vadd.xlane.f32.xlu0 %v3457
    %v3459 = vpop.xlane.xlu0 %3458
    %v3460 = vsel %vm68, %v3410, 0.0
    %3461 = vadd.xlane.f32.xlu0 %v3460
    %v3462 = vpop.xlane.xlu0 %3461
    %v3463 = vsel %vm68, %v3411, 0.0
    %3464 = vadd.xlane.f32.xlu0 %v3463
    %v3465 = vpop.xlane.xlu0 %3464
    %v3466 = vsel %vm68, %v3412, 0.0
    %3467 = vadd.xlane.f32.xlu0 %v3466
    %v3468 = vpop.xlane.xlu0 %3467
    %v3469 = vsel %vm68, %v3413, 0.0
    %3470 = vadd.xlane.f32.xlu0 %v3469
    %v3471 = vpop.xlane.xlu0 %3470
    %v3472 = vsel %vm68, %v3414, 0.0
    %3473 = vadd.xlane.f32.xlu0 %v3472
    %v3474 = vpop.xlane.xlu0 %3473
    %v3475 = vsel %vm68, %v3415, 0.0
    %3476 = vadd.xlane.f32.xlu0 %v3475
    %v3477 = vpop.xlane.xlu0 %3476
    %v3478 = vsel %vm68, %v3416, 0.0
    %3479 = vadd.xlane.f32.xlu0 %v3478
    %v3480 = vpop.xlane.xlu0 %3479
    %v3481 = vsel %vm68, %v3417, 0.0
    %3482 = vadd.xlane.f32.xlu0 %v3481
    %v3483 = vpop.xlane.xlu0 %3482
    %v3484 = vsel %vm68, %v3418, 0.0
    %3485 = vadd.xlane.f32.xlu0 %v3484
    %v3486 = vpop.xlane.xlu0 %3485
    %v3487 = vsel %vm68, %v3419, 0.0
    %3488 = vadd.xlane.f32.xlu0 %v3487
    %v3489 = vpop.xlane.xlu0 %3488
    %v3490 = vsel %vm68, %v3420, 0.0
    %3491 = vadd.xlane.f32.xlu0 %v3490
    %v3492 = vpop.xlane.xlu0 %3491
    %v3493 = vsel %vm68, %v3421, 0.0
    %3494 = vadd.xlane.f32.xlu0 %v3493
    %v3495 = vpop.xlane.xlu0 %3494
    %v3496 = vsel %vm68, %v3422, 0.0
    %3497 = vadd.xlane.f32.xlu0 %v3496
    %v3498 = vpop.xlane.xlu0 %3497
    %v3499 = vsel %vm68, %v3423, 0.0
    %3500 = vadd.xlane.f32.xlu0 %v3499
    %v3501 = vpop.xlane.xlu0 %3500
    %v3502 = vsel %vm68, %v3424, 0.0
    %3503 = vadd.xlane.f32.xlu0 %v3502
    %v3504 = vpop.xlane.xlu0 %3503
    %v3505 = vsel %vm68, %v3425, 0.0
    %3506 = vadd.xlane.f32.xlu0 %v3505
    %v3507 = vpop.xlane.xlu0 %3506
    %v3508 = vsel %vm68, %v3426, 0.0
    %3509 = vadd.xlane.f32.xlu0 %v3508
    %v3510 = vpop.xlane.xlu0 %3509
    %v3511 = vsel %vm68, %v3427, 0.0
    %3512 = vadd.xlane.f32.xlu0 %v3511
    %v3513 = vpop.xlane.xlu0 %3512
    %v3514 = vsel %vm68, %v3428, 0.0
    %3515 = vadd.xlane.f32.xlu0 %v3514
    %v3516 = vpop.xlane.xlu0 %3515
    %v3517 = vsel %vm68, %v3429, 0.0
    %3518 = vadd.xlane.f32.xlu0 %v3517
    %v3519 = vpop.xlane.xlu0 %3518
    %v3520 = vsel %vm68, %v3430, 0.0
    %3521 = vadd.xlane.f32.xlu0 %v3520
    %v3522 = vpop.xlane.xlu0 %3521
    %v3523 = vsel %vm68, %v3431, 0.0
    %3524 = vadd.xlane.f32.xlu0 %v3523
    %v3525 = vpop.xlane.xlu0 %3524
    %v3526 = vsel %vm68, %v3432, 0.0
    %3527 = vadd.xlane.f32.xlu0 %v3526
    %v3528 = vpop.xlane.xlu0 %3527
    %v3529 = vadd.f32 %v3369, %v3435
    %v3530 = vadd.f32 %v3370, %v3438
    %v3531 = vadd.f32 %v3371, %v3441
    %v3532 = vadd.f32 %v3372, %v3444
    %v3533 = vadd.f32 %v3373, %v3447
    %v3534 = vadd.f32 %v3374, %v3450
    %v3535 = vadd.f32 %v3375, %v3453
    %v3536 = vadd.f32 %v3376, %v3456
    %v3537 = vadd.f32 %v3377, %v3459
    %v3538 = vadd.f32 %v3378, %v3462
    %v3539 = vadd.f32 %v3379, %v3465
    %v3540 = vadd.f32 %v3380, %v3468
    %v3541 = vadd.f32 %v3381, %v3471
    %v3542 = vadd.f32 %v3382, %v3474
    %v3543 = vadd.f32 %v3383, %v3477
    %v3544 = vadd.f32 %v3384, %v3480
    %v3545 = vadd.f32 %v3385, %v3483
    %v3546 = vadd.f32 %v3386, %v3486
    %v3547 = vadd.f32 %v3387, %v3489
    %v3548 = vadd.f32 %v3388, %v3492
    %v3549 = vadd.f32 %v3389, %v3495
    %v3550 = vadd.f32 %v3390, %v3498
    %v3551 = vadd.f32 %v3391, %v3501
    %v3552 = vadd.f32 %v3392, %v3504
    %v3553 = vadd.f32 %v3393, %v3507
    %v3554 = vadd.f32 %v3394, %v3510
    %v3555 = vadd.f32 %v3395, %v3513
    %v3556 = vadd.f32 %v3396, %v3516
    %v3557 = vadd.f32 %v3397, %v3519
    %v3558 = vadd.f32 %v3398, %v3522
    %v3559 = vadd.f32 %v3399, %v3525
    %v3560 = vadd.f32 %v3400, %v3528
    %v3561 = vld [vmem:[%s3240 + $0x2] sm:$0xff]
    %v3562 = vld [vmem:[%s3240 + $0xa] sm:$0xff]
    %v3563 = vld [vmem:[%s3240 + $0x1a] sm:$0xff]
    %v3564 = vld [vmem:[%s3240 + $0x22] sm:$0xff]
    %v3565 = vld [vmem:[%s3240 + $0x32] sm:$0xff]
    %v3566 = vld [vmem:[%s3240 + $0x3a] sm:$0xff]
    %v3567 = vld [vmem:[%s3240 + $0x4a] sm:$0xff]
    %v3568 = vld [vmem:[%s3240 + $0x52] sm:$0xff]
    %v3569 = vld [vmem:[%s3240 + $0x62] sm:$0xff]
    %v3570 = vld [vmem:[%s3240 + $0x6a] sm:$0xff]
    %v3571 = vld [vmem:[%s3240 + $0x7a] sm:$0xff]
    %v3572 = vld [vmem:[%s3240 + $0x82] sm:$0xff]
    %v3573 = vld [vmem:[%s3240 + $0x92] sm:$0xff]
    %v3574 = vld [vmem:[%s3240 + $0x9a] sm:$0xff]
    %v3575 = vld [vmem:[%s3240 + $0xaa] sm:$0xff]
    %v3576 = vld [vmem:[%s3240 + $0xb2] sm:$0xff]
    %v3577 = vld [vmem:[%s3240 + $0xc2] sm:$0xff]
    %v3578 = vld [vmem:[%s3240 + $0xca] sm:$0xff]
    %v3579 = vld [vmem:[%s3240 + $0xda] sm:$0xff]
    %v3580 = vld [vmem:[%s3240 + $0xe2] sm:$0xff]
    %v3581 = vld [vmem:[%s3240 + $0xf2] sm:$0xff]
    %v3582 = vld [vmem:[%s3240 + $0xfa] sm:$0xff]
    %v3583 = vld [vmem:[%s3240 + $0x10a] sm:$0xff]
    %v3584 = vld [vmem:[%s3240 + $0x112] sm:$0xff]
    %v3585 = vld [vmem:[%s3240 + $0x122] sm:$0xff]
    %v3586 = vld [vmem:[%s3240 + $0x12a] sm:$0xff]
    %v3587 = vld [vmem:[%s3240 + $0x13a] sm:$0xff]
    %v3588 = vld [vmem:[%s3240 + $0x142] sm:$0xff]
    %v3589 = vld [vmem:[%s3240 + $0x152] sm:$0xff]
    %v3590 = vld [vmem:[%s3240 + $0x15a] sm:$0xff]
    %v3591 = vld [vmem:[%s3240 + $0x16a] sm:$0xff]
    %v3592 = vld [vmem:[%s3240 + $0x172] sm:$0xff]
    %v3593 = vsel %vm68, %v3561, 0.0
    %3594 = vadd.xlane.f32.xlu0 %v3593
    %v3595 = vpop.xlane.xlu0 %3594
    %v3596 = vsel %vm68, %v3562, 0.0
    %3597 = vadd.xlane.f32.xlu0 %v3596
    %v3598 = vpop.xlane.xlu0 %3597
    %v3599 = vsel %vm68, %v3563, 0.0
    %3600 = vadd.xlane.f32.xlu0 %v3599
    %v3601 = vpop.xlane.xlu0 %3600
    %v3602 = vsel %vm68, %v3564, 0.0
    %3603 = vadd.xlane.f32.xlu0 %v3602
    %v3604 = vpop.xlane.xlu0 %3603
    %v3605 = vsel %vm68, %v3565, 0.0
    %3606 = vadd.xlane.f32.xlu0 %v3605
    %v3607 = vpop.xlane.xlu0 %3606
    %v3608 = vsel %vm68, %v3566, 0.0
    %3609 = vadd.xlane.f32.xlu0 %v3608
    %v3610 = vpop.xlane.xlu0 %3609
    %v3611 = vsel %vm68, %v3567, 0.0
    %3612 = vadd.xlane.f32.xlu0 %v3611
    %v3613 = vpop.xlane.xlu0 %3612
    %v3614 = vsel %vm68, %v3568, 0.0
    %3615 = vadd.xlane.f32.xlu0 %v3614
    %v3616 = vpop.xlane.xlu0 %3615
    %v3617 = vsel %vm68, %v3569, 0.0
    %3618 = vadd.xlane.f32.xlu0 %v3617
    %v3619 = vpop.xlane.xlu0 %3618
    %v3620 = vsel %vm68, %v3570, 0.0
    %3621 = vadd.xlane.f32.xlu0 %v3620
    %v3622 = vpop.xlane.xlu0 %3621
    %v3623 = vsel %vm68, %v3571, 0.0
    %3624 = vadd.xlane.f32.xlu0 %v3623
    %v3625 = vpop.xlane.xlu0 %3624
    %v3626 = vsel %vm68, %v3572, 0.0
    %3627 = vadd.xlane.f32.xlu0 %v3626
    %v3628 = vpop.xlane.xlu0 %3627
    %v3629 = vsel %vm68, %v3573, 0.0
    %3630 = vadd.xlane.f32.xlu0 %v3629
    %v3631 = vpop.xlane.xlu0 %3630
    %v3632 = vsel %vm68, %v3574, 0.0
    %3633 = vadd.xlane.f32.xlu0 %v3632
    %v3634 = vpop.xlane.xlu0 %3633
    %v3635 = vsel %vm68, %v3575, 0.0
    %3636 = vadd.xlane.f32.xlu0 %v3635
    %v3637 = vpop.xlane.xlu0 %3636
    %v3638 = vsel %vm68, %v3576, 0.0
    %3639 = vadd.xlane.f32.xlu0 %v3638
    %v3640 = vpop.xlane.xlu0 %3639
    %v3641 = vsel %vm68, %v3577, 0.0
    %3642 = vadd.xlane.f32.xlu0 %v3641
    %v3643 = vpop.xlane.xlu0 %3642
    %v3644 = vsel %vm68, %v3578, 0.0
    %3645 = vadd.xlane.f32.xlu0 %v3644
    %v3646 = vpop.xlane.xlu0 %3645
    %v3647 = vsel %vm68, %v3579, 0.0
    %3648 = vadd.xlane.f32.xlu0 %v3647
    %v3649 = vpop.xlane.xlu0 %3648
    %v3650 = vsel %vm68, %v3580, 0.0
    %3651 = vadd.xlane.f32.xlu0 %v3650
    %v3652 = vpop.xlane.xlu0 %3651
    %v3653 = vsel %vm68, %v3581, 0.0
    %3654 = vadd.xlane.f32.xlu0 %v3653
    %v3655 = vpop.xlane.xlu0 %3654
    %v3656 = vsel %vm68, %v3582, 0.0
    %3657 = vadd.xlane.f32.xlu0 %v3656
    %v3658 = vpop.xlane.xlu0 %3657
    %v3659 = vsel %vm68, %v3583, 0.0
    %3660 = vadd.xlane.f32.xlu0 %v3659
    %v3661 = vpop.xlane.xlu0 %3660
    %v3662 = vsel %vm68, %v3584, 0.0
    %3663 = vadd.xlane.f32.xlu0 %v3662
    %v3664 = vpop.xlane.xlu0 %3663
    %v3665 = vsel %vm68, %v3585, 0.0
    %3666 = vadd.xlane.f32.xlu0 %v3665
    %v3667 = vpop.xlane.xlu0 %3666
    %v3668 = vsel %vm68, %v3586, 0.0
    %3669 = vadd.xlane.f32.xlu0 %v3668
    %v3670 = vpop.xlane.xlu0 %3669
    %v3671 = vsel %vm68, %v3587, 0.0
    %3672 = vadd.xlane.f32.xlu0 %v3671
    %v3673 = vpop.xlane.xlu0 %3672
    %v3674 = vsel %vm68, %v3588, 0.0
    %3675 = vadd.xlane.f32.xlu0 %v3674
    %v3676 = vpop.xlane.xlu0 %3675
    %v3677 = vsel %vm68, %v3589, 0.0
    %3678 = vadd.xlane.f32.xlu0 %v3677
    %v3679 = vpop.xlane.xlu0 %3678
    %v3680 = vsel %vm68, %v3590, 0.0
    %3681 = vadd.xlane.f32.xlu0 %v3680
    %v3682 = vpop.xlane.xlu0 %3681
    %v3683 = vsel %vm68, %v3591, 0.0
    %3684 = vadd.xlane.f32.xlu0 %v3683
    %v3685 = vpop.xlane.xlu0 %3684
    %v3686 = vsel %vm68, %v3592, 0.0
    %3687 = vadd.xlane.f32.xlu0 %v3686
    %v3688 = vpop.xlane.xlu0 %3687
    %v3689 = vadd.f32 %v3529, %v3595
    %v3690 = vadd.f32 %v3530, %v3598
    %v3691 = vadd.f32 %v3531, %v3601
    %v3692 = vadd.f32 %v3532, %v3604
    %v3693 = vadd.f32 %v3533, %v3607
    %v3694 = vadd.f32 %v3534, %v3610
    %v3695 = vadd.f32 %v3535, %v3613
    %v3696 = vadd.f32 %v3536, %v3616
    %v3697 = vadd.f32 %v3537, %v3619
    %v3698 = vadd.f32 %v3538, %v3622
    %v3699 = vadd.f32 %v3539, %v3625
    %v3700 = vadd.f32 %v3540, %v3628
    %v3701 = vadd.f32 %v3541, %v3631
    %v3702 = vadd.f32 %v3542, %v3634
    %v3703 = vadd.f32 %v3543, %v3637
    %v3704 = vadd.f32 %v3544, %v3640
    %v3705 = vadd.f32 %v3545, %v3643
    %v3706 = vadd.f32 %v3546, %v3646
    %v3707 = vadd.f32 %v3547, %v3649
    %v3708 = vadd.f32 %v3548, %v3652
    %v3709 = vadd.f32 %v3549, %v3655
    %v3710 = vadd.f32 %v3550, %v3658
    %v3711 = vadd.f32 %v3551, %v3661
    %v3712 = vadd.f32 %v3552, %v3664
    %v3713 = vadd.f32 %v3553, %v3667
    %v3714 = vadd.f32 %v3554, %v3670
    %v3715 = vadd.f32 %v3555, %v3673
    %v3716 = vadd.f32 %v3556, %v3676
    %v3717 = vadd.f32 %v3557, %v3679
    %v3718 = vadd.f32 %v3558, %v3682
    %v3719 = vadd.f32 %v3559, %v3685
    %v3720 = vadd.f32 %v3560, %v3688
    %v3721 = vld [vmem:[%s3240 + $0x3] sm:$0xff]
    %v3722 = vld [vmem:[%s3240 + $0xb] sm:$0xff]
    %v3723 = vld [vmem:[%s3240 + $0x1b] sm:$0xff]
    %v3724 = vld [vmem:[%s3240 + $0x23] sm:$0xff]
    %v3725 = vld [vmem:[%s3240 + $0x33] sm:$0xff]
    %v3726 = vld [vmem:[%s3240 + $0x3b] sm:$0xff]
    %v3727 = vld [vmem:[%s3240 + $0x4b] sm:$0xff]
    %v3728 = vld [vmem:[%s3240 + $0x53] sm:$0xff]
    %v3729 = vld [vmem:[%s3240 + $0x63] sm:$0xff]
    %v3730 = vld [vmem:[%s3240 + $0x6b] sm:$0xff]
    %v3731 = vld [vmem:[%s3240 + $0x7b] sm:$0xff]
    %v3732 = vld [vmem:[%s3240 + $0x83] sm:$0xff]
    %v3733 = vld [vmem:[%s3240 + $0x93] sm:$0xff]
    %v3734 = vld [vmem:[%s3240 + $0x9b] sm:$0xff]
    %v3735 = vld [vmem:[%s3240 + $0xab] sm:$0xff]
    %v3736 = vld [vmem:[%s3240 + $0xb3] sm:$0xff]
    %v3737 = vld [vmem:[%s3240 + $0xc3] sm:$0xff]
    %v3738 = vld [vmem:[%s3240 + $0xcb] sm:$0xff]
    %v3739 = vld [vmem:[%s3240 + $0xdb] sm:$0xff]
    %v3740 = vld [vmem:[%s3240 + $0xe3] sm:$0xff]
    %v3741 = vld [vmem:[%s3240 + $0xf3] sm:$0xff]
    %v3742 = vld [vmem:[%s3240 + $0xfb] sm:$0xff]
    %v3743 = vld [vmem:[%s3240 + $0x10b] sm:$0xff]
    %v3744 = vld [vmem:[%s3240 + $0x113] sm:$0xff]
    %v3745 = vld [vmem:[%s3240 + $0x123] sm:$0xff]
    %v3746 = vld [vmem:[%s3240 + $0x12b] sm:$0xff]
    %v3747 = vld [vmem:[%s3240 + $0x13b] sm:$0xff]
    %v3748 = vld [vmem:[%s3240 + $0x143] sm:$0xff]
    %v3749 = vld [vmem:[%s3240 + $0x153] sm:$0xff]
    %v3750 = vld [vmem:[%s3240 + $0x15b] sm:$0xff]
    %v3751 = vld [vmem:[%s3240 + $0x16b] sm:$0xff]
    %v3752 = vld [vmem:[%s3240 + $0x173] sm:$0xff]
    %v3753 = vsel %vm68, %v3721, 0.0
    %3754 = vadd.xlane.f32.xlu0 %v3753
    %v3755 = vpop.xlane.xlu0 %3754
    %v3756 = vsel %vm68, %v3722, 0.0
    %3757 = vadd.xlane.f32.xlu0 %v3756
    %v3758 = vpop.xlane.xlu0 %3757
    %v3759 = vsel %vm68, %v3723, 0.0
    %3760 = vadd.xlane.f32.xlu0 %v3759
    %v3761 = vpop.xlane.xlu0 %3760
    %v3762 = vsel %vm68, %v3724, 0.0
    %3763 = vadd.xlane.f32.xlu0 %v3762
    %v3764 = vpop.xlane.xlu0 %3763
    %v3765 = vsel %vm68, %v3725, 0.0
    %3766 = vadd.xlane.f32.xlu0 %v3765
    %v3767 = vpop.xlane.xlu0 %3766
    %v3768 = vsel %vm68, %v3726, 0.0
    %3769 = vadd.xlane.f32.xlu0 %v3768
    %v3770 = vpop.xlane.xlu0 %3769
    %v3771 = vsel %vm68, %v3727, 0.0
    %3772 = vadd.xlane.f32.xlu0 %v3771
    %v3773 = vpop.xlane.xlu0 %3772
    %v3774 = vsel %vm68, %v3728, 0.0
    %3775 = vadd.xlane.f32.xlu0 %v3774
    %v3776 = vpop.xlane.xlu0 %3775
    %v3777 = vsel %vm68, %v3729, 0.0
    %3778 = vadd.xlane.f32.xlu0 %v3777
    %v3779 = vpop.xlane.xlu0 %3778
    %v3780 = vsel %vm68, %v3730, 0.0
    %3781 = vadd.xlane.f32.xlu0 %v3780
    %v3782 = vpop.xlane.xlu0 %3781
    %v3783 = vsel %vm68, %v3731, 0.0
    %3784 = vadd.xlane.f32.xlu0 %v3783
    %v3785 = vpop.xlane.xlu0 %3784
    %v3786 = vsel %vm68, %v3732, 0.0
    %3787 = vadd.xlane.f32.xlu0 %v3786
    %v3788 = vpop.xlane.xlu0 %3787
    %v3789 = vsel %vm68, %v3733, 0.0
    %3790 = vadd.xlane.f32.xlu0 %v3789
    %v3791 = vpop.xlane.xlu0 %3790
    %v3792 = vsel %vm68, %v3734, 0.0
    %3793 = vadd.xlane.f32.xlu0 %v3792
    %v3794 = vpop.xlane.xlu0 %3793
    %v3795 = vsel %vm68, %v3735, 0.0
    %3796 = vadd.xlane.f32.xlu0 %v3795
    %v3797 = vpop.xlane.xlu0 %3796
    %v3798 = vsel %vm68, %v3736, 0.0
    %3799 = vadd.xlane.f32.xlu0 %v3798
    %v3800 = vpop.xlane.xlu0 %3799
    %v3801 = vsel %vm68, %v3737, 0.0
    %3802 = vadd.xlane.f32.xlu0 %v3801
    %v3803 = vpop.xlane.xlu0 %3802
    %v3804 = vsel %vm68, %v3738, 0.0
    %3805 = vadd.xlane.f32.xlu0 %v3804
    %v3806 = vpop.xlane.xlu0 %3805
    %v3807 = vsel %vm68, %v3739, 0.0
    %3808 = vadd.xlane.f32.xlu0 %v3807
    %v3809 = vpop.xlane.xlu0 %3808
    %v3810 = vsel %vm68, %v3740, 0.0
    %3811 = vadd.xlane.f32.xlu0 %v3810
    %v3812 = vpop.xlane.xlu0 %3811
    %v3813 = vsel %vm68, %v3741, 0.0
    %3814 = vadd.xlane.f32.xlu0 %v3813
    %v3815 = vpop.xlane.xlu0 %3814
    %v3816 = vsel %vm68, %v3742, 0.0
    %3817 = vadd.xlane.f32.xlu0 %v3816
    %v3818 = vpop.xlane.xlu0 %3817
    %v3819 = vsel %vm68, %v3743, 0.0
    %3820 = vadd.xlane.f32.xlu0 %v3819
    %v3821 = vpop.xlane.xlu0 %3820
    %v3822 = vsel %vm68, %v3744, 0.0
    %3823 = vadd.xlane.f32.xlu0 %v3822
    %v3824 = vpop.xlane.xlu0 %3823
    %v3825 = vsel %vm68, %v3745, 0.0
    %3826 = vadd.xlane.f32.xlu0 %v3825
    %v3827 = vpop.xlane.xlu0 %3826
    %v3828 = vsel %vm68, %v3746, 0.0
    %3829 = vadd.xlane.f32.xlu0 %v3828
    %v3830 = vpop.xlane.xlu0 %3829
    %v3831 = vsel %vm68, %v3747, 0.0
    %3832 = vadd.xlane.f32.xlu0 %v3831
    %v3833 = vpop.xlane.xlu0 %3832
    %v3834 = vsel %vm68, %v3748, 0.0
    %3835 = vadd.xlane.f32.xlu0 %v3834
    %v3836 = vpop.xlane.xlu0 %3835
    %v3837 = vsel %vm68, %v3749, 0.0
    %3838 = vadd.xlane.f32.xlu0 %v3837
    %v3839 = vpop.xlane.xlu0 %3838
    %v3840 = vsel %vm68, %v3750, 0.0
    %3841 = vadd.xlane.f32.xlu0 %v3840
    %v3842 = vpop.xlane.xlu0 %3841
    %v3843 = vsel %vm68, %v3751, 0.0
    %3844 = vadd.xlane.f32.xlu0 %v3843
    %v3845 = vpop.xlane.xlu0 %3844
    %v3846 = vsel %vm68, %v3752, 0.0
    %3847 = vadd.xlane.f32.xlu0 %v3846
    %v3848 = vpop.xlane.xlu0 %3847
    %v3849 = vadd.f32 %v3689, %v3755
    %v3850 = vadd.f32 %v3690, %v3758
    %v3851 = vadd.f32 %v3691, %v3761
    %v3852 = vadd.f32 %v3692, %v3764
    %v3853 = vadd.f32 %v3693, %v3767
    %v3854 = vadd.f32 %v3694, %v3770
    %v3855 = vadd.f32 %v3695, %v3773
    %v3856 = vadd.f32 %v3696, %v3776
    %v3857 = vadd.f32 %v3697, %v3779
    %v3858 = vadd.f32 %v3698, %v3782
    %v3859 = vadd.f32 %v3699, %v3785
    %v3860 = vadd.f32 %v3700, %v3788
    %v3861 = vadd.f32 %v3701, %v3791
    %v3862 = vadd.f32 %v3702, %v3794
    %v3863 = vadd.f32 %v3703, %v3797
    %v3864 = vadd.f32 %v3704, %v3800
    %v3865 = vadd.f32 %v3705, %v3803
    %v3866 = vadd.f32 %v3706, %v3806
    %v3867 = vadd.f32 %v3707, %v3809
    %v3868 = vadd.f32 %v3708, %v3812
    %v3869 = vadd.f32 %v3709, %v3815
    %v3870 = vadd.f32 %v3710, %v3818
    %v3871 = vadd.f32 %v3711, %v3821
    %v3872 = vadd.f32 %v3712, %v3824
    %v3873 = vadd.f32 %v3713, %v3827
    %v3874 = vadd.f32 %v3714, %v3830
    %v3875 = vadd.f32 %v3715, %v3833
    %v3876 = vadd.f32 %v3716, %v3836
    %v3877 = vadd.f32 %v3717, %v3839
    %v3878 = vadd.f32 %v3718, %v3842
    %v3879 = vadd.f32 %v3719, %v3845
    %v3880 = vadd.f32 %v3720, %v3848
    %v3881 = vld [vmem:[%s3240 + $0x4] sm:$0xff]
    %v3882 = vld [vmem:[%s3240 + $0xc] sm:$0xff]
    %v3883 = vld [vmem:[%s3240 + $0x1c] sm:$0xff]
    %v3884 = vld [vmem:[%s3240 + $0x24] sm:$0xff]
    %v3885 = vld [vmem:[%s3240 + $0x34] sm:$0xff]
    %v3886 = vld [vmem:[%s3240 + $0x3c] sm:$0xff]
    %v3887 = vld [vmem:[%s3240 + $0x4c] sm:$0xff]
    %v3888 = vld [vmem:[%s3240 + $0x54] sm:$0xff]
    %v3889 = vld [vmem:[%s3240 + $0x64] sm:$0xff]
    %v3890 = vld [vmem:[%s3240 + $0x6c] sm:$0xff]
    %v3891 = vld [vmem:[%s3240 + $0x7c] sm:$0xff]
    %v3892 = vld [vmem:[%s3240 + $0x84] sm:$0xff]
    %v3893 = vld [vmem:[%s3240 + $0x94] sm:$0xff]
    %v3894 = vld [vmem:[%s3240 + $0x9c] sm:$0xff]
    %v3895 = vld [vmem:[%s3240 + $0xac] sm:$0xff]
    %v3896 = vld [vmem:[%s3240 + $0xb4] sm:$0xff]
    %v3897 = vld [vmem:[%s3240 + $0xc4] sm:$0xff]
    %v3898 = vld [vmem:[%s3240 + $0xcc] sm:$0xff]
    %v3899 = vld [vmem:[%s3240 + $0xdc] sm:$0xff]
    %v3900 = vld [vmem:[%s3240 + $0xe4] sm:$0xff]
    %v3901 = vld [vmem:[%s3240 + $0xf4] sm:$0xff]
    %v3902 = vld [vmem:[%s3240 + $0xfc] sm:$0xff]
    %v3903 = vld [vmem:[%s3240 + $0x10c] sm:$0xff]
    %v3904 = vld [vmem:[%s3240 + $0x114] sm:$0xff]
    %v3905 = vld [vmem:[%s3240 + $0x124] sm:$0xff]
    %v3906 = vld [vmem:[%s3240 + $0x12c] sm:$0xff]
    %v3907 = vld [vmem:[%s3240 + $0x13c] sm:$0xff]
    %v3908 = vld [vmem:[%s3240 + $0x144] sm:$0xff]
    %v3909 = vld [vmem:[%s3240 + $0x154] sm:$0xff]
    %v3910 = vld [vmem:[%s3240 + $0x15c] sm:$0xff]
    %v3911 = vld [vmem:[%s3240 + $0x16c] sm:$0xff]
    %v3912 = vld [vmem:[%s3240 + $0x174] sm:$0xff]
    %v3913 = vsel %vm68, %v3881, 0.0
    %3914 = vadd.xlane.f32.xlu0 %v3913
    %v3915 = vpop.xlane.xlu0 %3914
    %v3916 = vsel %vm68, %v3882, 0.0
    %3917 = vadd.xlane.f32.xlu0 %v3916
    %v3918 = vpop.xlane.xlu0 %3917
    %v3919 = vsel %vm68, %v3883, 0.0
    %3920 = vadd.xlane.f32.xlu0 %v3919
    %v3921 = vpop.xlane.xlu0 %3920
    %v3922 = vsel %vm68, %v3884, 0.0
    %3923 = vadd.xlane.f32.xlu0 %v3922
    %v3924 = vpop.xlane.xlu0 %3923
    %v3925 = vsel %vm68, %v3885, 0.0
    %3926 = vadd.xlane.f32.xlu0 %v3925
    %v3927 = vpop.xlane.xlu0 %3926
    %v3928 = vsel %vm68, %v3886, 0.0
    %3929 = vadd.xlane.f32.xlu0 %v3928
    %v3930 = vpop.xlane.xlu0 %3929
    %v3931 = vsel %vm68, %v3887, 0.0
    %3932 = vadd.xlane.f32.xlu0 %v3931
    %v3933 = vpop.xlane.xlu0 %3932
    %v3934 = vsel %vm68, %v3888, 0.0
    %3935 = vadd.xlane.f32.xlu0 %v3934
    %v3936 = vpop.xlane.xlu0 %3935
    %v3937 = vsel %vm68, %v3889, 0.0
    %3938 = vadd.xlane.f32.xlu0 %v3937
    %v3939 = vpop.xlane.xlu0 %3938
    %v3940 = vsel %vm68, %v3890, 0.0
    %3941 = vadd.xlane.f32.xlu0 %v3940
    %v3942 = vpop.xlane.xlu0 %3941
    %v3943 = vsel %vm68, %v3891, 0.0
    %3944 = vadd.xlane.f32.xlu0 %v3943
    %v3945 = vpop.xlane.xlu0 %3944
    %v3946 = vsel %vm68, %v3892, 0.0
    %3947 = vadd.xlane.f32.xlu0 %v3946
    %v3948 = vpop.xlane.xlu0 %3947
    %v3949 = vsel %vm68, %v3893, 0.0
    %3950 = vadd.xlane.f32.xlu0 %v3949
    %v3951 = vpop.xlane.xlu0 %3950
    %v3952 = vsel %vm68, %v3894, 0.0
    %3953 = vadd.xlane.f32.xlu0 %v3952
    %v3954 = vpop.xlane.xlu0 %3953
    %v3955 = vsel %vm68, %v3895, 0.0
    %3956 = vadd.xlane.f32.xlu0 %v3955
    %v3957 = vpop.xlane.xlu0 %3956
    %v3958 = vsel %vm68, %v3896, 0.0
    %3959 = vadd.xlane.f32.xlu0 %v3958
    %v3960 = vpop.xlane.xlu0 %3959
    %v3961 = vsel %vm68, %v3897, 0.0
    %3962 = vadd.xlane.f32.xlu0 %v3961
    %v3963 = vpop.xlane.xlu0 %3962
    %v3964 = vsel %vm68, %v3898, 0.0
    %3965 = vadd.xlane.f32.xlu0 %v3964
    %v3966 = vpop.xlane.xlu0 %3965
    %v3967 = vsel %vm68, %v3899, 0.0
    %3968 = vadd.xlane.f32.xlu0 %v3967
    %v3969 = vpop.xlane.xlu0 %3968
    %v3970 = vsel %vm68, %v3900, 0.0
    %3971 = vadd.xlane.f32.xlu0 %v3970
    %v3972 = vpop.xlane.xlu0 %3971
    %v3973 = vsel %vm68, %v3901, 0.0
    %3974 = vadd.xlane.f32.xlu0 %v3973
    %v3975 = vpop.xlane.xlu0 %3974
    %v3976 = vsel %vm68, %v3902, 0.0
    %3977 = vadd.xlane.f32.xlu0 %v3976
    %v3978 = vpop.xlane.xlu0 %3977
    %v3979 = vsel %vm68, %v3903, 0.0
    %3980 = vadd.xlane.f32.xlu0 %v3979
    %v3981 = vpop.xlane.xlu0 %3980
    %v3982 = vsel %vm68, %v3904, 0.0
    %3983 = vadd.xlane.f32.xlu0 %v3982
    %v3984 = vpop.xlane.xlu0 %3983
    %v3985 = vsel %vm68, %v3905, 0.0
    %3986 = vadd.xlane.f32.xlu0 %v3985
    %v3987 = vpop.xlane.xlu0 %3986
    %v3988 = vsel %vm68, %v3906, 0.0
    %3989 = vadd.xlane.f32.xlu0 %v3988
    %v3990 = vpop.xlane.xlu0 %3989
    %v3991 = vsel %vm68, %v3907, 0.0
    %3992 = vadd.xlane.f32.xlu0 %v3991
    %v3993 = vpop.xlane.xlu0 %3992
    %v3994 = vsel %vm68, %v3908, 0.0
    %3995 = vadd.xlane.f32.xlu0 %v3994
    %v3996 = vpop.xlane.xlu0 %3995
    %v3997 = vsel %vm68, %v3909, 0.0
    %3998 = vadd.xlane.f32.xlu0 %v3997
    %v3999 = vpop.xlane.xlu0 %3998
    %v4000 = vsel %vm68, %v3910, 0.0
    %4001 = vadd.xlane.f32.xlu0 %v4000
    %v4002 = vpop.xlane.xlu0 %4001
    %v4003 = vsel %vm68, %v3911, 0.0
    %4004 = vadd.xlane.f32.xlu0 %v4003
    %v4005 = vpop.xlane.xlu0 %4004
    %v4006 = vsel %vm68, %v3912, 0.0
    %4007 = vadd.xlane.f32.xlu0 %v4006
    %v4008 = vpop.xlane.xlu0 %4007
    %v4009 = vadd.f32 %v3849, %v3915
    %v4010 = vadd.f32 %v3850, %v3918
    %v4011 = vadd.f32 %v3851, %v3921
    %v4012 = vadd.f32 %v3852, %v3924
    %v4013 = vadd.f32 %v3853, %v3927
    %v4014 = vadd.f32 %v3854, %v3930
    %v4015 = vadd.f32 %v3855, %v3933
    %v4016 = vadd.f32 %v3856, %v3936
    %v4017 = vadd.f32 %v3857, %v3939
    %v4018 = vadd.f32 %v3858, %v3942
    %v4019 = vadd.f32 %v3859, %v3945
    %v4020 = vadd.f32 %v3860, %v3948
    %v4021 = vadd.f32 %v3861, %v3951
    %v4022 = vadd.f32 %v3862, %v3954
    %v4023 = vadd.f32 %v3863, %v3957
    %v4024 = vadd.f32 %v3864, %v3960
    %v4025 = vadd.f32 %v3865, %v3963
    %v4026 = vadd.f32 %v3866, %v3966
    %v4027 = vadd.f32 %v3867, %v3969
    %v4028 = vadd.f32 %v3868, %v3972
    %v4029 = vadd.f32 %v3869, %v3975
    %v4030 = vadd.f32 %v3870, %v3978
    %v4031 = vadd.f32 %v3871, %v3981
    %v4032 = vadd.f32 %v3872, %v3984
    %v4033 = vadd.f32 %v3873, %v3987
    %v4034 = vadd.f32 %v3874, %v3990
    %v4035 = vadd.f32 %v3875, %v3993
    %v4036 = vadd.f32 %v3876, %v3996
    %v4037 = vadd.f32 %v3877, %v3999
    %v4038 = vadd.f32 %v3878, %v4002
    %v4039 = vadd.f32 %v3879, %v4005
    %v4040 = vadd.f32 %v3880, %v4008
    %v4041 = vstv %s35
    %v4042 = vsub.f32 %v4009, %v4041
    %v4043 = vsub.f32 %v4010, %v4041
    %v4044 = vsub.f32 %v4011, %v4041
    %v4045 = vsub.f32 %v4012, %v4041
    %v4046 = vsub.f32 %v4013, %v4041
    %v4047 = vsub.f32 %v4014, %v4041
    %v4048 = vsub.f32 %v4015, %v4041
    %v4049 = vsub.f32 %v4016, %v4041
    %v4050 = vsub.f32 %v4017, %v4041
    %v4051 = vsub.f32 %v4018, %v4041
    %v4052 = vsub.f32 %v4019, %v4041
    %v4053 = vsub.f32 %v4020, %v4041
    %v4054 = vsub.f32 %v4021, %v4041
    %v4055 = vsub.f32 %v4022, %v4041
    %v4056 = vsub.f32 %v4023, %v4041
    %v4057 = vsub.f32 %v4024, %v4041
    %v4058 = vsub.f32 %v4025, %v4041
    %v4059 = vsub.f32 %v4026, %v4041
    %v4060 = vsub.f32 %v4027, %v4041
    %v4061 = vsub.f32 %v4028, %v4041
    %v4062 = vsub.f32 %v4029, %v4041
    %v4063 = vsub.f32 %v4030, %v4041
    %v4064 = vsub.f32 %v4031, %v4041
    %v4065 = vsub.f32 %v4032, %v4041
    %v4066 = vsub.f32 %v4033, %v4041
    %v4067 = vsub.f32 %v4034, %v4041
    %v4068 = vsub.f32 %v4035, %v4041
    %v4069 = vsub.f32 %v4036, %v4041
    %v4070 = vsub.f32 %v4037, %v4041
    %v4071 = vsub.f32 %v4038, %v4041
    %v4072 = vsub.f32 %v4039, %v4041
    %v4073 = vsub.f32 %v4040, %v4041
    %v4074 = vand.u32 2147483647, %v4042
    %v4075 = vand.u32 2147483647, %v4043
    %v4076 = vand.u32 2147483647, %v4044
    %v4077 = vand.u32 2147483647, %v4045
    %v4078 = vand.u32 2147483647, %v4046
    %v4079 = vand.u32 2147483647, %v4047
    %v4080 = vand.u32 2147483647, %v4048
    %v4081 = vand.u32 2147483647, %v4049
    %v4082 = vand.u32 2147483647, %v4050
    %v4083 = vand.u32 2147483647, %v4051
    %v4084 = vand.u32 2147483647, %v4052
    %v4085 = vand.u32 2147483647, %v4053
    %v4086 = vand.u32 2147483647, %v4054
    %v4087 = vand.u32 2147483647, %v4055
    %v4088 = vand.u32 2147483647, %v4056
    %v4089 = vand.u32 2147483647, %v4057
    %v4090 = vand.u32 2147483647, %v4058
    %v4091 = vand.u32 2147483647, %v4059
    %v4092 = vand.u32 2147483647, %v4060
    %v4093 = vand.u32 2147483647, %v4061
    %v4094 = vand.u32 2147483647, %v4062
    %v4095 = vand.u32 2147483647, %v4063
    %v4096 = vand.u32 2147483647, %v4064
    %v4097 = vand.u32 2147483647, %v4065
    %v4098 = vand.u32 2147483647, %v4066
    %v4099 = vand.u32 2147483647, %v4067
    %v4100 = vand.u32 2147483647, %v4068
    %v4101 = vand.u32 2147483647, %v4069
    %v4102 = vand.u32 2147483647, %v4070
    %v4103 = vand.u32 2147483647, %v4071
    %v4104 = vand.u32 2147483647, %v4072
    %v4105 = vand.u32 2147483647, %v4073
    %v4106 = vmul.f32 %v4074, 0.00625
    %v4107 = vmul.f32 %v4075, 0.00625
    %v4108 = vmul.f32 %v4076, 0.00625
    %v4109 = vmul.f32 %v4077, 0.00625
    %v4110 = vmul.f32 %v4078, 0.00625
    %v4111 = vmul.f32 %v4079, 0.00625
    %v4112 = vmul.f32 %v4080, 0.00625
    %v4113 = vmul.f32 %v4081, 0.00625
    %v4114 = vmul.f32 %v4082, 0.00625
    %v4115 = vmul.f32 %v4083, 0.00625
    %v4116 = vmul.f32 %v4084, 0.00625
    %v4117 = vmul.f32 %v4085, 0.00625
    %v4118 = vmul.f32 %v4086, 0.00625
    %v4119 = vmul.f32 %v4087, 0.00625
    %v4120 = vmul.f32 %v4088, 0.00625
    %v4121 = vmul.f32 %v4089, 0.00625
    %v4122 = vmul.f32 %v4090, 0.00625
    %v4123 = vmul.f32 %v4091, 0.00625
    %v4124 = vmul.f32 %v4092, 0.00625
    %v4125 = vmul.f32 %v4093, 0.00625
    %v4126 = vmul.f32 %v4094, 0.00625
    %v4127 = vmul.f32 %v4095, 0.00625
    %v4128 = vmul.f32 %v4096, 0.00625
    %v4129 = vmul.f32 %v4097, 0.00625
    %v4130 = vmul.f32 %v4098, 0.00625
    %v4131 = vmul.f32 %v4099, 0.00625
    %v4132 = vmul.f32 %v4100, 0.00625
    %v4133 = vmul.f32 %v4101, 0.00625
    %v4134 = vmul.f32 %v4102, 0.00625
    %v4135 = vmul.f32 %v4103, 0.00625
    %v4136 = vmul.f32 %v4104, 0.00625
    %v4137 = vmul.f32 %v4105, 0.00625
    %v4170 = vlaneseq
    %v4171 = vand.u32 %v4170, 127
    %v4172 = vlaneseq
    %v4173 = vshrl.u32 %v4172, 7
    %v4174 = vsub.s32 %v4171, %v4173
    %v4175 = vrot.slane %v4106, %v4174
    %v4176 = vadd.s32 %v4171, 4294967288
    %v4177 = vlaneseq
    %v4178 = vshrl.u32 %v4177, 7
    %v4179 = vsub.s32 %v4176, %v4178
    %v4180 = vrot.slane %v4107, %v4179
    %vm4181 = vcmask 130112
    %v4182 = vsel %vm4181, %v4180, %v4175
    %v4183 = vlaneseq
    %v4184 = vshrl.u32 %v4183, 7
    %v4185 = vsub.s32 %v4171, %v4184
    %v4186 = vrot.slane %v4108, %v4185
    %v4187 = vlaneseq
    %v4188 = vshrl.u32 %v4187, 7
    %v4189 = vsub.s32 %v4176, %v4188
    %v4190 = vrot.slane %v4109, %v4189
    %v4191 = vsel %vm4181, %v4190, %v4186
    %v4192 = vlaneseq
    %v4193 = vshrl.u32 %v4192, 7
    %v4194 = vsub.s32 %v4171, %v4193
    %v4195 = vrot.slane %v4110, %v4194
    %v4196 = vlaneseq
    %v4197 = vshrl.u32 %v4196, 7
    %v4198 = vsub.s32 %v4176, %v4197
    %v4199 = vrot.slane %v4111, %v4198
    %v4200 = vsel %vm4181, %v4199, %v4195
    %v4201 = vlaneseq
    %v4202 = vshrl.u32 %v4201, 7
    %v4203 = vsub.s32 %v4171, %v4202
    %v4204 = vrot.slane %v4112, %v4203
    %v4205 = vlaneseq
    %v4206 = vshrl.u32 %v4205, 7
    %v4207 = vsub.s32 %v4176, %v4206
    %v4208 = vrot.slane %v4113, %v4207
    %v4209 = vsel %vm4181, %v4208, %v4204
    %v4210 = vlaneseq
    %v4211 = vshrl.u32 %v4210, 7
    %v4212 = vsub.s32 %v4171, %v4211
    %v4213 = vrot.slane %v4114, %v4212
    %v4214 = vlaneseq
    %v4215 = vshrl.u32 %v4214, 7
    %v4216 = vsub.s32 %v4176, %v4215
    %v4217 = vrot.slane %v4115, %v4216
    %v4218 = vsel %vm4181, %v4217, %v4213
    %v4219 = vlaneseq
    %v4220 = vshrl.u32 %v4219, 7
    %v4221 = vsub.s32 %v4171, %v4220
    %v4222 = vrot.slane %v4116, %v4221
    %v4223 = vlaneseq
    %v4224 = vshrl.u32 %v4223, 7
    %v4225 = vsub.s32 %v4176, %v4224
    %v4226 = vrot.slane %v4117, %v4225
    %v4227 = vsel %vm4181, %v4226, %v4222
    %v4228 = vlaneseq
    %v4229 = vshrl.u32 %v4228, 7
    %v4230 = vsub.s32 %v4171, %v4229
    %v4231 = vrot.slane %v4118, %v4230
    %v4232 = vlaneseq
    %v4233 = vshrl.u32 %v4232, 7
    %v4234 = vsub.s32 %v4176, %v4233
    %v4235 = vrot.slane %v4119, %v4234
    %v4236 = vsel %vm4181, %v4235, %v4231
    %v4237 = vlaneseq
    %v4238 = vshrl.u32 %v4237, 7
    %v4239 = vsub.s32 %v4171, %v4238
    %v4240 = vrot.slane %v4120, %v4239
    %v4241 = vlaneseq
    %v4242 = vshrl.u32 %v4241, 7
    %v4243 = vsub.s32 %v4176, %v4242
    %v4244 = vrot.slane %v4121, %v4243
    %v4245 = vsel %vm4181, %v4244, %v4240
    %v4246 = vlaneseq
    %v4247 = vshrl.u32 %v4246, 7
    %v4248 = vsub.s32 %v4171, %v4247
    %v4249 = vrot.slane %v4122, %v4248
    %v4250 = vlaneseq
    %v4251 = vshrl.u32 %v4250, 7
    %v4252 = vsub.s32 %v4176, %v4251
    %v4253 = vrot.slane %v4123, %v4252
    %v4254 = vsel %vm4181, %v4253, %v4249
    %v4255 = vlaneseq
    %v4256 = vshrl.u32 %v4255, 7
    %v4257 = vsub.s32 %v4171, %v4256
    %v4258 = vrot.slane %v4124, %v4257
    %v4259 = vlaneseq
    %v4260 = vshrl.u32 %v4259, 7
    %v4261 = vsub.s32 %v4176, %v4260
    %v4262 = vrot.slane %v4125, %v4261
    %v4263 = vsel %vm4181, %v4262, %v4258
    %v4264 = vlaneseq
    %v4265 = vshrl.u32 %v4264, 7
    %v4266 = vsub.s32 %v4171, %v4265
    %v4267 = vrot.slane %v4126, %v4266
    %v4268 = vlaneseq
    %v4269 = vshrl.u32 %v4268, 7
    %v4270 = vsub.s32 %v4176, %v4269
    %v4271 = vrot.slane %v4127, %v4270
    %v4272 = vsel %vm4181, %v4271, %v4267
    %v4273 = vlaneseq
    %v4274 = vshrl.u32 %v4273, 7
    %v4275 = vsub.s32 %v4171, %v4274
    %v4276 = vrot.slane %v4128, %v4275
    %v4277 = vlaneseq
    %v4278 = vshrl.u32 %v4277, 7
    %v4279 = vsub.s32 %v4176, %v4278
    %v4280 = vrot.slane %v4129, %v4279
    %v4281 = vsel %vm4181, %v4280, %v4276
    %v4282 = vlaneseq
    %v4283 = vshrl.u32 %v4282, 7
    %v4284 = vsub.s32 %v4171, %v4283
    %v4285 = vrot.slane %v4130, %v4284
    %v4286 = vlaneseq
    %v4287 = vshrl.u32 %v4286, 7
    %v4288 = vsub.s32 %v4176, %v4287
    %v4289 = vrot.slane %v4131, %v4288
    %v4290 = vsel %vm4181, %v4289, %v4285
    %v4291 = vlaneseq
    %v4292 = vshrl.u32 %v4291, 7
    %v4293 = vsub.s32 %v4171, %v4292
    %v4294 = vrot.slane %v4132, %v4293
    %v4295 = vlaneseq
    %v4296 = vshrl.u32 %v4295, 7
    %v4297 = vsub.s32 %v4176, %v4296
    %v4298 = vrot.slane %v4133, %v4297
    %v4299 = vsel %vm4181, %v4298, %v4294
    %v4300 = vlaneseq
    %v4301 = vshrl.u32 %v4300, 7
    %v4302 = vsub.s32 %v4171, %v4301
    %v4303 = vrot.slane %v4134, %v4302
    %v4304 = vlaneseq
    %v4305 = vshrl.u32 %v4304, 7
    %v4306 = vsub.s32 %v4176, %v4305
    %v4307 = vrot.slane %v4135, %v4306
    %v4308 = vsel %vm4181, %v4307, %v4303
    %v4309 = vlaneseq
    %v4310 = vshrl.u32 %v4309, 7
    %v4311 = vsub.s32 %v4171, %v4310
    %v4312 = vrot.slane %v4136, %v4311
    %v4313 = vlaneseq
    %v4314 = vshrl.u32 %v4313, 7
    %v4315 = vsub.s32 %v4176, %v4314
    %v4316 = vrot.slane %v4137, %v4315
    %v4317 = vsel %vm4181, %v4316, %v4312
    %vm4318 = vcmask 1041409
    %v4319 = vsel %vm4318, %v4191, %v4182
    %vm4320 = vcmask 1042434
    %v4321 = vsel %vm4320, %v4200, %v4319
    %vm4322 = vcmask 1043459
    %v4323 = vsel %vm4322, %v4209, %v4321
    %vm4324 = vcmask 1044484
    %v4325 = vsel %vm4324, %v4218, %v4323
    %vm4326 = vcmask 1045509
    %v4327 = vsel %vm4326, %v4227, %v4325
    %vm4328 = vcmask 1046534
    %v4329 = vsel %vm4328, %v4236, %v4327
    %vm4330 = vcmask 1047559
    %v4331 = vsel %vm4330, %v4245, %v4329
    %v4332 = vsel %vm4318, %v4263, %v4254
    %v4333 = vsel %vm4320, %v4272, %v4332
    %v4334 = vsel %vm4322, %v4281, %v4333
    %v4335 = vsel %vm4324, %v4290, %v4334
    %v4336 = vsel %vm4326, %v4299, %v4335
    %v4337 = vsel %vm4328, %v4308, %v4336
    %v4338 = vsel %vm4330, %v4317, %v4337
    %vm4341 = vcmask 130048
    %4342 = vst.msk [vmem:[#allocation2] sm:$0xff] %vm4341, %v4331
    %4343 = vst.msk [vmem:[#allocation2 + $0x8] sm:$0xff] %vm4341, %v4338
    // Predicated region
    $region10: #{rpn_forward.9} parent=1 // pred_check
      _
    $region11: #{rpn_forward.9} parent=1 // pred_check_branch
      %4345 = sbr.rel (0) target = $region13
    $region12: #{rpn_forward.9} parent=1 // pred_region
      %s4347 = ssub.s32 256, 256
      %4348 = vsyncadd [#allocation3], %s4347
      %s4349 = sshll.u32 [#allocation2], 4
      %s4350 = int_to_ptr.vmem [resolvable:$true] %s4349
      %4355 = dma.vmem_to_hbm [thread:$0]  %s4350, 256, %s2, [#allocation3], 128, 128, 8
    $region13: #{rpn_forward.9} parent=1 // pred_fallthru
      _
    // Predicated region
    $region14: #{rpn_forward.9} parent=1 // pred_check
      _
    $region15: #{rpn_forward.9} parent=1 // pred_check_branch
      %4357 = sbr.rel (0) target = $region17
    $region16: #{rpn_forward.9} parent=1 // pred_region
      %4358 = dma.done [#allocation3], 256
    $region17: #{rpn_forward.9} parent=1 // pred_fallthru
      _
    %4359 = vsyncpa [#allocation3], 1

</llo_original>
